<compile_context>
chip_gen: v6e
topology: v6e:2x2x1
jax: 0.10.0
libtpu: 0.0.40
codegen_flags: <defaults>
</compile_context>

<pallas_src>
import math

import jax
import jax.numpy as jnp
import numpy as np
from jax.experimental import pallas as pl
from jax.experimental.pallas import tpu as pltpu

NUM_CLASSES = 62   # FEMNIST
CLASS_PAD = 128    # lane-dense fc2 output


# ---------------------------------------------------------------------------
# Pallas kernels
# ---------------------------------------------------------------------------
def _conv_pool_relu_kernel(patch_ref, w_ref, b_ref, out_ref):
    """relu(maxpool2x2(conv(x)) + b) for B images: one big matmul + leading-axis max."""
    B, M, K = patch_ref.shape          # M = 4 * Sp (pool positions stacked p-major)
    Sp = M // 4
    C = w_ref.shape[1]
    x = patch_ref[...].reshape(B * M, K)                                  # bf16
    acc = jnp.dot(x, w_ref[...], preferred_element_type=jnp.float32)     # (B*M, C) f32
    acc = acc.reshape(B, 4, Sp, C)
    y = jnp.max(acc, axis=1) + b_ref[...]                                 # maxpool + bias
    out_ref[...] = jnp.maximum(y, 0.0).astype(out_ref.dtype)


def conv_pool_relu(patches, w, b):
    """patches: (N, 4*Sp, K) bf16   w: (K, Cout) bf16   b: (1, Cout) f32 -> (N, Sp, Cout) bf16."""
    N, M, K = patches.shape
    C = w.shape[1]
    Sp = M // 4
    B = math.gcd(N, 8)                 # images per grid step (amortizes grid overhead)
    return pl.pallas_call(
        _conv_pool_relu_kernel,
        out_shape=jax.ShapeDtypeStruct((N, Sp, C), jnp.bfloat16),
        grid=(N // B,),
        in_specs=[
            pl.BlockSpec((B, M, K), lambda n: (n, 0, 0)),
            pl.BlockSpec((K, C), lambda n: (0, 0)),
            pl.BlockSpec((1, C), lambda n: (0, 0)),
        ],
        out_specs=pl.BlockSpec((B, Sp, C), lambda n: (n, 0, 0)),
        compiler_params=pltpu.CompilerParams(dimension_semantics=("parallel",)),
    )(patches, w, b)


def _mlp_kernel(x_ref, w1_ref, b1_ref, w2_ref, b2_ref, out_ref, acc_ref):
    """fc1 (K-tiled bf16 matmul, f32 accumulate) + relu + fc2, fused; finalize on last K step."""
    k = pl.program_id(1)

    @pl.when(k == 0)
    def _():
        acc_ref[...] = jnp.zeros_like(acc_ref)

    acc_ref[...] += jnp.dot(x_ref[...], w1_ref[...],
                            preferred_element_type=jnp.float32)

    @pl.when(k == pl.num_programs(1) - 1)
    def _():
        h = jnp.maximum(acc_ref[...] + b1_ref[...], 0.0).astype(w2_ref.dtype)  # bf16 for MXU
        out_ref[...] = (jnp.dot(h, w2_ref[...], preferred_element_type=jnp.float32)
                        + b2_ref[...]).astype(out_ref.dtype)


def mlp(x, w1, b1, w2, b2, *, tk=640):
    """x: (N, Kp) bf16  w1: (Kp, H) bf16  b1: (1, H) f32  w2: (H, C) bf16  b2: (1, C) f32."""
    N, Kp = x.shape
    H = w1.shape[1]
    C = w2.shape[1]
    assert Kp % tk == 0 and tk % 128 == 0
    bn = N if N <= 256 else 256
    assert N % bn == 0
    return pl.pallas_call(
        _mlp_kernel,
        out_shape=jax.ShapeDtypeStruct((N, C), jnp.float32),
        grid=(N // bn, Kp // tk),      # batch axis parallel (v7x megacore), K reduction last
        in_specs=[
            pl.BlockSpec((bn, tk), lambda n, k: (n, k)),
            pl.BlockSpec((tk, H), lambda n, k: (k, 0)),
            pl.BlockSpec((1, H), lambda n, k: (0, 0)),
            pl.BlockSpec((H, C), lambda n, k: (0, 0)),
            pl.BlockSpec((1, C), lambda n, k: (0, 0)),
        ],
        out_specs=pl.BlockSpec((bn, C), lambda n, k: (n, 0)),
        scratch_shapes=[pltpu.VMEM((bn, H), jnp.float32)],
        compiler_params=pltpu.CompilerParams(
            dimension_semantics=("parallel", "arbitrary")),
    )(x, w1, b1, w2, b2)


# ---------------------------------------------------------------------------
# JAX glue: NHWC im2col with pool-position grouping (pure data movement, bf16)
# ---------------------------------------------------------------------------
def im2col_pool_nhwc(x, ksize=5, pad=2):
    """(N,H,W,C) NHWC -> (N, 4*Sp, K) patches.

    Rows are pool-position-major (p = py*2 + px), pooled-spatial rows padded S -> Sp (mult of 8).
    K index = (ky*ksize + kx)*C + c.
    """
    N, H, W, C = x.shape
    xp = jnp.pad(x, ((0, 0), (pad, pad), (pad, pad), (0, 0)))
    cols = [xp[:, ky:ky + H, kx:kx + W, :]
            for ky in range(ksize) for kx in range(ksize)]
    K = ksize * ksize * C
    p = jnp.stack(cols, axis=3).reshape(N, H, W, K)        # K = (ky*ks+kx)*C + c
    p = p.reshape(N, H // 2, 2, W // 2, 2, K)
    p = p.transpose(0, 2, 4, 1, 3, 5)                      # (N, py, px, ph, pw, K)
    S = (H // 2) * (W // 2)
    p = p.reshape(N, 4, S, K)
    Sp = (S + 7) // 8 * 8
    if Sp != S:
        p = jnp.pad(p, ((0, 0), (0, 0), (0, Sp - S), (0, 0)))
    return p.reshape(N, 4 * Sp, K)


# ---------------------------------------------------------------------------
# Parameters (deterministic, PyTorch-shaped) + one-time kernel-layout prep
# ---------------------------------------------------------------------------
def init_params(key, num_classes=NUM_CLASSES):
    ks = jax.random.split(key, 8)

    def u(k, shape, fan_in):
        bound = 1.0 / float(np.sqrt(fan_in))
        return jax.random.uniform(k, shape, jnp.float32, -bound, bound)

    return {
        "conv1_w": u(ks[0], (32, 1, 5, 5), 25),
        "conv1_b": u(ks[1], (32,), 25),
        "conv2_w": u(ks[2], (64, 32, 5, 5), 800),
        "conv2_b": u(ks[3], (64,), 800),
        "fc1_w": u(ks[4], (2048, 3136), 3136),
        "fc1_b": u(ks[5], (2048,), 3136),
        "fc2_w": u(ks[6], (num_classes, 2048), 2048),
        "fc2_b": u(ks[7], (num_classes,), 2048),
    }


def prepare_params(params):
    """One-time re-layout of the PyTorch-shaped params into kernel layout (bf16 matmul operands)."""
    def conv_w(w):                               # (O, I, KH, KW) -> (KH*KW*I, O)
        O, I, KH, KW = w.shape
        return w.transpose(2, 3, 1, 0).reshape(KH * KW * I, O).astype(jnp.bfloat16)

    # fc1 input permutation: my features are NHWC-flat g = (h*7+w)*64 + c,
    # torch features are CHW-flat f = c*49 + (h*7+w).
    g = np.arange(3136)
    perm = (g % 64) * 49 + (g // 64)
    fc1_w = params["fc1_w"][:, perm].T                                 # (3136, 2048)
    fc1_w = jnp.pad(fc1_w, ((0, 64), (0, 0))).astype(jnp.bfloat16)     # K-pad 3136 -> 3200

    fc2_w = jnp.pad(params["fc2_w"].T,
                    ((0, 0), (0, CLASS_PAD - NUM_CLASSES))).astype(jnp.bfloat16)
    fc2_b = jnp.pad(params["fc2_b"], (0, CLASS_PAD - NUM_CLASSES)).reshape(1, -1)

    return {
        "c1_w": conv_w(params["conv1_w"]),
        "c1_b": params["conv1_b"].reshape(1, -1).astype(jnp.float32),
        "c2_w": conv_w(params["conv2_w"]),
        "c2_b": params["conv2_b"].reshape(1, -1).astype(jnp.float32),
        "fc1_w": fc1_w,
        "fc1_b": params["fc1_b"].reshape(1, -1).astype(jnp.float32),
        "fc2_w": fc2_w,
        "fc2_b": fc2_b.astype(jnp.float32),
    }


# ---------------------------------------------------------------------------
# Forward pass (Pallas) and pure-JAX reference
# ---------------------------------------------------------------------------
@jax.jit
def net_forward(x, kp):
    N = x.shape[0]
    h = x.reshape(N, 28, 28, 1).astype(jnp.bfloat16)             # NHWC, C=1

    # conv1 -> pool1 -> relu   (S=196, Sp=200)
    p1 = im2col_pool_nhwc(h)                                     # (N, 800, 25) bf16
    h1 = conv_pool_relu(p1, kp["c1_w"], kp["c1_b"])              # (N, 200, 32) bf16
    h1 = h1[:, :196, :].reshape(N, 14, 14, 32)                   # NHWC, no transpose

    # conv2 -> pool2 -> relu   (S=49, Sp=56)
    p2 = im2col_pool_nhwc(h1)                                    # (N, 224, 800) bf16
    h2 = conv_pool_relu(p2, kp["c2_w"], kp["c2_b"])              # (N, 56, 64) bf16

    # fc1 + relu + fc2 (fc1_w already permuted for NHWC flatten order, K padded to 3200)
    feat = h2[:, :49, :].reshape(N, 3136)
    feat = jnp.pad(feat, ((0, 0), (0, 64)))                      # (N, 3200) bf16
    logits = mlp(feat, kp["fc1_w"], kp["fc1_b"], kp["fc2_w"], kp["fc2_b"])  # (N, 128) f32
    return logits[:, :NUM_CLASSES]


def net_reference(x, params):
    """Pure-JAX/XLA f32 reference replicating the PyTorch forward exactly."""
    N = x.shape[0]
    h = x.reshape(N, 1, 28, 28).astype(jnp.float32)

    def conv(h, w, b):
        y = jax.lax.conv_general_dilated(
            h, w, (1, 1), ((2, 2), (2, 2)),
            dimension_numbers=("NCHW", "OIHW", "NCHW"))
        return y + b[None, :, None, None]

    def pool(h):
        return jax.lax.reduce_window(h, -jnp.inf, jax.lax.max,
                                     (1, 1, 2, 2), (1, 1, 2, 2), "VALID")

    h = jax.nn.relu(pool(conv(h, params["conv1_w"], params["conv1_b"])))
    h = jax.nn.relu(pool(conv(h, params["conv2_w"], params["conv2_b"])))
    h = h.reshape(N, -1)
    h = jax.nn.relu(h @ params["fc1_w"].T + params["fc1_b"])
    return h @ params["fc2_w"].T + params["fc2_b"]


if __name__ == "__main__":
    key = jax.random.PRNGKey(0)
    pkey, xkey = jax.random.split(key)
    params = init_params(pkey)
    kparams = prepare_params(params)                 # one-time kernel-layout weights (bf16)
    x = jax.random.normal(xkey, (2, 784), jnp.float32)  # batch of flattened 28x28 images

    out = jax.block_until_ready(net_forward(x, kparams))
    assert out.shape == (2, NUM_CLASSES) and out.dtype == jnp.float32

    ref = net_reference(x, params)
    np.testing.assert_allclose(np.asarray(out), np.asarray(ref), rtol=3e-2, atol=3e-2)
    print("KERNEL_OK")
</pallas_src>

<mosaic_0001>
module attributes {stable_mosaic.version = 11 : i64} {
  func.func @_conv_pool_relu_kernel(%arg0: i32, %arg1: memref<2x800x25xbf16, #tpu.memory_space<vmem>>, %arg2: memref<25x32xbf16, #tpu.memory_space<vmem>>, %arg3: memref<1x32xf32, #tpu.memory_space<vmem>>, %arg4: memref<2x200x32xbf16, #tpu.memory_space<vmem>>) attributes {dimension_semantics = [#tpu.dimension_semantics<parallel>], iteration_bounds = array<i64: 1>, scalar_prefetch = 0 : i64, scratch_operands = 0 : i64, tpu.core_type = #tpu.core_type<tc>, window_params = [{transform_indices = @transform_0, window_bounds = array<i64: 2, 800, 25>}, {pipeline_mode = #tpu.pipeline_mode<synchronous>, transform_indices = @transform_1, window_bounds = array<i64: 25, 32>}, {pipeline_mode = #tpu.pipeline_mode<synchronous>, transform_indices = @transform_2, window_bounds = array<i64: 1, 32>}, {transform_indices = @transform_3, window_bounds = array<i64: 2, 200, 32>}]} {
    %c0 = arith.constant 0 : index
    %c0_0 = arith.constant 0 : index
    %c0_1 = arith.constant 0 : index
    %0 = vector.load %arg1[%c0, %c0_0, %c0_1] : memref<2x800x25xbf16, #tpu.memory_space<vmem>>, vector<2x800x25xbf16>
    %1 = vector.shape_cast %0 : vector<2x800x25xbf16> to vector<1600x25xbf16>
    %c0_2 = arith.constant 0 : index
    %c0_3 = arith.constant 0 : index
    %2 = vector.load %arg2[%c0_2, %c0_3] : memref<25x32xbf16, #tpu.memory_space<vmem>>, vector<25x32xbf16>
    %cst = arith.constant dense<0.000000e+00> : vector<1600x32xf32>
    %3 = tpu.matmul %1, %2, %cst {dimension_numbers = #tpu.dot_dimension_numbers<[1], [0], [0], [1], [0, 0, 1, 1], [], []>} : vector<1600x25xbf16>, vector<25x32xbf16>, vector<1600x32xf32> -> vector<1600x32xf32>
    %4 = vector.shape_cast %3 : vector<1600x32xf32> to vector<2x4x200x32xf32>
    %cst_4 = arith.constant dense<0xFF800000> : vector<2x200x32xf32>
    %5 = vector.multi_reduction <maximumf>, %4, %cst_4 [1] : vector<2x4x200x32xf32> to vector<2x200x32xf32>
    %c0_5 = arith.constant 0 : index
    %c0_6 = arith.constant 0 : index
    %6 = vector.load %arg3[%c0_5, %c0_6] : memref<1x32xf32, #tpu.memory_space<vmem>>, vector<1x32xf32>
    %7 = vector.shape_cast %6 : vector<1x32xf32> to vector<1x1x32xf32>
    %8 = vector.broadcast %7 : vector<1x1x32xf32> to vector<2x200x32xf32>
    %9 = arith.addf %5, %8 : vector<2x200x32xf32>
    %cst_7 = arith.constant 0.000000e+00 : f32
    %10 = vector.broadcast %cst_7 : f32 to vector<2x200x32xf32>
    %11 = arith.maximumf %9, %10 : vector<2x200x32xf32>
    %12 = arith.truncf %11 : vector<2x200x32xf32> to vector<2x200x32xbf16>
    %c0_8 = arith.constant 0 : index
    %c0_9 = arith.constant 0 : index
    %c0_10 = arith.constant 0 : index
    %13 = vector.load %arg4[%c0_8, %c0_9, %c0_10] : memref<2x200x32xbf16, #tpu.memory_space<vmem>>, vector<2x200x32xbf16>
    tpu.vector_store %arg4[%c0_8, %c0_9, %c0_10], %12 {strides = array<i32>} : memref<2x200x32xbf16, #tpu.memory_space<vmem>>, vector<2x200x32xbf16>,
    return
  }
  func.func @transform_0(%arg0: i32) -> (i32, i32, i32) {
    %c0_i32 = arith.constant 0 : i32
    %c0_i32_0 = arith.constant 0 : i32
    %c0_i32_1 = arith.constant 0 : i32
    return %arg0, %c0_i32, %c0_i32_0 : i32, i32, i32
  }
  func.func @transform_1(%arg0: i32) -> (i32, i32) {
    %c0_i32 = arith.constant 0 : i32
    %c0_i32_0 = arith.constant 0 : i32
    %c0_i32_1 = arith.constant 0 : i32
    return %c0_i32, %c0_i32_0 : i32, i32
  }
  func.func @transform_2(%arg0: i32) -> (i32, i32) {
    %c0_i32 = arith.constant 0 : i32
    %c0_i32_0 = arith.constant 0 : i32
    %c0_i32_1 = arith.constant 0 : i32
    return %c0_i32, %c0_i32_0 : i32, i32
  }
  func.func @transform_3(%arg0: i32) -> (i32, i32, i32) {
    %c0_i32 = arith.constant 0 : i32
    %c0_i32_0 = arith.constant 0 : i32
    %c0_i32_1 = arith.constant 0 : i32
    return %arg0, %c0_i32, %c0_i32_0 : i32, i32, i32
  }
}

module attributes {stable_mosaic.version = 11 : i64} {
  func.func @_conv_pool_relu_kernel(%arg0: i32, %arg1: memref<2x224x800xbf16, #tpu.memory_space<vmem>>, %arg2: memref<800x64xbf16, #tpu.memory_space<vmem>>, %arg3: memref<1x64xf32, #tpu.memory_space<vmem>>, %arg4: memref<2x56x64xbf16, #tpu.memory_space<vmem>>) attributes {dimension_semantics = [#tpu.dimension_semantics<parallel>], iteration_bounds = array<i64: 1>, scalar_prefetch = 0 : i64, scratch_operands = 0 : i64, tpu.core_type = #tpu.core_type<tc>, window_params = [{transform_indices = @transform_0, window_bounds = array<i64: 2, 224, 800>}, {pipeline_mode = #tpu.pipeline_mode<synchronous>, transform_indices = @transform_1, window_bounds = array<i64: 800, 64>}, {pipeline_mode = #tpu.pipeline_mode<synchronous>, transform_indices = @transform_2, window_bounds = array<i64: 1, 64>}, {transform_indices = @transform_3, window_bounds = array<i64: 2, 56, 64>}]} {
    %c0 = arith.constant 0 : index
    %c0_0 = arith.constant 0 : index
    %c0_1 = arith.constant 0 : index
    %0 = vector.load %arg1[%c0, %c0_0, %c0_1] : memref<2x224x800xbf16, #tpu.memory_space<vmem>>, vector<2x224x800xbf16>
    %1 = vector.shape_cast %0 : vector<2x224x800xbf16> to vector<448x800xbf16>
    %c0_2 = arith.constant 0 : index
    %c0_3 = arith.constant 0 : index
    %2 = vector.load %arg2[%c0_2, %c0_3] : memref<800x64xbf16, #tpu.memory_space<vmem>>, vector<800x64xbf16>
    %cst = arith.constant dense<0.000000e+00> : vector<448x64xf32>
    %3 = tpu.matmul %1, %2, %cst {dimension_numbers = #tpu.dot_dimension_numbers<[1], [0], [0], [1], [0, 0, 1, 1], [], []>} : vector<448x800xbf16>, vector<800x64xbf16>, vector<448x64xf32> -> vector<448x64xf32>
    %4 = vector.shape_cast %3 : vector<448x64xf32> to vector<2x4x56x64xf32>
    %cst_4 = arith.constant dense<0xFF800000> : vector<2x56x64xf32>
    %5 = vector.multi_reduction <maximumf>, %4, %cst_4 [1] : vector<2x4x56x64xf32> to vector<2x56x64xf32>
    %c0_5 = arith.constant 0 : index
    %c0_6 = arith.constant 0 : index
    %6 = vector.load %arg3[%c0_5, %c0_6] : memref<1x64xf32, #tpu.memory_space<vmem>>, vector<1x64xf32>
    %7 = vector.shape_cast %6 : vector<1x64xf32> to vector<1x1x64xf32>
    %8 = vector.broadcast %7 : vector<1x1x64xf32> to vector<2x56x64xf32>
    %9 = arith.addf %5, %8 : vector<2x56x64xf32>
    %cst_7 = arith.constant 0.000000e+00 : f32
    %10 = vector.broadcast %cst_7 : f32 to vector<2x56x64xf32>
    %11 = arith.maximumf %9, %10 : vector<2x56x64xf32>
    %12 = arith.truncf %11 : vector<2x56x64xf32> to vector<2x56x64xbf16>
    %c0_8 = arith.constant 0 : index
    %c0_9 = arith.constant 0 : index
    %c0_10 = arith.constant 0 : index
    %13 = vector.load %arg4[%c0_8, %c0_9, %c0_10] : memref<2x56x64xbf16, #tpu.memory_space<vmem>>, vector<2x56x64xbf16>
    tpu.vector_store %arg4[%c0_8, %c0_9, %c0_10], %12 {strides = array<i32>} : memref<2x56x64xbf16, #tpu.memory_space<vmem>>, vector<2x56x64xbf16>,
    return
  }
  func.func @transform_0(%arg0: i32) -> (i32, i32, i32) {
    %c0_i32 = arith.constant 0 : i32
    %c0_i32_0 = arith.constant 0 : i32
    %c0_i32_1 = arith.constant 0 : i32
    return %arg0, %c0_i32, %c0_i32_0 : i32, i32, i32
  }
  func.func @transform_1(%arg0: i32) -> (i32, i32) {
    %c0_i32 = arith.constant 0 : i32
    %c0_i32_0 = arith.constant 0 : i32
    %c0_i32_1 = arith.constant 0 : i32
    return %c0_i32, %c0_i32_0 : i32, i32
  }
  func.func @transform_2(%arg0: i32) -> (i32, i32) {
    %c0_i32 = arith.constant 0 : i32
    %c0_i32_0 = arith.constant 0 : i32
    %c0_i32_1 = arith.constant 0 : i32
    return %c0_i32, %c0_i32_0 : i32, i32
  }
  func.func @transform_3(%arg0: i32) -> (i32, i32, i32) {
    %c0_i32 = arith.constant 0 : i32
    %c0_i32_0 = arith.constant 0 : i32
    %c0_i32_1 = arith.constant 0 : i32
    return %arg0, %c0_i32, %c0_i32_0 : i32, i32, i32
  }
}

module attributes {stable_mosaic.version = 11 : i64} {
  func.func @_mlp_kernel(%arg0: i32, %arg1: i32, %arg2: memref<2x640xbf16, #tpu.memory_space<vmem>>, %arg3: memref<640x2048xbf16, #tpu.memory_space<vmem>>, %arg4: memref<1x2048xf32, #tpu.memory_space<vmem>>, %arg5: memref<2048x128xbf16, #tpu.memory_space<vmem>>, %arg6: memref<1x128xf32, #tpu.memory_space<vmem>>, %arg7: memref<2x128xf32, #tpu.memory_space<vmem>>, %arg8: memref<2x2048xf32, #tpu.memory_space<vmem>>) attributes {dimension_semantics = [#tpu.dimension_semantics<parallel>, #tpu.dimension_semantics<arbitrary>], iteration_bounds = array<i64: 1, 5>, scalar_prefetch = 0 : i64, scratch_operands = 1 : i64, tpu.core_type = #tpu.core_type<tc>, window_params = [{transform_indices = @transform_0, window_bounds = array<i64: 2, 640>}, {transform_indices = @transform_1, window_bounds = array<i64: 640, 2048>}, {pipeline_mode = #tpu.pipeline_mode<synchronous>, transform_indices = @transform_2, window_bounds = array<i64: 1, 2048>}, {pipeline_mode = #tpu.pipeline_mode<synchronous>, transform_indices = @transform_3, window_bounds = array<i64: 2048, 128>}, {pipeline_mode = #tpu.pipeline_mode<synchronous>, transform_indices = @transform_4, window_bounds = array<i64: 1, 128>}, {transform_indices = @transform_5, window_bounds = array<i64: 2, 128>}]} {
    %c0_i32 = arith.constant 0 : i32
    %0 = arith.cmpi eq, %arg1, %c0_i32 : i32
    %1 = arith.extui %0 : i1 to i32
    %c0_i32_0 = arith.constant 0 : i32
    %2 = arith.cmpi ne, %1, %c0_i32_0 : i32
    scf.if %2 {
      %cst_9 = arith.constant 0.000000e+00 : f32
      %12 = vector.broadcast %cst_9 : f32 to vector<2x2048xf32>
      %c0_10 = arith.constant 0 : index
      %c0_11 = arith.constant 0 : index
      %13 = vector.load %arg8[%c0_10, %c0_11] : memref<2x2048xf32, #tpu.memory_space<vmem>>, vector<2x2048xf32>
      tpu.vector_store %arg8[%c0_10, %c0_11], %12 {strides = array<i32>} : memref<2x2048xf32, #tpu.memory_space<vmem>>, vector<2x2048xf32>,
    } else {
    }
    %c0 = arith.constant 0 : index
    %c0_1 = arith.constant 0 : index
    %3 = vector.load %arg8[%c0, %c0_1] : memref<2x2048xf32, #tpu.memory_space<vmem>>, vector<2x2048xf32>
    %c0_2 = arith.constant 0 : index
    %c0_3 = arith.constant 0 : index
    %4 = vector.load %arg2[%c0_2, %c0_3] : memref<2x640xbf16, #tpu.memory_space<vmem>>, vector<2x640xbf16>
    %c0_4 = arith.constant 0 : index
    %c0_5 = arith.constant 0 : index
    %5 = vector.load %arg3[%c0_4, %c0_5] : memref<640x2048xbf16, #tpu.memory_space<vmem>>, vector<640x2048xbf16>
    %cst = arith.constant dense<0.000000e+00> : vector<2x2048xf32>
    %6 = tpu.matmul %4, %5, %cst {dimension_numbers = #tpu.dot_dimension_numbers<[1], [0], [0], [1], [0, 0, 1, 1], [], []>} : vector<2x640xbf16>, vector<640x2048xbf16>, vector<2x2048xf32> -> vector<2x2048xf32>
    %7 = arith.addf %3, %6 : vector<2x2048xf32>
    %c0_6 = arith.constant 0 : index
    %c0_7 = arith.constant 0 : index
    %8 = vector.load %arg8[%c0_6, %c0_7] : memref<2x2048xf32, #tpu.memory_space<vmem>>, vector<2x2048xf32>
    tpu.vector_store %arg8[%c0_6, %c0_7], %7 {strides = array<i32>} : memref<2x2048xf32, #tpu.memory_space<vmem>>, vector<2x2048xf32>,
    %c4_i32 = arith.constant 4 : i32
    %9 = arith.cmpi eq, %arg1, %c4_i32 : i32
    %10 = arith.extui %9 : i1 to i32
    %c0_i32_8 = arith.constant 0 : i32
    %11 = arith.cmpi ne, %10, %c0_i32_8 : i32
    scf.if %11 {
      %c0_9 = arith.constant 0 : index
      %c0_10 = arith.constant 0 : index
      %12 = vector.load %arg8[%c0_9, %c0_10] : memref<2x2048xf32, #tpu.memory_space<vmem>>, vector<2x2048xf32>
      %c0_11 = arith.constant 0 : index
      %c0_12 = arith.constant 0 : index
      %13 = vector.load %arg4[%c0_11, %c0_12] : memref<1x2048xf32, #tpu.memory_space<vmem>>, vector<1x2048xf32>
      %14 = vector.broadcast %13 : vector<1x2048xf32> to vector<2x2048xf32>
      %15 = arith.addf %12, %14 : vector<2x2048xf32>
      %cst_13 = arith.constant 0.000000e+00 : f32
      %16 = vector.broadcast %cst_13 : f32 to vector<2x2048xf32>
      %17 = arith.maximumf %15, %16 : vector<2x2048xf32>
      %18 = arith.truncf %17 : vector<2x2048xf32> to vector<2x2048xbf16>
      %c0_14 = arith.constant 0 : index
      %c0_15 = arith.constant 0 : index
      %19 = vector.load %arg5[%c0_14, %c0_15] : memref<2048x128xbf16, #tpu.memory_space<vmem>>, vector<2048x128xbf16>
      %cst_16 = arith.constant dense<0.000000e+00> : vector<2x128xf32>
      %20 = tpu.matmul %18, %19, %cst_16 {dimension_numbers = #tpu.dot_dimension_numbers<[1], [0], [0], [1], [0, 0, 1, 1], [], []>} : vector<2x2048xbf16>, vector<2048x128xbf16>, vector<2x128xf32> -> vector<2x128xf32>
      %c0_17 = arith.constant 0 : index
      %c0_18 = arith.constant 0 : index
      %21 = vector.load %arg6[%c0_17, %c0_18] : memref<1x128xf32, #tpu.memory_space<vmem>>, vector<1x128xf32>
      %22 = vector.broadcast %21 : vector<1x128xf32> to vector<2x128xf32>
      %23 = arith.addf %20, %22 : vector<2x128xf32>
      %c0_19 = arith.constant 0 : index
      %c0_20 = arith.constant 0 : index
      %24 = vector.load %arg7[%c0_19, %c0_20] : memref<2x128xf32, #tpu.memory_space<vmem>>, vector<2x128xf32>
      tpu.vector_store %arg7[%c0_19, %c0_20], %23 {strides = array<i32>} : memref<2x128xf32, #tpu.memory_space<vmem>>, vector<2x128xf32>,
    } else {
    }
    return
  }
  func.func @transform_0(%arg0: i32, %arg1: i32) -> (i32, i32) {
    %c0_i32 = arith.constant 0 : i32
    return %arg0, %arg1 : i32, i32
  }
  func.func @transform_1(%arg0: i32, %arg1: i32) -> (i32, i32) {
    %c0_i32 = arith.constant 0 : i32
    %c0_i32_0 = arith.constant 0 : i32
    return %arg1, %c0_i32 : i32, i32
  }
  func.func @transform_2(%arg0: i32, %arg1: i32) -> (i32, i32) {
    %c0_i32 = arith.constant 0 : i32
    %c0_i32_0 = arith.constant 0 : i32
    %c0_i32_1 = arith.constant 0 : i32
    return %c0_i32, %c0_i32_0 : i32, i32
  }
  func.func @transform_3(%arg0: i32, %arg1: i32) -> (i32, i32) {
    %c0_i32 = arith.constant 0 : i32
    %c0_i32_0 = arith.constant 0 : i32
    %c0_i32_1 = arith.constant 0 : i32
    return %c0_i32, %c0_i32_0 : i32, i32
  }
  func.func @transform_4(%arg0: i32, %arg1: i32) -> (i32, i32) {
    %c0_i32 = arith.constant 0 : i32
    %c0_i32_0 = arith.constant 0 : i32
    %c0_i32_1 = arith.constant 0 : i32
    return %c0_i32, %c0_i32_0 : i32, i32
  }
  func.func @transform_5(%arg0: i32, %arg1: i32) -> (i32, i32) {
    %c0_i32 = arith.constant 0 : i32
    %c0_i32_0 = arith.constant 0 : i32
    return %arg0, %c0_i32 : i32, i32
  }
}

</mosaic_0001>

<llo_original>
// kernel: net_forward.3
$region0: #{net_forward.3}
  #allocation0 [shape = 'u32[]', space=smem, size = 0x4, offset = 0x4, fixed_abs, tag = 'smem constant byte address 0x4 - core index']
  #allocation1 [shape = 'u32[144,128]{1,0:T(1,128)}', space=vmem, size = 0x12000, scoped, tag = 'internal scratch']
  %s0 = inlined_call_operand.vmem [shape: bf16[2,800,25], index: 0, kind: input, shape index: {}]
  %s1 = inlined_call_operand.vmem [shape: bf16[25,32], index: 1, kind: input, shape index: {}]
  %s2 = inlined_call_operand.vmem [shape: f32[1,32], index: 2, kind: input, shape index: {}]
  %s3 = inlined_call_operand.vmem [shape: bf16[2,200,32], index: 3, kind: output, shape index: {}]
  %s4 = sld [smem:[#allocation0]]
  $region22: #{net_forward.3} parent=0
    _
  %s6 = ssub.s32 1, %s4
  %s7 = scalar_select 0, %s6, %s4
  // Predicated region
  $region2: #{net_forward.3} parent=0 // pred_check
    _
  $region3: #{net_forward.3} parent=0 // pred_check_branch
    %9 = sbr.rel (0) target = $region5
  $region4: #{net_forward.3} parent=0 // pred_region
    _
  $region5: #{net_forward.3} parent=0 // pred_fallthru
    _
  // Predicated region
  $region6: #{net_forward.3} parent=0 // pred_check
    _
  $region7: #{net_forward.3} parent=0 // pred_check_branch
    %11 = sbr.rel (0) target = $region9
  $region8: #{net_forward.3} parent=0 // pred_region
    _
  $region9: #{net_forward.3} parent=0 // pred_fallthru
    _
  // Predicated region
  $region10: #{net_forward.3} parent=0 // pred_check
    _
  $region11: #{net_forward.3} parent=0 // pred_check_branch
    %13 = sbr.rel (0) target = $region13
  $region12: #{net_forward.3} parent=0 // pred_region
    _
  $region13: #{net_forward.3} parent=0 // pred_fallthru
    _
  %v15 = vld [vmem:[%s0] sm:$0xf]
  %v16 = vld [vmem:[%s0 + $0x4] sm:$0xf]
  %v17 = vld [vmem:[%s0 + $0x8] sm:$0xf]
  %v18 = vld [vmem:[%s0 + $0xc] sm:$0xf]
  %v19 = vld [vmem:[%s0 + $0x10] sm:$0xf]
  %v20 = vld [vmem:[%s0 + $0x14] sm:$0xf]
  %v21 = vld [vmem:[%s0 + $0x18] sm:$0xf]
  %v22 = vld [vmem:[%s0 + $0x1c] sm:$0xf]
  %v23 = vld [vmem:[%s0 + $0x20] sm:$0xf]
  %v24 = vld [vmem:[%s0 + $0x24] sm:$0xf]
  %v25 = vld [vmem:[%s0 + $0x28] sm:$0xf]
  %v26 = vld [vmem:[%s0 + $0x2c] sm:$0xf]
  %v27 = vld [vmem:[%s0 + $0x30] sm:$0xf]
  %v28 = vld [vmem:[%s0 + $0x34] sm:$0xf]
  %v29 = vld [vmem:[%s0 + $0x38] sm:$0xf]
  %v30 = vld [vmem:[%s0 + $0x3c] sm:$0xf]
  %v31 = vld [vmem:[%s0 + $0x40] sm:$0xf]
  %v32 = vld [vmem:[%s0 + $0x44] sm:$0xf]
  %v33 = vld [vmem:[%s0 + $0x48] sm:$0xf]
  %v34 = vld [vmem:[%s0 + $0x4c] sm:$0xf]
  %v35 = vld [vmem:[%s0 + $0x50] sm:$0xf]
  %v36 = vld [vmem:[%s0 + $0x54] sm:$0xf]
  %v37 = vld [vmem:[%s0 + $0x58] sm:$0xf]
  %v38 = vld [vmem:[%s0 + $0x5c] sm:$0xf]
  %v39 = vld [vmem:[%s0 + $0x60] sm:$0xf]
  %v40 = vld [vmem:[%s0 + $0x64] sm:$0xf]
  %v41 = vld [vmem:[%s0 + $0x68] sm:$0xf]
  %v42 = vld [vmem:[%s0 + $0x6c] sm:$0xf]
  %v43 = vld [vmem:[%s0 + $0x70] sm:$0xf]
  %v44 = vld [vmem:[%s0 + $0x74] sm:$0xf]
  %v45 = vld [vmem:[%s0 + $0x78] sm:$0xf]
  %v46 = vld [vmem:[%s0 + $0x7c] sm:$0xf]
  %v47 = vld [vmem:[%s0 + $0x80] sm:$0xf]
  %v48 = vld [vmem:[%s0 + $0x84] sm:$0xf]
  %v49 = vld [vmem:[%s0 + $0x88] sm:$0xf]
  %v50 = vld [vmem:[%s0 + $0x8c] sm:$0xf]
  %v51 = vld [vmem:[%s0 + $0x90] sm:$0xf]
  %v52 = vld [vmem:[%s0 + $0x94] sm:$0xf]
  %v53 = vld [vmem:[%s0 + $0x98] sm:$0xf]
  %v54 = vld [vmem:[%s0 + $0x9c] sm:$0xf]
  %v55 = vld [vmem:[%s0 + $0xa0] sm:$0xf]
  %v56 = vld [vmem:[%s0 + $0xa4] sm:$0xf]
  %v57 = vld [vmem:[%s0 + $0xa8] sm:$0xf]
  %v58 = vld [vmem:[%s0 + $0xac] sm:$0xf]
  %v59 = vld [vmem:[%s0 + $0xb0] sm:$0xf]
  %v60 = vld [vmem:[%s0 + $0xb4] sm:$0xf]
  %v61 = vld [vmem:[%s0 + $0xb8] sm:$0xf]
  %v62 = vld [vmem:[%s0 + $0xbc] sm:$0xf]
  %v63 = vld [vmem:[%s0 + $0xc0] sm:$0xf]
  %v64 = vld [vmem:[%s0 + $0xc4] sm:$0xf]
  %v65 = vld [vmem:[%s0 + $0xc8] sm:$0xf]
  %v66 = vld [vmem:[%s0 + $0xcc] sm:$0xf]
  %v67 = vld [vmem:[%s0 + $0xd0] sm:$0xf]
  %v68 = vld [vmem:[%s0 + $0xd4] sm:$0xf]
  %v69 = vld [vmem:[%s0 + $0xd8] sm:$0xf]
  %v70 = vld [vmem:[%s0 + $0xdc] sm:$0xf]
  %v71 = vld [vmem:[%s0 + $0xe0] sm:$0xf]
  %v72 = vld [vmem:[%s0 + $0xe4] sm:$0xf]
  %v73 = vld [vmem:[%s0 + $0xe8] sm:$0xf]
  %v74 = vld [vmem:[%s0 + $0xec] sm:$0xf]
  %v75 = vld [vmem:[%s0 + $0xf0] sm:$0xf]
  %v76 = vld [vmem:[%s0 + $0xf4] sm:$0xf]
  %v77 = vld [vmem:[%s0 + $0xf8] sm:$0xf]
  %v78 = vld [vmem:[%s0 + $0xfc] sm:$0xf]
  %v79 = vld [vmem:[%s0 + $0x100] sm:$0xf]
  %v80 = vld [vmem:[%s0 + $0x104] sm:$0xf]
  %v81 = vld [vmem:[%s0 + $0x108] sm:$0xf]
  %v82 = vld [vmem:[%s0 + $0x10c] sm:$0xf]
  %v83 = vld [vmem:[%s0 + $0x110] sm:$0xf]
  %v84 = vld [vmem:[%s0 + $0x114] sm:$0xf]
  %v85 = vld [vmem:[%s0 + $0x118] sm:$0xf]
  %v86 = vld [vmem:[%s0 + $0x11c] sm:$0xf]
  %v87 = vld [vmem:[%s0 + $0x120] sm:$0xf]
  %v88 = vld [vmem:[%s0 + $0x124] sm:$0xf]
  %v89 = vld [vmem:[%s0 + $0x128] sm:$0xf]
  %v90 = vld [vmem:[%s0 + $0x12c] sm:$0xf]
  %v91 = vld [vmem:[%s0 + $0x130] sm:$0xf]
  %v92 = vld [vmem:[%s0 + $0x134] sm:$0xf]
  %v93 = vld [vmem:[%s0 + $0x138] sm:$0xf]
  %v94 = vld [vmem:[%s0 + $0x13c] sm:$0xf]
  %v95 = vld [vmem:[%s0 + $0x140] sm:$0xf]
  %v96 = vld [vmem:[%s0 + $0x144] sm:$0xf]
  %v97 = vld [vmem:[%s0 + $0x148] sm:$0xf]
  %v98 = vld [vmem:[%s0 + $0x14c] sm:$0xf]
  %v99 = vld [vmem:[%s0 + $0x150] sm:$0xf]
  %v100 = vld [vmem:[%s0 + $0x154] sm:$0xf]
  %v101 = vld [vmem:[%s0 + $0x158] sm:$0xf]
  %v102 = vld [vmem:[%s0 + $0x15c] sm:$0xf]
  %v103 = vld [vmem:[%s0 + $0x160] sm:$0xf]
  %v104 = vld [vmem:[%s0 + $0x164] sm:$0xf]
  %v105 = vld [vmem:[%s0 + $0x168] sm:$0xf]
  %v106 = vld [vmem:[%s0 + $0x16c] sm:$0xf]
  %v107 = vld [vmem:[%s0 + $0x170] sm:$0xf]
  %v108 = vld [vmem:[%s0 + $0x174] sm:$0xf]
  %v109 = vld [vmem:[%s0 + $0x178] sm:$0xf]
  %v110 = vld [vmem:[%s0 + $0x17c] sm:$0xf]
  %v111 = vld [vmem:[%s0 + $0x180] sm:$0xf]
  %v112 = vld [vmem:[%s0 + $0x184] sm:$0xf]
  %v113 = vld [vmem:[%s0 + $0x188] sm:$0xf]
  %v114 = vld [vmem:[%s0 + $0x18c] sm:$0xf]
  %v115 = vld [vmem:[%s0 + $0x190] sm:$0xf]
  %v116 = vld [vmem:[%s0 + $0x194] sm:$0xf]
  %v117 = vld [vmem:[%s0 + $0x198] sm:$0xf]
  %v118 = vld [vmem:[%s0 + $0x19c] sm:$0xf]
  %v119 = vld [vmem:[%s0 + $0x1a0] sm:$0xf]
  %v120 = vld [vmem:[%s0 + $0x1a4] sm:$0xf]
  %v121 = vld [vmem:[%s0 + $0x1a8] sm:$0xf]
  %v122 = vld [vmem:[%s0 + $0x1ac] sm:$0xf]
  %v123 = vld [vmem:[%s0 + $0x1b0] sm:$0xf]
  %v124 = vld [vmem:[%s0 + $0x1b4] sm:$0xf]
  %v125 = vld [vmem:[%s0 + $0x1b8] sm:$0xf]
  %v126 = vld [vmem:[%s0 + $0x1bc] sm:$0xf]
  %v127 = vld [vmem:[%s0 + $0x1c0] sm:$0xf]
  %v128 = vld [vmem:[%s0 + $0x1c4] sm:$0xf]
  %v129 = vld [vmem:[%s0 + $0x1c8] sm:$0xf]
  %v130 = vld [vmem:[%s0 + $0x1cc] sm:$0xf]
  %v131 = vld [vmem:[%s0 + $0x1d0] sm:$0xf]
  %v132 = vld [vmem:[%s0 + $0x1d4] sm:$0xf]
  %v133 = vld [vmem:[%s0 + $0x1d8] sm:$0xf]
  %v134 = vld [vmem:[%s0 + $0x1dc] sm:$0xf]
  %v135 = vld [vmem:[%s0 + $0x1e0] sm:$0xf]
  %v136 = vld [vmem:[%s0 + $0x1e4] sm:$0xf]
  %v137 = vld [vmem:[%s0 + $0x1e8] sm:$0xf]
  %v138 = vld [vmem:[%s0 + $0x1ec] sm:$0xf]
  %v139 = vld [vmem:[%s0 + $0x1f0] sm:$0xf]
  %v140 = vld [vmem:[%s0 + $0x1f4] sm:$0xf]
  %v141 = vld [vmem:[%s0 + $0x1f8] sm:$0xf]
  %v142 = vld [vmem:[%s0 + $0x1fc] sm:$0xf]
  %v143 = vld [vmem:[%s0 + $0x200] sm:$0xf]
  %v144 = vld [vmem:[%s0 + $0x204] sm:$0xf]
  %v145 = vld [vmem:[%s0 + $0x208] sm:$0xf]
  %v146 = vld [vmem:[%s0 + $0x20c] sm:$0xf]
  %v147 = vld [vmem:[%s0 + $0x210] sm:$0xf]
  %v148 = vld [vmem:[%s0 + $0x214] sm:$0xf]
  %v149 = vld [vmem:[%s0 + $0x218] sm:$0xf]
  %v150 = vld [vmem:[%s0 + $0x21c] sm:$0xf]
  %v151 = vld [vmem:[%s0 + $0x220] sm:$0xf]
  %v152 = vld [vmem:[%s0 + $0x224] sm:$0xf]
  %v153 = vld [vmem:[%s0 + $0x228] sm:$0xf]
  %v154 = vld [vmem:[%s0 + $0x22c] sm:$0xf]
  %v155 = vld [vmem:[%s0 + $0x230] sm:$0xf]
  %v156 = vld [vmem:[%s0 + $0x234] sm:$0xf]
  %v157 = vld [vmem:[%s0 + $0x238] sm:$0xf]
  %v158 = vld [vmem:[%s0 + $0x23c] sm:$0xf]
  %v159 = vld [vmem:[%s0 + $0x240] sm:$0xf]
  %v160 = vld [vmem:[%s0 + $0x244] sm:$0xf]
  %v161 = vld [vmem:[%s0 + $0x248] sm:$0xf]
  %v162 = vld [vmem:[%s0 + $0x24c] sm:$0xf]
  %v163 = vld [vmem:[%s0 + $0x250] sm:$0xf]
  %v164 = vld [vmem:[%s0 + $0x254] sm:$0xf]
  %v165 = vld [vmem:[%s0 + $0x258] sm:$0xf]
  %v166 = vld [vmem:[%s0 + $0x25c] sm:$0xf]
  %v167 = vld [vmem:[%s0 + $0x260] sm:$0xf]
  %v168 = vld [vmem:[%s0 + $0x264] sm:$0xf]
  %v169 = vld [vmem:[%s0 + $0x268] sm:$0xf]
  %v170 = vld [vmem:[%s0 + $0x26c] sm:$0xf]
  %v171 = vld [vmem:[%s0 + $0x270] sm:$0xf]
  %v172 = vld [vmem:[%s0 + $0x274] sm:$0xf]
  %v173 = vld [vmem:[%s0 + $0x278] sm:$0xf]
  %v174 = vld [vmem:[%s0 + $0x27c] sm:$0xf]
  %v175 = vld [vmem:[%s0 + $0x280] sm:$0xf]
  %v176 = vld [vmem:[%s0 + $0x284] sm:$0xf]
  %v177 = vld [vmem:[%s0 + $0x288] sm:$0xf]
  %v178 = vld [vmem:[%s0 + $0x28c] sm:$0xf]
  %v179 = vld [vmem:[%s0 + $0x290] sm:$0xf]
  %v180 = vld [vmem:[%s0 + $0x294] sm:$0xf]
  %v181 = vld [vmem:[%s0 + $0x298] sm:$0xf]
  %v182 = vld [vmem:[%s0 + $0x29c] sm:$0xf]
  %v183 = vld [vmem:[%s0 + $0x2a0] sm:$0xf]
  %v184 = vld [vmem:[%s0 + $0x2a4] sm:$0xf]
  %v185 = vld [vmem:[%s0 + $0x2a8] sm:$0xf]
  %v186 = vld [vmem:[%s0 + $0x2ac] sm:$0xf]
  %v187 = vld [vmem:[%s0 + $0x2b0] sm:$0xf]
  %v188 = vld [vmem:[%s0 + $0x2b4] sm:$0xf]
  %v189 = vld [vmem:[%s0 + $0x2b8] sm:$0xf]
  %v190 = vld [vmem:[%s0 + $0x2bc] sm:$0xf]
  %v191 = vld [vmem:[%s0 + $0x2c0] sm:$0xf]
  %v192 = vld [vmem:[%s0 + $0x2c4] sm:$0xf]
  %v193 = vld [vmem:[%s0 + $0x2c8] sm:$0xf]
  %v194 = vld [vmem:[%s0 + $0x2cc] sm:$0xf]
  %v195 = vld [vmem:[%s0 + $0x2d0] sm:$0xf]
  %v196 = vld [vmem:[%s0 + $0x2d4] sm:$0xf]
  %v197 = vld [vmem:[%s0 + $0x2d8] sm:$0xf]
  %v198 = vld [vmem:[%s0 + $0x2dc] sm:$0xf]
  %v199 = vld [vmem:[%s0 + $0x2e0] sm:$0xf]
  %v200 = vld [vmem:[%s0 + $0x2e4] sm:$0xf]
  %v201 = vld [vmem:[%s0 + $0x2e8] sm:$0xf]
  %v202 = vld [vmem:[%s0 + $0x2ec] sm:$0xf]
  %v203 = vld [vmem:[%s0 + $0x2f0] sm:$0xf]
  %v204 = vld [vmem:[%s0 + $0x2f4] sm:$0xf]
  %v205 = vld [vmem:[%s0 + $0x2f8] sm:$0xf]
  %v206 = vld [vmem:[%s0 + $0x2fc] sm:$0xf]
  %v207 = vld [vmem:[%s0 + $0x300] sm:$0xf]
  %v208 = vld [vmem:[%s0 + $0x304] sm:$0xf]
  %v209 = vld [vmem:[%s0 + $0x308] sm:$0xf]
  %v210 = vld [vmem:[%s0 + $0x30c] sm:$0xf]
  %v211 = vld [vmem:[%s0 + $0x310] sm:$0xf]
  %v212 = vld [vmem:[%s0 + $0x314] sm:$0xf]
  %v213 = vld [vmem:[%s0 + $0x318] sm:$0xf]
  %v214 = vld [vmem:[%s0 + $0x31c] sm:$0xf]
  %v215 = vld [vmem:[%s1] sm:$0xf]
  %v216 = vld [vmem:[%s1 + $0x4] sm:$0xf]
  %v217 = vld [vmem:[%s1 + $0x8] sm:$0xf]
  %v218 = vld [vmem:[%s1 + $0xc] sm:$0x1]
  %v419 = vunpack.c.l.b16 %v15
  %v420 = vunpack.c.l.b16 %v16
  %v421 = vunpack.c.l.b16 %v17
  %v422 = vunpack.c.l.b16 %v18
  %v423 = vunpack.c.l.b16 %v19
  %v424 = vunpack.c.l.b16 %v20
  %v425 = vunpack.c.l.b16 %v21
  %v426 = vunpack.c.l.b16 %v22
  %v427 = vunpack.c.l.b16 %v23
  %v428 = vunpack.c.l.b16 %v24
  %v429 = vunpack.c.l.b16 %v25
  %v430 = vunpack.c.l.b16 %v26
  %v431 = vunpack.c.l.b16 %v27
  %v432 = vunpack.c.l.b16 %v28
  %v433 = vunpack.c.l.b16 %v29
  %v434 = vunpack.c.l.b16 %v30
  %v435 = vunpack.c.l.b16 %v31
  %v436 = vunpack.c.l.b16 %v32
  %v437 = vunpack.c.l.b16 %v33
  %v438 = vunpack.c.l.b16 %v34
  %v439 = vunpack.c.l.b16 %v35
  %v440 = vunpack.c.l.b16 %v36
  %v441 = vunpack.c.l.b16 %v37
  %v442 = vunpack.c.l.b16 %v38
  %v443 = vunpack.c.l.b16 %v39
  %v444 = vunpack.c.l.b16 %v40
  %v445 = vunpack.c.l.b16 %v41
  %v446 = vunpack.c.l.b16 %v42
  %v447 = vunpack.c.l.b16 %v43
  %v448 = vunpack.c.l.b16 %v44
  %v449 = vunpack.c.l.b16 %v45
  %v450 = vunpack.c.l.b16 %v46
  %v451 = vunpack.c.l.b16 %v47
  %v452 = vunpack.c.l.b16 %v48
  %v453 = vunpack.c.l.b16 %v49
  %v454 = vunpack.c.l.b16 %v50
  %v455 = vunpack.c.l.b16 %v51
  %v456 = vunpack.c.l.b16 %v52
  %v457 = vunpack.c.l.b16 %v53
  %v458 = vunpack.c.l.b16 %v54
  %v459 = vunpack.c.l.b16 %v55
  %v460 = vunpack.c.l.b16 %v56
  %v461 = vunpack.c.l.b16 %v57
  %v462 = vunpack.c.l.b16 %v58
  %v463 = vunpack.c.l.b16 %v59
  %v464 = vunpack.c.l.b16 %v60
  %v465 = vunpack.c.l.b16 %v61
  %v466 = vunpack.c.l.b16 %v62
  %v467 = vunpack.c.l.b16 %v63
  %v468 = vunpack.c.l.b16 %v64
  %v469 = vunpack.c.l.b16 %v65
  %v470 = vunpack.c.l.b16 %v66
  %v471 = vunpack.c.l.b16 %v67
  %v472 = vunpack.c.l.b16 %v68
  %v473 = vunpack.c.l.b16 %v69
  %v474 = vunpack.c.l.b16 %v70
  %v475 = vunpack.c.l.b16 %v71
  %v476 = vunpack.c.l.b16 %v72
  %v477 = vunpack.c.l.b16 %v73
  %v478 = vunpack.c.l.b16 %v74
  %v479 = vunpack.c.l.b16 %v75
  %v480 = vunpack.c.l.b16 %v76
  %v481 = vunpack.c.l.b16 %v77
  %v482 = vunpack.c.l.b16 %v78
  %v483 = vunpack.c.l.b16 %v79
  %v484 = vunpack.c.l.b16 %v80
  %v485 = vunpack.c.l.b16 %v81
  %v486 = vunpack.c.l.b16 %v82
  %v487 = vunpack.c.l.b16 %v83
  %v488 = vunpack.c.l.b16 %v84
  %v489 = vunpack.c.l.b16 %v85
  %v490 = vunpack.c.l.b16 %v86
  %v491 = vunpack.c.l.b16 %v87
  %v492 = vunpack.c.l.b16 %v88
  %v493 = vunpack.c.l.b16 %v89
  %v494 = vunpack.c.l.b16 %v90
  %v495 = vunpack.c.l.b16 %v91
  %v496 = vunpack.c.l.b16 %v92
  %v497 = vunpack.c.l.b16 %v93
  %v498 = vunpack.c.l.b16 %v94
  %v499 = vunpack.c.l.b16 %v95
  %v500 = vunpack.c.l.b16 %v96
  %v501 = vunpack.c.l.b16 %v97
  %v502 = vunpack.c.l.b16 %v98
  %v503 = vunpack.c.l.b16 %v99
  %v504 = vunpack.c.l.b16 %v100
  %v505 = vunpack.c.l.b16 %v101
  %v506 = vunpack.c.l.b16 %v102
  %v507 = vunpack.c.l.b16 %v103
  %v508 = vunpack.c.l.b16 %v104
  %v509 = vunpack.c.l.b16 %v105
  %v510 = vunpack.c.l.b16 %v106
  %v511 = vunpack.c.l.b16 %v107
  %v512 = vunpack.c.l.b16 %v108
  %v513 = vunpack.c.l.b16 %v109
  %v514 = vunpack.c.l.b16 %v110
  %v515 = vunpack.c.l.b16 %v111
  %v516 = vunpack.c.l.b16 %v112
  %v517 = vunpack.c.l.b16 %v113
  %v518 = vunpack.c.l.b16 %v114
  %v519 = vunpack.c.l.b16 %v115
  %v520 = vunpack.c.l.b16 %v116
  %v521 = vunpack.c.l.b16 %v117
  %v522 = vunpack.c.l.b16 %v118
  %v523 = vunpack.c.l.b16 %v119
  %v524 = vunpack.c.l.b16 %v120
  %v525 = vunpack.c.l.b16 %v121
  %v526 = vunpack.c.l.b16 %v122
  %v527 = vunpack.c.l.b16 %v123
  %v528 = vunpack.c.l.b16 %v124
  %v529 = vunpack.c.l.b16 %v125
  %v530 = vunpack.c.l.b16 %v126
  %v531 = vunpack.c.l.b16 %v127
  %v532 = vunpack.c.l.b16 %v128
  %v533 = vunpack.c.l.b16 %v129
  %v534 = vunpack.c.l.b16 %v130
  %v535 = vunpack.c.l.b16 %v131
  %v536 = vunpack.c.l.b16 %v132
  %v537 = vunpack.c.l.b16 %v133
  %v538 = vunpack.c.l.b16 %v134
  %v539 = vunpack.c.l.b16 %v135
  %v540 = vunpack.c.l.b16 %v136
  %v541 = vunpack.c.l.b16 %v137
  %v542 = vunpack.c.l.b16 %v138
  %v543 = vunpack.c.l.b16 %v139
  %v544 = vunpack.c.l.b16 %v140
  %v545 = vunpack.c.l.b16 %v141
  %v546 = vunpack.c.l.b16 %v142
  %v547 = vunpack.c.l.b16 %v143
  %v548 = vunpack.c.l.b16 %v144
  %v549 = vunpack.c.l.b16 %v145
  %v550 = vunpack.c.l.b16 %v146
  %v551 = vunpack.c.l.b16 %v147
  %v552 = vunpack.c.l.b16 %v148
  %v553 = vunpack.c.l.b16 %v149
  %v554 = vunpack.c.l.b16 %v150
  %v555 = vunpack.c.l.b16 %v151
  %v556 = vunpack.c.l.b16 %v152
  %v557 = vunpack.c.l.b16 %v153
  %v558 = vunpack.c.l.b16 %v154
  %v559 = vunpack.c.l.b16 %v155
  %v560 = vunpack.c.l.b16 %v156
  %v561 = vunpack.c.l.b16 %v157
  %v562 = vunpack.c.l.b16 %v158
  %v563 = vunpack.c.l.b16 %v159
  %v564 = vunpack.c.l.b16 %v160
  %v565 = vunpack.c.l.b16 %v161
  %v566 = vunpack.c.l.b16 %v162
  %v567 = vunpack.c.l.b16 %v163
  %v568 = vunpack.c.l.b16 %v164
  %v569 = vunpack.c.l.b16 %v165
  %v570 = vunpack.c.l.b16 %v166
  %v571 = vunpack.c.l.b16 %v167
  %v572 = vunpack.c.l.b16 %v168
  %v573 = vunpack.c.l.b16 %v169
  %v574 = vunpack.c.l.b16 %v170
  %v575 = vunpack.c.l.b16 %v171
  %v576 = vunpack.c.l.b16 %v172
  %v577 = vunpack.c.l.b16 %v173
  %v578 = vunpack.c.l.b16 %v174
  %v579 = vunpack.c.l.b16 %v175
  %v580 = vunpack.c.l.b16 %v176
  %v581 = vunpack.c.l.b16 %v177
  %v582 = vunpack.c.l.b16 %v178
  %v583 = vunpack.c.l.b16 %v179
  %v584 = vunpack.c.l.b16 %v180
  %v585 = vunpack.c.l.b16 %v181
  %v586 = vunpack.c.l.b16 %v182
  %v587 = vunpack.c.l.b16 %v183
  %v588 = vunpack.c.l.b16 %v184
  %v589 = vunpack.c.l.b16 %v185
  %v590 = vunpack.c.l.b16 %v186
  %v591 = vunpack.c.l.b16 %v187
  %v592 = vunpack.c.l.b16 %v188
  %v593 = vunpack.c.l.b16 %v189
  %v594 = vunpack.c.l.b16 %v190
  %v595 = vunpack.c.l.b16 %v191
  %v596 = vunpack.c.l.b16 %v192
  %v597 = vunpack.c.l.b16 %v193
  %v598 = vunpack.c.l.b16 %v194
  %v599 = vunpack.c.l.b16 %v195
  %v600 = vunpack.c.l.b16 %v196
  %v601 = vunpack.c.l.b16 %v197
  %v602 = vunpack.c.l.b16 %v198
  %v603 = vunpack.c.l.b16 %v199
  %v604 = vunpack.c.l.b16 %v200
  %v605 = vunpack.c.l.b16 %v201
  %v606 = vunpack.c.l.b16 %v202
  %v607 = vunpack.c.l.b16 %v203
  %v608 = vunpack.c.l.b16 %v204
  %v609 = vunpack.c.l.b16 %v205
  %v610 = vunpack.c.l.b16 %v206
  %v611 = vunpack.c.l.b16 %v207
  %v612 = vunpack.c.l.b16 %v208
  %v613 = vunpack.c.l.b16 %v209
  %v614 = vunpack.c.l.b16 %v210
  %v615 = vunpack.c.l.b16 %v211
  %v616 = vunpack.c.l.b16 %v212
  %v617 = vunpack.c.l.b16 %v213
  %v618 = vunpack.c.l.b16 %v214
  %v619 = vpack.c.b16 %v420, %v419
  %v620 = vpack.c.b16 %v422, %v421
  %v621 = vpack.c.b16 %v424, %v423
  %v622 = vpack.c.b16 %v426, %v425
  %v623 = vpack.c.b16 %v428, %v427
  %v624 = vpack.c.b16 %v430, %v429
  %v625 = vpack.c.b16 %v432, %v431
  %v626 = vpack.c.b16 %v434, %v433
  %v627 = vpack.c.b16 %v436, %v435
  %v628 = vpack.c.b16 %v438, %v437
  %v629 = vpack.c.b16 %v440, %v439
  %v630 = vpack.c.b16 %v442, %v441
  %v631 = vpack.c.b16 %v444, %v443
  %v632 = vpack.c.b16 %v446, %v445
  %v633 = vpack.c.b16 %v448, %v447
  %v634 = vpack.c.b16 %v450, %v449
  %v635 = vpack.c.b16 %v452, %v451
  %v636 = vpack.c.b16 %v454, %v453
  %v637 = vpack.c.b16 %v456, %v455
  %v638 = vpack.c.b16 %v458, %v457
  %v639 = vpack.c.b16 %v460, %v459
  %v640 = vpack.c.b16 %v462, %v461
  %v641 = vpack.c.b16 %v464, %v463
  %v642 = vpack.c.b16 %v466, %v465
  %v643 = vpack.c.b16 %v468, %v467
  %v644 = vpack.c.b16 %v470, %v469
  %v645 = vpack.c.b16 %v472, %v471
  %v646 = vpack.c.b16 %v474, %v473
  %v647 = vpack.c.b16 %v476, %v475
  %v648 = vpack.c.b16 %v478, %v477
  %v649 = vpack.c.b16 %v480, %v479
  %v650 = vpack.c.b16 %v482, %v481
  %v651 = vpack.c.b16 %v484, %v483
  %v652 = vpack.c.b16 %v486, %v485
  %v653 = vpack.c.b16 %v488, %v487
  %v654 = vpack.c.b16 %v490, %v489
  %v655 = vpack.c.b16 %v492, %v491
  %v656 = vpack.c.b16 %v494, %v493
  %v657 = vpack.c.b16 %v496, %v495
  %v658 = vpack.c.b16 %v498, %v497
  %v659 = vpack.c.b16 %v500, %v499
  %v660 = vpack.c.b16 %v502, %v501
  %v661 = vpack.c.b16 %v504, %v503
  %v662 = vpack.c.b16 %v506, %v505
  %v663 = vpack.c.b16 %v508, %v507
  %v664 = vpack.c.b16 %v510, %v509
  %v665 = vpack.c.b16 %v512, %v511
  %v666 = vpack.c.b16 %v514, %v513
  %v667 = vpack.c.b16 %v516, %v515
  %v668 = vpack.c.b16 %v518, %v517
  %v669 = vpack.c.b16 %v520, %v519
  %v670 = vpack.c.b16 %v522, %v521
  %v671 = vpack.c.b16 %v524, %v523
  %v672 = vpack.c.b16 %v526, %v525
  %v673 = vpack.c.b16 %v528, %v527
  %v674 = vpack.c.b16 %v530, %v529
  %v675 = vpack.c.b16 %v532, %v531
  %v676 = vpack.c.b16 %v534, %v533
  %v677 = vpack.c.b16 %v536, %v535
  %v678 = vpack.c.b16 %v538, %v537
  %v679 = vpack.c.b16 %v540, %v539
  %v680 = vpack.c.b16 %v542, %v541
  %v681 = vpack.c.b16 %v544, %v543
  %v682 = vpack.c.b16 %v546, %v545
  %v683 = vpack.c.b16 %v548, %v547
  %v684 = vpack.c.b16 %v550, %v549
  %v685 = vpack.c.b16 %v552, %v551
  %v686 = vpack.c.b16 %v554, %v553
  %v687 = vpack.c.b16 %v556, %v555
  %v688 = vpack.c.b16 %v558, %v557
  %v689 = vpack.c.b16 %v560, %v559
  %v690 = vpack.c.b16 %v562, %v561
  %v691 = vpack.c.b16 %v564, %v563
  %v692 = vpack.c.b16 %v566, %v565
  %v693 = vpack.c.b16 %v568, %v567
  %v694 = vpack.c.b16 %v570, %v569
  %v695 = vpack.c.b16 %v572, %v571
  %v696 = vpack.c.b16 %v574, %v573
  %v697 = vpack.c.b16 %v576, %v575
  %v698 = vpack.c.b16 %v578, %v577
  %v699 = vpack.c.b16 %v580, %v579
  %v700 = vpack.c.b16 %v582, %v581
  %v701 = vpack.c.b16 %v584, %v583
  %v702 = vpack.c.b16 %v586, %v585
  %v703 = vpack.c.b16 %v588, %v587
  %v704 = vpack.c.b16 %v590, %v589
  %v705 = vpack.c.b16 %v592, %v591
  %v706 = vpack.c.b16 %v594, %v593
  %v707 = vpack.c.b16 %v596, %v595
  %v708 = vpack.c.b16 %v598, %v597
  %v709 = vpack.c.b16 %v600, %v599
  %v710 = vpack.c.b16 %v602, %v601
  %v711 = vpack.c.b16 %v604, %v603
  %v712 = vpack.c.b16 %v606, %v605
  %v713 = vpack.c.b16 %v608, %v607
  %v714 = vpack.c.b16 %v610, %v609
  %v715 = vpack.c.b16 %v612, %v611
  %v716 = vpack.c.b16 %v614, %v613
  %v717 = vpack.c.b16 %v616, %v615
  %v718 = vpack.c.b16 %v618, %v617
  %v723 = vunpack.c.l.b16 %v215
  %v724 = vunpack.c.l.b16 %v216
  %v725 = vunpack.c.l.b16 %v217
  %v726 = vunpack.c.l.b16 %v218
  %v727 = vpack.c.b16 %v724, %v723
  %v728 = vpack.c.b16 %v726, %v725
  %vm730 = vcmask 203776
  %v732 = vsel %vm730, %v619, 0
  %v735 = vsel %vm730, %v620, 0
  %v738 = vsel %vm730, %v621, 0
  %v741 = vsel %vm730, %v622, 0
  %v744 = vsel %vm730, %v623, 0
  %v747 = vsel %vm730, %v624, 0
  %v750 = vsel %vm730, %v625, 0
  %v753 = vsel %vm730, %v626, 0
  %v756 = vsel %vm730, %v627, 0
  %v759 = vsel %vm730, %v628, 0
  %v762 = vsel %vm730, %v629, 0
  %v765 = vsel %vm730, %v630, 0
  %v768 = vsel %vm730, %v631, 0
  %v771 = vsel %vm730, %v632, 0
  %v774 = vsel %vm730, %v633, 0
  %v777 = vsel %vm730, %v634, 0
  %v780 = vsel %vm730, %v635, 0
  %v783 = vsel %vm730, %v636, 0
  %v786 = vsel %vm730, %v637, 0
  %v789 = vsel %vm730, %v638, 0
  %v792 = vsel %vm730, %v639, 0
  %v795 = vsel %vm730, %v640, 0
  %v798 = vsel %vm730, %v641, 0
  %v801 = vsel %vm730, %v642, 0
  %v804 = vsel %vm730, %v643, 0
  %v807 = vsel %vm730, %v644, 0
  %v810 = vsel %vm730, %v645, 0
  %v813 = vsel %vm730, %v646, 0
  %v816 = vsel %vm730, %v647, 0
  %v819 = vsel %vm730, %v648, 0
  %v822 = vsel %vm730, %v649, 0
  %v825 = vsel %vm730, %v650, 0
  %v828 = vsel %vm730, %v651, 0
  %v831 = vsel %vm730, %v652, 0
  %v834 = vsel %vm730, %v653, 0
  %v837 = vsel %vm730, %v654, 0
  %v840 = vsel %vm730, %v655, 0
  %v843 = vsel %vm730, %v656, 0
  %v846 = vsel %vm730, %v657, 0
  %v849 = vsel %vm730, %v658, 0
  %v852 = vsel %vm730, %v659, 0
  %v855 = vsel %vm730, %v660, 0
  %v858 = vsel %vm730, %v661, 0
  %v861 = vsel %vm730, %v662, 0
  %v864 = vsel %vm730, %v663, 0
  %v867 = vsel %vm730, %v664, 0
  %v870 = vsel %vm730, %v665, 0
  %v873 = vsel %vm730, %v666, 0
  %v876 = vsel %vm730, %v667, 0
  %v879 = vsel %vm730, %v668, 0
  %v882 = vsel %vm730, %v669, 0
  %v885 = vsel %vm730, %v670, 0
  %v888 = vsel %vm730, %v671, 0
  %v891 = vsel %vm730, %v672, 0
  %v894 = vsel %vm730, %v673, 0
  %v897 = vsel %vm730, %v674, 0
  %v900 = vsel %vm730, %v675, 0
  %v903 = vsel %vm730, %v676, 0
  %v906 = vsel %vm730, %v677, 0
  %v909 = vsel %vm730, %v678, 0
  %v912 = vsel %vm730, %v679, 0
  %v915 = vsel %vm730, %v680, 0
  %v918 = vsel %vm730, %v681, 0
  %v921 = vsel %vm730, %v682, 0
  %v924 = vsel %vm730, %v683, 0
  %v927 = vsel %vm730, %v684, 0
  %v930 = vsel %vm730, %v685, 0
  %v933 = vsel %vm730, %v686, 0
  %v936 = vsel %vm730, %v687, 0
  %v939 = vsel %vm730, %v688, 0
  %v942 = vsel %vm730, %v689, 0
  %v945 = vsel %vm730, %v690, 0
  %v948 = vsel %vm730, %v691, 0
  %v951 = vsel %vm730, %v692, 0
  %v954 = vsel %vm730, %v693, 0
  %v957 = vsel %vm730, %v694, 0
  %v960 = vsel %vm730, %v695, 0
  %v963 = vsel %vm730, %v696, 0
  %v966 = vsel %vm730, %v697, 0
  %v969 = vsel %vm730, %v698, 0
  %v972 = vsel %vm730, %v699, 0
  %v975 = vsel %vm730, %v700, 0
  %v978 = vsel %vm730, %v701, 0
  %v981 = vsel %vm730, %v702, 0
  %v984 = vsel %vm730, %v703, 0
  %v987 = vsel %vm730, %v704, 0
  %v990 = vsel %vm730, %v705, 0
  %v993 = vsel %vm730, %v706, 0
  %v996 = vsel %vm730, %v707, 0
  %v999 = vsel %vm730, %v708, 0
  %v1002 = vsel %vm730, %v709, 0
  %v1005 = vsel %vm730, %v710, 0
  %v1008 = vsel %vm730, %v711, 0
  %v1011 = vsel %vm730, %v712, 0
  %v1014 = vsel %vm730, %v713, 0
  %v1017 = vsel %vm730, %v714, 0
  %v1020 = vsel %vm730, %v715, 0
  %v1023 = vsel %vm730, %v716, 0
  %v1026 = vsel %vm730, %v717, 0
  %v1029 = vsel %vm730, %v718, 0
  %vm1031 = vcmask 1043456
  %vm1032 = vcmask 1044480
  %v1033 = vsel %vm1031, 4294967295, 65535
  %v1034 = vsel %vm1032, %v1033, 0
  %v1036 = vand.u32 %v728, %v1034
  %1038 = vmatprep.subr.bf16.mxu0 0
  %1039 = vmatpush1.bf16.msra.mxu0 0
  %1040 = vmatprep.subr.bf16.mxu0 0
  %1041 = vmatpush1.bf16.msra.mxu0 0
  %1042 = vmatprep.subr.bf16.mxu0 0
  %1043 = vmatpush1.bf16.msra.mxu0 0
  %1044 = vmatprep.subr.bf16.mxu0 0
  %1045 = vmatpush1.bf16.msra.mxu0 0
  %1046 = vmatprep.subr.bf16.mxu0 0
  %1047 = vmatpush1.bf16.msra.mxu0 0
  %1048 = vmatprep.subr.bf16.mxu0 0
  %1049 = vmatpush1.bf16.msra.mxu0 0
  %1050 = vmatprep.subr.bf16.mxu0 0
  %1051 = vmatpush1.bf16.msra.mxu0 %v1036
  %1052 = vmatprep.subr.bf16.mxu0 0
  %1053 = vmatpush1.bf16.msra.mxu0 %v727
  %1054 = vmatprep.subr.bf16.mxu0 0
  %1055 = vmatpush2.bf16.msra.mxu0 0
  %1056 = vmatprep.subr.bf16.mxu0 0
  %1057 = vmatpush2.bf16.msra.mxu0 0
  %1058 = vmatprep.subr.bf16.mxu0 0
  %1059 = vmatpush2.bf16.msra.mxu0 0
  %1060 = vmatprep.subr.bf16.mxu0 0
  %1061 = vmatpush2.bf16.msra.mxu0 0
  %1062 = vmatprep.subr.bf16.mxu0 0
  %1063 = vmatpush2.bf16.msra.mxu0 0
  %1064 = vmatprep.subr.bf16.mxu0 0
  %1065 = vmatpush2.bf16.msra.mxu0 0
  %1066 = vmatprep.subr.bf16.mxu0 0
  %1067 = vmatpush2.bf16.msra.mxu0 0
  %1068 = vmatprep.subr.bf16.mxu0 0
  %1069 = vmatpush2.bf16.msra.mxu0 0
  %1070 = vmatprep.mubr.bf16.mxu0 0
  %1071 = vmatmul.mubr.bf16.gmra.mxu0 %v732
  %v1072 = vpop.f32.mrf.mxu0
  %v1073 = vadd.f32 0.0, %v1072
  %v1074 = vpop.f32.mrf.mxu0
  %v1075 = vpop.f32.mrf.mxu0
  %v1076 = vadd.f32 0.0, %v1075
  %v1077 = vpop.f32.mrf.mxu0
  %1078 = vmatprep.mubr.bf16.mxu0 0
  %1079 = vmatmul.mubr.bf16.gmra.mxu0 %v735
  %v1080 = vpop.f32.mrf.mxu0
  %v1081 = vadd.f32 0.0, %v1080
  %v1082 = vpop.f32.mrf.mxu0
  %v1083 = vpop.f32.mrf.mxu0
  %v1084 = vadd.f32 0.0, %v1083
  %v1085 = vpop.f32.mrf.mxu0
  %1086 = vmatprep.mubr.bf16.mxu0 0
  %1087 = vmatmul.mubr.bf16.gmra.mxu0 %v738
  %v1088 = vpop.f32.mrf.mxu0
  %v1089 = vadd.f32 0.0, %v1088
  %v1090 = vpop.f32.mrf.mxu0
  %v1091 = vpop.f32.mrf.mxu0
  %v1092 = vadd.f32 0.0, %v1091
  %v1093 = vpop.f32.mrf.mxu0
  %1094 = vmatprep.mubr.bf16.mxu0 0
  %1095 = vmatmul.mubr.bf16.gmra.mxu0 %v741
  %v1096 = vpop.f32.mrf.mxu0
  %v1097 = vadd.f32 0.0, %v1096
  %v1098 = vpop.f32.mrf.mxu0
  %v1099 = vpop.f32.mrf.mxu0
  %v1100 = vadd.f32 0.0, %v1099
  %v1101 = vpop.f32.mrf.mxu0
  %1102 = vmatprep.mubr.bf16.mxu0 0
  %1103 = vmatmul.mubr.bf16.gmra.mxu0 %v744
  %v1104 = vpop.f32.mrf.mxu0
  %v1105 = vadd.f32 0.0, %v1104
  %v1106 = vpop.f32.mrf.mxu0
  %v1107 = vpop.f32.mrf.mxu0
  %v1108 = vadd.f32 0.0, %v1107
  %v1109 = vpop.f32.mrf.mxu0
  %1110 = vmatprep.mubr.bf16.mxu0 0
  %1111 = vmatmul.mubr.bf16.gmra.mxu0 %v747
  %v1112 = vpop.f32.mrf.mxu0
  %v1113 = vadd.f32 0.0, %v1112
  %v1114 = vpop.f32.mrf.mxu0
  %v1115 = vpop.f32.mrf.mxu0
  %v1116 = vadd.f32 0.0, %v1115
  %v1117 = vpop.f32.mrf.mxu0
  %1118 = vmatprep.mubr.bf16.mxu0 0
  %1119 = vmatmul.mubr.bf16.gmra.mxu0 %v750
  %v1120 = vpop.f32.mrf.mxu0
  %v1121 = vadd.f32 0.0, %v1120
  %v1122 = vpop.f32.mrf.mxu0
  %v1123 = vpop.f32.mrf.mxu0
  %v1124 = vadd.f32 0.0, %v1123
  %v1125 = vpop.f32.mrf.mxu0
  %1126 = vmatprep.mubr.bf16.mxu0 0
  %1127 = vmatmul.mubr.bf16.gmra.mxu0 %v753
  %v1128 = vpop.f32.mrf.mxu0
  %v1129 = vadd.f32 0.0, %v1128
  %v1130 = vpop.f32.mrf.mxu0
  %v1131 = vpop.f32.mrf.mxu0
  %v1132 = vadd.f32 0.0, %v1131
  %v1133 = vpop.f32.mrf.mxu0
  %1134 = vmatprep.mubr.bf16.mxu0 0
  %1135 = vmatmul.mubr.bf16.gmra.mxu0 %v756
  %v1136 = vpop.f32.mrf.mxu0
  %v1137 = vadd.f32 0.0, %v1136
  %v1138 = vpop.f32.mrf.mxu0
  %v1139 = vpop.f32.mrf.mxu0
  %v1140 = vadd.f32 0.0, %v1139
  %v1141 = vpop.f32.mrf.mxu0
  %1142 = vmatprep.mubr.bf16.mxu0 0
  %1143 = vmatmul.mubr.bf16.gmra.mxu0 %v759
  %v1144 = vpop.f32.mrf.mxu0
  %v1145 = vadd.f32 0.0, %v1144
  %v1146 = vpop.f32.mrf.mxu0
  %v1147 = vpop.f32.mrf.mxu0
  %v1148 = vadd.f32 0.0, %v1147
  %v1149 = vpop.f32.mrf.mxu0
  %1150 = vmatprep.mubr.bf16.mxu0 0
  %1151 = vmatmul.mubr.bf16.gmra.mxu0 %v762
  %v1152 = vpop.f32.mrf.mxu0
  %v1153 = vadd.f32 0.0, %v1152
  %v1154 = vpop.f32.mrf.mxu0
  %v1155 = vpop.f32.mrf.mxu0
  %v1156 = vadd.f32 0.0, %v1155
  %v1157 = vpop.f32.mrf.mxu0
  %1158 = vmatprep.mubr.bf16.mxu0 0
  %1159 = vmatmul.mubr.bf16.gmra.mxu0 %v765
  %v1160 = vpop.f32.mrf.mxu0
  %v1161 = vadd.f32 0.0, %v1160
  %v1162 = vpop.f32.mrf.mxu0
  %v1163 = vpop.f32.mrf.mxu0
  %v1164 = vadd.f32 0.0, %v1163
  %v1165 = vpop.f32.mrf.mxu0
  %1166 = vmatprep.mubr.bf16.mxu0 0
  %1167 = vmatmul.mubr.bf16.gmra.mxu0 %v768
  %v1168 = vpop.f32.mrf.mxu0
  %v1169 = vadd.f32 0.0, %v1168
  %v1170 = vpop.f32.mrf.mxu0
  %v1171 = vpop.f32.mrf.mxu0
  %v1172 = vadd.f32 0.0, %v1171
  %v1173 = vpop.f32.mrf.mxu0
  %1174 = vmatprep.mubr.bf16.mxu0 0
  %1175 = vmatmul.mubr.bf16.gmra.mxu0 %v771
  %v1176 = vpop.f32.mrf.mxu0
  %v1177 = vadd.f32 0.0, %v1176
  %v1178 = vpop.f32.mrf.mxu0
  %v1179 = vpop.f32.mrf.mxu0
  %v1180 = vadd.f32 0.0, %v1179
  %v1181 = vpop.f32.mrf.mxu0
  %1182 = vmatprep.mubr.bf16.mxu0 0
  %1183 = vmatmul.mubr.bf16.gmra.mxu0 %v774
  %v1184 = vpop.f32.mrf.mxu0
  %v1185 = vadd.f32 0.0, %v1184
  %v1186 = vpop.f32.mrf.mxu0
  %v1187 = vpop.f32.mrf.mxu0
  %v1188 = vadd.f32 0.0, %v1187
  %v1189 = vpop.f32.mrf.mxu0
  %1190 = vmatprep.mubr.bf16.mxu0 0
  %1191 = vmatmul.mubr.bf16.gmra.mxu0 %v777
  %v1192 = vpop.f32.mrf.mxu0
  %v1193 = vadd.f32 0.0, %v1192
  %v1194 = vpop.f32.mrf.mxu0
  %v1195 = vpop.f32.mrf.mxu0
  %v1196 = vadd.f32 0.0, %v1195
  %v1197 = vpop.f32.mrf.mxu0
  %1198 = vmatprep.mubr.bf16.mxu0 0
  %1199 = vmatmul.mubr.bf16.gmra.mxu0 %v780
  %v1200 = vpop.f32.mrf.mxu0
  %v1201 = vadd.f32 0.0, %v1200
  %v1202 = vpop.f32.mrf.mxu0
  %v1203 = vpop.f32.mrf.mxu0
  %v1204 = vadd.f32 0.0, %v1203
  %v1205 = vpop.f32.mrf.mxu0
  %1206 = vmatprep.mubr.bf16.mxu0 0
  %1207 = vmatmul.mubr.bf16.gmra.mxu0 %v783
  %v1208 = vpop.f32.mrf.mxu0
  %v1209 = vadd.f32 0.0, %v1208
  %v1210 = vpop.f32.mrf.mxu0
  %v1211 = vpop.f32.mrf.mxu0
  %v1212 = vadd.f32 0.0, %v1211
  %v1213 = vpop.f32.mrf.mxu0
  %1214 = vmatprep.mubr.bf16.mxu0 0
  %1215 = vmatmul.mubr.bf16.gmra.mxu0 %v786
  %v1216 = vpop.f32.mrf.mxu0
  %v1217 = vadd.f32 0.0, %v1216
  %v1218 = vpop.f32.mrf.mxu0
  %v1219 = vpop.f32.mrf.mxu0
  %v1220 = vadd.f32 0.0, %v1219
  %v1221 = vpop.f32.mrf.mxu0
  %1222 = vmatprep.mubr.bf16.mxu0 0
  %1223 = vmatmul.mubr.bf16.gmra.mxu0 %v789
  %v1224 = vpop.f32.mrf.mxu0
  %v1225 = vadd.f32 0.0, %v1224
  %v1226 = vpop.f32.mrf.mxu0
  %v1227 = vpop.f32.mrf.mxu0
  %v1228 = vadd.f32 0.0, %v1227
  %v1229 = vpop.f32.mrf.mxu0
  %1230 = vmatprep.mubr.bf16.mxu0 0
  %1231 = vmatmul.mubr.bf16.gmra.mxu0 %v792
  %v1232 = vpop.f32.mrf.mxu0
  %v1233 = vadd.f32 0.0, %v1232
  %v1234 = vpop.f32.mrf.mxu0
  %v1235 = vpop.f32.mrf.mxu0
  %v1236 = vadd.f32 0.0, %v1235
  %v1237 = vpop.f32.mrf.mxu0
  %1238 = vmatprep.mubr.bf16.mxu0 0
  %1239 = vmatmul.mubr.bf16.gmra.mxu0 %v795
  %v1240 = vpop.f32.mrf.mxu0
  %v1241 = vadd.f32 0.0, %v1240
  %v1242 = vpop.f32.mrf.mxu0
  %v1243 = vpop.f32.mrf.mxu0
  %v1244 = vadd.f32 0.0, %v1243
  %v1245 = vpop.f32.mrf.mxu0
  %1246 = vmatprep.mubr.bf16.mxu0 0
  %1247 = vmatmul.mubr.bf16.gmra.mxu0 %v798
  %v1248 = vpop.f32.mrf.mxu0
  %v1249 = vadd.f32 0.0, %v1248
  %v1250 = vpop.f32.mrf.mxu0
  %v1251 = vpop.f32.mrf.mxu0
  %v1252 = vadd.f32 0.0, %v1251
  %v1253 = vpop.f32.mrf.mxu0
  %1254 = vmatprep.mubr.bf16.mxu0 0
  %1255 = vmatmul.mubr.bf16.gmra.mxu0 %v801
  %v1256 = vpop.f32.mrf.mxu0
  %v1257 = vadd.f32 0.0, %v1256
  %v1258 = vpop.f32.mrf.mxu0
  %v1259 = vpop.f32.mrf.mxu0
  %v1260 = vadd.f32 0.0, %v1259
  %v1261 = vpop.f32.mrf.mxu0
  %1262 = vmatprep.mubr.bf16.mxu0 0
  %1263 = vmatmul.mubr.bf16.gmra.mxu0 %v804
  %v1264 = vpop.f32.mrf.mxu0
  %v1265 = vadd.f32 0.0, %v1264
  %v1266 = vpop.f32.mrf.mxu0
  %v1267 = vpop.f32.mrf.mxu0
  %v1268 = vadd.f32 0.0, %v1267
  %v1269 = vpop.f32.mrf.mxu0
  %1270 = vmatprep.mubr.bf16.mxu0 0
  %1271 = vmatmul.mubr.bf16.gmra.mxu0 %v807
  %v1272 = vpop.f32.mrf.mxu0
  %v1273 = vadd.f32 0.0, %v1272
  %v1274 = vpop.f32.mrf.mxu0
  %v1275 = vpop.f32.mrf.mxu0
  %v1276 = vadd.f32 0.0, %v1275
  %v1277 = vpop.f32.mrf.mxu0
  %1278 = vmatprep.mubr.bf16.mxu0 0
  %1279 = vmatmul.mubr.bf16.gmra.mxu0 %v810
  %v1280 = vpop.f32.mrf.mxu0
  %v1281 = vadd.f32 0.0, %v1280
  %v1282 = vpop.f32.mrf.mxu0
  %v1283 = vpop.f32.mrf.mxu0
  %v1284 = vadd.f32 0.0, %v1283
  %v1285 = vpop.f32.mrf.mxu0
  %1286 = vmatprep.mubr.bf16.mxu0 0
  %1287 = vmatmul.mubr.bf16.gmra.mxu0 %v813
  %v1288 = vpop.f32.mrf.mxu0
  %v1289 = vadd.f32 0.0, %v1288
  %v1290 = vpop.f32.mrf.mxu0
  %v1291 = vpop.f32.mrf.mxu0
  %v1292 = vadd.f32 0.0, %v1291
  %v1293 = vpop.f32.mrf.mxu0
  %1294 = vmatprep.mubr.bf16.mxu0 0
  %1295 = vmatmul.mubr.bf16.gmra.mxu0 %v816
  %v1296 = vpop.f32.mrf.mxu0
  %v1297 = vadd.f32 0.0, %v1296
  %v1298 = vpop.f32.mrf.mxu0
  %v1299 = vpop.f32.mrf.mxu0
  %v1300 = vadd.f32 0.0, %v1299
  %v1301 = vpop.f32.mrf.mxu0
  %1302 = vmatprep.mubr.bf16.mxu0 0
  %1303 = vmatmul.mubr.bf16.gmra.mxu0 %v819
  %v1304 = vpop.f32.mrf.mxu0
  %v1305 = vadd.f32 0.0, %v1304
  %v1306 = vpop.f32.mrf.mxu0
  %v1307 = vpop.f32.mrf.mxu0
  %v1308 = vadd.f32 0.0, %v1307
  %v1309 = vpop.f32.mrf.mxu0
  %1310 = vmatprep.mubr.bf16.mxu0 0
  %1311 = vmatmul.mubr.bf16.gmra.mxu0 %v822
  %v1312 = vpop.f32.mrf.mxu0
  %v1313 = vadd.f32 0.0, %v1312
  %v1314 = vpop.f32.mrf.mxu0
  %v1315 = vpop.f32.mrf.mxu0
  %v1316 = vadd.f32 0.0, %v1315
  %v1317 = vpop.f32.mrf.mxu0
  %1318 = vmatprep.mubr.bf16.mxu0 0
  %1319 = vmatmul.mubr.bf16.gmra.mxu0 %v825
  %v1320 = vpop.f32.mrf.mxu0
  %v1321 = vadd.f32 0.0, %v1320
  %v1322 = vpop.f32.mrf.mxu0
  %v1323 = vpop.f32.mrf.mxu0
  %v1324 = vadd.f32 0.0, %v1323
  %v1325 = vpop.f32.mrf.mxu0
  %1326 = vmatprep.mubr.bf16.mxu0 0
  %1327 = vmatmul.mubr.bf16.gmra.mxu0 %v828
  %v1328 = vpop.f32.mrf.mxu0
  %v1329 = vadd.f32 0.0, %v1328
  %v1330 = vpop.f32.mrf.mxu0
  %v1331 = vpop.f32.mrf.mxu0
  %v1332 = vadd.f32 0.0, %v1331
  %v1333 = vpop.f32.mrf.mxu0
  %1334 = vmatprep.mubr.bf16.mxu0 0
  %1335 = vmatmul.mubr.bf16.gmra.mxu0 %v831
  %v1336 = vpop.f32.mrf.mxu0
  %v1337 = vadd.f32 0.0, %v1336
  %v1338 = vpop.f32.mrf.mxu0
  %v1339 = vpop.f32.mrf.mxu0
  %v1340 = vadd.f32 0.0, %v1339
  %v1341 = vpop.f32.mrf.mxu0
  %1342 = vmatprep.mubr.bf16.mxu0 0
  %1343 = vmatmul.mubr.bf16.gmra.mxu0 %v834
  %v1344 = vpop.f32.mrf.mxu0
  %v1345 = vadd.f32 0.0, %v1344
  %v1346 = vpop.f32.mrf.mxu0
  %v1347 = vpop.f32.mrf.mxu0
  %v1348 = vadd.f32 0.0, %v1347
  %v1349 = vpop.f32.mrf.mxu0
  %1350 = vmatprep.mubr.bf16.mxu0 0
  %1351 = vmatmul.mubr.bf16.gmra.mxu0 %v837
  %v1352 = vpop.f32.mrf.mxu0
  %v1353 = vadd.f32 0.0, %v1352
  %v1354 = vpop.f32.mrf.mxu0
  %v1355 = vpop.f32.mrf.mxu0
  %v1356 = vadd.f32 0.0, %v1355
  %v1357 = vpop.f32.mrf.mxu0
  %1358 = vmatprep.mubr.bf16.mxu0 0
  %1359 = vmatmul.mubr.bf16.gmra.mxu0 %v840
  %v1360 = vpop.f32.mrf.mxu0
  %v1361 = vadd.f32 0.0, %v1360
  %v1362 = vpop.f32.mrf.mxu0
  %v1363 = vpop.f32.mrf.mxu0
  %v1364 = vadd.f32 0.0, %v1363
  %v1365 = vpop.f32.mrf.mxu0
  %1366 = vmatprep.mubr.bf16.mxu0 0
  %1367 = vmatmul.mubr.bf16.gmra.mxu0 %v843
  %v1368 = vpop.f32.mrf.mxu0
  %v1369 = vadd.f32 0.0, %v1368
  %v1370 = vpop.f32.mrf.mxu0
  %v1371 = vpop.f32.mrf.mxu0
  %v1372 = vadd.f32 0.0, %v1371
  %v1373 = vpop.f32.mrf.mxu0
  %1374 = vmatprep.mubr.bf16.mxu0 0
  %1375 = vmatmul.mubr.bf16.gmra.mxu0 %v846
  %v1376 = vpop.f32.mrf.mxu0
  %v1377 = vadd.f32 0.0, %v1376
  %v1378 = vpop.f32.mrf.mxu0
  %v1379 = vpop.f32.mrf.mxu0
  %v1380 = vadd.f32 0.0, %v1379
  %v1381 = vpop.f32.mrf.mxu0
  %1382 = vmatprep.mubr.bf16.mxu0 0
  %1383 = vmatmul.mubr.bf16.gmra.mxu0 %v849
  %v1384 = vpop.f32.mrf.mxu0
  %v1385 = vadd.f32 0.0, %v1384
  %v1386 = vpop.f32.mrf.mxu0
  %v1387 = vpop.f32.mrf.mxu0
  %v1388 = vadd.f32 0.0, %v1387
  %v1389 = vpop.f32.mrf.mxu0
  %1390 = vmatprep.mubr.bf16.mxu0 0
  %1391 = vmatmul.mubr.bf16.gmra.mxu0 %v852
  %v1392 = vpop.f32.mrf.mxu0
  %v1393 = vadd.f32 0.0, %v1392
  %v1394 = vpop.f32.mrf.mxu0
  %v1395 = vpop.f32.mrf.mxu0
  %v1396 = vadd.f32 0.0, %v1395
  %v1397 = vpop.f32.mrf.mxu0
  %1398 = vmatprep.mubr.bf16.mxu0 0
  %1399 = vmatmul.mubr.bf16.gmra.mxu0 %v855
  %v1400 = vpop.f32.mrf.mxu0
  %v1401 = vadd.f32 0.0, %v1400
  %v1402 = vpop.f32.mrf.mxu0
  %v1403 = vpop.f32.mrf.mxu0
  %v1404 = vadd.f32 0.0, %v1403
  %v1405 = vpop.f32.mrf.mxu0
  %1406 = vmatprep.mubr.bf16.mxu0 0
  %1407 = vmatmul.mubr.bf16.gmra.mxu0 %v858
  %v1408 = vpop.f32.mrf.mxu0
  %v1409 = vadd.f32 0.0, %v1408
  %v1410 = vpop.f32.mrf.mxu0
  %v1411 = vpop.f32.mrf.mxu0
  %v1412 = vadd.f32 0.0, %v1411
  %v1413 = vpop.f32.mrf.mxu0
  %1414 = vmatprep.mubr.bf16.mxu0 0
  %1415 = vmatmul.mubr.bf16.gmra.mxu0 %v861
  %v1416 = vpop.f32.mrf.mxu0
  %v1417 = vadd.f32 0.0, %v1416
  %v1418 = vpop.f32.mrf.mxu0
  %v1419 = vpop.f32.mrf.mxu0
  %v1420 = vadd.f32 0.0, %v1419
  %v1421 = vpop.f32.mrf.mxu0
  %1422 = vmatprep.mubr.bf16.mxu0 0
  %1423 = vmatmul.mubr.bf16.gmra.mxu0 %v864
  %v1424 = vpop.f32.mrf.mxu0
  %v1425 = vadd.f32 0.0, %v1424
  %v1426 = vpop.f32.mrf.mxu0
  %v1427 = vpop.f32.mrf.mxu0
  %v1428 = vadd.f32 0.0, %v1427
  %v1429 = vpop.f32.mrf.mxu0
  %1430 = vmatprep.mubr.bf16.mxu0 0
  %1431 = vmatmul.mubr.bf16.gmra.mxu0 %v867
  %v1432 = vpop.f32.mrf.mxu0
  %v1433 = vadd.f32 0.0, %v1432
  %v1434 = vpop.f32.mrf.mxu0
  %v1435 = vpop.f32.mrf.mxu0
  %v1436 = vadd.f32 0.0, %v1435
  %v1437 = vpop.f32.mrf.mxu0
  %1438 = vmatprep.mubr.bf16.mxu0 0
  %1439 = vmatmul.mubr.bf16.gmra.mxu0 %v870
  %v1440 = vpop.f32.mrf.mxu0
  %v1441 = vadd.f32 0.0, %v1440
  %v1442 = vpop.f32.mrf.mxu0
  %v1443 = vpop.f32.mrf.mxu0
  %v1444 = vadd.f32 0.0, %v1443
  %v1445 = vpop.f32.mrf.mxu0
  %1446 = vmatprep.mubr.bf16.mxu0 0
  %1447 = vmatmul.mubr.bf16.gmra.mxu0 %v873
  %v1448 = vpop.f32.mrf.mxu0
  %v1449 = vadd.f32 0.0, %v1448
  %v1450 = vpop.f32.mrf.mxu0
  %v1451 = vpop.f32.mrf.mxu0
  %v1452 = vadd.f32 0.0, %v1451
  %v1453 = vpop.f32.mrf.mxu0
  %1454 = vmatprep.mubr.bf16.mxu0 0
  %1455 = vmatmul.mubr.bf16.gmra.mxu0 %v876
  %v1456 = vpop.f32.mrf.mxu0
  %v1457 = vadd.f32 0.0, %v1456
  %v1458 = vpop.f32.mrf.mxu0
  %v1459 = vpop.f32.mrf.mxu0
  %v1460 = vadd.f32 0.0, %v1459
  %v1461 = vpop.f32.mrf.mxu0
  %1462 = vmatprep.mubr.bf16.mxu0 0
  %1463 = vmatmul.mubr.bf16.gmra.mxu0 %v879
  %v1464 = vpop.f32.mrf.mxu0
  %v1465 = vadd.f32 0.0, %v1464
  %v1466 = vpop.f32.mrf.mxu0
  %v1467 = vpop.f32.mrf.mxu0
  %v1468 = vadd.f32 0.0, %v1467
  %v1469 = vpop.f32.mrf.mxu0
  %1470 = vmatprep.mubr.bf16.mxu0 0
  %1471 = vmatmul.mubr.bf16.gmra.mxu0 %v882
  %v1472 = vpop.f32.mrf.mxu0
  %v1473 = vadd.f32 0.0, %v1472
  %v1474 = vpop.f32.mrf.mxu0
  %v1475 = vpop.f32.mrf.mxu0
  %v1476 = vadd.f32 0.0, %v1475
  %v1477 = vpop.f32.mrf.mxu0
  %1478 = vmatprep.mubr.bf16.mxu0 0
  %1479 = vmatmul.mubr.bf16.gmra.mxu0 %v885
  %v1480 = vpop.f32.mrf.mxu0
  %v1481 = vadd.f32 0.0, %v1480
  %v1482 = vpop.f32.mrf.mxu0
  %v1483 = vpop.f32.mrf.mxu0
  %v1484 = vadd.f32 0.0, %v1483
  %v1485 = vpop.f32.mrf.mxu0
  %1486 = vmatprep.mubr.bf16.mxu0 0
  %1487 = vmatmul.mubr.bf16.gmra.mxu0 %v888
  %v1488 = vpop.f32.mrf.mxu0
  %v1489 = vadd.f32 0.0, %v1488
  %v1490 = vpop.f32.mrf.mxu0
  %v1491 = vpop.f32.mrf.mxu0
  %v1492 = vadd.f32 0.0, %v1491
  %v1493 = vpop.f32.mrf.mxu0
  %1494 = vmatprep.mubr.bf16.mxu0 0
  %1495 = vmatmul.mubr.bf16.gmra.mxu0 %v891
  %v1496 = vpop.f32.mrf.mxu0
  %v1497 = vadd.f32 0.0, %v1496
  %v1498 = vpop.f32.mrf.mxu0
  %v1499 = vpop.f32.mrf.mxu0
  %v1500 = vadd.f32 0.0, %v1499
  %v1501 = vpop.f32.mrf.mxu0
  %1502 = vmatprep.mubr.bf16.mxu0 0
  %1503 = vmatmul.mubr.bf16.gmra.mxu0 %v894
  %v1504 = vpop.f32.mrf.mxu0
  %v1505 = vadd.f32 0.0, %v1504
  %v1506 = vpop.f32.mrf.mxu0
  %v1507 = vpop.f32.mrf.mxu0
  %v1508 = vadd.f32 0.0, %v1507
  %v1509 = vpop.f32.mrf.mxu0
  %1510 = vmatprep.mubr.bf16.mxu0 0
  %1511 = vmatmul.mubr.bf16.gmra.mxu0 %v897
  %v1512 = vpop.f32.mrf.mxu0
  %v1513 = vadd.f32 0.0, %v1512
  %v1514 = vpop.f32.mrf.mxu0
  %v1515 = vpop.f32.mrf.mxu0
  %v1516 = vadd.f32 0.0, %v1515
  %v1517 = vpop.f32.mrf.mxu0
  %1518 = vmatprep.mubr.bf16.mxu0 0
  %1519 = vmatmul.mubr.bf16.gmra.mxu0 %v900
  %v1520 = vpop.f32.mrf.mxu0
  %v1521 = vadd.f32 0.0, %v1520
  %v1522 = vpop.f32.mrf.mxu0
  %v1523 = vpop.f32.mrf.mxu0
  %v1524 = vadd.f32 0.0, %v1523
  %v1525 = vpop.f32.mrf.mxu0
  %1526 = vmatprep.mubr.bf16.mxu0 0
  %1527 = vmatmul.mubr.bf16.gmra.mxu0 %v903
  %v1528 = vpop.f32.mrf.mxu0
  %v1529 = vadd.f32 0.0, %v1528
  %v1530 = vpop.f32.mrf.mxu0
  %v1531 = vpop.f32.mrf.mxu0
  %v1532 = vadd.f32 0.0, %v1531
  %v1533 = vpop.f32.mrf.mxu0
  %1534 = vmatprep.mubr.bf16.mxu0 0
  %1535 = vmatmul.mubr.bf16.gmra.mxu0 %v906
  %v1536 = vpop.f32.mrf.mxu0
  %v1537 = vadd.f32 0.0, %v1536
  %v1538 = vpop.f32.mrf.mxu0
  %v1539 = vpop.f32.mrf.mxu0
  %v1540 = vadd.f32 0.0, %v1539
  %v1541 = vpop.f32.mrf.mxu0
  %1542 = vmatprep.mubr.bf16.mxu0 0
  %1543 = vmatmul.mubr.bf16.gmra.mxu0 %v909
  %v1544 = vpop.f32.mrf.mxu0
  %v1545 = vadd.f32 0.0, %v1544
  %v1546 = vpop.f32.mrf.mxu0
  %v1547 = vpop.f32.mrf.mxu0
  %v1548 = vadd.f32 0.0, %v1547
  %v1549 = vpop.f32.mrf.mxu0
  %1550 = vmatprep.mubr.bf16.mxu0 0
  %1551 = vmatmul.mubr.bf16.gmra.mxu0 %v912
  %v1552 = vpop.f32.mrf.mxu0
  %v1553 = vadd.f32 0.0, %v1552
  %v1554 = vpop.f32.mrf.mxu0
  %v1555 = vpop.f32.mrf.mxu0
  %v1556 = vadd.f32 0.0, %v1555
  %v1557 = vpop.f32.mrf.mxu0
  %1558 = vmatprep.mubr.bf16.mxu0 0
  %1559 = vmatmul.mubr.bf16.gmra.mxu0 %v915
  %v1560 = vpop.f32.mrf.mxu0
  %v1561 = vadd.f32 0.0, %v1560
  %v1562 = vpop.f32.mrf.mxu0
  %v1563 = vpop.f32.mrf.mxu0
  %v1564 = vadd.f32 0.0, %v1563
  %v1565 = vpop.f32.mrf.mxu0
  %1566 = vmatprep.mubr.bf16.mxu0 0
  %1567 = vmatmul.mubr.bf16.gmra.mxu0 %v918
  %v1568 = vpop.f32.mrf.mxu0
  %v1569 = vadd.f32 0.0, %v1568
  %v1570 = vpop.f32.mrf.mxu0
  %v1571 = vpop.f32.mrf.mxu0
  %v1572 = vadd.f32 0.0, %v1571
  %v1573 = vpop.f32.mrf.mxu0
  %1574 = vmatprep.mubr.bf16.mxu0 0
  %1575 = vmatmul.mubr.bf16.gmra.mxu0 %v921
  %v1576 = vpop.f32.mrf.mxu0
  %v1577 = vadd.f32 0.0, %v1576
  %v1578 = vpop.f32.mrf.mxu0
  %v1579 = vpop.f32.mrf.mxu0
  %v1580 = vadd.f32 0.0, %v1579
  %v1581 = vpop.f32.mrf.mxu0
  %1582 = vmatprep.mubr.bf16.mxu0 0
  %1583 = vmatmul.mubr.bf16.gmra.mxu0 %v924
  %v1584 = vpop.f32.mrf.mxu0
  %v1585 = vadd.f32 0.0, %v1584
  %v1586 = vpop.f32.mrf.mxu0
  %v1587 = vpop.f32.mrf.mxu0
  %v1588 = vadd.f32 0.0, %v1587
  %v1589 = vpop.f32.mrf.mxu0
  %1590 = vmatprep.mubr.bf16.mxu0 0
  %1591 = vmatmul.mubr.bf16.gmra.mxu0 %v927
  %v1592 = vpop.f32.mrf.mxu0
  %v1593 = vadd.f32 0.0, %v1592
  %v1594 = vpop.f32.mrf.mxu0
  %v1595 = vpop.f32.mrf.mxu0
  %v1596 = vadd.f32 0.0, %v1595
  %v1597 = vpop.f32.mrf.mxu0
  %1598 = vmatprep.mubr.bf16.mxu0 0
  %1599 = vmatmul.mubr.bf16.gmra.mxu0 %v930
  %v1600 = vpop.f32.mrf.mxu0
  %v1601 = vadd.f32 0.0, %v1600
  %v1602 = vpop.f32.mrf.mxu0
  %v1603 = vpop.f32.mrf.mxu0
  %v1604 = vadd.f32 0.0, %v1603
  %v1605 = vpop.f32.mrf.mxu0
  %1606 = vmatprep.mubr.bf16.mxu0 0
  %1607 = vmatmul.mubr.bf16.gmra.mxu0 %v933
  %v1608 = vpop.f32.mrf.mxu0
  %v1609 = vadd.f32 0.0, %v1608
  %v1610 = vpop.f32.mrf.mxu0
  %v1611 = vpop.f32.mrf.mxu0
  %v1612 = vadd.f32 0.0, %v1611
  %v1613 = vpop.f32.mrf.mxu0
  %1614 = vmatprep.mubr.bf16.mxu0 0
  %1615 = vmatmul.mubr.bf16.gmra.mxu0 %v936
  %v1616 = vpop.f32.mrf.mxu0
  %v1617 = vadd.f32 0.0, %v1616
  %v1618 = vpop.f32.mrf.mxu0
  %v1619 = vpop.f32.mrf.mxu0
  %v1620 = vadd.f32 0.0, %v1619
  %v1621 = vpop.f32.mrf.mxu0
  %1622 = vmatprep.mubr.bf16.mxu0 0
  %1623 = vmatmul.mubr.bf16.gmra.mxu0 %v939
  %v1624 = vpop.f32.mrf.mxu0
  %v1625 = vadd.f32 0.0, %v1624
  %v1626 = vpop.f32.mrf.mxu0
  %v1627 = vpop.f32.mrf.mxu0
  %v1628 = vadd.f32 0.0, %v1627
  %v1629 = vpop.f32.mrf.mxu0
  %1630 = vmatprep.mubr.bf16.mxu0 0
  %1631 = vmatmul.mubr.bf16.gmra.mxu0 %v942
  %v1632 = vpop.f32.mrf.mxu0
  %v1633 = vadd.f32 0.0, %v1632
  %v1634 = vpop.f32.mrf.mxu0
  %v1635 = vpop.f32.mrf.mxu0
  %v1636 = vadd.f32 0.0, %v1635
  %v1637 = vpop.f32.mrf.mxu0
  %1638 = vmatprep.mubr.bf16.mxu0 0
  %1639 = vmatmul.mubr.bf16.gmra.mxu0 %v945
  %v1640 = vpop.f32.mrf.mxu0
  %v1641 = vadd.f32 0.0, %v1640
  %v1642 = vpop.f32.mrf.mxu0
  %v1643 = vpop.f32.mrf.mxu0
  %v1644 = vadd.f32 0.0, %v1643
  %v1645 = vpop.f32.mrf.mxu0
  %1646 = vmatprep.mubr.bf16.mxu0 0
  %1647 = vmatmul.mubr.bf16.gmra.mxu0 %v948
  %v1648 = vpop.f32.mrf.mxu0
  %v1649 = vadd.f32 0.0, %v1648
  %v1650 = vpop.f32.mrf.mxu0
  %v1651 = vpop.f32.mrf.mxu0
  %v1652 = vadd.f32 0.0, %v1651
  %v1653 = vpop.f32.mrf.mxu0
  %1654 = vmatprep.mubr.bf16.mxu0 0
  %1655 = vmatmul.mubr.bf16.gmra.mxu0 %v951
  %v1656 = vpop.f32.mrf.mxu0
  %v1657 = vadd.f32 0.0, %v1656
  %v1658 = vpop.f32.mrf.mxu0
  %v1659 = vpop.f32.mrf.mxu0
  %v1660 = vadd.f32 0.0, %v1659
  %v1661 = vpop.f32.mrf.mxu0
  %1662 = vmatprep.mubr.bf16.mxu0 0
  %1663 = vmatmul.mubr.bf16.gmra.mxu0 %v954
  %v1664 = vpop.f32.mrf.mxu0
  %v1665 = vadd.f32 0.0, %v1664
  %v1666 = vpop.f32.mrf.mxu0
  %v1667 = vpop.f32.mrf.mxu0
  %v1668 = vadd.f32 0.0, %v1667
  %v1669 = vpop.f32.mrf.mxu0
  %1670 = vmatprep.mubr.bf16.mxu0 0
  %1671 = vmatmul.mubr.bf16.gmra.mxu0 %v957
  %v1672 = vpop.f32.mrf.mxu0
  %v1673 = vadd.f32 0.0, %v1672
  %v1674 = vpop.f32.mrf.mxu0
  %v1675 = vpop.f32.mrf.mxu0
  %v1676 = vadd.f32 0.0, %v1675
  %v1677 = vpop.f32.mrf.mxu0
  %1678 = vmatprep.mubr.bf16.mxu0 0
  %1679 = vmatmul.mubr.bf16.gmra.mxu0 %v960
  %v1680 = vpop.f32.mrf.mxu0
  %v1681 = vadd.f32 0.0, %v1680
  %v1682 = vpop.f32.mrf.mxu0
  %v1683 = vpop.f32.mrf.mxu0
  %v1684 = vadd.f32 0.0, %v1683
  %v1685 = vpop.f32.mrf.mxu0
  %1686 = vmatprep.mubr.bf16.mxu0 0
  %1687 = vmatmul.mubr.bf16.gmra.mxu0 %v963
  %v1688 = vpop.f32.mrf.mxu0
  %v1689 = vadd.f32 0.0, %v1688
  %v1690 = vpop.f32.mrf.mxu0
  %v1691 = vpop.f32.mrf.mxu0
  %v1692 = vadd.f32 0.0, %v1691
  %v1693 = vpop.f32.mrf.mxu0
  %1694 = vmatprep.mubr.bf16.mxu0 0
  %1695 = vmatmul.mubr.bf16.gmra.mxu0 %v966
  %v1696 = vpop.f32.mrf.mxu0
  %v1697 = vadd.f32 0.0, %v1696
  %v1698 = vpop.f32.mrf.mxu0
  %v1699 = vpop.f32.mrf.mxu0
  %v1700 = vadd.f32 0.0, %v1699
  %v1701 = vpop.f32.mrf.mxu0
  %1702 = vmatprep.mubr.bf16.mxu0 0
  %1703 = vmatmul.mubr.bf16.gmra.mxu0 %v969
  %v1704 = vpop.f32.mrf.mxu0
  %v1705 = vadd.f32 0.0, %v1704
  %v1706 = vpop.f32.mrf.mxu0
  %v1707 = vpop.f32.mrf.mxu0
  %v1708 = vadd.f32 0.0, %v1707
  %v1709 = vpop.f32.mrf.mxu0
  %1710 = vmatprep.mubr.bf16.mxu0 0
  %1711 = vmatmul.mubr.bf16.gmra.mxu0 %v972
  %v1712 = vpop.f32.mrf.mxu0
  %v1713 = vadd.f32 0.0, %v1712
  %v1714 = vpop.f32.mrf.mxu0
  %v1715 = vpop.f32.mrf.mxu0
  %v1716 = vadd.f32 0.0, %v1715
  %v1717 = vpop.f32.mrf.mxu0
  %1718 = vmatprep.mubr.bf16.mxu0 0
  %1719 = vmatmul.mubr.bf16.gmra.mxu0 %v975
  %v1720 = vpop.f32.mrf.mxu0
  %v1721 = vadd.f32 0.0, %v1720
  %v1722 = vpop.f32.mrf.mxu0
  %v1723 = vpop.f32.mrf.mxu0
  %v1724 = vadd.f32 0.0, %v1723
  %v1725 = vpop.f32.mrf.mxu0
  %1726 = vmatprep.mubr.bf16.mxu0 0
  %1727 = vmatmul.mubr.bf16.gmra.mxu0 %v978
  %v1728 = vpop.f32.mrf.mxu0
  %v1729 = vadd.f32 0.0, %v1728
  %v1730 = vpop.f32.mrf.mxu0
  %v1731 = vpop.f32.mrf.mxu0
  %v1732 = vadd.f32 0.0, %v1731
  %v1733 = vpop.f32.mrf.mxu0
  %1734 = vmatprep.mubr.bf16.mxu0 0
  %1735 = vmatmul.mubr.bf16.gmra.mxu0 %v981
  %v1736 = vpop.f32.mrf.mxu0
  %v1737 = vadd.f32 0.0, %v1736
  %v1738 = vpop.f32.mrf.mxu0
  %v1739 = vpop.f32.mrf.mxu0
  %v1740 = vadd.f32 0.0, %v1739
  %v1741 = vpop.f32.mrf.mxu0
  %1742 = vmatprep.mubr.bf16.mxu0 0
  %1743 = vmatmul.mubr.bf16.gmra.mxu0 %v984
  %v1744 = vpop.f32.mrf.mxu0
  %v1745 = vadd.f32 0.0, %v1744
  %v1746 = vpop.f32.mrf.mxu0
  %v1747 = vpop.f32.mrf.mxu0
  %v1748 = vadd.f32 0.0, %v1747
  %v1749 = vpop.f32.mrf.mxu0
  %1750 = vmatprep.mubr.bf16.mxu0 0
  %1751 = vmatmul.mubr.bf16.gmra.mxu0 %v987
  %v1752 = vpop.f32.mrf.mxu0
  %v1753 = vadd.f32 0.0, %v1752
  %v1754 = vpop.f32.mrf.mxu0
  %v1755 = vpop.f32.mrf.mxu0
  %v1756 = vadd.f32 0.0, %v1755
  %v1757 = vpop.f32.mrf.mxu0
  %1758 = vmatprep.mubr.bf16.mxu0 0
  %1759 = vmatmul.mubr.bf16.gmra.mxu0 %v990
  %v1760 = vpop.f32.mrf.mxu0
  %v1761 = vadd.f32 0.0, %v1760
  %v1762 = vpop.f32.mrf.mxu0
  %v1763 = vpop.f32.mrf.mxu0
  %v1764 = vadd.f32 0.0, %v1763
  %v1765 = vpop.f32.mrf.mxu0
  %1766 = vmatprep.mubr.bf16.mxu0 0
  %1767 = vmatmul.mubr.bf16.gmra.mxu0 %v993
  %v1768 = vpop.f32.mrf.mxu0
  %v1769 = vadd.f32 0.0, %v1768
  %v1770 = vpop.f32.mrf.mxu0
  %v1771 = vpop.f32.mrf.mxu0
  %v1772 = vadd.f32 0.0, %v1771
  %v1773 = vpop.f32.mrf.mxu0
  %1774 = vmatprep.mubr.bf16.mxu0 0
  %1775 = vmatmul.mubr.bf16.gmra.mxu0 %v996
  %v1776 = vpop.f32.mrf.mxu0
  %v1777 = vadd.f32 0.0, %v1776
  %v1778 = vpop.f32.mrf.mxu0
  %v1779 = vpop.f32.mrf.mxu0
  %v1780 = vadd.f32 0.0, %v1779
  %v1781 = vpop.f32.mrf.mxu0
  %1782 = vmatprep.mubr.bf16.mxu0 0
  %1783 = vmatmul.mubr.bf16.gmra.mxu0 %v999
  %v1784 = vpop.f32.mrf.mxu0
  %v1785 = vadd.f32 0.0, %v1784
  %v1786 = vpop.f32.mrf.mxu0
  %v1787 = vpop.f32.mrf.mxu0
  %v1788 = vadd.f32 0.0, %v1787
  %v1789 = vpop.f32.mrf.mxu0
  %1790 = vmatprep.mubr.bf16.mxu0 0
  %1791 = vmatmul.mubr.bf16.gmra.mxu0 %v1002
  %v1792 = vpop.f32.mrf.mxu0
  %v1793 = vadd.f32 0.0, %v1792
  %v1794 = vpop.f32.mrf.mxu0
  %v1795 = vpop.f32.mrf.mxu0
  %v1796 = vadd.f32 0.0, %v1795
  %v1797 = vpop.f32.mrf.mxu0
  %1798 = vmatprep.mubr.bf16.mxu0 0
  %1799 = vmatmul.mubr.bf16.gmra.mxu0 %v1005
  %v1800 = vpop.f32.mrf.mxu0
  %v1801 = vadd.f32 0.0, %v1800
  %v1802 = vpop.f32.mrf.mxu0
  %v1803 = vpop.f32.mrf.mxu0
  %v1804 = vadd.f32 0.0, %v1803
  %v1805 = vpop.f32.mrf.mxu0
  %1806 = vmatprep.mubr.bf16.mxu0 0
  %1807 = vmatmul.mubr.bf16.gmra.mxu0 %v1008
  %v1808 = vpop.f32.mrf.mxu0
  %v1809 = vadd.f32 0.0, %v1808
  %v1810 = vpop.f32.mrf.mxu0
  %v1811 = vpop.f32.mrf.mxu0
  %v1812 = vadd.f32 0.0, %v1811
  %v1813 = vpop.f32.mrf.mxu0
  %1814 = vmatprep.mubr.bf16.mxu0 0
  %1815 = vmatmul.mubr.bf16.gmra.mxu0 %v1011
  %v1816 = vpop.f32.mrf.mxu0
  %v1817 = vadd.f32 0.0, %v1816
  %v1818 = vpop.f32.mrf.mxu0
  %v1819 = vpop.f32.mrf.mxu0
  %v1820 = vadd.f32 0.0, %v1819
  %v1821 = vpop.f32.mrf.mxu0
  %1822 = vmatprep.mubr.bf16.mxu0 0
  %1823 = vmatmul.mubr.bf16.gmra.mxu0 %v1014
  %v1824 = vpop.f32.mrf.mxu0
  %v1825 = vadd.f32 0.0, %v1824
  %v1826 = vpop.f32.mrf.mxu0
  %v1827 = vpop.f32.mrf.mxu0
  %v1828 = vadd.f32 0.0, %v1827
  %v1829 = vpop.f32.mrf.mxu0
  %1830 = vmatprep.mubr.bf16.mxu0 0
  %1831 = vmatmul.mubr.bf16.gmra.mxu0 %v1017
  %v1832 = vpop.f32.mrf.mxu0
  %v1833 = vadd.f32 0.0, %v1832
  %v1834 = vpop.f32.mrf.mxu0
  %v1835 = vpop.f32.mrf.mxu0
  %v1836 = vadd.f32 0.0, %v1835
  %v1837 = vpop.f32.mrf.mxu0
  %1838 = vmatprep.mubr.bf16.mxu0 0
  %1839 = vmatmul.mubr.bf16.gmra.mxu0 %v1020
  %v1840 = vpop.f32.mrf.mxu0
  %v1841 = vadd.f32 0.0, %v1840
  %v1842 = vpop.f32.mrf.mxu0
  %v1843 = vpop.f32.mrf.mxu0
  %v1844 = vadd.f32 0.0, %v1843
  %v1845 = vpop.f32.mrf.mxu0
  %1846 = vmatprep.mubr.bf16.mxu0 0
  %1847 = vmatmul.mubr.bf16.gmra.mxu0 %v1023
  %v1848 = vpop.f32.mrf.mxu0
  %v1849 = vadd.f32 0.0, %v1848
  %v1850 = vpop.f32.mrf.mxu0
  %v1851 = vpop.f32.mrf.mxu0
  %v1852 = vadd.f32 0.0, %v1851
  %v1853 = vpop.f32.mrf.mxu0
  %1854 = vmatprep.mubr.bf16.mxu0 0
  %1855 = vmatmul.mubr.bf16.gmra.mxu0 %v1026
  %v1856 = vpop.f32.mrf.mxu0
  %v1857 = vadd.f32 0.0, %v1856
  %v1858 = vpop.f32.mrf.mxu0
  %v1859 = vpop.f32.mrf.mxu0
  %v1860 = vadd.f32 0.0, %v1859
  %v1861 = vpop.f32.mrf.mxu0
  %1862 = vmatprep.mubr.bf16.mxu0 0
  %1863 = vmatmul.mubr.bf16.gmra.mxu0 %v1029
  %v1864 = vpop.f32.mrf.mxu0
  %v1865 = vadd.f32 0.0, %v1864
  %v1866 = vpop.f32.mrf.mxu0
  %v1867 = vpop.f32.mrf.mxu0
  %v1868 = vadd.f32 0.0, %v1867
  %v1869 = vpop.f32.mrf.mxu0
  %1870 = vdwg.mxu0
  %vm1871 = vcmask 261120
  %v1872 = vsel %vm1871, %v1073, -inf
  %v1873 = vsel %vm1871, %v1172, -inf
  %v1874 = vmax.f32 %v1872, %v1873
  %v1875 = vsel %vm1871, %v1273, -inf
  %v1876 = vmax.f32 %v1874, %v1875
  %v1877 = vsel %vm1871, %v1372, -inf
  %v1878 = vmax.f32 %v1876, %v1877
  %v1879 = vsel %vm1871, %v1076, -inf
  %v1880 = vsel %vm1871, %v1177, -inf
  %v1881 = vmax.f32 %v1879, %v1880
  %v1882 = vsel %vm1871, %v1276, -inf
  %v1883 = vmax.f32 %v1881, %v1882
  %v1884 = vsel %vm1871, %v1377, -inf
  %v1885 = vmax.f32 %v1883, %v1884
  %v1886 = vsel %vm1871, %v1081, -inf
  %v1887 = vsel %vm1871, %v1180, -inf
  %v1888 = vmax.f32 %v1886, %v1887
  %v1889 = vsel %vm1871, %v1281, -inf
  %v1890 = vmax.f32 %v1888, %v1889
  %v1891 = vsel %vm1871, %v1380, -inf
  %v1892 = vmax.f32 %v1890, %v1891
  %v1893 = vsel %vm1871, %v1084, -inf
  %v1894 = vsel %vm1871, %v1185, -inf
  %v1895 = vmax.f32 %v1893, %v1894
  %v1896 = vsel %vm1871, %v1284, -inf
  %v1897 = vmax.f32 %v1895, %v1896
  %v1898 = vsel %vm1871, %v1385, -inf
  %v1899 = vmax.f32 %v1897, %v1898
  %v1900 = vsel %vm1871, %v1089, -inf
  %v1901 = vsel %vm1871, %v1188, -inf
  %v1902 = vmax.f32 %v1900, %v1901
  %v1903 = vsel %vm1871, %v1289, -inf
  %v1904 = vmax.f32 %v1902, %v1903
  %v1905 = vsel %vm1871, %v1388, -inf
  %v1906 = vmax.f32 %v1904, %v1905
  %v1907 = vsel %vm1871, %v1092, -inf
  %v1908 = vsel %vm1871, %v1193, -inf
  %v1909 = vmax.f32 %v1907, %v1908
  %v1910 = vsel %vm1871, %v1292, -inf
  %v1911 = vmax.f32 %v1909, %v1910
  %v1912 = vsel %vm1871, %v1393, -inf
  %v1913 = vmax.f32 %v1911, %v1912
  %v1914 = vsel %vm1871, %v1097, -inf
  %v1915 = vsel %vm1871, %v1196, -inf
  %v1916 = vmax.f32 %v1914, %v1915
  %v1917 = vsel %vm1871, %v1297, -inf
  %v1918 = vmax.f32 %v1916, %v1917
  %v1919 = vsel %vm1871, %v1396, -inf
  %v1920 = vmax.f32 %v1918, %v1919
  %v1921 = vsel %vm1871, %v1100, -inf
  %v1922 = vsel %vm1871, %v1201, -inf
  %v1923 = vmax.f32 %v1921, %v1922
  %v1924 = vsel %vm1871, %v1300, -inf
  %v1925 = vmax.f32 %v1923, %v1924
  %v1926 = vsel %vm1871, %v1401, -inf
  %v1927 = vmax.f32 %v1925, %v1926
  %v1928 = vsel %vm1871, %v1105, -inf
  %v1929 = vsel %vm1871, %v1204, -inf
  %v1930 = vmax.f32 %v1928, %v1929
  %v1931 = vsel %vm1871, %v1305, -inf
  %v1932 = vmax.f32 %v1930, %v1931
  %v1933 = vsel %vm1871, %v1404, -inf
  %v1934 = vmax.f32 %v1932, %v1933
  %v1935 = vsel %vm1871, %v1108, -inf
  %v1936 = vsel %vm1871, %v1209, -inf
  %v1937 = vmax.f32 %v1935, %v1936
  %v1938 = vsel %vm1871, %v1308, -inf
  %v1939 = vmax.f32 %v1937, %v1938
  %v1940 = vsel %vm1871, %v1409, -inf
  %v1941 = vmax.f32 %v1939, %v1940
  %v1942 = vsel %vm1871, %v1113, -inf
  %v1943 = vsel %vm1871, %v1212, -inf
  %v1944 = vmax.f32 %v1942, %v1943
  %v1945 = vsel %vm1871, %v1313, -inf
  %v1946 = vmax.f32 %v1944, %v1945
  %v1947 = vsel %vm1871, %v1412, -inf
  %v1948 = vmax.f32 %v1946, %v1947
  %v1949 = vsel %vm1871, %v1116, -inf
  %v1950 = vsel %vm1871, %v1217, -inf
  %v1951 = vmax.f32 %v1949, %v1950
  %v1952 = vsel %vm1871, %v1316, -inf
  %v1953 = vmax.f32 %v1951, %v1952
  %v1954 = vsel %vm1871, %v1417, -inf
  %v1955 = vmax.f32 %v1953, %v1954
  %v1956 = vsel %vm1871, %v1121, -inf
  %v1957 = vsel %vm1871, %v1220, -inf
  %v1958 = vmax.f32 %v1956, %v1957
  %v1959 = vsel %vm1871, %v1321, -inf
  %v1960 = vmax.f32 %v1958, %v1959
  %v1961 = vsel %vm1871, %v1420, -inf
  %v1962 = vmax.f32 %v1960, %v1961
  %v1963 = vsel %vm1871, %v1124, -inf
  %v1964 = vsel %vm1871, %v1225, -inf
  %v1965 = vmax.f32 %v1963, %v1964
  %v1966 = vsel %vm1871, %v1324, -inf
  %v1967 = vmax.f32 %v1965, %v1966
  %v1968 = vsel %vm1871, %v1425, -inf
  %v1969 = vmax.f32 %v1967, %v1968
  %v1970 = vsel %vm1871, %v1129, -inf
  %v1971 = vsel %vm1871, %v1228, -inf
  %v1972 = vmax.f32 %v1970, %v1971
  %v1973 = vsel %vm1871, %v1329, -inf
  %v1974 = vmax.f32 %v1972, %v1973
  %v1975 = vsel %vm1871, %v1428, -inf
  %v1976 = vmax.f32 %v1974, %v1975
  %v1977 = vsel %vm1871, %v1132, -inf
  %v1978 = vsel %vm1871, %v1233, -inf
  %v1979 = vmax.f32 %v1977, %v1978
  %v1980 = vsel %vm1871, %v1332, -inf
  %v1981 = vmax.f32 %v1979, %v1980
  %v1982 = vsel %vm1871, %v1433, -inf
  %v1983 = vmax.f32 %v1981, %v1982
  %v1984 = vsel %vm1871, %v1137, -inf
  %v1985 = vsel %vm1871, %v1236, -inf
  %v1986 = vmax.f32 %v1984, %v1985
  %v1987 = vsel %vm1871, %v1337, -inf
  %v1988 = vmax.f32 %v1986, %v1987
  %v1989 = vsel %vm1871, %v1436, -inf
  %v1990 = vmax.f32 %v1988, %v1989
  %v1991 = vsel %vm1871, %v1140, -inf
  %v1992 = vsel %vm1871, %v1241, -inf
  %v1993 = vmax.f32 %v1991, %v1992
  %v1994 = vsel %vm1871, %v1340, -inf
  %v1995 = vmax.f32 %v1993, %v1994
  %v1996 = vsel %vm1871, %v1441, -inf
  %v1997 = vmax.f32 %v1995, %v1996
  %v1998 = vsel %vm1871, %v1145, -inf
  %v1999 = vsel %vm1871, %v1244, -inf
  %v2000 = vmax.f32 %v1998, %v1999
  %v2001 = vsel %vm1871, %v1345, -inf
  %v2002 = vmax.f32 %v2000, %v2001
  %v2003 = vsel %vm1871, %v1444, -inf
  %v2004 = vmax.f32 %v2002, %v2003
  %v2005 = vsel %vm1871, %v1148, -inf
  %v2006 = vsel %vm1871, %v1249, -inf
  %v2007 = vmax.f32 %v2005, %v2006
  %v2008 = vsel %vm1871, %v1348, -inf
  %v2009 = vmax.f32 %v2007, %v2008
  %v2010 = vsel %vm1871, %v1449, -inf
  %v2011 = vmax.f32 %v2009, %v2010
  %v2012 = vsel %vm1871, %v1153, -inf
  %v2013 = vsel %vm1871, %v1252, -inf
  %v2014 = vmax.f32 %v2012, %v2013
  %v2015 = vsel %vm1871, %v1353, -inf
  %v2016 = vmax.f32 %v2014, %v2015
  %v2017 = vsel %vm1871, %v1452, -inf
  %v2018 = vmax.f32 %v2016, %v2017
  %v2019 = vsel %vm1871, %v1156, -inf
  %v2020 = vsel %vm1871, %v1257, -inf
  %v2021 = vmax.f32 %v2019, %v2020
  %v2022 = vsel %vm1871, %v1356, -inf
  %v2023 = vmax.f32 %v2021, %v2022
  %v2024 = vsel %vm1871, %v1457, -inf
  %v2025 = vmax.f32 %v2023, %v2024
  %v2026 = vsel %vm1871, %v1161, -inf
  %v2027 = vsel %vm1871, %v1260, -inf
  %v2028 = vmax.f32 %v2026, %v2027
  %v2029 = vsel %vm1871, %v1361, -inf
  %v2030 = vmax.f32 %v2028, %v2029
  %v2031 = vsel %vm1871, %v1460, -inf
  %v2032 = vmax.f32 %v2030, %v2031
  %v2033 = vsel %vm1871, %v1164, -inf
  %v2034 = vsel %vm1871, %v1265, -inf
  %v2035 = vmax.f32 %v2033, %v2034
  %v2036 = vsel %vm1871, %v1364, -inf
  %v2037 = vmax.f32 %v2035, %v2036
  %v2038 = vsel %vm1871, %v1465, -inf
  %v2039 = vmax.f32 %v2037, %v2038
  %v2040 = vsel %vm1871, %v1169, -inf
  %v2041 = vsel %vm1871, %v1268, -inf
  %v2042 = vmax.f32 %v2040, %v2041
  %v2043 = vsel %vm1871, %v1369, -inf
  %v2044 = vmax.f32 %v2042, %v2043
  %v2045 = vsel %vm1871, %v1468, -inf
  %v2046 = vmax.f32 %v2044, %v2045
  %v2047 = vsel %vm1871, %v1473, -inf
  %v2048 = vsel %vm1871, %v1572, -inf
  %v2049 = vmax.f32 %v2047, %v2048
  %v2050 = vsel %vm1871, %v1673, -inf
  %v2051 = vmax.f32 %v2049, %v2050
  %v2052 = vsel %vm1871, %v1772, -inf
  %v2053 = vmax.f32 %v2051, %v2052
  %v2054 = vsel %vm1871, %v1476, -inf
  %v2055 = vsel %vm1871, %v1577, -inf
  %v2056 = vmax.f32 %v2054, %v2055
  %v2057 = vsel %vm1871, %v1676, -inf
  %v2058 = vmax.f32 %v2056, %v2057
  %v2059 = vsel %vm1871, %v1777, -inf
  %v2060 = vmax.f32 %v2058, %v2059
  %v2061 = vsel %vm1871, %v1481, -inf
  %v2062 = vsel %vm1871, %v1580, -inf
  %v2063 = vmax.f32 %v2061, %v2062
  %v2064 = vsel %vm1871, %v1681, -inf
  %v2065 = vmax.f32 %v2063, %v2064
  %v2066 = vsel %vm1871, %v1780, -inf
  %v2067 = vmax.f32 %v2065, %v2066
  %v2068 = vsel %vm1871, %v1484, -inf
  %v2069 = vsel %vm1871, %v1585, -inf
  %v2070 = vmax.f32 %v2068, %v2069
  %v2071 = vsel %vm1871, %v1684, -inf
  %v2072 = vmax.f32 %v2070, %v2071
  %v2073 = vsel %vm1871, %v1785, -inf
  %v2074 = vmax.f32 %v2072, %v2073
  %v2075 = vsel %vm1871, %v1489, -inf
  %v2076 = vsel %vm1871, %v1588, -inf
  %v2077 = vmax.f32 %v2075, %v2076
  %v2078 = vsel %vm1871, %v1689, -inf
  %v2079 = vmax.f32 %v2077, %v2078
  %v2080 = vsel %vm1871, %v1788, -inf
  %v2081 = vmax.f32 %v2079, %v2080
  %v2082 = vsel %vm1871, %v1492, -inf
  %v2083 = vsel %vm1871, %v1593, -inf
  %v2084 = vmax.f32 %v2082, %v2083
  %v2085 = vsel %vm1871, %v1692, -inf
  %v2086 = vmax.f32 %v2084, %v2085
  %v2087 = vsel %vm1871, %v1793, -inf
  %v2088 = vmax.f32 %v2086, %v2087
  %v2089 = vsel %vm1871, %v1497, -inf
  %v2090 = vsel %vm1871, %v1596, -inf
  %v2091 = vmax.f32 %v2089, %v2090
  %v2092 = vsel %vm1871, %v1697, -inf
  %v2093 = vmax.f32 %v2091, %v2092
  %v2094 = vsel %vm1871, %v1796, -inf
  %v2095 = vmax.f32 %v2093, %v2094
  %v2096 = vsel %vm1871, %v1500, -inf
  %v2097 = vsel %vm1871, %v1601, -inf
  %v2098 = vmax.f32 %v2096, %v2097
  %v2099 = vsel %vm1871, %v1700, -inf
  %v2100 = vmax.f32 %v2098, %v2099
  %v2101 = vsel %vm1871, %v1801, -inf
  %v2102 = vmax.f32 %v2100, %v2101
  %v2103 = vsel %vm1871, %v1505, -inf
  %v2104 = vsel %vm1871, %v1604, -inf
  %v2105 = vmax.f32 %v2103, %v2104
  %v2106 = vsel %vm1871, %v1705, -inf
  %v2107 = vmax.f32 %v2105, %v2106
  %v2108 = vsel %vm1871, %v1804, -inf
  %v2109 = vmax.f32 %v2107, %v2108
  %v2110 = vsel %vm1871, %v1508, -inf
  %v2111 = vsel %vm1871, %v1609, -inf
  %v2112 = vmax.f32 %v2110, %v2111
  %v2113 = vsel %vm1871, %v1708, -inf
  %v2114 = vmax.f32 %v2112, %v2113
  %v2115 = vsel %vm1871, %v1809, -inf
  %v2116 = vmax.f32 %v2114, %v2115
  %v2117 = vsel %vm1871, %v1513, -inf
  %v2118 = vsel %vm1871, %v1612, -inf
  %v2119 = vmax.f32 %v2117, %v2118
  %v2120 = vsel %vm1871, %v1713, -inf
  %v2121 = vmax.f32 %v2119, %v2120
  %v2122 = vsel %vm1871, %v1812, -inf
  %v2123 = vmax.f32 %v2121, %v2122
  %v2124 = vsel %vm1871, %v1516, -inf
  %v2125 = vsel %vm1871, %v1617, -inf
  %v2126 = vmax.f32 %v2124, %v2125
  %v2127 = vsel %vm1871, %v1716, -inf
  %v2128 = vmax.f32 %v2126, %v2127
  %v2129 = vsel %vm1871, %v1817, -inf
  %v2130 = vmax.f32 %v2128, %v2129
  %v2131 = vsel %vm1871, %v1521, -inf
  %v2132 = vsel %vm1871, %v1620, -inf
  %v2133 = vmax.f32 %v2131, %v2132
  %v2134 = vsel %vm1871, %v1721, -inf
  %v2135 = vmax.f32 %v2133, %v2134
  %v2136 = vsel %vm1871, %v1820, -inf
  %v2137 = vmax.f32 %v2135, %v2136
  %v2138 = vsel %vm1871, %v1524, -inf
  %v2139 = vsel %vm1871, %v1625, -inf
  %v2140 = vmax.f32 %v2138, %v2139
  %v2141 = vsel %vm1871, %v1724, -inf
  %v2142 = vmax.f32 %v2140, %v2141
  %v2143 = vsel %vm1871, %v1825, -inf
  %v2144 = vmax.f32 %v2142, %v2143
  %v2145 = vsel %vm1871, %v1529, -inf
  %v2146 = vsel %vm1871, %v1628, -inf
  %v2147 = vmax.f32 %v2145, %v2146
  %v2148 = vsel %vm1871, %v1729, -inf
  %v2149 = vmax.f32 %v2147, %v2148
  %v2150 = vsel %vm1871, %v1828, -inf
  %v2151 = vmax.f32 %v2149, %v2150
  %v2152 = vsel %vm1871, %v1532, -inf
  %v2153 = vsel %vm1871, %v1633, -inf
  %v2154 = vmax.f32 %v2152, %v2153
  %v2155 = vsel %vm1871, %v1732, -inf
  %v2156 = vmax.f32 %v2154, %v2155
  %v2157 = vsel %vm1871, %v1833, -inf
  %v2158 = vmax.f32 %v2156, %v2157
  %v2159 = vsel %vm1871, %v1537, -inf
  %v2160 = vsel %vm1871, %v1636, -inf
  %v2161 = vmax.f32 %v2159, %v2160
  %v2162 = vsel %vm1871, %v1737, -inf
  %v2163 = vmax.f32 %v2161, %v2162
  %v2164 = vsel %vm1871, %v1836, -inf
  %v2165 = vmax.f32 %v2163, %v2164
  %v2166 = vsel %vm1871, %v1540, -inf
  %v2167 = vsel %vm1871, %v1641, -inf
  %v2168 = vmax.f32 %v2166, %v2167
  %v2169 = vsel %vm1871, %v1740, -inf
  %v2170 = vmax.f32 %v2168, %v2169
  %v2171 = vsel %vm1871, %v1841, -inf
  %v2172 = vmax.f32 %v2170, %v2171
  %v2173 = vsel %vm1871, %v1545, -inf
  %v2174 = vsel %vm1871, %v1644, -inf
  %v2175 = vmax.f32 %v2173, %v2174
  %v2176 = vsel %vm1871, %v1745, -inf
  %v2177 = vmax.f32 %v2175, %v2176
  %v2178 = vsel %vm1871, %v1844, -inf
  %v2179 = vmax.f32 %v2177, %v2178
  %v2180 = vsel %vm1871, %v1548, -inf
  %v2181 = vsel %vm1871, %v1649, -inf
  %v2182 = vmax.f32 %v2180, %v2181
  %v2183 = vsel %vm1871, %v1748, -inf
  %v2184 = vmax.f32 %v2182, %v2183
  %v2185 = vsel %vm1871, %v1849, -inf
  %v2186 = vmax.f32 %v2184, %v2185
  %v2187 = vsel %vm1871, %v1553, -inf
  %v2188 = vsel %vm1871, %v1652, -inf
  %v2189 = vmax.f32 %v2187, %v2188
  %v2190 = vsel %vm1871, %v1753, -inf
  %v2191 = vmax.f32 %v2189, %v2190
  %v2192 = vsel %vm1871, %v1852, -inf
  %v2193 = vmax.f32 %v2191, %v2192
  %v2194 = vsel %vm1871, %v1556, -inf
  %v2195 = vsel %vm1871, %v1657, -inf
  %v2196 = vmax.f32 %v2194, %v2195
  %v2197 = vsel %vm1871, %v1756, -inf
  %v2198 = vmax.f32 %v2196, %v2197
  %v2199 = vsel %vm1871, %v1857, -inf
  %v2200 = vmax.f32 %v2198, %v2199
  %v2201 = vsel %vm1871, %v1561, -inf
  %v2202 = vsel %vm1871, %v1660, -inf
  %v2203 = vmax.f32 %v2201, %v2202
  %v2204 = vsel %vm1871, %v1761, -inf
  %v2205 = vmax.f32 %v2203, %v2204
  %v2206 = vsel %vm1871, %v1860, -inf
  %v2207 = vmax.f32 %v2205, %v2206
  %v2208 = vsel %vm1871, %v1564, -inf
  %v2209 = vsel %vm1871, %v1665, -inf
  %v2210 = vmax.f32 %v2208, %v2209
  %v2211 = vsel %vm1871, %v1764, -inf
  %v2212 = vmax.f32 %v2210, %v2211
  %v2213 = vsel %vm1871, %v1865, -inf
  %v2214 = vmax.f32 %v2212, %v2213
  %v2215 = vsel %vm1871, %v1569, -inf
  %v2216 = vsel %vm1871, %v1668, -inf
  %v2217 = vmax.f32 %v2215, %v2216
  %v2218 = vsel %vm1871, %v1769, -inf
  %v2219 = vmax.f32 %v2217, %v2218
  %v2220 = vsel %vm1871, %v1868, -inf
  %v2221 = vmax.f32 %v2219, %v2220
  %v2222 = vld [vmem:[%s2] sm:$0x1]
  %v2224 = vlaneseq
  %v2225 = vshrl.u32 %v2224, 7
  %v2226 = vsub.s32 0, %v2225
  %v2227 = vrot.slane %v2222, %v2226
  %v2229 = vadd.f32 %v1878, %v2227
  %v2230 = vadd.f32 %v1885, %v2227
  %v2231 = vadd.f32 %v1892, %v2227
  %v2232 = vadd.f32 %v1899, %v2227
  %v2233 = vadd.f32 %v1906, %v2227
  %v2234 = vadd.f32 %v1913, %v2227
  %v2235 = vadd.f32 %v1920, %v2227
  %v2236 = vadd.f32 %v1927, %v2227
  %v2237 = vadd.f32 %v1934, %v2227
  %v2238 = vadd.f32 %v1941, %v2227
  %v2239 = vadd.f32 %v1948, %v2227
  %v2240 = vadd.f32 %v1955, %v2227
  %v2241 = vadd.f32 %v1962, %v2227
  %v2242 = vadd.f32 %v1969, %v2227
  %v2243 = vadd.f32 %v1976, %v2227
  %v2244 = vadd.f32 %v1983, %v2227
  %v2245 = vadd.f32 %v1990, %v2227
  %v2246 = vadd.f32 %v1997, %v2227
  %v2247 = vadd.f32 %v2004, %v2227
  %v2248 = vadd.f32 %v2011, %v2227
  %v2249 = vadd.f32 %v2018, %v2227
  %v2250 = vadd.f32 %v2025, %v2227
  %v2251 = vadd.f32 %v2032, %v2227
  %v2252 = vadd.f32 %v2039, %v2227
  %v2253 = vadd.f32 %v2046, %v2227
  %v2254 = vadd.f32 %v2053, %v2227
  %v2255 = vadd.f32 %v2060, %v2227
  %v2256 = vadd.f32 %v2067, %v2227
  %v2257 = vadd.f32 %v2074, %v2227
  %v2258 = vadd.f32 %v2081, %v2227
  %v2259 = vadd.f32 %v2088, %v2227
  %v2260 = vadd.f32 %v2095, %v2227
  %v2261 = vadd.f32 %v2102, %v2227
  %v2262 = vadd.f32 %v2109, %v2227
  %v2263 = vadd.f32 %v2116, %v2227
  %v2264 = vadd.f32 %v2123, %v2227
  %v2265 = vadd.f32 %v2130, %v2227
  %v2266 = vadd.f32 %v2137, %v2227
  %v2267 = vadd.f32 %v2144, %v2227
  %v2268 = vadd.f32 %v2151, %v2227
  %v2269 = vadd.f32 %v2158, %v2227
  %v2270 = vadd.f32 %v2165, %v2227
  %v2271 = vadd.f32 %v2172, %v2227
  %v2272 = vadd.f32 %v2179, %v2227
  %v2273 = vadd.f32 %v2186, %v2227
  %v2274 = vadd.f32 %v2193, %v2227
  %v2275 = vadd.f32 %v2200, %v2227
  %v2276 = vadd.f32 %v2207, %v2227
  %v2277 = vadd.f32 %v2214, %v2227
  %v2278 = vadd.f32 %v2221, %v2227
  %v2279 = vmax.f32 %v2229, 0.0
  %v2280 = vmax.f32 %v2230, 0.0
  %v2281 = vmax.f32 %v2231, 0.0
  %v2282 = vmax.f32 %v2232, 0.0
  %v2283 = vmax.f32 %v2233, 0.0
  %v2284 = vmax.f32 %v2234, 0.0
  %v2285 = vmax.f32 %v2235, 0.0
  %v2286 = vmax.f32 %v2236, 0.0
  %v2287 = vmax.f32 %v2237, 0.0
  %v2288 = vmax.f32 %v2238, 0.0
  %v2289 = vmax.f32 %v2239, 0.0
  %v2290 = vmax.f32 %v2240, 0.0
  %v2291 = vmax.f32 %v2241, 0.0
  %v2292 = vmax.f32 %v2242, 0.0
  %v2293 = vmax.f32 %v2243, 0.0
  %v2294 = vmax.f32 %v2244, 0.0
  %v2295 = vmax.f32 %v2245, 0.0
  %v2296 = vmax.f32 %v2246, 0.0
  %v2297 = vmax.f32 %v2247, 0.0
  %v2298 = vmax.f32 %v2248, 0.0
  %v2299 = vmax.f32 %v2249, 0.0
  %v2300 = vmax.f32 %v2250, 0.0
  %v2301 = vmax.f32 %v2251, 0.0
  %v2302 = vmax.f32 %v2252, 0.0
  %v2303 = vmax.f32 %v2253, 0.0
  %v2304 = vmax.f32 %v2254, 0.0
  %v2305 = vmax.f32 %v2255, 0.0
  %v2306 = vmax.f32 %v2256, 0.0
  %v2307 = vmax.f32 %v2257, 0.0
  %v2308 = vmax.f32 %v2258, 0.0
  %v2309 = vmax.f32 %v2259, 0.0
  %v2310 = vmax.f32 %v2260, 0.0
  %v2311 = vmax.f32 %v2261, 0.0
  %v2312 = vmax.f32 %v2262, 0.0
  %v2313 = vmax.f32 %v2263, 0.0
  %v2314 = vmax.f32 %v2264, 0.0
  %v2315 = vmax.f32 %v2265, 0.0
  %v2316 = vmax.f32 %v2266, 0.0
  %v2317 = vmax.f32 %v2267, 0.0
  %v2318 = vmax.f32 %v2268, 0.0
  %v2319 = vmax.f32 %v2269, 0.0
  %v2320 = vmax.f32 %v2270, 0.0
  %v2321 = vmax.f32 %v2271, 0.0
  %v2322 = vmax.f32 %v2272, 0.0
  %v2323 = vmax.f32 %v2273, 0.0
  %v2324 = vmax.f32 %v2274, 0.0
  %v2325 = vmax.f32 %v2275, 0.0
  %v2326 = vmax.f32 %v2276, 0.0
  %v2327 = vmax.f32 %v2277, 0.0
  %v2328 = vmax.f32 %v2278, 0.0
  %v2329 = vpack.c.bf16 %v2280, %v2279
  %v2330 = vpack.c.bf16 %v2282, %v2281
  %v2331 = vpack.c.bf16 %v2284, %v2283
  %v2332 = vpack.c.bf16 %v2286, %v2285
  %v2333 = vpack.c.bf16 %v2288, %v2287
  %v2334 = vpack.c.bf16 %v2290, %v2289
  %v2335 = vpack.c.bf16 %v2292, %v2291
  %v2336 = vpack.c.bf16 %v2294, %v2293
  %v2337 = vpack.c.bf16 %v2296, %v2295
  %v2338 = vpack.c.bf16 %v2298, %v2297
  %v2339 = vpack.c.bf16 %v2300, %v2299
  %v2340 = vpack.c.bf16 %v2302, %v2301
  %v2341 = vpack.c.bf16 %v2303, %v2303
  %v2342 = vpack.c.bf16 %v2305, %v2304
  %v2343 = vpack.c.bf16 %v2307, %v2306
  %v2344 = vpack.c.bf16 %v2309, %v2308
  %v2345 = vpack.c.bf16 %v2311, %v2310
  %v2346 = vpack.c.bf16 %v2313, %v2312
  %v2347 = vpack.c.bf16 %v2315, %v2314
  %v2348 = vpack.c.bf16 %v2317, %v2316
  %v2349 = vpack.c.bf16 %v2319, %v2318
  %v2350 = vpack.c.bf16 %v2321, %v2320
  %v2351 = vpack.c.bf16 %v2323, %v2322
  %v2352 = vpack.c.bf16 %v2325, %v2324
  %v2353 = vpack.c.bf16 %v2327, %v2326
  %v2354 = vpack.c.bf16 %v2328, %v2328
  %v2381 = vunpack.c.l.b16 %v2329
  %v2382 = vunpack.c.h.b16 %v2329
  %v2383 = vunpack.c.l.b16 %v2330
  %v2384 = vunpack.c.h.b16 %v2330
  %v2385 = vunpack.c.l.b16 %v2331
  %v2386 = vunpack.c.h.b16 %v2331
  %v2387 = vunpack.c.l.b16 %v2332
  %v2388 = vunpack.c.h.b16 %v2332
  %v2389 = vunpack.c.l.b16 %v2333
  %v2390 = vunpack.c.h.b16 %v2333
  %v2391 = vunpack.c.l.b16 %v2334
  %v2392 = vunpack.c.h.b16 %v2334
  %v2393 = vunpack.c.l.b16 %v2335
  %v2394 = vunpack.c.h.b16 %v2335
  %v2395 = vunpack.c.l.b16 %v2336
  %v2396 = vunpack.c.h.b16 %v2336
  %v2397 = vunpack.c.l.b16 %v2337
  %v2398 = vunpack.c.h.b16 %v2337
  %v2399 = vunpack.c.l.b16 %v2338
  %v2400 = vunpack.c.h.b16 %v2338
  %v2401 = vunpack.c.l.b16 %v2339
  %v2402 = vunpack.c.h.b16 %v2339
  %v2403 = vunpack.c.l.b16 %v2340
  %v2404 = vunpack.c.h.b16 %v2340
  %v2405 = vunpack.c.l.b16 %v2341
  %v2406 = vunpack.c.l.b16 %v2342
  %v2407 = vunpack.c.h.b16 %v2342
  %v2408 = vunpack.c.l.b16 %v2343
  %v2409 = vunpack.c.h.b16 %v2343
  %v2410 = vunpack.c.l.b16 %v2344
  %v2411 = vunpack.c.h.b16 %v2344
  %v2412 = vunpack.c.l.b16 %v2345
  %v2413 = vunpack.c.h.b16 %v2345
  %v2414 = vunpack.c.l.b16 %v2346
  %v2415 = vunpack.c.h.b16 %v2346
  %v2416 = vunpack.c.l.b16 %v2347
  %v2417 = vunpack.c.h.b16 %v2347
  %v2418 = vunpack.c.l.b16 %v2348
  %v2419 = vunpack.c.h.b16 %v2348
  %v2420 = vunpack.c.l.b16 %v2349
  %v2421 = vunpack.c.h.b16 %v2349
  %v2422 = vunpack.c.l.b16 %v2350
  %v2423 = vunpack.c.h.b16 %v2350
  %v2424 = vunpack.c.l.b16 %v2351
  %v2425 = vunpack.c.h.b16 %v2351
  %v2426 = vunpack.c.l.b16 %v2352
  %v2427 = vunpack.c.h.b16 %v2352
  %v2428 = vunpack.c.l.b16 %v2353
  %v2429 = vunpack.c.h.b16 %v2353
  %v2430 = vunpack.c.l.b16 %v2354
  %v2431 = vpack.c.b16 %v2381, %v2381
  %v2432 = vpack.c.b16 %v2382, %v2382
  %v2433 = vpack.c.b16 %v2383, %v2383
  %v2434 = vpack.c.b16 %v2384, %v2384
  %v2435 = vpack.c.b16 %v2385, %v2385
  %v2436 = vpack.c.b16 %v2386, %v2386
  %v2437 = vpack.c.b16 %v2387, %v2387
  %v2438 = vpack.c.b16 %v2388, %v2388
  %v2439 = vpack.c.b16 %v2389, %v2389
  %v2440 = vpack.c.b16 %v2390, %v2390
  %v2441 = vpack.c.b16 %v2391, %v2391
  %v2442 = vpack.c.b16 %v2392, %v2392
  %v2443 = vpack.c.b16 %v2393, %v2393
  %v2444 = vpack.c.b16 %v2394, %v2394
  %v2445 = vpack.c.b16 %v2395, %v2395
  %v2446 = vpack.c.b16 %v2396, %v2396
  %v2447 = vpack.c.b16 %v2397, %v2397
  %v2448 = vpack.c.b16 %v2398, %v2398
  %v2449 = vpack.c.b16 %v2399, %v2399
  %v2450 = vpack.c.b16 %v2400, %v2400
  %v2451 = vpack.c.b16 %v2401, %v2401
  %v2452 = vpack.c.b16 %v2402, %v2402
  %v2453 = vpack.c.b16 %v2403, %v2403
  %v2454 = vpack.c.b16 %v2404, %v2404
  %v2455 = vpack.c.b16 %v2405, %v2405
  %v2456 = vpack.c.b16 %v2406, %v2406
  %v2457 = vpack.c.b16 %v2407, %v2407
  %v2458 = vpack.c.b16 %v2408, %v2408
  %v2459 = vpack.c.b16 %v2409, %v2409
  %v2460 = vpack.c.b16 %v2410, %v2410
  %v2461 = vpack.c.b16 %v2411, %v2411
  %v2462 = vpack.c.b16 %v2412, %v2412
  %v2463 = vpack.c.b16 %v2413, %v2413
  %v2464 = vpack.c.b16 %v2414, %v2414
  %v2465 = vpack.c.b16 %v2415, %v2415
  %v2466 = vpack.c.b16 %v2416, %v2416
  %v2467 = vpack.c.b16 %v2417, %v2417
  %v2468 = vpack.c.b16 %v2418, %v2418
  %v2469 = vpack.c.b16 %v2419, %v2419
  %v2470 = vpack.c.b16 %v2420, %v2420
  %v2471 = vpack.c.b16 %v2421, %v2421
  %v2472 = vpack.c.b16 %v2422, %v2422
  %v2473 = vpack.c.b16 %v2423, %v2423
  %v2474 = vpack.c.b16 %v2424, %v2424
  %v2475 = vpack.c.b16 %v2425, %v2425
  %v2476 = vpack.c.b16 %v2426, %v2426
  %v2477 = vpack.c.b16 %v2427, %v2427
  %v2478 = vpack.c.b16 %v2428, %v2428
  %v2479 = vpack.c.b16 %v2429, %v2429
  %v2480 = vpack.c.b16 %v2430, %v2430
  %vm2531 = vcmask 257024
  %2532 = vst.msk [vmem:[%s3] sm:$0xf] %vm2531, %v2431
  %2533 = vst.msk [vmem:[%s3 + $0x4] sm:$0xf] %vm2531, %v2432
  %2534 = vst.msk [vmem:[%s3 + $0x8] sm:$0xf] %vm2531, %v2433
  %2535 = vst.msk [vmem:[%s3 + $0xc] sm:$0xf] %vm2531, %v2434
  %2536 = vst.msk [vmem:[%s3 + $0x10] sm:$0xf] %vm2531, %v2435
  %2537 = vst.msk [vmem:[%s3 + $0x14] sm:$0xf] %vm2531, %v2436
  %2538 = vst.msk [vmem:[%s3 + $0x18] sm:$0xf] %vm2531, %v2437
  %2539 = vst.msk [vmem:[%s3 + $0x1c] sm:$0xf] %vm2531, %v2438
  %2540 = vst.msk [vmem:[%s3 + $0x20] sm:$0xf] %vm2531, %v2439
  %2541 = vst.msk [vmem:[%s3 + $0x24] sm:$0xf] %vm2531, %v2440
  %2542 = vst.msk [vmem:[%s3 + $0x28] sm:$0xf] %vm2531, %v2441
  %2543 = vst.msk [vmem:[%s3 + $0x2c] sm:$0xf] %vm2531, %v2442
  %2544 = vst.msk [vmem:[%s3 + $0x30] sm:$0xf] %vm2531, %v2443
  %2545 = vst.msk [vmem:[%s3 + $0x34] sm:$0xf] %vm2531, %v2444
  %2546 = vst.msk [vmem:[%s3 + $0x38] sm:$0xf] %vm2531, %v2445
  %2547 = vst.msk [vmem:[%s3 + $0x3c] sm:$0xf] %vm2531, %v2446
  %2548 = vst.msk [vmem:[%s3 + $0x40] sm:$0xf] %vm2531, %v2447
  %2549 = vst.msk [vmem:[%s3 + $0x44] sm:$0xf] %vm2531, %v2448
  %2550 = vst.msk [vmem:[%s3 + $0x48] sm:$0xf] %vm2531, %v2449
  %2551 = vst.msk [vmem:[%s3 + $0x4c] sm:$0xf] %vm2531, %v2450
  %2552 = vst.msk [vmem:[%s3 + $0x50] sm:$0xf] %vm2531, %v2451
  %2553 = vst.msk [vmem:[%s3 + $0x54] sm:$0xf] %vm2531, %v2452
  %2554 = vst.msk [vmem:[%s3 + $0x58] sm:$0xf] %vm2531, %v2453
  %2555 = vst.msk [vmem:[%s3 + $0x5c] sm:$0xf] %vm2531, %v2454
  %2556 = vst.msk [vmem:[%s3 + $0x60] sm:$0xf] %vm2531, %v2455
  %2557 = vst.msk [vmem:[%s3 + $0x64] sm:$0xf] %vm2531, %v2456
  %2558 = vst.msk [vmem:[%s3 + $0x68] sm:$0xf] %vm2531, %v2457
  %2559 = vst.msk [vmem:[%s3 + $0x6c] sm:$0xf] %vm2531, %v2458
  %2560 = vst.msk [vmem:[%s3 + $0x70] sm:$0xf] %vm2531, %v2459
  %2561 = vst.msk [vmem:[%s3 + $0x74] sm:$0xf] %vm2531, %v2460
  %2562 = vst.msk [vmem:[%s3 + $0x78] sm:$0xf] %vm2531, %v2461
  %2563 = vst.msk [vmem:[%s3 + $0x7c] sm:$0xf] %vm2531, %v2462
  %2564 = vst.msk [vmem:[%s3 + $0x80] sm:$0xf] %vm2531, %v2463
  %2565 = vst.msk [vmem:[%s3 + $0x84] sm:$0xf] %vm2531, %v2464
  %2566 = vst.msk [vmem:[%s3 + $0x88] sm:$0xf] %vm2531, %v2465
  %2567 = vst.msk [vmem:[%s3 + $0x8c] sm:$0xf] %vm2531, %v2466
  %2568 = vst.msk [vmem:[%s3 + $0x90] sm:$0xf] %vm2531, %v2467
  %2569 = vst.msk [vmem:[%s3 + $0x94] sm:$0xf] %vm2531, %v2468
  %2570 = vst.msk [vmem:[%s3 + $0x98] sm:$0xf] %vm2531, %v2469
  %2571 = vst.msk [vmem:[%s3 + $0x9c] sm:$0xf] %vm2531, %v2470
  %2572 = vst.msk [vmem:[%s3 + $0xa0] sm:$0xf] %vm2531, %v2471
  %2573 = vst.msk [vmem:[%s3 + $0xa4] sm:$0xf] %vm2531, %v2472
  %2574 = vst.msk [vmem:[%s3 + $0xa8] sm:$0xf] %vm2531, %v2473
  %2575 = vst.msk [vmem:[%s3 + $0xac] sm:$0xf] %vm2531, %v2474
  %2576 = vst.msk [vmem:[%s3 + $0xb0] sm:$0xf] %vm2531, %v2475
  %2577 = vst.msk [vmem:[%s3 + $0xb4] sm:$0xf] %vm2531, %v2476
  %2578 = vst.msk [vmem:[%s3 + $0xb8] sm:$0xf] %vm2531, %v2477
  %2579 = vst.msk [vmem:[%s3 + $0xbc] sm:$0xf] %vm2531, %v2478
  %2580 = vst.msk [vmem:[%s3 + $0xc0] sm:$0xf] %vm2531, %v2479
  %2581 = vst.msk [vmem:[%s3 + $0xc4] sm:$0xf] %vm2531, %v2480
  // Predicated region
  $region14: #{net_forward.3} parent=0 // pred_check
    _
  $region15: #{net_forward.3} parent=0 // pred_check_branch
    %2583 = sbr.rel (0) target = $region17
  $region16: #{net_forward.3} parent=0 // pred_region
    _
  $region17: #{net_forward.3} parent=0 // pred_fallthru
    _
  // Predicated region
  $region18: #{net_forward.3} parent=0 // pred_check
    _
  $region19: #{net_forward.3} parent=0 // pred_check_branch
    %2585 = sbr.rel (0) target = $region21
  $region20: #{net_forward.3} parent=0 // pred_region
    _
  $region21: #{net_forward.3} parent=0 // pred_fallthru
    _

// kernel: net_forward.4
$region0: #{net_forward.4}
  #allocation0 [shape = 'u32[]', space=smem, size = 0x4, offset = 0x4, fixed_abs, tag = 'smem constant byte address 0x4 - core index']
  #allocation1 [shape = 'u32[144,128]{1,0:T(1,128)}', space=vmem, size = 0x12000, scoped, tag = 'internal scratch']
  %s0 = inlined_call_operand.vmem [shape: bf16[2,224,800], index: 0, kind: input, shape index: {}]
  %s1 = inlined_call_operand.vmem [shape: bf16[800,64], index: 1, kind: input, shape index: {}]
  %s2 = inlined_call_operand.vmem [shape: f32[1,64], index: 2, kind: input, shape index: {}]
  %s3 = inlined_call_operand.vmem [shape: bf16[2,56,64], index: 3, kind: output, shape index: {}]
  %s4 = sld [smem:[#allocation0]]
  $region22: #{net_forward.4} parent=0
    _
  %s6 = ssub.s32 1, %s4
  %s7 = scalar_select 0, %s6, %s4
  // Predicated region
  $region2: #{net_forward.4} parent=0 // pred_check
    _
  $region3: #{net_forward.4} parent=0 // pred_check_branch
    %9 = sbr.rel (0) target = $region5
  $region4: #{net_forward.4} parent=0 // pred_region
    _
  $region5: #{net_forward.4} parent=0 // pred_fallthru
    _
  // Predicated region
  $region6: #{net_forward.4} parent=0 // pred_check
    _
  $region7: #{net_forward.4} parent=0 // pred_check_branch
    %11 = sbr.rel (0) target = $region9
  $region8: #{net_forward.4} parent=0 // pred_region
    _
  $region9: #{net_forward.4} parent=0 // pred_fallthru
    _
  // Predicated region
  $region10: #{net_forward.4} parent=0 // pred_check
    _
  $region11: #{net_forward.4} parent=0 // pred_check_branch
    %13 = sbr.rel (0) target = $region13
  $region12: #{net_forward.4} parent=0 // pred_region
    _
  $region13: #{net_forward.4} parent=0 // pred_fallthru
    _
  %v15 = vld [vmem:[%s0] sm:$0xff]
  %v16 = vld [vmem:[%s0 + $0x8] sm:$0xff]
  %v17 = vld [vmem:[%s0 + $0x10] sm:$0xff]
  %v18 = vld [vmem:[%s0 + $0x18] sm:$0xf]
  %v19 = vld [vmem:[%s0 + $0x1c] sm:$0xff]
  %v20 = vld [vmem:[%s0 + $0x24] sm:$0xff]
  %v21 = vld [vmem:[%s0 + $0x2c] sm:$0xff]
  %v22 = vld [vmem:[%s0 + $0x34] sm:$0xf]
  %v23 = vld [vmem:[%s0 + $0x38] sm:$0xff]
  %v24 = vld [vmem:[%s0 + $0x40] sm:$0xff]
  %v25 = vld [vmem:[%s0 + $0x48] sm:$0xff]
  %v26 = vld [vmem:[%s0 + $0x50] sm:$0xf]
  %v27 = vld [vmem:[%s0 + $0x54] sm:$0xff]
  %v28 = vld [vmem:[%s0 + $0x5c] sm:$0xff]
  %v29 = vld [vmem:[%s0 + $0x64] sm:$0xff]
  %v30 = vld [vmem:[%s0 + $0x6c] sm:$0xf]
  %v31 = vld [vmem:[%s0 + $0x70] sm:$0xff]
  %v32 = vld [vmem:[%s0 + $0x78] sm:$0xff]
  %v33 = vld [vmem:[%s0 + $0x80] sm:$0xff]
  %v34 = vld [vmem:[%s0 + $0x88] sm:$0xf]
  %v35 = vld [vmem:[%s0 + $0x8c] sm:$0xff]
  %v36 = vld [vmem:[%s0 + $0x94] sm:$0xff]
  %v37 = vld [vmem:[%s0 + $0x9c] sm:$0xff]
  %v38 = vld [vmem:[%s0 + $0xa4] sm:$0xf]
  %v39 = vld [vmem:[%s0 + $0xa8] sm:$0xff]
  %v40 = vld [vmem:[%s0 + $0xb0] sm:$0xff]
  %v41 = vld [vmem:[%s0 + $0xb8] sm:$0xff]
  %v42 = vld [vmem:[%s0 + $0xc0] sm:$0xf]
  %v43 = vld [vmem:[%s0 + $0xc4] sm:$0xff]
  %v44 = vld [vmem:[%s0 + $0xcc] sm:$0xff]
  %v45 = vld [vmem:[%s0 + $0xd4] sm:$0xff]
  %v46 = vld [vmem:[%s0 + $0xdc] sm:$0xf]
  %v47 = vld [vmem:[%s0 + $0xe0] sm:$0xff]
  %v48 = vld [vmem:[%s0 + $0xe8] sm:$0xff]
  %v49 = vld [vmem:[%s0 + $0xf0] sm:$0xff]
  %v50 = vld [vmem:[%s0 + $0xf8] sm:$0xf]
  %v51 = vld [vmem:[%s0 + $0xfc] sm:$0xff]
  %v52 = vld [vmem:[%s0 + $0x104] sm:$0xff]
  %v53 = vld [vmem:[%s0 + $0x10c] sm:$0xff]
  %v54 = vld [vmem:[%s0 + $0x114] sm:$0xf]
  %v55 = vld [vmem:[%s0 + $0x118] sm:$0xff]
  %v56 = vld [vmem:[%s0 + $0x120] sm:$0xff]
  %v57 = vld [vmem:[%s0 + $0x128] sm:$0xff]
  %v58 = vld [vmem:[%s0 + $0x130] sm:$0xf]
  %v59 = vld [vmem:[%s0 + $0x134] sm:$0xff]
  %v60 = vld [vmem:[%s0 + $0x13c] sm:$0xff]
  %v61 = vld [vmem:[%s0 + $0x144] sm:$0xff]
  %v62 = vld [vmem:[%s0 + $0x14c] sm:$0xf]
  %v63 = vld [vmem:[%s0 + $0x150] sm:$0xff]
  %v64 = vld [vmem:[%s0 + $0x158] sm:$0xff]
  %v65 = vld [vmem:[%s0 + $0x160] sm:$0xff]
  %v66 = vld [vmem:[%s0 + $0x168] sm:$0xf]
  %v67 = vld [vmem:[%s0 + $0x16c] sm:$0xff]
  %v68 = vld [vmem:[%s0 + $0x174] sm:$0xff]
  %v69 = vld [vmem:[%s0 + $0x17c] sm:$0xff]
  %v70 = vld [vmem:[%s0 + $0x184] sm:$0xf]
  %v71 = vld [vmem:[%s0 + $0x188] sm:$0xff]
  %v72 = vld [vmem:[%s0 + $0x190] sm:$0xff]
  %v73 = vld [vmem:[%s0 + $0x198] sm:$0xff]
  %v74 = vld [vmem:[%s0 + $0x1a0] sm:$0xf]
  %v75 = vld [vmem:[%s0 + $0x1a4] sm:$0xff]
  %v76 = vld [vmem:[%s0 + $0x1ac] sm:$0xff]
  %v77 = vld [vmem:[%s0 + $0x1b4] sm:$0xff]
  %v78 = vld [vmem:[%s0 + $0x1bc] sm:$0xf]
  %v79 = vld [vmem:[%s0 + $0x1c0] sm:$0xff]
  %v80 = vld [vmem:[%s0 + $0x1c8] sm:$0xff]
  %v81 = vld [vmem:[%s0 + $0x1d0] sm:$0xff]
  %v82 = vld [vmem:[%s0 + $0x1d8] sm:$0xf]
  %v83 = vld [vmem:[%s0 + $0x1dc] sm:$0xff]
  %v84 = vld [vmem:[%s0 + $0x1e4] sm:$0xff]
  %v85 = vld [vmem:[%s0 + $0x1ec] sm:$0xff]
  %v86 = vld [vmem:[%s0 + $0x1f4] sm:$0xf]
  %v87 = vld [vmem:[%s0 + $0x1f8] sm:$0xff]
  %v88 = vld [vmem:[%s0 + $0x200] sm:$0xff]
  %v89 = vld [vmem:[%s0 + $0x208] sm:$0xff]
  %v90 = vld [vmem:[%s0 + $0x210] sm:$0xf]
  %v91 = vld [vmem:[%s0 + $0x214] sm:$0xff]
  %v92 = vld [vmem:[%s0 + $0x21c] sm:$0xff]
  %v93 = vld [vmem:[%s0 + $0x224] sm:$0xff]
  %v94 = vld [vmem:[%s0 + $0x22c] sm:$0xf]
  %v95 = vld [vmem:[%s0 + $0x230] sm:$0xff]
  %v96 = vld [vmem:[%s0 + $0x238] sm:$0xff]
  %v97 = vld [vmem:[%s0 + $0x240] sm:$0xff]
  %v98 = vld [vmem:[%s0 + $0x248] sm:$0xf]
  %v99 = vld [vmem:[%s0 + $0x24c] sm:$0xff]
  %v100 = vld [vmem:[%s0 + $0x254] sm:$0xff]
  %v101 = vld [vmem:[%s0 + $0x25c] sm:$0xff]
  %v102 = vld [vmem:[%s0 + $0x264] sm:$0xf]
  %v103 = vld [vmem:[%s0 + $0x268] sm:$0xff]
  %v104 = vld [vmem:[%s0 + $0x270] sm:$0xff]
  %v105 = vld [vmem:[%s0 + $0x278] sm:$0xff]
  %v106 = vld [vmem:[%s0 + $0x280] sm:$0xf]
  %v107 = vld [vmem:[%s0 + $0x284] sm:$0xff]
  %v108 = vld [vmem:[%s0 + $0x28c] sm:$0xff]
  %v109 = vld [vmem:[%s0 + $0x294] sm:$0xff]
  %v110 = vld [vmem:[%s0 + $0x29c] sm:$0xf]
  %v111 = vld [vmem:[%s0 + $0x2a0] sm:$0xff]
  %v112 = vld [vmem:[%s0 + $0x2a8] sm:$0xff]
  %v113 = vld [vmem:[%s0 + $0x2b0] sm:$0xff]
  %v114 = vld [vmem:[%s0 + $0x2b8] sm:$0xf]
  %v115 = vld [vmem:[%s0 + $0x2bc] sm:$0xff]
  %v116 = vld [vmem:[%s0 + $0x2c4] sm:$0xff]
  %v117 = vld [vmem:[%s0 + $0x2cc] sm:$0xff]
  %v118 = vld [vmem:[%s0 + $0x2d4] sm:$0xf]
  %v119 = vld [vmem:[%s0 + $0x2d8] sm:$0xff]
  %v120 = vld [vmem:[%s0 + $0x2e0] sm:$0xff]
  %v121 = vld [vmem:[%s0 + $0x2e8] sm:$0xff]
  %v122 = vld [vmem:[%s0 + $0x2f0] sm:$0xf]
  %v123 = vld [vmem:[%s0 + $0x2f4] sm:$0xff]
  %v124 = vld [vmem:[%s0 + $0x2fc] sm:$0xff]
  %v125 = vld [vmem:[%s0 + $0x304] sm:$0xff]
  %v126 = vld [vmem:[%s0 + $0x30c] sm:$0xf]
  %v127 = vld [vmem:[%s0 + $0x310] sm:$0xff]
  %v128 = vld [vmem:[%s0 + $0x318] sm:$0xff]
  %v129 = vld [vmem:[%s0 + $0x320] sm:$0xff]
  %v130 = vld [vmem:[%s0 + $0x328] sm:$0xf]
  %v131 = vld [vmem:[%s0 + $0x32c] sm:$0xff]
  %v132 = vld [vmem:[%s0 + $0x334] sm:$0xff]
  %v133 = vld [vmem:[%s0 + $0x33c] sm:$0xff]
  %v134 = vld [vmem:[%s0 + $0x344] sm:$0xf]
  %v135 = vld [vmem:[%s0 + $0x348] sm:$0xff]
  %v136 = vld [vmem:[%s0 + $0x350] sm:$0xff]
  %v137 = vld [vmem:[%s0 + $0x358] sm:$0xff]
  %v138 = vld [vmem:[%s0 + $0x360] sm:$0xf]
  %v139 = vld [vmem:[%s0 + $0x364] sm:$0xff]
  %v140 = vld [vmem:[%s0 + $0x36c] sm:$0xff]
  %v141 = vld [vmem:[%s0 + $0x374] sm:$0xff]
  %v142 = vld [vmem:[%s0 + $0x37c] sm:$0xf]
  %v143 = vld [vmem:[%s0 + $0x380] sm:$0xff]
  %v144 = vld [vmem:[%s0 + $0x388] sm:$0xff]
  %v145 = vld [vmem:[%s0 + $0x390] sm:$0xff]
  %v146 = vld [vmem:[%s0 + $0x398] sm:$0xf]
  %v147 = vld [vmem:[%s0 + $0x39c] sm:$0xff]
  %v148 = vld [vmem:[%s0 + $0x3a4] sm:$0xff]
  %v149 = vld [vmem:[%s0 + $0x3ac] sm:$0xff]
  %v150 = vld [vmem:[%s0 + $0x3b4] sm:$0xf]
  %v151 = vld [vmem:[%s0 + $0x3b8] sm:$0xff]
  %v152 = vld [vmem:[%s0 + $0x3c0] sm:$0xff]
  %v153 = vld [vmem:[%s0 + $0x3c8] sm:$0xff]
  %v154 = vld [vmem:[%s0 + $0x3d0] sm:$0xf]
  %v155 = vld [vmem:[%s0 + $0x3d4] sm:$0xff]
  %v156 = vld [vmem:[%s0 + $0x3dc] sm:$0xff]
  %v157 = vld [vmem:[%s0 + $0x3e4] sm:$0xff]
  %v158 = vld [vmem:[%s0 + $0x3ec] sm:$0xf]
  %v159 = vld [vmem:[%s0 + $0x3f0] sm:$0xff]
  %v160 = vld [vmem:[%s0 + $0x3f8] sm:$0xff]
  %v161 = vld [vmem:[%s0 + $0x400] sm:$0xff]
  %v162 = vld [vmem:[%s0 + $0x408] sm:$0xf]
  %v163 = vld [vmem:[%s0 + $0x40c] sm:$0xff]
  %v164 = vld [vmem:[%s0 + $0x414] sm:$0xff]
  %v165 = vld [vmem:[%s0 + $0x41c] sm:$0xff]
  %v166 = vld [vmem:[%s0 + $0x424] sm:$0xf]
  %v167 = vld [vmem:[%s0 + $0x428] sm:$0xff]
  %v168 = vld [vmem:[%s0 + $0x430] sm:$0xff]
  %v169 = vld [vmem:[%s0 + $0x438] sm:$0xff]
  %v170 = vld [vmem:[%s0 + $0x440] sm:$0xf]
  %v171 = vld [vmem:[%s0 + $0x444] sm:$0xff]
  %v172 = vld [vmem:[%s0 + $0x44c] sm:$0xff]
  %v173 = vld [vmem:[%s0 + $0x454] sm:$0xff]
  %v174 = vld [vmem:[%s0 + $0x45c] sm:$0xf]
  %v175 = vld [vmem:[%s0 + $0x460] sm:$0xff]
  %v176 = vld [vmem:[%s0 + $0x468] sm:$0xff]
  %v177 = vld [vmem:[%s0 + $0x470] sm:$0xff]
  %v178 = vld [vmem:[%s0 + $0x478] sm:$0xf]
  %v179 = vld [vmem:[%s0 + $0x47c] sm:$0xff]
  %v180 = vld [vmem:[%s0 + $0x484] sm:$0xff]
  %v181 = vld [vmem:[%s0 + $0x48c] sm:$0xff]
  %v182 = vld [vmem:[%s0 + $0x494] sm:$0xf]
  %v183 = vld [vmem:[%s0 + $0x498] sm:$0xff]
  %v184 = vld [vmem:[%s0 + $0x4a0] sm:$0xff]
  %v185 = vld [vmem:[%s0 + $0x4a8] sm:$0xff]
  %v186 = vld [vmem:[%s0 + $0x4b0] sm:$0xf]
  %v187 = vld [vmem:[%s0 + $0x4b4] sm:$0xff]
  %v188 = vld [vmem:[%s0 + $0x4bc] sm:$0xff]
  %v189 = vld [vmem:[%s0 + $0x4c4] sm:$0xff]
  %v190 = vld [vmem:[%s0 + $0x4cc] sm:$0xf]
  %v191 = vld [vmem:[%s0 + $0x4d0] sm:$0xff]
  %v192 = vld [vmem:[%s0 + $0x4d8] sm:$0xff]
  %v193 = vld [vmem:[%s0 + $0x4e0] sm:$0xff]
  %v194 = vld [vmem:[%s0 + $0x4e8] sm:$0xf]
  %v195 = vld [vmem:[%s0 + $0x4ec] sm:$0xff]
  %v196 = vld [vmem:[%s0 + $0x4f4] sm:$0xff]
  %v197 = vld [vmem:[%s0 + $0x4fc] sm:$0xff]
  %v198 = vld [vmem:[%s0 + $0x504] sm:$0xf]
  %v199 = vld [vmem:[%s0 + $0x508] sm:$0xff]
  %v200 = vld [vmem:[%s0 + $0x510] sm:$0xff]
  %v201 = vld [vmem:[%s0 + $0x518] sm:$0xff]
  %v202 = vld [vmem:[%s0 + $0x520] sm:$0xf]
  %v203 = vld [vmem:[%s0 + $0x524] sm:$0xff]
  %v204 = vld [vmem:[%s0 + $0x52c] sm:$0xff]
  %v205 = vld [vmem:[%s0 + $0x534] sm:$0xff]
  %v206 = vld [vmem:[%s0 + $0x53c] sm:$0xf]
  %v207 = vld [vmem:[%s0 + $0x540] sm:$0xff]
  %v208 = vld [vmem:[%s0 + $0x548] sm:$0xff]
  %v209 = vld [vmem:[%s0 + $0x550] sm:$0xff]
  %v210 = vld [vmem:[%s0 + $0x558] sm:$0xf]
  %v211 = vld [vmem:[%s0 + $0x55c] sm:$0xff]
  %v212 = vld [vmem:[%s0 + $0x564] sm:$0xff]
  %v213 = vld [vmem:[%s0 + $0x56c] sm:$0xff]
  %v214 = vld [vmem:[%s0 + $0x574] sm:$0xf]
  %v215 = vld [vmem:[%s0 + $0x578] sm:$0xff]
  %v216 = vld [vmem:[%s0 + $0x580] sm:$0xff]
  %v217 = vld [vmem:[%s0 + $0x588] sm:$0xff]
  %v218 = vld [vmem:[%s0 + $0x590] sm:$0xf]
  %v219 = vld [vmem:[%s0 + $0x594] sm:$0xff]
  %v220 = vld [vmem:[%s0 + $0x59c] sm:$0xff]
  %v221 = vld [vmem:[%s0 + $0x5a4] sm:$0xff]
  %v222 = vld [vmem:[%s0 + $0x5ac] sm:$0xf]
  %v223 = vld [vmem:[%s0 + $0x5b0] sm:$0xff]
  %v224 = vld [vmem:[%s0 + $0x5b8] sm:$0xff]
  %v225 = vld [vmem:[%s0 + $0x5c0] sm:$0xff]
  %v226 = vld [vmem:[%s0 + $0x5c8] sm:$0xf]
  %v227 = vld [vmem:[%s0 + $0x5cc] sm:$0xff]
  %v228 = vld [vmem:[%s0 + $0x5d4] sm:$0xff]
  %v229 = vld [vmem:[%s0 + $0x5dc] sm:$0xff]
  %v230 = vld [vmem:[%s0 + $0x5e4] sm:$0xf]
  %v231 = vld [vmem:[%s0 + $0x5e8] sm:$0xff]
  %v232 = vld [vmem:[%s0 + $0x5f0] sm:$0xff]
  %v233 = vld [vmem:[%s0 + $0x5f8] sm:$0xff]
  %v234 = vld [vmem:[%s0 + $0x600] sm:$0xf]
  %v235 = vld [vmem:[%s0 + $0x604] sm:$0xff]
  %v236 = vld [vmem:[%s0 + $0x60c] sm:$0xff]
  %v237 = vld [vmem:[%s0 + $0x614] sm:$0xff]
  %v238 = vld [vmem:[%s0 + $0x61c] sm:$0xf]
  %v239 = vld [vmem:[%s1] sm:$0xf]
  %v240 = vld [vmem:[%s1 + $0x4] sm:$0xf]
  %v241 = vld [vmem:[%s1 + $0x8] sm:$0xf]
  %v242 = vld [vmem:[%s1 + $0xc] sm:$0xf]
  %v243 = vld [vmem:[%s1 + $0x10] sm:$0xf]
  %v244 = vld [vmem:[%s1 + $0x14] sm:$0xf]
  %v245 = vld [vmem:[%s1 + $0x18] sm:$0xf]
  %v246 = vld [vmem:[%s1 + $0x1c] sm:$0xf]
  %v247 = vld [vmem:[%s1 + $0x20] sm:$0xf]
  %v248 = vld [vmem:[%s1 + $0x24] sm:$0xf]
  %v249 = vld [vmem:[%s1 + $0x28] sm:$0xf]
  %v250 = vld [vmem:[%s1 + $0x2c] sm:$0xf]
  %v251 = vld [vmem:[%s1 + $0x30] sm:$0xf]
  %v252 = vld [vmem:[%s1 + $0x34] sm:$0xf]
  %v253 = vld [vmem:[%s1 + $0x38] sm:$0xf]
  %v254 = vld [vmem:[%s1 + $0x3c] sm:$0xf]
  %v255 = vld [vmem:[%s1 + $0x40] sm:$0xf]
  %v256 = vld [vmem:[%s1 + $0x44] sm:$0xf]
  %v257 = vld [vmem:[%s1 + $0x48] sm:$0xf]
  %v258 = vld [vmem:[%s1 + $0x4c] sm:$0xf]
  %v259 = vld [vmem:[%s1 + $0x50] sm:$0xf]
  %v260 = vld [vmem:[%s1 + $0x54] sm:$0xf]
  %v261 = vld [vmem:[%s1 + $0x58] sm:$0xf]
  %v262 = vld [vmem:[%s1 + $0x5c] sm:$0xf]
  %v263 = vld [vmem:[%s1 + $0x60] sm:$0xf]
  %v264 = vld [vmem:[%s1 + $0x64] sm:$0xf]
  %v265 = vld [vmem:[%s1 + $0x68] sm:$0xf]
  %v266 = vld [vmem:[%s1 + $0x6c] sm:$0xf]
  %v267 = vld [vmem:[%s1 + $0x70] sm:$0xf]
  %v268 = vld [vmem:[%s1 + $0x74] sm:$0xf]
  %v269 = vld [vmem:[%s1 + $0x78] sm:$0xf]
  %v270 = vld [vmem:[%s1 + $0x7c] sm:$0xf]
  %v271 = vld [vmem:[%s1 + $0x80] sm:$0xf]
  %v272 = vld [vmem:[%s1 + $0x84] sm:$0xf]
  %v273 = vld [vmem:[%s1 + $0x88] sm:$0xf]
  %v274 = vld [vmem:[%s1 + $0x8c] sm:$0xf]
  %v275 = vld [vmem:[%s1 + $0x90] sm:$0xf]
  %v276 = vld [vmem:[%s1 + $0x94] sm:$0xf]
  %v277 = vld [vmem:[%s1 + $0x98] sm:$0xf]
  %v278 = vld [vmem:[%s1 + $0x9c] sm:$0xf]
  %v279 = vld [vmem:[%s1 + $0xa0] sm:$0xf]
  %v280 = vld [vmem:[%s1 + $0xa4] sm:$0xf]
  %v281 = vld [vmem:[%s1 + $0xa8] sm:$0xf]
  %v282 = vld [vmem:[%s1 + $0xac] sm:$0xf]
  %v283 = vld [vmem:[%s1 + $0xb0] sm:$0xf]
  %v284 = vld [vmem:[%s1 + $0xb4] sm:$0xf]
  %v285 = vld [vmem:[%s1 + $0xb8] sm:$0xf]
  %v286 = vld [vmem:[%s1 + $0xbc] sm:$0xf]
  %v287 = vld [vmem:[%s1 + $0xc0] sm:$0xf]
  %v288 = vld [vmem:[%s1 + $0xc4] sm:$0xf]
  %v289 = vld [vmem:[%s1 + $0xc8] sm:$0xf]
  %v290 = vld [vmem:[%s1 + $0xcc] sm:$0xf]
  %v291 = vld [vmem:[%s1 + $0xd0] sm:$0xf]
  %v292 = vld [vmem:[%s1 + $0xd4] sm:$0xf]
  %v293 = vld [vmem:[%s1 + $0xd8] sm:$0xf]
  %v294 = vld [vmem:[%s1 + $0xdc] sm:$0xf]
  %v295 = vld [vmem:[%s1 + $0xe0] sm:$0xf]
  %v296 = vld [vmem:[%s1 + $0xe4] sm:$0xf]
  %v297 = vld [vmem:[%s1 + $0xe8] sm:$0xf]
  %v298 = vld [vmem:[%s1 + $0xec] sm:$0xf]
  %v299 = vld [vmem:[%s1 + $0xf0] sm:$0xf]
  %v300 = vld [vmem:[%s1 + $0xf4] sm:$0xf]
  %v301 = vld [vmem:[%s1 + $0xf8] sm:$0xf]
  %v302 = vld [vmem:[%s1 + $0xfc] sm:$0xf]
  %v303 = vld [vmem:[%s1 + $0x100] sm:$0xf]
  %v304 = vld [vmem:[%s1 + $0x104] sm:$0xf]
  %v305 = vld [vmem:[%s1 + $0x108] sm:$0xf]
  %v306 = vld [vmem:[%s1 + $0x10c] sm:$0xf]
  %v307 = vld [vmem:[%s1 + $0x110] sm:$0xf]
  %v308 = vld [vmem:[%s1 + $0x114] sm:$0xf]
  %v309 = vld [vmem:[%s1 + $0x118] sm:$0xf]
  %v310 = vld [vmem:[%s1 + $0x11c] sm:$0xf]
  %v311 = vld [vmem:[%s1 + $0x120] sm:$0xf]
  %v312 = vld [vmem:[%s1 + $0x124] sm:$0xf]
  %v313 = vld [vmem:[%s1 + $0x128] sm:$0xf]
  %v314 = vld [vmem:[%s1 + $0x12c] sm:$0xf]
  %v315 = vld [vmem:[%s1 + $0x130] sm:$0xf]
  %v316 = vld [vmem:[%s1 + $0x134] sm:$0xf]
  %v317 = vld [vmem:[%s1 + $0x138] sm:$0xf]
  %v318 = vld [vmem:[%s1 + $0x13c] sm:$0xf]
  %v319 = vld [vmem:[%s1 + $0x140] sm:$0xf]
  %v320 = vld [vmem:[%s1 + $0x144] sm:$0xf]
  %v321 = vld [vmem:[%s1 + $0x148] sm:$0xf]
  %v322 = vld [vmem:[%s1 + $0x14c] sm:$0xf]
  %v323 = vld [vmem:[%s1 + $0x150] sm:$0xf]
  %v324 = vld [vmem:[%s1 + $0x154] sm:$0xf]
  %v325 = vld [vmem:[%s1 + $0x158] sm:$0xf]
  %v326 = vld [vmem:[%s1 + $0x15c] sm:$0xf]
  %v327 = vld [vmem:[%s1 + $0x160] sm:$0xf]
  %v328 = vld [vmem:[%s1 + $0x164] sm:$0xf]
  %v329 = vld [vmem:[%s1 + $0x168] sm:$0xf]
  %v330 = vld [vmem:[%s1 + $0x16c] sm:$0xf]
  %v331 = vld [vmem:[%s1 + $0x170] sm:$0xf]
  %v332 = vld [vmem:[%s1 + $0x174] sm:$0xf]
  %v333 = vld [vmem:[%s1 + $0x178] sm:$0xf]
  %v334 = vld [vmem:[%s1 + $0x17c] sm:$0xf]
  %v335 = vld [vmem:[%s1 + $0x180] sm:$0xf]
  %v336 = vld [vmem:[%s1 + $0x184] sm:$0xf]
  %v337 = vld [vmem:[%s1 + $0x188] sm:$0xf]
  %v338 = vld [vmem:[%s1 + $0x18c] sm:$0xf]
  %v563 = vunpack.c.l.b16 %v15
  %v564 = vunpack.c.h.b16 %v15
  %v565 = vunpack.c.l.b16 %v16
  %v566 = vunpack.c.h.b16 %v16
  %v567 = vunpack.c.l.b16 %v17
  %v568 = vunpack.c.h.b16 %v17
  %v569 = vunpack.c.l.b16 %v18
  %v570 = vunpack.c.l.b16 %v19
  %v571 = vunpack.c.h.b16 %v19
  %v572 = vunpack.c.l.b16 %v20
  %v573 = vunpack.c.h.b16 %v20
  %v574 = vunpack.c.l.b16 %v21
  %v575 = vunpack.c.h.b16 %v21
  %v576 = vunpack.c.l.b16 %v22
  %v577 = vunpack.c.l.b16 %v23
  %v578 = vunpack.c.h.b16 %v23
  %v579 = vunpack.c.l.b16 %v24
  %v580 = vunpack.c.h.b16 %v24
  %v581 = vunpack.c.l.b16 %v25
  %v582 = vunpack.c.h.b16 %v25
  %v583 = vunpack.c.l.b16 %v26
  %v584 = vunpack.c.l.b16 %v27
  %v585 = vunpack.c.h.b16 %v27
  %v586 = vunpack.c.l.b16 %v28
  %v587 = vunpack.c.h.b16 %v28
  %v588 = vunpack.c.l.b16 %v29
  %v589 = vunpack.c.h.b16 %v29
  %v590 = vunpack.c.l.b16 %v30
  %v591 = vunpack.c.l.b16 %v31
  %v592 = vunpack.c.h.b16 %v31
  %v593 = vunpack.c.l.b16 %v32
  %v594 = vunpack.c.h.b16 %v32
  %v595 = vunpack.c.l.b16 %v33
  %v596 = vunpack.c.h.b16 %v33
  %v597 = vunpack.c.l.b16 %v34
  %v598 = vunpack.c.l.b16 %v35
  %v599 = vunpack.c.h.b16 %v35
  %v600 = vunpack.c.l.b16 %v36
  %v601 = vunpack.c.h.b16 %v36
  %v602 = vunpack.c.l.b16 %v37
  %v603 = vunpack.c.h.b16 %v37
  %v604 = vunpack.c.l.b16 %v38
  %v605 = vunpack.c.l.b16 %v39
  %v606 = vunpack.c.h.b16 %v39
  %v607 = vunpack.c.l.b16 %v40
  %v608 = vunpack.c.h.b16 %v40
  %v609 = vunpack.c.l.b16 %v41
  %v610 = vunpack.c.h.b16 %v41
  %v611 = vunpack.c.l.b16 %v42
  %v612 = vunpack.c.l.b16 %v43
  %v613 = vunpack.c.h.b16 %v43
  %v614 = vunpack.c.l.b16 %v44
  %v615 = vunpack.c.h.b16 %v44
  %v616 = vunpack.c.l.b16 %v45
  %v617 = vunpack.c.h.b16 %v45
  %v618 = vunpack.c.l.b16 %v46
  %v619 = vunpack.c.l.b16 %v47
  %v620 = vunpack.c.h.b16 %v47
  %v621 = vunpack.c.l.b16 %v48
  %v622 = vunpack.c.h.b16 %v48
  %v623 = vunpack.c.l.b16 %v49
  %v624 = vunpack.c.h.b16 %v49
  %v625 = vunpack.c.l.b16 %v50
  %v626 = vunpack.c.l.b16 %v51
  %v627 = vunpack.c.h.b16 %v51
  %v628 = vunpack.c.l.b16 %v52
  %v629 = vunpack.c.h.b16 %v52
  %v630 = vunpack.c.l.b16 %v53
  %v631 = vunpack.c.h.b16 %v53
  %v632 = vunpack.c.l.b16 %v54
  %v633 = vunpack.c.l.b16 %v55
  %v634 = vunpack.c.h.b16 %v55
  %v635 = vunpack.c.l.b16 %v56
  %v636 = vunpack.c.h.b16 %v56
  %v637 = vunpack.c.l.b16 %v57
  %v638 = vunpack.c.h.b16 %v57
  %v639 = vunpack.c.l.b16 %v58
  %v640 = vunpack.c.l.b16 %v59
  %v641 = vunpack.c.h.b16 %v59
  %v642 = vunpack.c.l.b16 %v60
  %v643 = vunpack.c.h.b16 %v60
  %v644 = vunpack.c.l.b16 %v61
  %v645 = vunpack.c.h.b16 %v61
  %v646 = vunpack.c.l.b16 %v62
  %v647 = vunpack.c.l.b16 %v63
  %v648 = vunpack.c.h.b16 %v63
  %v649 = vunpack.c.l.b16 %v64
  %v650 = vunpack.c.h.b16 %v64
  %v651 = vunpack.c.l.b16 %v65
  %v652 = vunpack.c.h.b16 %v65
  %v653 = vunpack.c.l.b16 %v66
  %v654 = vunpack.c.l.b16 %v67
  %v655 = vunpack.c.h.b16 %v67
  %v656 = vunpack.c.l.b16 %v68
  %v657 = vunpack.c.h.b16 %v68
  %v658 = vunpack.c.l.b16 %v69
  %v659 = vunpack.c.h.b16 %v69
  %v660 = vunpack.c.l.b16 %v70
  %v661 = vunpack.c.l.b16 %v71
  %v662 = vunpack.c.h.b16 %v71
  %v663 = vunpack.c.l.b16 %v72
  %v664 = vunpack.c.h.b16 %v72
  %v665 = vunpack.c.l.b16 %v73
  %v666 = vunpack.c.h.b16 %v73
  %v667 = vunpack.c.l.b16 %v74
  %v668 = vunpack.c.l.b16 %v75
  %v669 = vunpack.c.h.b16 %v75
  %v670 = vunpack.c.l.b16 %v76
  %v671 = vunpack.c.h.b16 %v76
  %v672 = vunpack.c.l.b16 %v77
  %v673 = vunpack.c.h.b16 %v77
  %v674 = vunpack.c.l.b16 %v78
  %v675 = vunpack.c.l.b16 %v79
  %v676 = vunpack.c.h.b16 %v79
  %v677 = vunpack.c.l.b16 %v80
  %v678 = vunpack.c.h.b16 %v80
  %v679 = vunpack.c.l.b16 %v81
  %v680 = vunpack.c.h.b16 %v81
  %v681 = vunpack.c.l.b16 %v82
  %v682 = vunpack.c.l.b16 %v83
  %v683 = vunpack.c.h.b16 %v83
  %v684 = vunpack.c.l.b16 %v84
  %v685 = vunpack.c.h.b16 %v84
  %v686 = vunpack.c.l.b16 %v85
  %v687 = vunpack.c.h.b16 %v85
  %v688 = vunpack.c.l.b16 %v86
  %v689 = vunpack.c.l.b16 %v87
  %v690 = vunpack.c.h.b16 %v87
  %v691 = vunpack.c.l.b16 %v88
  %v692 = vunpack.c.h.b16 %v88
  %v693 = vunpack.c.l.b16 %v89
  %v694 = vunpack.c.h.b16 %v89
  %v695 = vunpack.c.l.b16 %v90
  %v696 = vunpack.c.l.b16 %v91
  %v697 = vunpack.c.h.b16 %v91
  %v698 = vunpack.c.l.b16 %v92
  %v699 = vunpack.c.h.b16 %v92
  %v700 = vunpack.c.l.b16 %v93
  %v701 = vunpack.c.h.b16 %v93
  %v702 = vunpack.c.l.b16 %v94
  %v703 = vunpack.c.l.b16 %v95
  %v704 = vunpack.c.h.b16 %v95
  %v705 = vunpack.c.l.b16 %v96
  %v706 = vunpack.c.h.b16 %v96
  %v707 = vunpack.c.l.b16 %v97
  %v708 = vunpack.c.h.b16 %v97
  %v709 = vunpack.c.l.b16 %v98
  %v710 = vunpack.c.l.b16 %v99
  %v711 = vunpack.c.h.b16 %v99
  %v712 = vunpack.c.l.b16 %v100
  %v713 = vunpack.c.h.b16 %v100
  %v714 = vunpack.c.l.b16 %v101
  %v715 = vunpack.c.h.b16 %v101
  %v716 = vunpack.c.l.b16 %v102
  %v717 = vunpack.c.l.b16 %v103
  %v718 = vunpack.c.h.b16 %v103
  %v719 = vunpack.c.l.b16 %v104
  %v720 = vunpack.c.h.b16 %v104
  %v721 = vunpack.c.l.b16 %v105
  %v722 = vunpack.c.h.b16 %v105
  %v723 = vunpack.c.l.b16 %v106
  %v724 = vunpack.c.l.b16 %v107
  %v725 = vunpack.c.h.b16 %v107
  %v726 = vunpack.c.l.b16 %v108
  %v727 = vunpack.c.h.b16 %v108
  %v728 = vunpack.c.l.b16 %v109
  %v729 = vunpack.c.h.b16 %v109
  %v730 = vunpack.c.l.b16 %v110
  %v731 = vunpack.c.l.b16 %v111
  %v732 = vunpack.c.h.b16 %v111
  %v733 = vunpack.c.l.b16 %v112
  %v734 = vunpack.c.h.b16 %v112
  %v735 = vunpack.c.l.b16 %v113
  %v736 = vunpack.c.h.b16 %v113
  %v737 = vunpack.c.l.b16 %v114
  %v738 = vunpack.c.l.b16 %v115
  %v739 = vunpack.c.h.b16 %v115
  %v740 = vunpack.c.l.b16 %v116
  %v741 = vunpack.c.h.b16 %v116
  %v742 = vunpack.c.l.b16 %v117
  %v743 = vunpack.c.h.b16 %v117
  %v744 = vunpack.c.l.b16 %v118
  %v745 = vunpack.c.l.b16 %v119
  %v746 = vunpack.c.h.b16 %v119
  %v747 = vunpack.c.l.b16 %v120
  %v748 = vunpack.c.h.b16 %v120
  %v749 = vunpack.c.l.b16 %v121
  %v750 = vunpack.c.h.b16 %v121
  %v751 = vunpack.c.l.b16 %v122
  %v752 = vunpack.c.l.b16 %v123
  %v753 = vunpack.c.h.b16 %v123
  %v754 = vunpack.c.l.b16 %v124
  %v755 = vunpack.c.h.b16 %v124
  %v756 = vunpack.c.l.b16 %v125
  %v757 = vunpack.c.h.b16 %v125
  %v758 = vunpack.c.l.b16 %v126
  %v759 = vunpack.c.l.b16 %v127
  %v760 = vunpack.c.h.b16 %v127
  %v761 = vunpack.c.l.b16 %v128
  %v762 = vunpack.c.h.b16 %v128
  %v763 = vunpack.c.l.b16 %v129
  %v764 = vunpack.c.h.b16 %v129
  %v765 = vunpack.c.l.b16 %v130
  %v766 = vunpack.c.l.b16 %v131
  %v767 = vunpack.c.h.b16 %v131
  %v768 = vunpack.c.l.b16 %v132
  %v769 = vunpack.c.h.b16 %v132
  %v770 = vunpack.c.l.b16 %v133
  %v771 = vunpack.c.h.b16 %v133
  %v772 = vunpack.c.l.b16 %v134
  %v773 = vunpack.c.l.b16 %v135
  %v774 = vunpack.c.h.b16 %v135
  %v775 = vunpack.c.l.b16 %v136
  %v776 = vunpack.c.h.b16 %v136
  %v777 = vunpack.c.l.b16 %v137
  %v778 = vunpack.c.h.b16 %v137
  %v779 = vunpack.c.l.b16 %v138
  %v780 = vunpack.c.l.b16 %v139
  %v781 = vunpack.c.h.b16 %v139
  %v782 = vunpack.c.l.b16 %v140
  %v783 = vunpack.c.h.b16 %v140
  %v784 = vunpack.c.l.b16 %v141
  %v785 = vunpack.c.h.b16 %v141
  %v786 = vunpack.c.l.b16 %v142
  %v787 = vunpack.c.l.b16 %v143
  %v788 = vunpack.c.h.b16 %v143
  %v789 = vunpack.c.l.b16 %v144
  %v790 = vunpack.c.h.b16 %v144
  %v791 = vunpack.c.l.b16 %v145
  %v792 = vunpack.c.h.b16 %v145
  %v793 = vunpack.c.l.b16 %v146
  %v794 = vunpack.c.l.b16 %v147
  %v795 = vunpack.c.h.b16 %v147
  %v796 = vunpack.c.l.b16 %v148
  %v797 = vunpack.c.h.b16 %v148
  %v798 = vunpack.c.l.b16 %v149
  %v799 = vunpack.c.h.b16 %v149
  %v800 = vunpack.c.l.b16 %v150
  %v801 = vunpack.c.l.b16 %v151
  %v802 = vunpack.c.h.b16 %v151
  %v803 = vunpack.c.l.b16 %v152
  %v804 = vunpack.c.h.b16 %v152
  %v805 = vunpack.c.l.b16 %v153
  %v806 = vunpack.c.h.b16 %v153
  %v807 = vunpack.c.l.b16 %v154
  %v808 = vunpack.c.l.b16 %v155
  %v809 = vunpack.c.h.b16 %v155
  %v810 = vunpack.c.l.b16 %v156
  %v811 = vunpack.c.h.b16 %v156
  %v812 = vunpack.c.l.b16 %v157
  %v813 = vunpack.c.h.b16 %v157
  %v814 = vunpack.c.l.b16 %v158
  %v815 = vunpack.c.l.b16 %v159
  %v816 = vunpack.c.h.b16 %v159
  %v817 = vunpack.c.l.b16 %v160
  %v818 = vunpack.c.h.b16 %v160
  %v819 = vunpack.c.l.b16 %v161
  %v820 = vunpack.c.h.b16 %v161
  %v821 = vunpack.c.l.b16 %v162
  %v822 = vunpack.c.l.b16 %v163
  %v823 = vunpack.c.h.b16 %v163
  %v824 = vunpack.c.l.b16 %v164
  %v825 = vunpack.c.h.b16 %v164
  %v826 = vunpack.c.l.b16 %v165
  %v827 = vunpack.c.h.b16 %v165
  %v828 = vunpack.c.l.b16 %v166
  %v829 = vunpack.c.l.b16 %v167
  %v830 = vunpack.c.h.b16 %v167
  %v831 = vunpack.c.l.b16 %v168
  %v832 = vunpack.c.h.b16 %v168
  %v833 = vunpack.c.l.b16 %v169
  %v834 = vunpack.c.h.b16 %v169
  %v835 = vunpack.c.l.b16 %v170
  %v836 = vunpack.c.l.b16 %v171
  %v837 = vunpack.c.h.b16 %v171
  %v838 = vunpack.c.l.b16 %v172
  %v839 = vunpack.c.h.b16 %v172
  %v840 = vunpack.c.l.b16 %v173
  %v841 = vunpack.c.h.b16 %v173
  %v842 = vunpack.c.l.b16 %v174
  %v843 = vunpack.c.l.b16 %v175
  %v844 = vunpack.c.h.b16 %v175
  %v845 = vunpack.c.l.b16 %v176
  %v846 = vunpack.c.h.b16 %v176
  %v847 = vunpack.c.l.b16 %v177
  %v848 = vunpack.c.h.b16 %v177
  %v849 = vunpack.c.l.b16 %v178
  %v850 = vunpack.c.l.b16 %v179
  %v851 = vunpack.c.h.b16 %v179
  %v852 = vunpack.c.l.b16 %v180
  %v853 = vunpack.c.h.b16 %v180
  %v854 = vunpack.c.l.b16 %v181
  %v855 = vunpack.c.h.b16 %v181
  %v856 = vunpack.c.l.b16 %v182
  %v857 = vunpack.c.l.b16 %v183
  %v858 = vunpack.c.h.b16 %v183
  %v859 = vunpack.c.l.b16 %v184
  %v860 = vunpack.c.h.b16 %v184
  %v861 = vunpack.c.l.b16 %v185
  %v862 = vunpack.c.h.b16 %v185
  %v863 = vunpack.c.l.b16 %v186
  %v864 = vunpack.c.l.b16 %v187
  %v865 = vunpack.c.h.b16 %v187
  %v866 = vunpack.c.l.b16 %v188
  %v867 = vunpack.c.h.b16 %v188
  %v868 = vunpack.c.l.b16 %v189
  %v869 = vunpack.c.h.b16 %v189
  %v870 = vunpack.c.l.b16 %v190
  %v871 = vunpack.c.l.b16 %v191
  %v872 = vunpack.c.h.b16 %v191
  %v873 = vunpack.c.l.b16 %v192
  %v874 = vunpack.c.h.b16 %v192
  %v875 = vunpack.c.l.b16 %v193
  %v876 = vunpack.c.h.b16 %v193
  %v877 = vunpack.c.l.b16 %v194
  %v878 = vunpack.c.l.b16 %v195
  %v879 = vunpack.c.h.b16 %v195
  %v880 = vunpack.c.l.b16 %v196
  %v881 = vunpack.c.h.b16 %v196
  %v882 = vunpack.c.l.b16 %v197
  %v883 = vunpack.c.h.b16 %v197
  %v884 = vunpack.c.l.b16 %v198
  %v885 = vunpack.c.l.b16 %v199
  %v886 = vunpack.c.h.b16 %v199
  %v887 = vunpack.c.l.b16 %v200
  %v888 = vunpack.c.h.b16 %v200
  %v889 = vunpack.c.l.b16 %v201
  %v890 = vunpack.c.h.b16 %v201
  %v891 = vunpack.c.l.b16 %v202
  %v892 = vunpack.c.l.b16 %v203
  %v893 = vunpack.c.h.b16 %v203
  %v894 = vunpack.c.l.b16 %v204
  %v895 = vunpack.c.h.b16 %v204
  %v896 = vunpack.c.l.b16 %v205
  %v897 = vunpack.c.h.b16 %v205
  %v898 = vunpack.c.l.b16 %v206
  %v899 = vunpack.c.l.b16 %v207
  %v900 = vunpack.c.h.b16 %v207
  %v901 = vunpack.c.l.b16 %v208
  %v902 = vunpack.c.h.b16 %v208
  %v903 = vunpack.c.l.b16 %v209
  %v904 = vunpack.c.h.b16 %v209
  %v905 = vunpack.c.l.b16 %v210
  %v906 = vunpack.c.l.b16 %v211
  %v907 = vunpack.c.h.b16 %v211
  %v908 = vunpack.c.l.b16 %v212
  %v909 = vunpack.c.h.b16 %v212
  %v910 = vunpack.c.l.b16 %v213
  %v911 = vunpack.c.h.b16 %v213
  %v912 = vunpack.c.l.b16 %v214
  %v913 = vunpack.c.l.b16 %v215
  %v914 = vunpack.c.h.b16 %v215
  %v915 = vunpack.c.l.b16 %v216
  %v916 = vunpack.c.h.b16 %v216
  %v917 = vunpack.c.l.b16 %v217
  %v918 = vunpack.c.h.b16 %v217
  %v919 = vunpack.c.l.b16 %v218
  %v920 = vunpack.c.l.b16 %v219
  %v921 = vunpack.c.h.b16 %v219
  %v922 = vunpack.c.l.b16 %v220
  %v923 = vunpack.c.h.b16 %v220
  %v924 = vunpack.c.l.b16 %v221
  %v925 = vunpack.c.h.b16 %v221
  %v926 = vunpack.c.l.b16 %v222
  %v927 = vunpack.c.l.b16 %v223
  %v928 = vunpack.c.h.b16 %v223
  %v929 = vunpack.c.l.b16 %v224
  %v930 = vunpack.c.h.b16 %v224
  %v931 = vunpack.c.l.b16 %v225
  %v932 = vunpack.c.h.b16 %v225
  %v933 = vunpack.c.l.b16 %v226
  %v934 = vunpack.c.l.b16 %v227
  %v935 = vunpack.c.h.b16 %v227
  %v936 = vunpack.c.l.b16 %v228
  %v937 = vunpack.c.h.b16 %v228
  %v938 = vunpack.c.l.b16 %v229
  %v939 = vunpack.c.h.b16 %v229
  %v940 = vunpack.c.l.b16 %v230
  %v941 = vunpack.c.l.b16 %v231
  %v942 = vunpack.c.h.b16 %v231
  %v943 = vunpack.c.l.b16 %v232
  %v944 = vunpack.c.h.b16 %v232
  %v945 = vunpack.c.l.b16 %v233
  %v946 = vunpack.c.h.b16 %v233
  %v947 = vunpack.c.l.b16 %v234
  %v948 = vunpack.c.l.b16 %v235
  %v949 = vunpack.c.h.b16 %v235
  %v950 = vunpack.c.l.b16 %v236
  %v951 = vunpack.c.h.b16 %v236
  %v952 = vunpack.c.l.b16 %v237
  %v953 = vunpack.c.h.b16 %v237
  %v954 = vunpack.c.l.b16 %v238
  %v955 = vpack.c.b16 %v570, %v563
  %v956 = vpack.c.b16 %v571, %v564
  %v957 = vpack.c.b16 %v572, %v565
  %v958 = vpack.c.b16 %v573, %v566
  %v959 = vpack.c.b16 %v574, %v567
  %v960 = vpack.c.b16 %v575, %v568
  %v961 = vpack.c.b16 %v576, %v569
  %v962 = vpack.c.b16 %v584, %v577
  %v963 = vpack.c.b16 %v585, %v578
  %v964 = vpack.c.b16 %v586, %v579
  %v965 = vpack.c.b16 %v587, %v580
  %v966 = vpack.c.b16 %v588, %v581
  %v967 = vpack.c.b16 %v589, %v582
  %v968 = vpack.c.b16 %v590, %v583
  %v969 = vpack.c.b16 %v598, %v591
  %v970 = vpack.c.b16 %v599, %v592
  %v971 = vpack.c.b16 %v600, %v593
  %v972 = vpack.c.b16 %v601, %v594
  %v973 = vpack.c.b16 %v602, %v595
  %v974 = vpack.c.b16 %v603, %v596
  %v975 = vpack.c.b16 %v604, %v597
  %v976 = vpack.c.b16 %v612, %v605
  %v977 = vpack.c.b16 %v613, %v606
  %v978 = vpack.c.b16 %v614, %v607
  %v979 = vpack.c.b16 %v615, %v608
  %v980 = vpack.c.b16 %v616, %v609
  %v981 = vpack.c.b16 %v617, %v610
  %v982 = vpack.c.b16 %v618, %v611
  %v983 = vpack.c.b16 %v626, %v619
  %v984 = vpack.c.b16 %v627, %v620
  %v985 = vpack.c.b16 %v628, %v621
  %v986 = vpack.c.b16 %v629, %v622
  %v987 = vpack.c.b16 %v630, %v623
  %v988 = vpack.c.b16 %v631, %v624
  %v989 = vpack.c.b16 %v632, %v625
  %v990 = vpack.c.b16 %v640, %v633
  %v991 = vpack.c.b16 %v641, %v634
  %v992 = vpack.c.b16 %v642, %v635
  %v993 = vpack.c.b16 %v643, %v636
  %v994 = vpack.c.b16 %v644, %v637
  %v995 = vpack.c.b16 %v645, %v638
  %v996 = vpack.c.b16 %v646, %v639
  %v997 = vpack.c.b16 %v654, %v647
  %v998 = vpack.c.b16 %v655, %v648
  %v999 = vpack.c.b16 %v656, %v649
  %v1000 = vpack.c.b16 %v657, %v650
  %v1001 = vpack.c.b16 %v658, %v651
  %v1002 = vpack.c.b16 %v659, %v652
  %v1003 = vpack.c.b16 %v660, %v653
  %v1004 = vpack.c.b16 %v668, %v661
  %v1005 = vpack.c.b16 %v669, %v662
  %v1006 = vpack.c.b16 %v670, %v663
  %v1007 = vpack.c.b16 %v671, %v664
  %v1008 = vpack.c.b16 %v672, %v665
  %v1009 = vpack.c.b16 %v673, %v666
  %v1010 = vpack.c.b16 %v674, %v667
  %v1011 = vpack.c.b16 %v682, %v675
  %v1012 = vpack.c.b16 %v683, %v676
  %v1013 = vpack.c.b16 %v684, %v677
  %v1014 = vpack.c.b16 %v685, %v678
  %v1015 = vpack.c.b16 %v686, %v679
  %v1016 = vpack.c.b16 %v687, %v680
  %v1017 = vpack.c.b16 %v688, %v681
  %v1018 = vpack.c.b16 %v696, %v689
  %v1019 = vpack.c.b16 %v697, %v690
  %v1020 = vpack.c.b16 %v698, %v691
  %v1021 = vpack.c.b16 %v699, %v692
  %v1022 = vpack.c.b16 %v700, %v693
  %v1023 = vpack.c.b16 %v701, %v694
  %v1024 = vpack.c.b16 %v702, %v695
  %v1025 = vpack.c.b16 %v710, %v703
  %v1026 = vpack.c.b16 %v711, %v704
  %v1027 = vpack.c.b16 %v712, %v705
  %v1028 = vpack.c.b16 %v713, %v706
  %v1029 = vpack.c.b16 %v714, %v707
  %v1030 = vpack.c.b16 %v715, %v708
  %v1031 = vpack.c.b16 %v716, %v709
  %v1032 = vpack.c.b16 %v724, %v717
  %v1033 = vpack.c.b16 %v725, %v718
  %v1034 = vpack.c.b16 %v726, %v719
  %v1035 = vpack.c.b16 %v727, %v720
  %v1036 = vpack.c.b16 %v728, %v721
  %v1037 = vpack.c.b16 %v729, %v722
  %v1038 = vpack.c.b16 %v730, %v723
  %v1039 = vpack.c.b16 %v738, %v731
  %v1040 = vpack.c.b16 %v739, %v732
  %v1041 = vpack.c.b16 %v740, %v733
  %v1042 = vpack.c.b16 %v741, %v734
  %v1043 = vpack.c.b16 %v742, %v735
  %v1044 = vpack.c.b16 %v743, %v736
  %v1045 = vpack.c.b16 %v744, %v737
  %v1046 = vpack.c.b16 %v752, %v745
  %v1047 = vpack.c.b16 %v753, %v746
  %v1048 = vpack.c.b16 %v754, %v747
  %v1049 = vpack.c.b16 %v755, %v748
  %v1050 = vpack.c.b16 %v756, %v749
  %v1051 = vpack.c.b16 %v757, %v750
  %v1052 = vpack.c.b16 %v758, %v751
  %v1053 = vpack.c.b16 %v766, %v759
  %v1054 = vpack.c.b16 %v767, %v760
  %v1055 = vpack.c.b16 %v768, %v761
  %v1056 = vpack.c.b16 %v769, %v762
  %v1057 = vpack.c.b16 %v770, %v763
  %v1058 = vpack.c.b16 %v771, %v764
  %v1059 = vpack.c.b16 %v772, %v765
  %v1060 = vpack.c.b16 %v780, %v773
  %v1061 = vpack.c.b16 %v781, %v774
  %v1062 = vpack.c.b16 %v782, %v775
  %v1063 = vpack.c.b16 %v783, %v776
  %v1064 = vpack.c.b16 %v784, %v777
  %v1065 = vpack.c.b16 %v785, %v778
  %v1066 = vpack.c.b16 %v786, %v779
  %v1067 = vpack.c.b16 %v794, %v787
  %v1068 = vpack.c.b16 %v795, %v788
  %v1069 = vpack.c.b16 %v796, %v789
  %v1070 = vpack.c.b16 %v797, %v790
  %v1071 = vpack.c.b16 %v798, %v791
  %v1072 = vpack.c.b16 %v799, %v792
  %v1073 = vpack.c.b16 %v800, %v793
  %v1074 = vpack.c.b16 %v808, %v801
  %v1075 = vpack.c.b16 %v809, %v802
  %v1076 = vpack.c.b16 %v810, %v803
  %v1077 = vpack.c.b16 %v811, %v804
  %v1078 = vpack.c.b16 %v812, %v805
  %v1079 = vpack.c.b16 %v813, %v806
  %v1080 = vpack.c.b16 %v814, %v807
  %v1081 = vpack.c.b16 %v822, %v815
  %v1082 = vpack.c.b16 %v823, %v816
  %v1083 = vpack.c.b16 %v824, %v817
  %v1084 = vpack.c.b16 %v825, %v818
  %v1085 = vpack.c.b16 %v826, %v819
  %v1086 = vpack.c.b16 %v827, %v820
  %v1087 = vpack.c.b16 %v828, %v821
  %v1088 = vpack.c.b16 %v836, %v829
  %v1089 = vpack.c.b16 %v837, %v830
  %v1090 = vpack.c.b16 %v838, %v831
  %v1091 = vpack.c.b16 %v839, %v832
  %v1092 = vpack.c.b16 %v840, %v833
  %v1093 = vpack.c.b16 %v841, %v834
  %v1094 = vpack.c.b16 %v842, %v835
  %v1095 = vpack.c.b16 %v850, %v843
  %v1096 = vpack.c.b16 %v851, %v844
  %v1097 = vpack.c.b16 %v852, %v845
  %v1098 = vpack.c.b16 %v853, %v846
  %v1099 = vpack.c.b16 %v854, %v847
  %v1100 = vpack.c.b16 %v855, %v848
  %v1101 = vpack.c.b16 %v856, %v849
  %v1102 = vpack.c.b16 %v864, %v857
  %v1103 = vpack.c.b16 %v865, %v858
  %v1104 = vpack.c.b16 %v866, %v859
  %v1105 = vpack.c.b16 %v867, %v860
  %v1106 = vpack.c.b16 %v868, %v861
  %v1107 = vpack.c.b16 %v869, %v862
  %v1108 = vpack.c.b16 %v870, %v863
  %v1109 = vpack.c.b16 %v878, %v871
  %v1110 = vpack.c.b16 %v879, %v872
  %v1111 = vpack.c.b16 %v880, %v873
  %v1112 = vpack.c.b16 %v881, %v874
  %v1113 = vpack.c.b16 %v882, %v875
  %v1114 = vpack.c.b16 %v883, %v876
  %v1115 = vpack.c.b16 %v884, %v877
  %v1116 = vpack.c.b16 %v892, %v885
  %v1117 = vpack.c.b16 %v893, %v886
  %v1118 = vpack.c.b16 %v894, %v887
  %v1119 = vpack.c.b16 %v895, %v888
  %v1120 = vpack.c.b16 %v896, %v889
  %v1121 = vpack.c.b16 %v897, %v890
  %v1122 = vpack.c.b16 %v898, %v891
  %v1123 = vpack.c.b16 %v906, %v899
  %v1124 = vpack.c.b16 %v907, %v900
  %v1125 = vpack.c.b16 %v908, %v901
  %v1126 = vpack.c.b16 %v909, %v902
  %v1127 = vpack.c.b16 %v910, %v903
  %v1128 = vpack.c.b16 %v911, %v904
  %v1129 = vpack.c.b16 %v912, %v905
  %v1130 = vpack.c.b16 %v920, %v913
  %v1131 = vpack.c.b16 %v921, %v914
  %v1132 = vpack.c.b16 %v922, %v915
  %v1133 = vpack.c.b16 %v923, %v916
  %v1134 = vpack.c.b16 %v924, %v917
  %v1135 = vpack.c.b16 %v925, %v918
  %v1136 = vpack.c.b16 %v926, %v919
  %v1137 = vpack.c.b16 %v934, %v927
  %v1138 = vpack.c.b16 %v935, %v928
  %v1139 = vpack.c.b16 %v936, %v929
  %v1140 = vpack.c.b16 %v937, %v930
  %v1141 = vpack.c.b16 %v938, %v931
  %v1142 = vpack.c.b16 %v939, %v932
  %v1143 = vpack.c.b16 %v940, %v933
  %v1144 = vpack.c.b16 %v948, %v941
  %v1145 = vpack.c.b16 %v949, %v942
  %v1146 = vpack.c.b16 %v950, %v943
  %v1147 = vpack.c.b16 %v951, %v944
  %v1148 = vpack.c.b16 %v952, %v945
  %v1149 = vpack.c.b16 %v953, %v946
  %v1150 = vpack.c.b16 %v954, %v947
  %v1419 = vunpack.c.l.b16 %v239
  %v1420 = vunpack.c.l.b16 %v240
  %v1421 = vunpack.c.l.b16 %v241
  %v1422 = vunpack.c.l.b16 %v242
  %v1423 = vunpack.c.l.b16 %v243
  %v1424 = vunpack.c.l.b16 %v244
  %v1425 = vunpack.c.l.b16 %v245
  %v1426 = vunpack.c.l.b16 %v246
  %v1427 = vunpack.c.l.b16 %v247
  %v1428 = vunpack.c.l.b16 %v248
  %v1429 = vunpack.c.l.b16 %v249
  %v1430 = vunpack.c.l.b16 %v250
  %v1431 = vunpack.c.l.b16 %v251
  %v1432 = vunpack.c.l.b16 %v252
  %v1433 = vunpack.c.l.b16 %v253
  %v1434 = vunpack.c.l.b16 %v254
  %v1435 = vunpack.c.l.b16 %v255
  %v1436 = vunpack.c.l.b16 %v256
  %v1437 = vunpack.c.l.b16 %v257
  %v1438 = vunpack.c.l.b16 %v258
  %v1439 = vunpack.c.l.b16 %v259
  %v1440 = vunpack.c.l.b16 %v260
  %v1441 = vunpack.c.l.b16 %v261
  %v1442 = vunpack.c.l.b16 %v262
  %v1443 = vunpack.c.l.b16 %v263
  %v1444 = vunpack.c.l.b16 %v264
  %v1445 = vunpack.c.l.b16 %v265
  %v1446 = vunpack.c.l.b16 %v266
  %v1447 = vunpack.c.l.b16 %v267
  %v1448 = vunpack.c.l.b16 %v268
  %v1449 = vunpack.c.l.b16 %v269
  %v1450 = vunpack.c.l.b16 %v270
  %v1451 = vunpack.c.l.b16 %v271
  %v1452 = vunpack.c.l.b16 %v272
  %v1453 = vunpack.c.l.b16 %v273
  %v1454 = vunpack.c.l.b16 %v274
  %v1455 = vunpack.c.l.b16 %v275
  %v1456 = vunpack.c.l.b16 %v276
  %v1457 = vunpack.c.l.b16 %v277
  %v1458 = vunpack.c.l.b16 %v278
  %v1459 = vunpack.c.l.b16 %v279
  %v1460 = vunpack.c.l.b16 %v280
  %v1461 = vunpack.c.l.b16 %v281
  %v1462 = vunpack.c.l.b16 %v282
  %v1463 = vunpack.c.l.b16 %v283
  %v1464 = vunpack.c.l.b16 %v284
  %v1465 = vunpack.c.l.b16 %v285
  %v1466 = vunpack.c.l.b16 %v286
  %v1467 = vunpack.c.l.b16 %v287
  %v1468 = vunpack.c.l.b16 %v288
  %v1469 = vunpack.c.l.b16 %v289
  %v1470 = vunpack.c.l.b16 %v290
  %v1471 = vunpack.c.l.b16 %v291
  %v1472 = vunpack.c.l.b16 %v292
  %v1473 = vunpack.c.l.b16 %v293
  %v1474 = vunpack.c.l.b16 %v294
  %v1475 = vunpack.c.l.b16 %v295
  %v1476 = vunpack.c.l.b16 %v296
  %v1477 = vunpack.c.l.b16 %v297
  %v1478 = vunpack.c.l.b16 %v298
  %v1479 = vunpack.c.l.b16 %v299
  %v1480 = vunpack.c.l.b16 %v300
  %v1481 = vunpack.c.l.b16 %v301
  %v1482 = vunpack.c.l.b16 %v302
  %v1483 = vunpack.c.l.b16 %v303
  %v1484 = vunpack.c.l.b16 %v304
  %v1485 = vunpack.c.l.b16 %v305
  %v1486 = vunpack.c.l.b16 %v306
  %v1487 = vunpack.c.l.b16 %v307
  %v1488 = vunpack.c.l.b16 %v308
  %v1489 = vunpack.c.l.b16 %v309
  %v1490 = vunpack.c.l.b16 %v310
  %v1491 = vunpack.c.l.b16 %v311
  %v1492 = vunpack.c.l.b16 %v312
  %v1493 = vunpack.c.l.b16 %v313
  %v1494 = vunpack.c.l.b16 %v314
  %v1495 = vunpack.c.l.b16 %v315
  %v1496 = vunpack.c.l.b16 %v316
  %v1497 = vunpack.c.l.b16 %v317
  %v1498 = vunpack.c.l.b16 %v318
  %v1499 = vunpack.c.l.b16 %v319
  %v1500 = vunpack.c.l.b16 %v320
  %v1501 = vunpack.c.l.b16 %v321
  %v1502 = vunpack.c.l.b16 %v322
  %v1503 = vunpack.c.l.b16 %v323
  %v1504 = vunpack.c.l.b16 %v324
  %v1505 = vunpack.c.l.b16 %v325
  %v1506 = vunpack.c.l.b16 %v326
  %v1507 = vunpack.c.l.b16 %v327
  %v1508 = vunpack.c.l.b16 %v328
  %v1509 = vunpack.c.l.b16 %v329
  %v1510 = vunpack.c.l.b16 %v330
  %v1511 = vunpack.c.l.b16 %v331
  %v1512 = vunpack.c.l.b16 %v332
  %v1513 = vunpack.c.l.b16 %v333
  %v1514 = vunpack.c.l.b16 %v334
  %v1515 = vunpack.c.l.b16 %v335
  %v1516 = vunpack.c.l.b16 %v336
  %v1517 = vunpack.c.l.b16 %v337
  %v1518 = vunpack.c.l.b16 %v338
  %v1519 = vpack.c.b16 %v1420, %v1419
  %v1520 = vpack.c.b16 %v1422, %v1421
  %v1521 = vpack.c.b16 %v1424, %v1423
  %v1522 = vpack.c.b16 %v1426, %v1425
  %v1523 = vpack.c.b16 %v1428, %v1427
  %v1524 = vpack.c.b16 %v1430, %v1429
  %v1525 = vpack.c.b16 %v1432, %v1431
  %v1526 = vpack.c.b16 %v1434, %v1433
  %v1527 = vpack.c.b16 %v1436, %v1435
  %v1528 = vpack.c.b16 %v1438, %v1437
  %v1529 = vpack.c.b16 %v1440, %v1439
  %v1530 = vpack.c.b16 %v1442, %v1441
  %v1531 = vpack.c.b16 %v1444, %v1443
  %v1532 = vpack.c.b16 %v1446, %v1445
  %v1533 = vpack.c.b16 %v1448, %v1447
  %v1534 = vpack.c.b16 %v1450, %v1449
  %v1535 = vpack.c.b16 %v1452, %v1451
  %v1536 = vpack.c.b16 %v1454, %v1453
  %v1537 = vpack.c.b16 %v1456, %v1455
  %v1538 = vpack.c.b16 %v1458, %v1457
  %v1539 = vpack.c.b16 %v1460, %v1459
  %v1540 = vpack.c.b16 %v1462, %v1461
  %v1541 = vpack.c.b16 %v1464, %v1463
  %v1542 = vpack.c.b16 %v1466, %v1465
  %v1543 = vpack.c.b16 %v1468, %v1467
  %v1544 = vpack.c.b16 %v1470, %v1469
  %v1545 = vpack.c.b16 %v1472, %v1471
  %v1546 = vpack.c.b16 %v1474, %v1473
  %v1547 = vpack.c.b16 %v1476, %v1475
  %v1548 = vpack.c.b16 %v1478, %v1477
  %v1549 = vpack.c.b16 %v1480, %v1479
  %v1550 = vpack.c.b16 %v1482, %v1481
  %v1551 = vpack.c.b16 %v1484, %v1483
  %v1552 = vpack.c.b16 %v1486, %v1485
  %v1553 = vpack.c.b16 %v1488, %v1487
  %v1554 = vpack.c.b16 %v1490, %v1489
  %v1555 = vpack.c.b16 %v1492, %v1491
  %v1556 = vpack.c.b16 %v1494, %v1493
  %v1557 = vpack.c.b16 %v1496, %v1495
  %v1558 = vpack.c.b16 %v1498, %v1497
  %v1559 = vpack.c.b16 %v1500, %v1499
  %v1560 = vpack.c.b16 %v1502, %v1501
  %v1561 = vpack.c.b16 %v1504, %v1503
  %v1562 = vpack.c.b16 %v1506, %v1505
  %v1563 = vpack.c.b16 %v1508, %v1507
  %v1564 = vpack.c.b16 %v1510, %v1509
  %v1565 = vpack.c.b16 %v1512, %v1511
  %v1566 = vpack.c.b16 %v1514, %v1513
  %v1567 = vpack.c.b16 %v1516, %v1515
  %v1568 = vpack.c.b16 %v1518, %v1517
  %vm1619 = vcmask 261120
  %v1621 = vsel %vm1619, %v961, 0
  %v1624 = vsel %vm1619, %v968, 0
  %v1627 = vsel %vm1619, %v975, 0
  %v1630 = vsel %vm1619, %v982, 0
  %v1633 = vsel %vm1619, %v989, 0
  %v1636 = vsel %vm1619, %v996, 0
  %v1639 = vsel %vm1619, %v1003, 0
  %v1642 = vsel %vm1619, %v1010, 0
  %v1645 = vsel %vm1619, %v1017, 0
  %v1648 = vsel %vm1619, %v1024, 0
  %v1651 = vsel %vm1619, %v1031, 0
  %v1654 = vsel %vm1619, %v1038, 0
  %v1657 = vsel %vm1619, %v1045, 0
  %v1660 = vsel %vm1619, %v1052, 0
  %v1663 = vsel %vm1619, %v1059, 0
  %v1666 = vsel %vm1619, %v1066, 0
  %v1669 = vsel %vm1619, %v1073, 0
  %v1672 = vsel %vm1619, %v1080, 0
  %v1675 = vsel %vm1619, %v1087, 0
  %v1678 = vsel %vm1619, %v1094, 0
  %v1681 = vsel %vm1619, %v1101, 0
  %v1684 = vsel %vm1619, %v1108, 0
  %v1687 = vsel %vm1619, %v1115, 0
  %v1690 = vsel %vm1619, %v1122, 0
  %v1693 = vsel %vm1619, %v1129, 0
  %v1696 = vsel %vm1619, %v1136, 0
  %v1699 = vsel %vm1619, %v1143, 0
  %v1702 = vsel %vm1619, %v1150, 0
  %1704 = vmatprep.subr.bf16.mxu0 0
  %1705 = vmatpush1.bf16.msra.mxu0 %v1526
  %1706 = vmatprep.subr.bf16.mxu0 0
  %1707 = vmatpush1.bf16.msra.mxu0 %v1525
  %1708 = vmatprep.subr.bf16.mxu0 0
  %1709 = vmatpush1.bf16.msra.mxu0 %v1524
  %1710 = vmatprep.subr.bf16.mxu0 0
  %1711 = vmatpush1.bf16.msra.mxu0 %v1523
  %1712 = vmatprep.subr.bf16.mxu0 0
  %1713 = vmatpush1.bf16.msra.mxu0 %v1522
  %1714 = vmatprep.subr.bf16.mxu0 0
  %1715 = vmatpush1.bf16.msra.mxu0 %v1521
  %1716 = vmatprep.subr.bf16.mxu0 0
  %1717 = vmatpush1.bf16.msra.mxu0 %v1520
  %1718 = vmatprep.subr.bf16.mxu0 0
  %1719 = vmatpush1.bf16.msra.mxu0 %v1519
  %1720 = vmatprep.subr.bf16.mxu0 0
  %1721 = vmatpush2.bf16.msra.mxu0 %v1534
  %1722 = vmatprep.subr.bf16.mxu0 0
  %1723 = vmatpush2.bf16.msra.mxu0 %v1533
  %1724 = vmatprep.subr.bf16.mxu0 0
  %1725 = vmatpush2.bf16.msra.mxu0 %v1532
  %1726 = vmatprep.subr.bf16.mxu0 0
  %1727 = vmatpush2.bf16.msra.mxu0 %v1531
  %1728 = vmatprep.subr.bf16.mxu0 0
  %1729 = vmatpush2.bf16.msra.mxu0 %v1530
  %1730 = vmatprep.subr.bf16.mxu0 0
  %1731 = vmatpush2.bf16.msra.mxu0 %v1529
  %1732 = vmatprep.subr.bf16.mxu0 0
  %1733 = vmatpush2.bf16.msra.mxu0 %v1528
  %1734 = vmatprep.subr.bf16.mxu0 0
  %1735 = vmatpush2.bf16.msra.mxu0 %v1527
  %1736 = vmatprep.mubr.bf16.mxu0 %v956
  %1737 = vmatmul.mubr.bf16.gmra.mxu0 %v955
  %v1738 = vpop.f32.mrf.mxu0
  %v1739 = vadd.f32 0.0, %v1738
  %v1740 = vpop.f32.mrf.mxu0
  %v1741 = vpop.f32.mrf.mxu0
  %v1742 = vadd.f32 0.0, %v1741
  %v1743 = vpop.f32.mrf.mxu0
  %1744 = vmatprep.mubr.bf16.mxu0 %v963
  %1745 = vmatmul.mubr.bf16.gmra.mxu0 %v962
  %v1746 = vpop.f32.mrf.mxu0
  %v1747 = vadd.f32 0.0, %v1746
  %v1748 = vpop.f32.mrf.mxu0
  %v1749 = vpop.f32.mrf.mxu0
  %v1750 = vadd.f32 0.0, %v1749
  %v1751 = vpop.f32.mrf.mxu0
  %1752 = vmatprep.mubr.bf16.mxu0 %v970
  %1753 = vmatmul.mubr.bf16.gmra.mxu0 %v969
  %v1754 = vpop.f32.mrf.mxu0
  %v1755 = vadd.f32 0.0, %v1754
  %v1756 = vpop.f32.mrf.mxu0
  %v1757 = vpop.f32.mrf.mxu0
  %v1758 = vadd.f32 0.0, %v1757
  %v1759 = vpop.f32.mrf.mxu0
  %1760 = vmatprep.mubr.bf16.mxu0 %v977
  %1761 = vmatmul.mubr.bf16.gmra.mxu0 %v976
  %v1762 = vpop.f32.mrf.mxu0
  %v1763 = vadd.f32 0.0, %v1762
  %v1764 = vpop.f32.mrf.mxu0
  %v1765 = vpop.f32.mrf.mxu0
  %v1766 = vadd.f32 0.0, %v1765
  %v1767 = vpop.f32.mrf.mxu0
  %1768 = vmatprep.mubr.bf16.mxu0 %v984
  %1769 = vmatmul.mubr.bf16.gmra.mxu0 %v983
  %v1770 = vpop.f32.mrf.mxu0
  %v1771 = vadd.f32 0.0, %v1770
  %v1772 = vpop.f32.mrf.mxu0
  %v1773 = vpop.f32.mrf.mxu0
  %v1774 = vadd.f32 0.0, %v1773
  %v1775 = vpop.f32.mrf.mxu0
  %1776 = vmatprep.mubr.bf16.mxu0 %v991
  %1777 = vmatmul.mubr.bf16.gmra.mxu0 %v990
  %v1778 = vpop.f32.mrf.mxu0
  %v1779 = vadd.f32 0.0, %v1778
  %v1780 = vpop.f32.mrf.mxu0
  %v1781 = vpop.f32.mrf.mxu0
  %v1782 = vadd.f32 0.0, %v1781
  %v1783 = vpop.f32.mrf.mxu0
  %1784 = vmatprep.mubr.bf16.mxu0 %v998
  %1785 = vmatmul.mubr.bf16.gmra.mxu0 %v997
  %v1786 = vpop.f32.mrf.mxu0
  %v1787 = vadd.f32 0.0, %v1786
  %v1788 = vpop.f32.mrf.mxu0
  %v1789 = vpop.f32.mrf.mxu0
  %v1790 = vadd.f32 0.0, %v1789
  %v1791 = vpop.f32.mrf.mxu0
  %1792 = vmatprep.mubr.bf16.mxu0 %v1005
  %1793 = vmatmul.mubr.bf16.gmra.mxu0 %v1004
  %v1794 = vpop.f32.mrf.mxu0
  %v1795 = vadd.f32 0.0, %v1794
  %v1796 = vpop.f32.mrf.mxu0
  %v1797 = vpop.f32.mrf.mxu0
  %v1798 = vadd.f32 0.0, %v1797
  %v1799 = vpop.f32.mrf.mxu0
  %1800 = vmatprep.mubr.bf16.mxu0 %v1012
  %1801 = vmatmul.mubr.bf16.gmra.mxu0 %v1011
  %v1802 = vpop.f32.mrf.mxu0
  %v1803 = vadd.f32 0.0, %v1802
  %v1804 = vpop.f32.mrf.mxu0
  %v1805 = vpop.f32.mrf.mxu0
  %v1806 = vadd.f32 0.0, %v1805
  %v1807 = vpop.f32.mrf.mxu0
  %1808 = vmatprep.mubr.bf16.mxu0 %v1019
  %1809 = vmatmul.mubr.bf16.gmra.mxu0 %v1018
  %v1810 = vpop.f32.mrf.mxu0
  %v1811 = vadd.f32 0.0, %v1810
  %v1812 = vpop.f32.mrf.mxu0
  %v1813 = vpop.f32.mrf.mxu0
  %v1814 = vadd.f32 0.0, %v1813
  %v1815 = vpop.f32.mrf.mxu0
  %1816 = vmatprep.mubr.bf16.mxu0 %v1026
  %1817 = vmatmul.mubr.bf16.gmra.mxu0 %v1025
  %v1818 = vpop.f32.mrf.mxu0
  %v1819 = vadd.f32 0.0, %v1818
  %v1820 = vpop.f32.mrf.mxu0
  %v1821 = vpop.f32.mrf.mxu0
  %v1822 = vadd.f32 0.0, %v1821
  %v1823 = vpop.f32.mrf.mxu0
  %1824 = vmatprep.mubr.bf16.mxu0 %v1033
  %1825 = vmatmul.mubr.bf16.gmra.mxu0 %v1032
  %v1826 = vpop.f32.mrf.mxu0
  %v1827 = vadd.f32 0.0, %v1826
  %v1828 = vpop.f32.mrf.mxu0
  %v1829 = vpop.f32.mrf.mxu0
  %v1830 = vadd.f32 0.0, %v1829
  %v1831 = vpop.f32.mrf.mxu0
  %1832 = vmatprep.mubr.bf16.mxu0 %v1040
  %1833 = vmatmul.mubr.bf16.gmra.mxu0 %v1039
  %v1834 = vpop.f32.mrf.mxu0
  %v1835 = vadd.f32 0.0, %v1834
  %v1836 = vpop.f32.mrf.mxu0
  %v1837 = vpop.f32.mrf.mxu0
  %v1838 = vadd.f32 0.0, %v1837
  %v1839 = vpop.f32.mrf.mxu0
  %1840 = vmatprep.mubr.bf16.mxu0 %v1047
  %1841 = vmatmul.mubr.bf16.gmra.mxu0 %v1046
  %v1842 = vpop.f32.mrf.mxu0
  %v1843 = vadd.f32 0.0, %v1842
  %v1844 = vpop.f32.mrf.mxu0
  %v1845 = vpop.f32.mrf.mxu0
  %v1846 = vadd.f32 0.0, %v1845
  %v1847 = vpop.f32.mrf.mxu0
  %1848 = vmatprep.mubr.bf16.mxu0 %v1054
  %1849 = vmatmul.mubr.bf16.gmra.mxu0 %v1053
  %v1850 = vpop.f32.mrf.mxu0
  %v1851 = vadd.f32 0.0, %v1850
  %v1852 = vpop.f32.mrf.mxu0
  %v1853 = vpop.f32.mrf.mxu0
  %v1854 = vadd.f32 0.0, %v1853
  %v1855 = vpop.f32.mrf.mxu0
  %1856 = vmatprep.mubr.bf16.mxu0 %v1061
  %1857 = vmatmul.mubr.bf16.gmra.mxu0 %v1060
  %v1858 = vpop.f32.mrf.mxu0
  %v1859 = vadd.f32 0.0, %v1858
  %v1860 = vpop.f32.mrf.mxu0
  %v1861 = vpop.f32.mrf.mxu0
  %v1862 = vadd.f32 0.0, %v1861
  %v1863 = vpop.f32.mrf.mxu0
  %1864 = vmatprep.mubr.bf16.mxu0 %v1068
  %1865 = vmatmul.mubr.bf16.gmra.mxu0 %v1067
  %v1866 = vpop.f32.mrf.mxu0
  %v1867 = vadd.f32 0.0, %v1866
  %v1868 = vpop.f32.mrf.mxu0
  %v1869 = vpop.f32.mrf.mxu0
  %v1870 = vadd.f32 0.0, %v1869
  %v1871 = vpop.f32.mrf.mxu0
  %1872 = vmatprep.mubr.bf16.mxu0 %v1075
  %1873 = vmatmul.mubr.bf16.gmra.mxu0 %v1074
  %v1874 = vpop.f32.mrf.mxu0
  %v1875 = vadd.f32 0.0, %v1874
  %v1876 = vpop.f32.mrf.mxu0
  %v1877 = vpop.f32.mrf.mxu0
  %v1878 = vadd.f32 0.0, %v1877
  %v1879 = vpop.f32.mrf.mxu0
  %1880 = vmatprep.mubr.bf16.mxu0 %v1082
  %1881 = vmatmul.mubr.bf16.gmra.mxu0 %v1081
  %v1882 = vpop.f32.mrf.mxu0
  %v1883 = vadd.f32 0.0, %v1882
  %v1884 = vpop.f32.mrf.mxu0
  %v1885 = vpop.f32.mrf.mxu0
  %v1886 = vadd.f32 0.0, %v1885
  %v1887 = vpop.f32.mrf.mxu0
  %1888 = vmatprep.mubr.bf16.mxu0 %v1089
  %1889 = vmatmul.mubr.bf16.gmra.mxu0 %v1088
  %v1890 = vpop.f32.mrf.mxu0
  %v1891 = vadd.f32 0.0, %v1890
  %v1892 = vpop.f32.mrf.mxu0
  %v1893 = vpop.f32.mrf.mxu0
  %v1894 = vadd.f32 0.0, %v1893
  %v1895 = vpop.f32.mrf.mxu0
  %1896 = vmatprep.mubr.bf16.mxu0 %v1096
  %1897 = vmatmul.mubr.bf16.gmra.mxu0 %v1095
  %v1898 = vpop.f32.mrf.mxu0
  %v1899 = vadd.f32 0.0, %v1898
  %v1900 = vpop.f32.mrf.mxu0
  %v1901 = vpop.f32.mrf.mxu0
  %v1902 = vadd.f32 0.0, %v1901
  %v1903 = vpop.f32.mrf.mxu0
  %1904 = vmatprep.mubr.bf16.mxu0 %v1103
  %1905 = vmatmul.mubr.bf16.gmra.mxu0 %v1102
  %v1906 = vpop.f32.mrf.mxu0
  %v1907 = vadd.f32 0.0, %v1906
  %v1908 = vpop.f32.mrf.mxu0
  %v1909 = vpop.f32.mrf.mxu0
  %v1910 = vadd.f32 0.0, %v1909
  %v1911 = vpop.f32.mrf.mxu0
  %1912 = vmatprep.mubr.bf16.mxu0 %v1110
  %1913 = vmatmul.mubr.bf16.gmra.mxu0 %v1109
  %v1914 = vpop.f32.mrf.mxu0
  %v1915 = vadd.f32 0.0, %v1914
  %v1916 = vpop.f32.mrf.mxu0
  %v1917 = vpop.f32.mrf.mxu0
  %v1918 = vadd.f32 0.0, %v1917
  %v1919 = vpop.f32.mrf.mxu0
  %1920 = vmatprep.mubr.bf16.mxu0 %v1117
  %1921 = vmatmul.mubr.bf16.gmra.mxu0 %v1116
  %v1922 = vpop.f32.mrf.mxu0
  %v1923 = vadd.f32 0.0, %v1922
  %v1924 = vpop.f32.mrf.mxu0
  %v1925 = vpop.f32.mrf.mxu0
  %v1926 = vadd.f32 0.0, %v1925
  %v1927 = vpop.f32.mrf.mxu0
  %1928 = vmatprep.mubr.bf16.mxu0 %v1124
  %1929 = vmatmul.mubr.bf16.gmra.mxu0 %v1123
  %v1930 = vpop.f32.mrf.mxu0
  %v1931 = vadd.f32 0.0, %v1930
  %v1932 = vpop.f32.mrf.mxu0
  %v1933 = vpop.f32.mrf.mxu0
  %v1934 = vadd.f32 0.0, %v1933
  %v1935 = vpop.f32.mrf.mxu0
  %1936 = vmatprep.mubr.bf16.mxu0 %v1131
  %1937 = vmatmul.mubr.bf16.gmra.mxu0 %v1130
  %v1938 = vpop.f32.mrf.mxu0
  %v1939 = vadd.f32 0.0, %v1938
  %v1940 = vpop.f32.mrf.mxu0
  %v1941 = vpop.f32.mrf.mxu0
  %v1942 = vadd.f32 0.0, %v1941
  %v1943 = vpop.f32.mrf.mxu0
  %1944 = vmatprep.mubr.bf16.mxu0 %v1138
  %1945 = vmatmul.mubr.bf16.gmra.mxu0 %v1137
  %v1946 = vpop.f32.mrf.mxu0
  %v1947 = vadd.f32 0.0, %v1946
  %v1948 = vpop.f32.mrf.mxu0
  %v1949 = vpop.f32.mrf.mxu0
  %v1950 = vadd.f32 0.0, %v1949
  %v1951 = vpop.f32.mrf.mxu0
  %1952 = vmatprep.mubr.bf16.mxu0 %v1145
  %1953 = vmatmul.mubr.bf16.gmra.mxu0 %v1144
  %v1954 = vpop.f32.mrf.mxu0
  %v1955 = vadd.f32 0.0, %v1954
  %v1956 = vpop.f32.mrf.mxu0
  %v1957 = vpop.f32.mrf.mxu0
  %v1958 = vadd.f32 0.0, %v1957
  %v1959 = vpop.f32.mrf.mxu0
  %1960 = vdwg.mxu0
  %1961 = vmatprep.subr.bf16.mxu0 0
  %1962 = vmatpush1.bf16.msra.mxu0 %v1542
  %1963 = vmatprep.subr.bf16.mxu0 0
  %1964 = vmatpush1.bf16.msra.mxu0 %v1541
  %1965 = vmatprep.subr.bf16.mxu0 0
  %1966 = vmatpush1.bf16.msra.mxu0 %v1540
  %1967 = vmatprep.subr.bf16.mxu0 0
  %1968 = vmatpush1.bf16.msra.mxu0 %v1539
  %1969 = vmatprep.subr.bf16.mxu0 0
  %1970 = vmatpush1.bf16.msra.mxu0 %v1538
  %1971 = vmatprep.subr.bf16.mxu0 0
  %1972 = vmatpush1.bf16.msra.mxu0 %v1537
  %1973 = vmatprep.subr.bf16.mxu0 0
  %1974 = vmatpush1.bf16.msra.mxu0 %v1536
  %1975 = vmatprep.subr.bf16.mxu0 0
  %1976 = vmatpush1.bf16.msra.mxu0 %v1535
  %1977 = vmatprep.subr.bf16.mxu0 0
  %1978 = vmatpush2.bf16.msra.mxu0 %v1550
  %1979 = vmatprep.subr.bf16.mxu0 0
  %1980 = vmatpush2.bf16.msra.mxu0 %v1549
  %1981 = vmatprep.subr.bf16.mxu0 0
  %1982 = vmatpush2.bf16.msra.mxu0 %v1548
  %1983 = vmatprep.subr.bf16.mxu0 0
  %1984 = vmatpush2.bf16.msra.mxu0 %v1547
  %1985 = vmatprep.subr.bf16.mxu0 0
  %1986 = vmatpush2.bf16.msra.mxu0 %v1546
  %1987 = vmatprep.subr.bf16.mxu0 0
  %1988 = vmatpush2.bf16.msra.mxu0 %v1545
  %1989 = vmatprep.subr.bf16.mxu0 0
  %1990 = vmatpush2.bf16.msra.mxu0 %v1544
  %1991 = vmatprep.subr.bf16.mxu0 0
  %1992 = vmatpush2.bf16.msra.mxu0 %v1543
  %1993 = vmatprep.mubr.bf16.mxu0 %v958
  %1994 = vmatmul.mubr.bf16.gmra.mxu0 %v957
  %v1995 = vpop.f32.mrf.mxu0
  %v1996 = vadd.f32 %v1739, %v1995
  %v1997 = vpop.f32.mrf.mxu0
  %v1998 = vpop.f32.mrf.mxu0
  %v1999 = vadd.f32 %v1742, %v1998
  %v2000 = vpop.f32.mrf.mxu0
  %2001 = vmatprep.mubr.bf16.mxu0 %v965
  %2002 = vmatmul.mubr.bf16.gmra.mxu0 %v964
  %v2003 = vpop.f32.mrf.mxu0
  %v2004 = vadd.f32 %v1747, %v2003
  %v2005 = vpop.f32.mrf.mxu0
  %v2006 = vpop.f32.mrf.mxu0
  %v2007 = vadd.f32 %v1750, %v2006
  %v2008 = vpop.f32.mrf.mxu0
  %2009 = vmatprep.mubr.bf16.mxu0 %v972
  %2010 = vmatmul.mubr.bf16.gmra.mxu0 %v971
  %v2011 = vpop.f32.mrf.mxu0
  %v2012 = vadd.f32 %v1755, %v2011
  %v2013 = vpop.f32.mrf.mxu0
  %v2014 = vpop.f32.mrf.mxu0
  %v2015 = vadd.f32 %v1758, %v2014
  %v2016 = vpop.f32.mrf.mxu0
  %2017 = vmatprep.mubr.bf16.mxu0 %v979
  %2018 = vmatmul.mubr.bf16.gmra.mxu0 %v978
  %v2019 = vpop.f32.mrf.mxu0
  %v2020 = vadd.f32 %v1763, %v2019
  %v2021 = vpop.f32.mrf.mxu0
  %v2022 = vpop.f32.mrf.mxu0
  %v2023 = vadd.f32 %v1766, %v2022
  %v2024 = vpop.f32.mrf.mxu0
  %2025 = vmatprep.mubr.bf16.mxu0 %v986
  %2026 = vmatmul.mubr.bf16.gmra.mxu0 %v985
  %v2027 = vpop.f32.mrf.mxu0
  %v2028 = vadd.f32 %v1771, %v2027
  %v2029 = vpop.f32.mrf.mxu0
  %v2030 = vpop.f32.mrf.mxu0
  %v2031 = vadd.f32 %v1774, %v2030
  %v2032 = vpop.f32.mrf.mxu0
  %2033 = vmatprep.mubr.bf16.mxu0 %v993
  %2034 = vmatmul.mubr.bf16.gmra.mxu0 %v992
  %v2035 = vpop.f32.mrf.mxu0
  %v2036 = vadd.f32 %v1779, %v2035
  %v2037 = vpop.f32.mrf.mxu0
  %v2038 = vpop.f32.mrf.mxu0
  %v2039 = vadd.f32 %v1782, %v2038
  %v2040 = vpop.f32.mrf.mxu0
  %2041 = vmatprep.mubr.bf16.mxu0 %v1000
  %2042 = vmatmul.mubr.bf16.gmra.mxu0 %v999
  %v2043 = vpop.f32.mrf.mxu0
  %v2044 = vadd.f32 %v1787, %v2043
  %v2045 = vpop.f32.mrf.mxu0
  %v2046 = vpop.f32.mrf.mxu0
  %v2047 = vadd.f32 %v1790, %v2046
  %v2048 = vpop.f32.mrf.mxu0
  %2049 = vmatprep.mubr.bf16.mxu0 %v1007
  %2050 = vmatmul.mubr.bf16.gmra.mxu0 %v1006
  %v2051 = vpop.f32.mrf.mxu0
  %v2052 = vadd.f32 %v1795, %v2051
  %v2053 = vpop.f32.mrf.mxu0
  %v2054 = vpop.f32.mrf.mxu0
  %v2055 = vadd.f32 %v1798, %v2054
  %v2056 = vpop.f32.mrf.mxu0
  %2057 = vmatprep.mubr.bf16.mxu0 %v1014
  %2058 = vmatmul.mubr.bf16.gmra.mxu0 %v1013
  %v2059 = vpop.f32.mrf.mxu0
  %v2060 = vadd.f32 %v1803, %v2059
  %v2061 = vpop.f32.mrf.mxu0
  %v2062 = vpop.f32.mrf.mxu0
  %v2063 = vadd.f32 %v1806, %v2062
  %v2064 = vpop.f32.mrf.mxu0
  %2065 = vmatprep.mubr.bf16.mxu0 %v1021
  %2066 = vmatmul.mubr.bf16.gmra.mxu0 %v1020
  %v2067 = vpop.f32.mrf.mxu0
  %v2068 = vadd.f32 %v1811, %v2067
  %v2069 = vpop.f32.mrf.mxu0
  %v2070 = vpop.f32.mrf.mxu0
  %v2071 = vadd.f32 %v1814, %v2070
  %v2072 = vpop.f32.mrf.mxu0
  %2073 = vmatprep.mubr.bf16.mxu0 %v1028
  %2074 = vmatmul.mubr.bf16.gmra.mxu0 %v1027
  %v2075 = vpop.f32.mrf.mxu0
  %v2076 = vadd.f32 %v1819, %v2075
  %v2077 = vpop.f32.mrf.mxu0
  %v2078 = vpop.f32.mrf.mxu0
  %v2079 = vadd.f32 %v1822, %v2078
  %v2080 = vpop.f32.mrf.mxu0
  %2081 = vmatprep.mubr.bf16.mxu0 %v1035
  %2082 = vmatmul.mubr.bf16.gmra.mxu0 %v1034
  %v2083 = vpop.f32.mrf.mxu0
  %v2084 = vadd.f32 %v1827, %v2083
  %v2085 = vpop.f32.mrf.mxu0
  %v2086 = vpop.f32.mrf.mxu0
  %v2087 = vadd.f32 %v1830, %v2086
  %v2088 = vpop.f32.mrf.mxu0
  %2089 = vmatprep.mubr.bf16.mxu0 %v1042
  %2090 = vmatmul.mubr.bf16.gmra.mxu0 %v1041
  %v2091 = vpop.f32.mrf.mxu0
  %v2092 = vadd.f32 %v1835, %v2091
  %v2093 = vpop.f32.mrf.mxu0
  %v2094 = vpop.f32.mrf.mxu0
  %v2095 = vadd.f32 %v1838, %v2094
  %v2096 = vpop.f32.mrf.mxu0
  %2097 = vmatprep.mubr.bf16.mxu0 %v1049
  %2098 = vmatmul.mubr.bf16.gmra.mxu0 %v1048
  %v2099 = vpop.f32.mrf.mxu0
  %v2100 = vadd.f32 %v1843, %v2099
  %v2101 = vpop.f32.mrf.mxu0
  %v2102 = vpop.f32.mrf.mxu0
  %v2103 = vadd.f32 %v1846, %v2102
  %v2104 = vpop.f32.mrf.mxu0
  %2105 = vmatprep.mubr.bf16.mxu0 %v1056
  %2106 = vmatmul.mubr.bf16.gmra.mxu0 %v1055
  %v2107 = vpop.f32.mrf.mxu0
  %v2108 = vadd.f32 %v1851, %v2107
  %v2109 = vpop.f32.mrf.mxu0
  %v2110 = vpop.f32.mrf.mxu0
  %v2111 = vadd.f32 %v1854, %v2110
  %v2112 = vpop.f32.mrf.mxu0
  %2113 = vmatprep.mubr.bf16.mxu0 %v1063
  %2114 = vmatmul.mubr.bf16.gmra.mxu0 %v1062
  %v2115 = vpop.f32.mrf.mxu0
  %v2116 = vadd.f32 %v1859, %v2115
  %v2117 = vpop.f32.mrf.mxu0
  %v2118 = vpop.f32.mrf.mxu0
  %v2119 = vadd.f32 %v1862, %v2118
  %v2120 = vpop.f32.mrf.mxu0
  %2121 = vmatprep.mubr.bf16.mxu0 %v1070
  %2122 = vmatmul.mubr.bf16.gmra.mxu0 %v1069
  %v2123 = vpop.f32.mrf.mxu0
  %v2124 = vadd.f32 %v1867, %v2123
  %v2125 = vpop.f32.mrf.mxu0
  %v2126 = vpop.f32.mrf.mxu0
  %v2127 = vadd.f32 %v1870, %v2126
  %v2128 = vpop.f32.mrf.mxu0
  %2129 = vmatprep.mubr.bf16.mxu0 %v1077
  %2130 = vmatmul.mubr.bf16.gmra.mxu0 %v1076
  %v2131 = vpop.f32.mrf.mxu0
  %v2132 = vadd.f32 %v1875, %v2131
  %v2133 = vpop.f32.mrf.mxu0
  %v2134 = vpop.f32.mrf.mxu0
  %v2135 = vadd.f32 %v1878, %v2134
  %v2136 = vpop.f32.mrf.mxu0
  %2137 = vmatprep.mubr.bf16.mxu0 %v1084
  %2138 = vmatmul.mubr.bf16.gmra.mxu0 %v1083
  %v2139 = vpop.f32.mrf.mxu0
  %v2140 = vadd.f32 %v1883, %v2139
  %v2141 = vpop.f32.mrf.mxu0
  %v2142 = vpop.f32.mrf.mxu0
  %v2143 = vadd.f32 %v1886, %v2142
  %v2144 = vpop.f32.mrf.mxu0
  %2145 = vmatprep.mubr.bf16.mxu0 %v1091
  %2146 = vmatmul.mubr.bf16.gmra.mxu0 %v1090
  %v2147 = vpop.f32.mrf.mxu0
  %v2148 = vadd.f32 %v1891, %v2147
  %v2149 = vpop.f32.mrf.mxu0
  %v2150 = vpop.f32.mrf.mxu0
  %v2151 = vadd.f32 %v1894, %v2150
  %v2152 = vpop.f32.mrf.mxu0
  %2153 = vmatprep.mubr.bf16.mxu0 %v1098
  %2154 = vmatmul.mubr.bf16.gmra.mxu0 %v1097
  %v2155 = vpop.f32.mrf.mxu0
  %v2156 = vadd.f32 %v1899, %v2155
  %v2157 = vpop.f32.mrf.mxu0
  %v2158 = vpop.f32.mrf.mxu0
  %v2159 = vadd.f32 %v1902, %v2158
  %v2160 = vpop.f32.mrf.mxu0
  %2161 = vmatprep.mubr.bf16.mxu0 %v1105
  %2162 = vmatmul.mubr.bf16.gmra.mxu0 %v1104
  %v2163 = vpop.f32.mrf.mxu0
  %v2164 = vadd.f32 %v1907, %v2163
  %v2165 = vpop.f32.mrf.mxu0
  %v2166 = vpop.f32.mrf.mxu0
  %v2167 = vadd.f32 %v1910, %v2166
  %v2168 = vpop.f32.mrf.mxu0
  %2169 = vmatprep.mubr.bf16.mxu0 %v1112
  %2170 = vmatmul.mubr.bf16.gmra.mxu0 %v1111
  %v2171 = vpop.f32.mrf.mxu0
  %v2172 = vadd.f32 %v1915, %v2171
  %v2173 = vpop.f32.mrf.mxu0
  %v2174 = vpop.f32.mrf.mxu0
  %v2175 = vadd.f32 %v1918, %v2174
  %v2176 = vpop.f32.mrf.mxu0
  %2177 = vmatprep.mubr.bf16.mxu0 %v1119
  %2178 = vmatmul.mubr.bf16.gmra.mxu0 %v1118
  %v2179 = vpop.f32.mrf.mxu0
  %v2180 = vadd.f32 %v1923, %v2179
  %v2181 = vpop.f32.mrf.mxu0
  %v2182 = vpop.f32.mrf.mxu0
  %v2183 = vadd.f32 %v1926, %v2182
  %v2184 = vpop.f32.mrf.mxu0
  %2185 = vmatprep.mubr.bf16.mxu0 %v1126
  %2186 = vmatmul.mubr.bf16.gmra.mxu0 %v1125
  %v2187 = vpop.f32.mrf.mxu0
  %v2188 = vadd.f32 %v1931, %v2187
  %v2189 = vpop.f32.mrf.mxu0
  %v2190 = vpop.f32.mrf.mxu0
  %v2191 = vadd.f32 %v1934, %v2190
  %v2192 = vpop.f32.mrf.mxu0
  %2193 = vmatprep.mubr.bf16.mxu0 %v1133
  %2194 = vmatmul.mubr.bf16.gmra.mxu0 %v1132
  %v2195 = vpop.f32.mrf.mxu0
  %v2196 = vadd.f32 %v1939, %v2195
  %v2197 = vpop.f32.mrf.mxu0
  %v2198 = vpop.f32.mrf.mxu0
  %v2199 = vadd.f32 %v1942, %v2198
  %v2200 = vpop.f32.mrf.mxu0
  %2201 = vmatprep.mubr.bf16.mxu0 %v1140
  %2202 = vmatmul.mubr.bf16.gmra.mxu0 %v1139
  %v2203 = vpop.f32.mrf.mxu0
  %v2204 = vadd.f32 %v1947, %v2203
  %v2205 = vpop.f32.mrf.mxu0
  %v2206 = vpop.f32.mrf.mxu0
  %v2207 = vadd.f32 %v1950, %v2206
  %v2208 = vpop.f32.mrf.mxu0
  %2209 = vmatprep.mubr.bf16.mxu0 %v1147
  %2210 = vmatmul.mubr.bf16.gmra.mxu0 %v1146
  %v2211 = vpop.f32.mrf.mxu0
  %v2212 = vadd.f32 %v1955, %v2211
  %v2213 = vpop.f32.mrf.mxu0
  %v2214 = vpop.f32.mrf.mxu0
  %v2215 = vadd.f32 %v1958, %v2214
  %v2216 = vpop.f32.mrf.mxu0
  %2217 = vdwg.mxu0
  %2218 = vmatprep.subr.bf16.mxu0 0
  %2219 = vmatpush1.bf16.msra.mxu0 %v1558
  %2220 = vmatprep.subr.bf16.mxu0 0
  %2221 = vmatpush1.bf16.msra.mxu0 %v1557
  %2222 = vmatprep.subr.bf16.mxu0 0
  %2223 = vmatpush1.bf16.msra.mxu0 %v1556
  %2224 = vmatprep.subr.bf16.mxu0 0
  %2225 = vmatpush1.bf16.msra.mxu0 %v1555
  %2226 = vmatprep.subr.bf16.mxu0 0
  %2227 = vmatpush1.bf16.msra.mxu0 %v1554
  %2228 = vmatprep.subr.bf16.mxu0 0
  %2229 = vmatpush1.bf16.msra.mxu0 %v1553
  %2230 = vmatprep.subr.bf16.mxu0 0
  %2231 = vmatpush1.bf16.msra.mxu0 %v1552
  %2232 = vmatprep.subr.bf16.mxu0 0
  %2233 = vmatpush1.bf16.msra.mxu0 %v1551
  %2234 = vmatprep.subr.bf16.mxu0 0
  %2235 = vmatpush2.bf16.msra.mxu0 %v1566
  %2236 = vmatprep.subr.bf16.mxu0 0
  %2237 = vmatpush2.bf16.msra.mxu0 %v1565
  %2238 = vmatprep.subr.bf16.mxu0 0
  %2239 = vmatpush2.bf16.msra.mxu0 %v1564
  %2240 = vmatprep.subr.bf16.mxu0 0
  %2241 = vmatpush2.bf16.msra.mxu0 %v1563
  %2242 = vmatprep.subr.bf16.mxu0 0
  %2243 = vmatpush2.bf16.msra.mxu0 %v1562
  %2244 = vmatprep.subr.bf16.mxu0 0
  %2245 = vmatpush2.bf16.msra.mxu0 %v1561
  %2246 = vmatprep.subr.bf16.mxu0 0
  %2247 = vmatpush2.bf16.msra.mxu0 %v1560
  %2248 = vmatprep.subr.bf16.mxu0 0
  %2249 = vmatpush2.bf16.msra.mxu0 %v1559
  %2250 = vmatprep.mubr.bf16.mxu0 %v960
  %2251 = vmatmul.mubr.bf16.gmra.mxu0 %v959
  %v2252 = vpop.f32.mrf.mxu0
  %v2253 = vadd.f32 %v1996, %v2252
  %v2254 = vpop.f32.mrf.mxu0
  %v2255 = vpop.f32.mrf.mxu0
  %v2256 = vadd.f32 %v1999, %v2255
  %v2257 = vpop.f32.mrf.mxu0
  %2258 = vmatprep.mubr.bf16.mxu0 %v967
  %2259 = vmatmul.mubr.bf16.gmra.mxu0 %v966
  %v2260 = vpop.f32.mrf.mxu0
  %v2261 = vadd.f32 %v2004, %v2260
  %v2262 = vpop.f32.mrf.mxu0
  %v2263 = vpop.f32.mrf.mxu0
  %v2264 = vadd.f32 %v2007, %v2263
  %v2265 = vpop.f32.mrf.mxu0
  %2266 = vmatprep.mubr.bf16.mxu0 %v974
  %2267 = vmatmul.mubr.bf16.gmra.mxu0 %v973
  %v2268 = vpop.f32.mrf.mxu0
  %v2269 = vadd.f32 %v2012, %v2268
  %v2270 = vpop.f32.mrf.mxu0
  %v2271 = vpop.f32.mrf.mxu0
  %v2272 = vadd.f32 %v2015, %v2271
  %v2273 = vpop.f32.mrf.mxu0
  %2274 = vmatprep.mubr.bf16.mxu0 %v981
  %2275 = vmatmul.mubr.bf16.gmra.mxu0 %v980
  %v2276 = vpop.f32.mrf.mxu0
  %v2277 = vadd.f32 %v2020, %v2276
  %v2278 = vpop.f32.mrf.mxu0
  %v2279 = vpop.f32.mrf.mxu0
  %v2280 = vadd.f32 %v2023, %v2279
  %v2281 = vpop.f32.mrf.mxu0
  %2282 = vmatprep.mubr.bf16.mxu0 %v988
  %2283 = vmatmul.mubr.bf16.gmra.mxu0 %v987
  %v2284 = vpop.f32.mrf.mxu0
  %v2285 = vadd.f32 %v2028, %v2284
  %v2286 = vpop.f32.mrf.mxu0
  %v2287 = vpop.f32.mrf.mxu0
  %v2288 = vadd.f32 %v2031, %v2287
  %v2289 = vpop.f32.mrf.mxu0
  %2290 = vmatprep.mubr.bf16.mxu0 %v995
  %2291 = vmatmul.mubr.bf16.gmra.mxu0 %v994
  %v2292 = vpop.f32.mrf.mxu0
  %v2293 = vadd.f32 %v2036, %v2292
  %v2294 = vpop.f32.mrf.mxu0
  %v2295 = vpop.f32.mrf.mxu0
  %v2296 = vadd.f32 %v2039, %v2295
  %v2297 = vpop.f32.mrf.mxu0
  %2298 = vmatprep.mubr.bf16.mxu0 %v1002
  %2299 = vmatmul.mubr.bf16.gmra.mxu0 %v1001
  %v2300 = vpop.f32.mrf.mxu0
  %v2301 = vadd.f32 %v2044, %v2300
  %v2302 = vpop.f32.mrf.mxu0
  %v2303 = vpop.f32.mrf.mxu0
  %v2304 = vadd.f32 %v2047, %v2303
  %v2305 = vpop.f32.mrf.mxu0
  %2306 = vmatprep.mubr.bf16.mxu0 %v1009
  %2307 = vmatmul.mubr.bf16.gmra.mxu0 %v1008
  %v2308 = vpop.f32.mrf.mxu0
  %v2309 = vadd.f32 %v2052, %v2308
  %v2310 = vpop.f32.mrf.mxu0
  %v2311 = vpop.f32.mrf.mxu0
  %v2312 = vadd.f32 %v2055, %v2311
  %v2313 = vpop.f32.mrf.mxu0
  %2314 = vmatprep.mubr.bf16.mxu0 %v1016
  %2315 = vmatmul.mubr.bf16.gmra.mxu0 %v1015
  %v2316 = vpop.f32.mrf.mxu0
  %v2317 = vadd.f32 %v2060, %v2316
  %v2318 = vpop.f32.mrf.mxu0
  %v2319 = vpop.f32.mrf.mxu0
  %v2320 = vadd.f32 %v2063, %v2319
  %v2321 = vpop.f32.mrf.mxu0
  %2322 = vmatprep.mubr.bf16.mxu0 %v1023
  %2323 = vmatmul.mubr.bf16.gmra.mxu0 %v1022
  %v2324 = vpop.f32.mrf.mxu0
  %v2325 = vadd.f32 %v2068, %v2324
  %v2326 = vpop.f32.mrf.mxu0
  %v2327 = vpop.f32.mrf.mxu0
  %v2328 = vadd.f32 %v2071, %v2327
  %v2329 = vpop.f32.mrf.mxu0
  %2330 = vmatprep.mubr.bf16.mxu0 %v1030
  %2331 = vmatmul.mubr.bf16.gmra.mxu0 %v1029
  %v2332 = vpop.f32.mrf.mxu0
  %v2333 = vadd.f32 %v2076, %v2332
  %v2334 = vpop.f32.mrf.mxu0
  %v2335 = vpop.f32.mrf.mxu0
  %v2336 = vadd.f32 %v2079, %v2335
  %v2337 = vpop.f32.mrf.mxu0
  %2338 = vmatprep.mubr.bf16.mxu0 %v1037
  %2339 = vmatmul.mubr.bf16.gmra.mxu0 %v1036
  %v2340 = vpop.f32.mrf.mxu0
  %v2341 = vadd.f32 %v2084, %v2340
  %v2342 = vpop.f32.mrf.mxu0
  %v2343 = vpop.f32.mrf.mxu0
  %v2344 = vadd.f32 %v2087, %v2343
  %v2345 = vpop.f32.mrf.mxu0
  %2346 = vmatprep.mubr.bf16.mxu0 %v1044
  %2347 = vmatmul.mubr.bf16.gmra.mxu0 %v1043
  %v2348 = vpop.f32.mrf.mxu0
  %v2349 = vadd.f32 %v2092, %v2348
  %v2350 = vpop.f32.mrf.mxu0
  %v2351 = vpop.f32.mrf.mxu0
  %v2352 = vadd.f32 %v2095, %v2351
  %v2353 = vpop.f32.mrf.mxu0
  %2354 = vmatprep.mubr.bf16.mxu0 %v1051
  %2355 = vmatmul.mubr.bf16.gmra.mxu0 %v1050
  %v2356 = vpop.f32.mrf.mxu0
  %v2357 = vadd.f32 %v2100, %v2356
  %v2358 = vpop.f32.mrf.mxu0
  %v2359 = vpop.f32.mrf.mxu0
  %v2360 = vadd.f32 %v2103, %v2359
  %v2361 = vpop.f32.mrf.mxu0
  %2362 = vmatprep.mubr.bf16.mxu0 %v1058
  %2363 = vmatmul.mubr.bf16.gmra.mxu0 %v1057
  %v2364 = vpop.f32.mrf.mxu0
  %v2365 = vadd.f32 %v2108, %v2364
  %v2366 = vpop.f32.mrf.mxu0
  %v2367 = vpop.f32.mrf.mxu0
  %v2368 = vadd.f32 %v2111, %v2367
  %v2369 = vpop.f32.mrf.mxu0
  %2370 = vmatprep.mubr.bf16.mxu0 %v1065
  %2371 = vmatmul.mubr.bf16.gmra.mxu0 %v1064
  %v2372 = vpop.f32.mrf.mxu0
  %v2373 = vadd.f32 %v2116, %v2372
  %v2374 = vpop.f32.mrf.mxu0
  %v2375 = vpop.f32.mrf.mxu0
  %v2376 = vadd.f32 %v2119, %v2375
  %v2377 = vpop.f32.mrf.mxu0
  %2378 = vmatprep.mubr.bf16.mxu0 %v1072
  %2379 = vmatmul.mubr.bf16.gmra.mxu0 %v1071
  %v2380 = vpop.f32.mrf.mxu0
  %v2381 = vadd.f32 %v2124, %v2380
  %v2382 = vpop.f32.mrf.mxu0
  %v2383 = vpop.f32.mrf.mxu0
  %v2384 = vadd.f32 %v2127, %v2383
  %v2385 = vpop.f32.mrf.mxu0
  %2386 = vmatprep.mubr.bf16.mxu0 %v1079
  %2387 = vmatmul.mubr.bf16.gmra.mxu0 %v1078
  %v2388 = vpop.f32.mrf.mxu0
  %v2389 = vadd.f32 %v2132, %v2388
  %v2390 = vpop.f32.mrf.mxu0
  %v2391 = vpop.f32.mrf.mxu0
  %v2392 = vadd.f32 %v2135, %v2391
  %v2393 = vpop.f32.mrf.mxu0
  %2394 = vmatprep.mubr.bf16.mxu0 %v1086
  %2395 = vmatmul.mubr.bf16.gmra.mxu0 %v1085
  %v2396 = vpop.f32.mrf.mxu0
  %v2397 = vadd.f32 %v2140, %v2396
  %v2398 = vpop.f32.mrf.mxu0
  %v2399 = vpop.f32.mrf.mxu0
  %v2400 = vadd.f32 %v2143, %v2399
  %v2401 = vpop.f32.mrf.mxu0
  %2402 = vmatprep.mubr.bf16.mxu0 %v1093
  %2403 = vmatmul.mubr.bf16.gmra.mxu0 %v1092
  %v2404 = vpop.f32.mrf.mxu0
  %v2405 = vadd.f32 %v2148, %v2404
  %v2406 = vpop.f32.mrf.mxu0
  %v2407 = vpop.f32.mrf.mxu0
  %v2408 = vadd.f32 %v2151, %v2407
  %v2409 = vpop.f32.mrf.mxu0
  %2410 = vmatprep.mubr.bf16.mxu0 %v1100
  %2411 = vmatmul.mubr.bf16.gmra.mxu0 %v1099
  %v2412 = vpop.f32.mrf.mxu0
  %v2413 = vadd.f32 %v2156, %v2412
  %v2414 = vpop.f32.mrf.mxu0
  %v2415 = vpop.f32.mrf.mxu0
  %v2416 = vadd.f32 %v2159, %v2415
  %v2417 = vpop.f32.mrf.mxu0
  %2418 = vmatprep.mubr.bf16.mxu0 %v1107
  %2419 = vmatmul.mubr.bf16.gmra.mxu0 %v1106
  %v2420 = vpop.f32.mrf.mxu0
  %v2421 = vadd.f32 %v2164, %v2420
  %v2422 = vpop.f32.mrf.mxu0
  %v2423 = vpop.f32.mrf.mxu0
  %v2424 = vadd.f32 %v2167, %v2423
  %v2425 = vpop.f32.mrf.mxu0
  %2426 = vmatprep.mubr.bf16.mxu0 %v1114
  %2427 = vmatmul.mubr.bf16.gmra.mxu0 %v1113
  %v2428 = vpop.f32.mrf.mxu0
  %v2429 = vadd.f32 %v2172, %v2428
  %v2430 = vpop.f32.mrf.mxu0
  %v2431 = vpop.f32.mrf.mxu0
  %v2432 = vadd.f32 %v2175, %v2431
  %v2433 = vpop.f32.mrf.mxu0
  %2434 = vmatprep.mubr.bf16.mxu0 %v1121
  %2435 = vmatmul.mubr.bf16.gmra.mxu0 %v1120
  %v2436 = vpop.f32.mrf.mxu0
  %v2437 = vadd.f32 %v2180, %v2436
  %v2438 = vpop.f32.mrf.mxu0
  %v2439 = vpop.f32.mrf.mxu0
  %v2440 = vadd.f32 %v2183, %v2439
  %v2441 = vpop.f32.mrf.mxu0
  %2442 = vmatprep.mubr.bf16.mxu0 %v1128
  %2443 = vmatmul.mubr.bf16.gmra.mxu0 %v1127
  %v2444 = vpop.f32.mrf.mxu0
  %v2445 = vadd.f32 %v2188, %v2444
  %v2446 = vpop.f32.mrf.mxu0
  %v2447 = vpop.f32.mrf.mxu0
  %v2448 = vadd.f32 %v2191, %v2447
  %v2449 = vpop.f32.mrf.mxu0
  %2450 = vmatprep.mubr.bf16.mxu0 %v1135
  %2451 = vmatmul.mubr.bf16.gmra.mxu0 %v1134
  %v2452 = vpop.f32.mrf.mxu0
  %v2453 = vadd.f32 %v2196, %v2452
  %v2454 = vpop.f32.mrf.mxu0
  %v2455 = vpop.f32.mrf.mxu0
  %v2456 = vadd.f32 %v2199, %v2455
  %v2457 = vpop.f32.mrf.mxu0
  %2458 = vmatprep.mubr.bf16.mxu0 %v1142
  %2459 = vmatmul.mubr.bf16.gmra.mxu0 %v1141
  %v2460 = vpop.f32.mrf.mxu0
  %v2461 = vadd.f32 %v2204, %v2460
  %v2462 = vpop.f32.mrf.mxu0
  %v2463 = vpop.f32.mrf.mxu0
  %v2464 = vadd.f32 %v2207, %v2463
  %v2465 = vpop.f32.mrf.mxu0
  %2466 = vmatprep.mubr.bf16.mxu0 %v1149
  %2467 = vmatmul.mubr.bf16.gmra.mxu0 %v1148
  %v2468 = vpop.f32.mrf.mxu0
  %v2469 = vadd.f32 %v2212, %v2468
  %v2470 = vpop.f32.mrf.mxu0
  %v2471 = vpop.f32.mrf.mxu0
  %v2472 = vadd.f32 %v2215, %v2471
  %v2473 = vpop.f32.mrf.mxu0
  %2474 = vdwg.mxu0
  %2475 = vmatprep.subr.bf16.mxu0 0
  %2476 = vmatpush1.bf16.msra.mxu0 0
  %2477 = vmatprep.subr.bf16.mxu0 0
  %2478 = vmatpush1.bf16.msra.mxu0 0
  %2479 = vmatprep.subr.bf16.mxu0 0
  %2480 = vmatpush1.bf16.msra.mxu0 0
  %2481 = vmatprep.subr.bf16.mxu0 0
  %2482 = vmatpush1.bf16.msra.mxu0 0
  %2483 = vmatprep.subr.bf16.mxu0 0
  %2484 = vmatpush1.bf16.msra.mxu0 0
  %2485 = vmatprep.subr.bf16.mxu0 0
  %2486 = vmatpush1.bf16.msra.mxu0 0
  %2487 = vmatprep.subr.bf16.mxu0 0
  %2488 = vmatpush1.bf16.msra.mxu0 %v1568
  %2489 = vmatprep.subr.bf16.mxu0 0
  %2490 = vmatpush1.bf16.msra.mxu0 %v1567
  %2491 = vmatprep.subr.bf16.mxu0 0
  %2492 = vmatpush2.bf16.msra.mxu0 0
  %2493 = vmatprep.subr.bf16.mxu0 0
  %2494 = vmatpush2.bf16.msra.mxu0 0
  %2495 = vmatprep.subr.bf16.mxu0 0
  %2496 = vmatpush2.bf16.msra.mxu0 0
  %2497 = vmatprep.subr.bf16.mxu0 0
  %2498 = vmatpush2.bf16.msra.mxu0 0
  %2499 = vmatprep.subr.bf16.mxu0 0
  %2500 = vmatpush2.bf16.msra.mxu0 0
  %2501 = vmatprep.subr.bf16.mxu0 0
  %2502 = vmatpush2.bf16.msra.mxu0 0
  %2503 = vmatprep.subr.bf16.mxu0 0
  %2504 = vmatpush2.bf16.msra.mxu0 0
  %2505 = vmatprep.subr.bf16.mxu0 0
  %2506 = vmatpush2.bf16.msra.mxu0 0
  %2507 = vmatprep.mubr.bf16.mxu0 0
  %2508 = vmatmul.mubr.bf16.gmra.mxu0 %v1621
  %v2509 = vpop.f32.mrf.mxu0
  %v2510 = vadd.f32 %v2253, %v2509
  %v2511 = vpop.f32.mrf.mxu0
  %v2512 = vpop.f32.mrf.mxu0
  %v2513 = vadd.f32 %v2256, %v2512
  %v2514 = vpop.f32.mrf.mxu0
  %2515 = vmatprep.mubr.bf16.mxu0 0
  %2516 = vmatmul.mubr.bf16.gmra.mxu0 %v1624
  %v2517 = vpop.f32.mrf.mxu0
  %v2518 = vadd.f32 %v2261, %v2517
  %v2519 = vpop.f32.mrf.mxu0
  %v2520 = vpop.f32.mrf.mxu0
  %v2521 = vadd.f32 %v2264, %v2520
  %v2522 = vpop.f32.mrf.mxu0
  %2523 = vmatprep.mubr.bf16.mxu0 0
  %2524 = vmatmul.mubr.bf16.gmra.mxu0 %v1627
  %v2525 = vpop.f32.mrf.mxu0
  %v2526 = vadd.f32 %v2269, %v2525
  %v2527 = vpop.f32.mrf.mxu0
  %v2528 = vpop.f32.mrf.mxu0
  %v2529 = vadd.f32 %v2272, %v2528
  %v2530 = vpop.f32.mrf.mxu0
  %2531 = vmatprep.mubr.bf16.mxu0 0
  %2532 = vmatmul.mubr.bf16.gmra.mxu0 %v1630
  %v2533 = vpop.f32.mrf.mxu0
  %v2534 = vadd.f32 %v2277, %v2533
  %v2535 = vpop.f32.mrf.mxu0
  %v2536 = vpop.f32.mrf.mxu0
  %v2537 = vadd.f32 %v2280, %v2536
  %v2538 = vpop.f32.mrf.mxu0
  %2539 = vmatprep.mubr.bf16.mxu0 0
  %2540 = vmatmul.mubr.bf16.gmra.mxu0 %v1633
  %v2541 = vpop.f32.mrf.mxu0
  %v2542 = vadd.f32 %v2285, %v2541
  %v2543 = vpop.f32.mrf.mxu0
  %v2544 = vpop.f32.mrf.mxu0
  %v2545 = vadd.f32 %v2288, %v2544
  %v2546 = vpop.f32.mrf.mxu0
  %2547 = vmatprep.mubr.bf16.mxu0 0
  %2548 = vmatmul.mubr.bf16.gmra.mxu0 %v1636
  %v2549 = vpop.f32.mrf.mxu0
  %v2550 = vadd.f32 %v2293, %v2549
  %v2551 = vpop.f32.mrf.mxu0
  %v2552 = vpop.f32.mrf.mxu0
  %v2553 = vadd.f32 %v2296, %v2552
  %v2554 = vpop.f32.mrf.mxu0
  %2555 = vmatprep.mubr.bf16.mxu0 0
  %2556 = vmatmul.mubr.bf16.gmra.mxu0 %v1639
  %v2557 = vpop.f32.mrf.mxu0
  %v2558 = vadd.f32 %v2301, %v2557
  %v2559 = vpop.f32.mrf.mxu0
  %v2560 = vpop.f32.mrf.mxu0
  %v2561 = vadd.f32 %v2304, %v2560
  %v2562 = vpop.f32.mrf.mxu0
  %2563 = vmatprep.mubr.bf16.mxu0 0
  %2564 = vmatmul.mubr.bf16.gmra.mxu0 %v1642
  %v2565 = vpop.f32.mrf.mxu0
  %v2566 = vadd.f32 %v2309, %v2565
  %v2567 = vpop.f32.mrf.mxu0
  %v2568 = vpop.f32.mrf.mxu0
  %v2569 = vadd.f32 %v2312, %v2568
  %v2570 = vpop.f32.mrf.mxu0
  %2571 = vmatprep.mubr.bf16.mxu0 0
  %2572 = vmatmul.mubr.bf16.gmra.mxu0 %v1645
  %v2573 = vpop.f32.mrf.mxu0
  %v2574 = vadd.f32 %v2317, %v2573
  %v2575 = vpop.f32.mrf.mxu0
  %v2576 = vpop.f32.mrf.mxu0
  %v2577 = vadd.f32 %v2320, %v2576
  %v2578 = vpop.f32.mrf.mxu0
  %2579 = vmatprep.mubr.bf16.mxu0 0
  %2580 = vmatmul.mubr.bf16.gmra.mxu0 %v1648
  %v2581 = vpop.f32.mrf.mxu0
  %v2582 = vadd.f32 %v2325, %v2581
  %v2583 = vpop.f32.mrf.mxu0
  %v2584 = vpop.f32.mrf.mxu0
  %v2585 = vadd.f32 %v2328, %v2584
  %v2586 = vpop.f32.mrf.mxu0
  %2587 = vmatprep.mubr.bf16.mxu0 0
  %2588 = vmatmul.mubr.bf16.gmra.mxu0 %v1651
  %v2589 = vpop.f32.mrf.mxu0
  %v2590 = vadd.f32 %v2333, %v2589
  %v2591 = vpop.f32.mrf.mxu0
  %v2592 = vpop.f32.mrf.mxu0
  %v2593 = vadd.f32 %v2336, %v2592
  %v2594 = vpop.f32.mrf.mxu0
  %2595 = vmatprep.mubr.bf16.mxu0 0
  %2596 = vmatmul.mubr.bf16.gmra.mxu0 %v1654
  %v2597 = vpop.f32.mrf.mxu0
  %v2598 = vadd.f32 %v2341, %v2597
  %v2599 = vpop.f32.mrf.mxu0
  %v2600 = vpop.f32.mrf.mxu0
  %v2601 = vadd.f32 %v2344, %v2600
  %v2602 = vpop.f32.mrf.mxu0
  %2603 = vmatprep.mubr.bf16.mxu0 0
  %2604 = vmatmul.mubr.bf16.gmra.mxu0 %v1657
  %v2605 = vpop.f32.mrf.mxu0
  %v2606 = vadd.f32 %v2349, %v2605
  %v2607 = vpop.f32.mrf.mxu0
  %v2608 = vpop.f32.mrf.mxu0
  %v2609 = vadd.f32 %v2352, %v2608
  %v2610 = vpop.f32.mrf.mxu0
  %2611 = vmatprep.mubr.bf16.mxu0 0
  %2612 = vmatmul.mubr.bf16.gmra.mxu0 %v1660
  %v2613 = vpop.f32.mrf.mxu0
  %v2614 = vadd.f32 %v2357, %v2613
  %v2615 = vpop.f32.mrf.mxu0
  %v2616 = vpop.f32.mrf.mxu0
  %v2617 = vadd.f32 %v2360, %v2616
  %v2618 = vpop.f32.mrf.mxu0
  %2619 = vmatprep.mubr.bf16.mxu0 0
  %2620 = vmatmul.mubr.bf16.gmra.mxu0 %v1663
  %v2621 = vpop.f32.mrf.mxu0
  %v2622 = vadd.f32 %v2365, %v2621
  %v2623 = vpop.f32.mrf.mxu0
  %v2624 = vpop.f32.mrf.mxu0
  %v2625 = vadd.f32 %v2368, %v2624
  %v2626 = vpop.f32.mrf.mxu0
  %2627 = vmatprep.mubr.bf16.mxu0 0
  %2628 = vmatmul.mubr.bf16.gmra.mxu0 %v1666
  %v2629 = vpop.f32.mrf.mxu0
  %v2630 = vadd.f32 %v2373, %v2629
  %v2631 = vpop.f32.mrf.mxu0
  %v2632 = vpop.f32.mrf.mxu0
  %v2633 = vadd.f32 %v2376, %v2632
  %v2634 = vpop.f32.mrf.mxu0
  %2635 = vmatprep.mubr.bf16.mxu0 0
  %2636 = vmatmul.mubr.bf16.gmra.mxu0 %v1669
  %v2637 = vpop.f32.mrf.mxu0
  %v2638 = vadd.f32 %v2381, %v2637
  %v2639 = vpop.f32.mrf.mxu0
  %v2640 = vpop.f32.mrf.mxu0
  %v2641 = vadd.f32 %v2384, %v2640
  %v2642 = vpop.f32.mrf.mxu0
  %2643 = vmatprep.mubr.bf16.mxu0 0
  %2644 = vmatmul.mubr.bf16.gmra.mxu0 %v1672
  %v2645 = vpop.f32.mrf.mxu0
  %v2646 = vadd.f32 %v2389, %v2645
  %v2647 = vpop.f32.mrf.mxu0
  %v2648 = vpop.f32.mrf.mxu0
  %v2649 = vadd.f32 %v2392, %v2648
  %v2650 = vpop.f32.mrf.mxu0
  %2651 = vmatprep.mubr.bf16.mxu0 0
  %2652 = vmatmul.mubr.bf16.gmra.mxu0 %v1675
  %v2653 = vpop.f32.mrf.mxu0
  %v2654 = vadd.f32 %v2397, %v2653
  %v2655 = vpop.f32.mrf.mxu0
  %v2656 = vpop.f32.mrf.mxu0
  %v2657 = vadd.f32 %v2400, %v2656
  %v2658 = vpop.f32.mrf.mxu0
  %2659 = vmatprep.mubr.bf16.mxu0 0
  %2660 = vmatmul.mubr.bf16.gmra.mxu0 %v1678
  %v2661 = vpop.f32.mrf.mxu0
  %v2662 = vadd.f32 %v2405, %v2661
  %v2663 = vpop.f32.mrf.mxu0
  %v2664 = vpop.f32.mrf.mxu0
  %v2665 = vadd.f32 %v2408, %v2664
  %v2666 = vpop.f32.mrf.mxu0
  %2667 = vmatprep.mubr.bf16.mxu0 0
  %2668 = vmatmul.mubr.bf16.gmra.mxu0 %v1681
  %v2669 = vpop.f32.mrf.mxu0
  %v2670 = vadd.f32 %v2413, %v2669
  %v2671 = vpop.f32.mrf.mxu0
  %v2672 = vpop.f32.mrf.mxu0
  %v2673 = vadd.f32 %v2416, %v2672
  %v2674 = vpop.f32.mrf.mxu0
  %2675 = vmatprep.mubr.bf16.mxu0 0
  %2676 = vmatmul.mubr.bf16.gmra.mxu0 %v1684
  %v2677 = vpop.f32.mrf.mxu0
  %v2678 = vadd.f32 %v2421, %v2677
  %v2679 = vpop.f32.mrf.mxu0
  %v2680 = vpop.f32.mrf.mxu0
  %v2681 = vadd.f32 %v2424, %v2680
  %v2682 = vpop.f32.mrf.mxu0
  %2683 = vmatprep.mubr.bf16.mxu0 0
  %2684 = vmatmul.mubr.bf16.gmra.mxu0 %v1687
  %v2685 = vpop.f32.mrf.mxu0
  %v2686 = vadd.f32 %v2429, %v2685
  %v2687 = vpop.f32.mrf.mxu0
  %v2688 = vpop.f32.mrf.mxu0
  %v2689 = vadd.f32 %v2432, %v2688
  %v2690 = vpop.f32.mrf.mxu0
  %2691 = vmatprep.mubr.bf16.mxu0 0
  %2692 = vmatmul.mubr.bf16.gmra.mxu0 %v1690
  %v2693 = vpop.f32.mrf.mxu0
  %v2694 = vadd.f32 %v2437, %v2693
  %v2695 = vpop.f32.mrf.mxu0
  %v2696 = vpop.f32.mrf.mxu0
  %v2697 = vadd.f32 %v2440, %v2696
  %v2698 = vpop.f32.mrf.mxu0
  %2699 = vmatprep.mubr.bf16.mxu0 0
  %2700 = vmatmul.mubr.bf16.gmra.mxu0 %v1693
  %v2701 = vpop.f32.mrf.mxu0
  %v2702 = vadd.f32 %v2445, %v2701
  %v2703 = vpop.f32.mrf.mxu0
  %v2704 = vpop.f32.mrf.mxu0
  %v2705 = vadd.f32 %v2448, %v2704
  %v2706 = vpop.f32.mrf.mxu0
  %2707 = vmatprep.mubr.bf16.mxu0 0
  %2708 = vmatmul.mubr.bf16.gmra.mxu0 %v1696
  %v2709 = vpop.f32.mrf.mxu0
  %v2710 = vadd.f32 %v2453, %v2709
  %v2711 = vpop.f32.mrf.mxu0
  %v2712 = vpop.f32.mrf.mxu0
  %v2713 = vadd.f32 %v2456, %v2712
  %v2714 = vpop.f32.mrf.mxu0
  %2715 = vmatprep.mubr.bf16.mxu0 0
  %2716 = vmatmul.mubr.bf16.gmra.mxu0 %v1699
  %v2717 = vpop.f32.mrf.mxu0
  %v2718 = vadd.f32 %v2461, %v2717
  %v2719 = vpop.f32.mrf.mxu0
  %v2720 = vpop.f32.mrf.mxu0
  %v2721 = vadd.f32 %v2464, %v2720
  %v2722 = vpop.f32.mrf.mxu0
  %2723 = vmatprep.mubr.bf16.mxu0 0
  %2724 = vmatmul.mubr.bf16.gmra.mxu0 %v1702
  %v2725 = vpop.f32.mrf.mxu0
  %v2726 = vadd.f32 %v2469, %v2725
  %v2727 = vpop.f32.mrf.mxu0
  %v2728 = vpop.f32.mrf.mxu0
  %v2729 = vadd.f32 %v2472, %v2728
  %v2730 = vpop.f32.mrf.mxu0
  %2731 = vdwg.mxu0
  %vm2732 = vcmask 523264
  %v2733 = vsel %vm2732, %v2510, -inf
  %v2734 = vsel %vm2732, %v2537, -inf
  %v2735 = vmax.f32 %v2733, %v2734
  %v2736 = vsel %vm2732, %v2566, -inf
  %v2737 = vmax.f32 %v2735, %v2736
  %v2738 = vsel %vm2732, %v2593, -inf
  %v2739 = vmax.f32 %v2737, %v2738
  %v2740 = vsel %vm2732, %v2513, -inf
  %v2741 = vsel %vm2732, %v2542, -inf
  %v2742 = vmax.f32 %v2740, %v2741
  %v2743 = vsel %vm2732, %v2569, -inf
  %v2744 = vmax.f32 %v2742, %v2743
  %v2745 = vsel %vm2732, %v2598, -inf
  %v2746 = vmax.f32 %v2744, %v2745
  %v2747 = vsel %vm2732, %v2518, -inf
  %v2748 = vsel %vm2732, %v2545, -inf
  %v2749 = vmax.f32 %v2747, %v2748
  %v2750 = vsel %vm2732, %v2574, -inf
  %v2751 = vmax.f32 %v2749, %v2750
  %v2752 = vsel %vm2732, %v2601, -inf
  %v2753 = vmax.f32 %v2751, %v2752
  %v2754 = vsel %vm2732, %v2521, -inf
  %v2755 = vsel %vm2732, %v2550, -inf
  %v2756 = vmax.f32 %v2754, %v2755
  %v2757 = vsel %vm2732, %v2577, -inf
  %v2758 = vmax.f32 %v2756, %v2757
  %v2759 = vsel %vm2732, %v2606, -inf
  %v2760 = vmax.f32 %v2758, %v2759
  %v2761 = vsel %vm2732, %v2526, -inf
  %v2762 = vsel %vm2732, %v2553, -inf
  %v2763 = vmax.f32 %v2761, %v2762
  %v2764 = vsel %vm2732, %v2582, -inf
  %v2765 = vmax.f32 %v2763, %v2764
  %v2766 = vsel %vm2732, %v2609, -inf
  %v2767 = vmax.f32 %v2765, %v2766
  %v2768 = vsel %vm2732, %v2529, -inf
  %v2769 = vsel %vm2732, %v2558, -inf
  %v2770 = vmax.f32 %v2768, %v2769
  %v2771 = vsel %vm2732, %v2585, -inf
  %v2772 = vmax.f32 %v2770, %v2771
  %v2773 = vsel %vm2732, %v2614, -inf
  %v2774 = vmax.f32 %v2772, %v2773
  %v2775 = vsel %vm2732, %v2534, -inf
  %v2776 = vsel %vm2732, %v2561, -inf
  %v2777 = vmax.f32 %v2775, %v2776
  %v2778 = vsel %vm2732, %v2590, -inf
  %v2779 = vmax.f32 %v2777, %v2778
  %v2780 = vsel %vm2732, %v2617, -inf
  %v2781 = vmax.f32 %v2779, %v2780
  %v2782 = vsel %vm2732, %v2622, -inf
  %v2783 = vsel %vm2732, %v2649, -inf
  %v2784 = vmax.f32 %v2782, %v2783
  %v2785 = vsel %vm2732, %v2678, -inf
  %v2786 = vmax.f32 %v2784, %v2785
  %v2787 = vsel %vm2732, %v2705, -inf
  %v2788 = vmax.f32 %v2786, %v2787
  %v2789 = vsel %vm2732, %v2625, -inf
  %v2790 = vsel %vm2732, %v2654, -inf
  %v2791 = vmax.f32 %v2789, %v2790
  %v2792 = vsel %vm2732, %v2681, -inf
  %v2793 = vmax.f32 %v2791, %v2792
  %v2794 = vsel %vm2732, %v2710, -inf
  %v2795 = vmax.f32 %v2793, %v2794
  %v2796 = vsel %vm2732, %v2630, -inf
  %v2797 = vsel %vm2732, %v2657, -inf
  %v2798 = vmax.f32 %v2796, %v2797
  %v2799 = vsel %vm2732, %v2686, -inf
  %v2800 = vmax.f32 %v2798, %v2799
  %v2801 = vsel %vm2732, %v2713, -inf
  %v2802 = vmax.f32 %v2800, %v2801
  %v2803 = vsel %vm2732, %v2633, -inf
  %v2804 = vsel %vm2732, %v2662, -inf
  %v2805 = vmax.f32 %v2803, %v2804
  %v2806 = vsel %vm2732, %v2689, -inf
  %v2807 = vmax.f32 %v2805, %v2806
  %v2808 = vsel %vm2732, %v2718, -inf
  %v2809 = vmax.f32 %v2807, %v2808
  %v2810 = vsel %vm2732, %v2638, -inf
  %v2811 = vsel %vm2732, %v2665, -inf
  %v2812 = vmax.f32 %v2810, %v2811
  %v2813 = vsel %vm2732, %v2694, -inf
  %v2814 = vmax.f32 %v2812, %v2813
  %v2815 = vsel %vm2732, %v2721, -inf
  %v2816 = vmax.f32 %v2814, %v2815
  %v2817 = vsel %vm2732, %v2641, -inf
  %v2818 = vsel %vm2732, %v2670, -inf
  %v2819 = vmax.f32 %v2817, %v2818
  %v2820 = vsel %vm2732, %v2697, -inf
  %v2821 = vmax.f32 %v2819, %v2820
  %v2822 = vsel %vm2732, %v2726, -inf
  %v2823 = vmax.f32 %v2821, %v2822
  %v2824 = vsel %vm2732, %v2646, -inf
  %v2825 = vsel %vm2732, %v2673, -inf
  %v2826 = vmax.f32 %v2824, %v2825
  %v2827 = vsel %vm2732, %v2702, -inf
  %v2828 = vmax.f32 %v2826, %v2827
  %v2829 = vsel %vm2732, %v2729, -inf
  %v2830 = vmax.f32 %v2828, %v2829
  %v2831 = vld [vmem:[%s2] sm:$0x1]
  %v2833 = vlaneseq
  %v2834 = vshrl.u32 %v2833, 7
  %v2835 = vsub.s32 0, %v2834
  %v2836 = vrot.slane %v2831, %v2835
  %v2838 = vadd.f32 %v2739, %v2836
  %v2839 = vadd.f32 %v2746, %v2836
  %v2840 = vadd.f32 %v2753, %v2836
  %v2841 = vadd.f32 %v2760, %v2836
  %v2842 = vadd.f32 %v2767, %v2836
  %v2843 = vadd.f32 %v2774, %v2836
  %v2844 = vadd.f32 %v2781, %v2836
  %v2845 = vadd.f32 %v2788, %v2836
  %v2846 = vadd.f32 %v2795, %v2836
  %v2847 = vadd.f32 %v2802, %v2836
  %v2848 = vadd.f32 %v2809, %v2836
  %v2849 = vadd.f32 %v2816, %v2836
  %v2850 = vadd.f32 %v2823, %v2836
  %v2851 = vadd.f32 %v2830, %v2836
  %v2852 = vmax.f32 %v2838, 0.0
  %v2853 = vmax.f32 %v2839, 0.0
  %v2854 = vmax.f32 %v2840, 0.0
  %v2855 = vmax.f32 %v2841, 0.0
  %v2856 = vmax.f32 %v2842, 0.0
  %v2857 = vmax.f32 %v2843, 0.0
  %v2858 = vmax.f32 %v2844, 0.0
  %v2859 = vmax.f32 %v2845, 0.0
  %v2860 = vmax.f32 %v2846, 0.0
  %v2861 = vmax.f32 %v2847, 0.0
  %v2862 = vmax.f32 %v2848, 0.0
  %v2863 = vmax.f32 %v2849, 0.0
  %v2864 = vmax.f32 %v2850, 0.0
  %v2865 = vmax.f32 %v2851, 0.0
  %v2866 = vpack.c.bf16 %v2853, %v2852
  %v2867 = vpack.c.bf16 %v2855, %v2854
  %v2868 = vpack.c.bf16 %v2857, %v2856
  %v2869 = vpack.c.bf16 %v2858, %v2858
  %v2870 = vpack.c.bf16 %v2860, %v2859
  %v2871 = vpack.c.bf16 %v2862, %v2861
  %v2872 = vpack.c.bf16 %v2864, %v2863
  %v2873 = vpack.c.bf16 %v2865, %v2865
  %v2882 = vunpack.c.l.b16 %v2866
  %v2883 = vunpack.c.h.b16 %v2866
  %v2884 = vunpack.c.l.b16 %v2867
  %v2885 = vunpack.c.h.b16 %v2867
  %v2886 = vunpack.c.l.b16 %v2868
  %v2887 = vunpack.c.h.b16 %v2868
  %v2888 = vunpack.c.l.b16 %v2869
  %v2889 = vunpack.c.l.b16 %v2870
  %v2890 = vunpack.c.h.b16 %v2870
  %v2891 = vunpack.c.l.b16 %v2871
  %v2892 = vunpack.c.h.b16 %v2871
  %v2893 = vunpack.c.l.b16 %v2872
  %v2894 = vunpack.c.h.b16 %v2872
  %v2895 = vunpack.c.l.b16 %v2873
  %v2896 = vpack.c.b16 %v2882, %v2882
  %v2897 = vpack.c.b16 %v2883, %v2883
  %v2898 = vpack.c.b16 %v2884, %v2884
  %v2899 = vpack.c.b16 %v2885, %v2885
  %v2900 = vpack.c.b16 %v2886, %v2886
  %v2901 = vpack.c.b16 %v2887, %v2887
  %v2902 = vpack.c.b16 %v2888, %v2888
  %v2903 = vpack.c.b16 %v2889, %v2889
  %v2904 = vpack.c.b16 %v2890, %v2890
  %v2905 = vpack.c.b16 %v2891, %v2891
  %v2906 = vpack.c.b16 %v2892, %v2892
  %v2907 = vpack.c.b16 %v2893, %v2893
  %v2908 = vpack.c.b16 %v2894, %v2894
  %v2909 = vpack.c.b16 %v2895, %v2895
  %vm2924 = vcmask 519168
  %2925 = vst.msk [vmem:[%s3] sm:$0xf] %vm2924, %v2896
  %2926 = vst.msk [vmem:[%s3 + $0x4] sm:$0xf] %vm2924, %v2897
  %2927 = vst.msk [vmem:[%s3 + $0x8] sm:$0xf] %vm2924, %v2898
  %2928 = vst.msk [vmem:[%s3 + $0xc] sm:$0xf] %vm2924, %v2899
  %2929 = vst.msk [vmem:[%s3 + $0x10] sm:$0xf] %vm2924, %v2900
  %2930 = vst.msk [vmem:[%s3 + $0x14] sm:$0xf] %vm2924, %v2901
  %2931 = vst.msk [vmem:[%s3 + $0x18] sm:$0xf] %vm2924, %v2902
  %2932 = vst.msk [vmem:[%s3 + $0x1c] sm:$0xf] %vm2924, %v2903
  %2933 = vst.msk [vmem:[%s3 + $0x20] sm:$0xf] %vm2924, %v2904
  %2934 = vst.msk [vmem:[%s3 + $0x24] sm:$0xf] %vm2924, %v2905
  %2935 = vst.msk [vmem:[%s3 + $0x28] sm:$0xf] %vm2924, %v2906
  %2936 = vst.msk [vmem:[%s3 + $0x2c] sm:$0xf] %vm2924, %v2907
  %2937 = vst.msk [vmem:[%s3 + $0x30] sm:$0xf] %vm2924, %v2908
  %2938 = vst.msk [vmem:[%s3 + $0x34] sm:$0xf] %vm2924, %v2909
  // Predicated region
  $region14: #{net_forward.4} parent=0 // pred_check
    _
  $region15: #{net_forward.4} parent=0 // pred_check_branch
    %2940 = sbr.rel (0) target = $region17
  $region16: #{net_forward.4} parent=0 // pred_region
    _
  $region17: #{net_forward.4} parent=0 // pred_fallthru
    _
  // Predicated region
  $region18: #{net_forward.4} parent=0 // pred_check
    _
  $region19: #{net_forward.4} parent=0 // pred_check_branch
    %2942 = sbr.rel (0) target = $region21
  $region20: #{net_forward.4} parent=0 // pred_region
    _
  $region21: #{net_forward.4} parent=0 // pred_fallthru
    _

// kernel: net_forward.5
$region0: #{net_forward.5}
  #allocation0 [shape = 'u32[]', space=smem, size = 0x4, offset = 0x4, fixed_abs, tag = 'smem constant byte address 0x4 - core index']
  #allocation1 [shape = 'u32[144,128]{1,0:T(1,128)}', space=vmem, size = 0x12000, scoped, tag = 'internal scratch']
  #allocation2 [shape = 'f32[2,2048]{1,0:T(2,128)}', space=vmem, size = 0x4000, scoped, tag = 'scratch operand']
  %s0 = inlined_call_operand.vmem [shape: bf16[2,3200], index: 0, kind: input, shape index: {}]
  %s1 = inlined_call_operand.vmem [shape: bf16[3200,2048], index: 1, kind: input, shape index: {}]
  %s2 = inlined_call_operand.vmem [shape: f32[1,2048], index: 2, kind: input, shape index: {}]
  %s3 = inlined_call_operand.vmem [shape: bf16[2048,128], index: 3, kind: input, shape index: {}]
  %s4 = inlined_call_operand.vmem [shape: f32[1,128], index: 4, kind: input, shape index: {}]
  %s5 = inlined_call_operand.hbm [shape: f32[2,128], index: 5, kind: output, shape index: {}]
  %s6 = sld [smem:[#allocation0]]
  $region61: #{net_forward.5} parent=0
    _
  %s8 = ssub.s32 1, %s6
  %s9 = scalar_select 0, %s8, %s6
  $region1: #{net_forward.5} parent=0
    #allocation3 [shape = 'u8[1024]{0}', space=vmem, size = 0x400, scoped, tag = 'output window, operand 0, single buffered']
    #allocation4 [shape = 's32[2]{0}', space=sflag, size = 0x8, scoped, tag = 'scoped memory for net_forward.5']
    %10 = vsyncpa [#allocation4], 0
    loop: start=0, step=1, limit=7
    $region2: #{net_forward.5} parent=1 // loop_pre_header
      _
    $region3: #{net_forward.5} parent=1 // loop_header
      %s12 = sphi 0, %s16
      %p13 = scmp.ge.s32.totalorder %s12, 7
      %s19 = sphi 0, %s31
      %s20 = sphi 0, %s27
      %s21 = sphi 0, %s19
      %s22 = sphi 0, %s20
      %s23 = sphi 0, %s21
      %s24 = sphi 0, %s22
      %s36 = sphi 0, %s38
      %s39 = sphi 0, %s36
      %s40 = sphi 0, %s39
      %s56 = sphi 0, %s40
      %s62 = sphi 0, %s64
      %s65 = sphi 0, %s62
      %s66 = sphi 0, %s65
      %s82 = sphi 0, %s66
      %s86 = sphi 0, %s86
      %s88 = sphi 0, %s86
      %s89 = sphi 0, %s88
      %s103 = sphi 0, %s89
      %s107 = sphi 0, %s107
      %s109 = sphi 0, %s107
      %s110 = sphi 0, %s109
      %s124 = sphi 0, %s110
      %s128 = sphi 0, %s128
      %s130 = sphi 0, %s128
      %s131 = sphi 0, %s130
      %s145 = sphi 0, %s131
      %s151 = sphi 0, %s153
      %s154 = sphi 0, %s151
      %s155 = sphi 0, %s154
      %s171 = sphi 0, %s155
    $region4: #{net_forward.5} parent=1 // loop_header_branch
      %15 = sbr.rel (%p13) target = $region8
    $region5: #{net_forward.5} parent=1 // loop_body
      %s17 = ssub.s32 %s12, 1
      %s18 = ssub.s32 %s12, 2
      %s25 = sadd.s32 1, %s20
      %p26 = scmp.ge.s32.totalorder %s25, 5
      %s27 = scalar_select %p26, 0, %s25
      %s28 = sadd.s32 1, %s19
      %s29 = scalar_select %p26, %s28, %s19
      %p30 = scmp.ge.s32.totalorder %s29, 1
      %s31 = scalar_select %p30, 0, %s29
      %s32 = ssub.s32 %s19, %s31
      %s33 = ssub.s32 %s20, %s27
      %s34 = sor.u32 %s32, %s33
      %p35 = scmp.eq.s32.totalorder %s34, 0
      %s37 = sadd.s32 %s36, 1
      %s38 = scalar_select %p35, %s36, %s37
      %p41 = pneg %p35
      %p42 = scmp.eq.s32.totalorder %s12, 4
      %p43 = por %p41, %p42
      %p44 = scmp.ne.s32.totalorder %s36, %s39
      %p45 = scmp.eq.s32.totalorder %s12, 0
      %p46 = por %p44, %p45
      %p47 = scmp.ne.s32.totalorder %s36, %s39
      %p48 = scmp.eq.s32.totalorder %s17, 4
      %p49 = por %p47, %p48
      %p50 = scmp.ne.s32.totalorder %s39, %s40
      %p51 = scmp.eq.s32.totalorder %s17, 0
      %p52 = por %p50, %p51
      %p53 = scmp.ne.s32.totalorder %s39, %s40
      %p54 = scmp.eq.s32.totalorder %s18, 4
      %p55 = por %p53, %p54
      %p57 = scmp.ne.s32.totalorder %s40, %s56
      %p58 = scmp.eq.s32.totalorder %s18, 0
      %p59 = por %p57, %p58
      %s60 = ssub.s32 %s20, %s27
      %p61 = scmp.eq.s32.totalorder %s60, 0
      %s63 = sadd.s32 %s62, 1
      %s64 = scalar_select %p61, %s62, %s63
      %p67 = pneg %p61
      %p68 = scmp.eq.s32.totalorder %s12, 4
      %p69 = por %p67, %p68
      %p70 = scmp.ne.s32.totalorder %s62, %s65
      %p71 = scmp.eq.s32.totalorder %s12, 0
      %p72 = por %p70, %p71
      %p73 = scmp.ne.s32.totalorder %s62, %s65
      %p74 = scmp.eq.s32.totalorder %s17, 4
      %p75 = por %p73, %p74
      %p76 = scmp.ne.s32.totalorder %s65, %s66
      %p77 = scmp.eq.s32.totalorder %s17, 0
      %p78 = por %p76, %p77
      %p79 = scmp.ne.s32.totalorder %s65, %s66
      %p80 = scmp.eq.s32.totalorder %s18, 4
      %p81 = por %p79, %p80
      %p83 = scmp.ne.s32.totalorder %s66, %s82
      %p84 = scmp.eq.s32.totalorder %s18, 0
      %p85 = por %p83, %p84
      %s87 = sadd.s32 %s86, 1
      %p90 = scmp.eq.s32.totalorder %s12, 4
      %p91 = scmp.ne.s32.totalorder %s86, %s88
      %p92 = scmp.eq.s32.totalorder %s12, 0
      %p93 = por %p91, %p92
      %p94 = scmp.ne.s32.totalorder %s86, %s88
      %p95 = scmp.eq.s32.totalorder %s17, 4
      %p96 = por %p94, %p95
      %p97 = scmp.ne.s32.totalorder %s88, %s89
      %p98 = scmp.eq.s32.totalorder %s17, 0
      %p99 = por %p97, %p98
      %p100 = scmp.ne.s32.totalorder %s88, %s89
      %p101 = scmp.eq.s32.totalorder %s18, 4
      %p102 = por %p100, %p101
      %p104 = scmp.ne.s32.totalorder %s89, %s103
      %p105 = scmp.eq.s32.totalorder %s18, 0
      %p106 = por %p104, %p105
      %s108 = sadd.s32 %s107, 1
      %p111 = scmp.eq.s32.totalorder %s12, 4
      %p112 = scmp.ne.s32.totalorder %s107, %s109
      %p113 = scmp.eq.s32.totalorder %s12, 0
      %p114 = por %p112, %p113
      %p115 = scmp.ne.s32.totalorder %s107, %s109
      %p116 = scmp.eq.s32.totalorder %s17, 4
      %p117 = por %p115, %p116
      %p118 = scmp.ne.s32.totalorder %s109, %s110
      %p119 = scmp.eq.s32.totalorder %s17, 0
      %p120 = por %p118, %p119
      %p121 = scmp.ne.s32.totalorder %s109, %s110
      %p122 = scmp.eq.s32.totalorder %s18, 4
      %p123 = por %p121, %p122
      %p125 = scmp.ne.s32.totalorder %s110, %s124
      %p126 = scmp.eq.s32.totalorder %s18, 0
      %p127 = por %p125, %p126
      %s129 = sadd.s32 %s128, 1
      %p132 = scmp.eq.s32.totalorder %s12, 4
      %p133 = scmp.ne.s32.totalorder %s128, %s130
      %p134 = scmp.eq.s32.totalorder %s12, 0
      %p135 = por %p133, %p134
      %p136 = scmp.ne.s32.totalorder %s128, %s130
      %p137 = scmp.eq.s32.totalorder %s17, 4
      %p138 = por %p136, %p137
      %p139 = scmp.ne.s32.totalorder %s130, %s131
      %p140 = scmp.eq.s32.totalorder %s17, 0
      %p141 = por %p139, %p140
      %p142 = scmp.ne.s32.totalorder %s130, %s131
      %p143 = scmp.eq.s32.totalorder %s18, 4
      %p144 = por %p142, %p143
      %p146 = scmp.ne.s32.totalorder %s131, %s145
      %p147 = scmp.eq.s32.totalorder %s18, 0
      %p148 = por %p146, %p147
      %s149 = ssub.s32 %s19, %s31
      %p150 = scmp.eq.s32.totalorder %s149, 0
      %s152 = sadd.s32 %s151, 1
      %s153 = scalar_select %p150, %s151, %s152
      %p156 = pneg %p150
      %p157 = scmp.eq.s32.totalorder %s12, 4
      %p158 = por %p156, %p157
      %p159 = scmp.ne.s32.totalorder %s151, %s154
      %p160 = scmp.eq.s32.totalorder %s12, 0
      %p161 = por %p159, %p160
      %p162 = scmp.ne.s32.totalorder %s151, %s154
      %p163 = scmp.eq.s32.totalorder %s17, 4
      %p164 = por %p162, %p163
      %p165 = scmp.ne.s32.totalorder %s154, %s155
      %p166 = scmp.eq.s32.totalorder %s17, 0
      %p167 = por %p165, %p166
      %p168 = scmp.ne.s32.totalorder %s154, %s155
      %p169 = scmp.eq.s32.totalorder %s18, 4
      %p170 = por %p168, %p169
      %p172 = scmp.ne.s32.totalorder %s155, %s171
      %p173 = scmp.eq.s32.totalorder %s18, 0
      %p174 = por %p172, %p173
      %p175 = scmp.le.s32.totalorder 1, %s12
      %p176 = scmp.lt.s32.totalorder %s12, 6
      %p177 = pnand %p175, %p176
      %p178 = pneg %p177
      // Predicated region
      $region9: #{net_forward.5} parent=5 // pred_check
        _
      $region10: #{net_forward.5} parent=5 // pred_check_branch
        %180 = sbr.rel (%p177) target = $region12
      $region11: #{net_forward.5} parent=5 // pred_region
        %s181 = ssub.s32 %s12, 1
        // Predicated region
        $region13: #{net_forward.5} parent=11 // pred_check
          %p182 = pneg %p99
        $region14: #{net_forward.5} parent=11 // pred_check_branch
          %184 = sbr.rel (%p182) target = $region16
        $region15: #{net_forward.5} parent=11 // pred_region
          _
        $region16: #{net_forward.5} parent=11 // pred_fallthru
          _
        // Predicated region
        $region17: #{net_forward.5} parent=11 // pred_check
          %p185 = pneg %p120
        $region18: #{net_forward.5} parent=11 // pred_check_branch
          %187 = sbr.rel (%p185) target = $region20
        $region19: #{net_forward.5} parent=11 // pred_region
          _
        $region20: #{net_forward.5} parent=11 // pred_fallthru
          _
        // Predicated region
        $region21: #{net_forward.5} parent=11 // pred_check
          %p188 = pneg %p141
        $region22: #{net_forward.5} parent=11 // pred_check_branch
          %190 = sbr.rel (%p188) target = $region24
        $region23: #{net_forward.5} parent=11 // pred_region
          _
        $region24: #{net_forward.5} parent=11 // pred_fallthru
          _
      $region12: #{net_forward.5} parent=5 // pred_fallthru
        _
      %p191 = scmp.lt.s32.totalorder %s12, 5
      // Predicated region
      $region25: #{net_forward.5} parent=5 // pred_check
        %p192 = pneg %p191
      $region26: #{net_forward.5} parent=5 // pred_check_branch
        %194 = sbr.rel (%p192) target = $region28
      $region27: #{net_forward.5} parent=5 // pred_region
        // Predicated region
        $region29: #{net_forward.5} parent=27 // pred_check
          %p195 = pneg %p46
        $region30: #{net_forward.5} parent=27 // pred_check_branch
          %197 = sbr.rel (%p195) target = $region32
        $region31: #{net_forward.5} parent=27 // pred_region
          %s198 = smul.u32 5, %s20
          %p199 = scmp.lt.s32.totalorder %s19, 0
          %s200 = scalar_select %p199, %s19, 0
          %p201 = scmp.lt.s32.totalorder %s198, 24
          %s202 = scalar_select %p201, %s198, 24
          %s203 = smul.addr %s200, 25
          %s204 = sadd.s32 %s202, %s203
          %s205 = scalar_lea.vmem %s0, %s204
          %s206 = smul.u32 5, %s20
        $region32: #{net_forward.5} parent=27 // pred_fallthru
          _
        // Predicated region
        $region33: #{net_forward.5} parent=27 // pred_check
          %p207 = pneg %p72
        $region34: #{net_forward.5} parent=27 // pred_check_branch
          %209 = sbr.rel (%p207) target = $region36
        $region35: #{net_forward.5} parent=27 // pred_region
          %s210 = smul.u32 80, %s20
          %p211 = scmp.lt.s32.totalorder %s210, 399
          %s212 = scalar_select %p211, %s210, 399
          %s213 = smul.addr %s212, 16
          %s214 = smul.addr %s213, 4
          %s215 = scalar_lea.vmem %s1, %s214
          %s216 = smul.u32 80, %s20
        $region36: #{net_forward.5} parent=27 // pred_fallthru
          _
      $region28: #{net_forward.5} parent=5 // pred_fallthru
        _
      %p217 = scmp.le.s32.totalorder 1, %s12
      %p218 = scmp.lt.s32.totalorder %s12, 6
      %p219 = pnand %p217, %p218
      %p220 = pneg %p219
      // Predicated region
      $region37: #{net_forward.5} parent=5 // pred_check
        _
      $region38: #{net_forward.5} parent=5 // pred_check_branch
        %222 = sbr.rel (%p219) target = $region40
      $region39: #{net_forward.5} parent=5 // pred_region
        %s223 = ssub.s32 %s12, 1
        %s224 = smul.u32 5, %s22
        %p225 = scmp.lt.s32.totalorder %s21, 0
        %s226 = scalar_select %p225, %s21, 0
        %p227 = scmp.lt.s32.totalorder %s224, 24
        %s228 = scalar_select %p227, %s224, 24
        %s229 = smul.addr %s226, 25
        %s230 = sadd.s32 %s228, %s229
        %s231 = scalar_lea.vmem %s0, %s230
        %p232 = pneg %p52
        %p233 = pneg %p49
        %s234 = smul.u32 80, %s22
        %p235 = scmp.lt.s32.totalorder %s234, 399
        %s236 = scalar_select %p235, %s234, 399
        %s237 = smul.addr %s236, 16
        %s238 = smul.addr %s237, 4
        %s239 = scalar_lea.vmem %s1, %s238
        %p240 = pneg %p78
        %p241 = pneg %p75
        %p242 = pneg %p99
        %p243 = pneg %p96
        %p244 = pneg %p120
        %p245 = pneg %p117
        %p246 = pneg %p141
        %p247 = pneg %p138
        %p248 = pneg %p167
        %p249 = pneg %p164
        %s250 = smul.u32 5, %s22
        %p251 = scmp.lt.s32.totalorder %s21, 0
        %s252 = scalar_select %p251, %s21, 0
        %p253 = scmp.lt.s32.totalorder %s250, 24
        %s254 = scalar_select %p253, %s250, 24
        %s255 = smul.addr %s252, 25
        %s256 = sadd.s32 %s254, %s255
        %s257 = scalar_lea.vmem %s0, %s256
        %s258 = smul.u32 5, %s22
        %s259 = smul.u32 80, %s22
        %p260 = scmp.lt.s32.totalorder %s259, 399
        %s261 = scalar_select %p260, %s259, 399
        %s262 = smul.addr %s261, 16
        %s263 = smul.addr %s262, 4
        %s264 = scalar_lea.vmem %s1, %s263
        %s265 = smul.u32 80, %s22
        %p267 = scmp.eq.s32.totalorder %s22, 0
        // Predicated region
        $region41: #{net_forward.5} parent=39 // pred_check
          %p268 = pneg %p267
        $region42: #{net_forward.5} parent=39 // pred_check_branch
          %270 = sbr.rel (%p268) target = $region44
        $region43: #{net_forward.5} parent=39 // pred_region
          %271 = vst [vmem:[#allocation2] sm:$0xff] 0.0
          %272 = vst [vmem:[#allocation2 + $0x8] sm:$0xff] 0.0
          %273 = vst [vmem:[#allocation2 + $0x10] sm:$0xff] 0.0
          %274 = vst [vmem:[#allocation2 + $0x18] sm:$0xff] 0.0
        $region44: #{net_forward.5} parent=39 // pred_fallthru
          _
        %v275 = vld [vmem:[#allocation2] sm:$0xff]
        %v276 = vld [vmem:[#allocation2 + $0x8] sm:$0xff]
        %v277 = vld [vmem:[#allocation2 + $0x10] sm:$0xff]
        %v278 = vld [vmem:[#allocation2 + $0x18] sm:$0xff]
        %v279 = vld [vmem:[%s257] sm:$0x1f]
        %v280 = vld [vmem:[%s264] sm:$0xff]
        %v281 = vld [vmem:[%s264 + $0x8] sm:$0xff]
        %v282 = vld [vmem:[%s264 + $0x10] sm:$0xff]
        %v283 = vld [vmem:[%s264 + $0x18] sm:$0xff]
        %v284 = vld [vmem:[%s264 + $0x20] sm:$0xff]
        %v285 = vld [vmem:[%s264 + $0x28] sm:$0xff]
        %v286 = vld [vmem:[%s264 + $0x30] sm:$0xff]
        %v287 = vld [vmem:[%s264 + $0x38] sm:$0xff]
        %v288 = vld [vmem:[%s264 + $0x40] sm:$0xff]
        %v289 = vld [vmem:[%s264 + $0x48] sm:$0xff]
        %v290 = vld [vmem:[%s264 + $0x50] sm:$0xff]
        %v291 = vld [vmem:[%s264 + $0x58] sm:$0xff]
        %v292 = vld [vmem:[%s264 + $0x60] sm:$0xff]
        %v293 = vld [vmem:[%s264 + $0x68] sm:$0xff]
        %v294 = vld [vmem:[%s264 + $0x70] sm:$0xff]
        %v295 = vld [vmem:[%s264 + $0x78] sm:$0xff]
        %v296 = vld [vmem:[%s264 + $0x80] sm:$0xff]
        %v297 = vld [vmem:[%s264 + $0x88] sm:$0xff]
        %v298 = vld [vmem:[%s264 + $0x90] sm:$0xff]
        %v299 = vld [vmem:[%s264 + $0x98] sm:$0xff]
        %v300 = vld [vmem:[%s264 + $0xa0] sm:$0xff]
        %v301 = vld [vmem:[%s264 + $0xa8] sm:$0xff]
        %v302 = vld [vmem:[%s264 + $0xb0] sm:$0xff]
        %v303 = vld [vmem:[%s264 + $0xb8] sm:$0xff]
        %v304 = vld [vmem:[%s264 + $0xc0] sm:$0xff]
        %v305 = vld [vmem:[%s264 + $0xc8] sm:$0xff]
        %v306 = vld [vmem:[%s264 + $0xd0] sm:$0xff]
        %v307 = vld [vmem:[%s264 + $0xd8] sm:$0xff]
        %v308 = vld [vmem:[%s264 + $0xe0] sm:$0xff]
        %v309 = vld [vmem:[%s264 + $0xe8] sm:$0xff]
        %v310 = vld [vmem:[%s264 + $0xf0] sm:$0xff]
        %v311 = vld [vmem:[%s264 + $0xf8] sm:$0xff]
        %v312 = vld [vmem:[%s264 + $0x100] sm:$0xff]
        %v313 = vld [vmem:[%s264 + $0x108] sm:$0xff]
        %v314 = vld [vmem:[%s264 + $0x110] sm:$0xff]
        %v315 = vld [vmem:[%s264 + $0x118] sm:$0xff]
        %v316 = vld [vmem:[%s264 + $0x120] sm:$0xff]
        %v317 = vld [vmem:[%s264 + $0x128] sm:$0xff]
        %v318 = vld [vmem:[%s264 + $0x130] sm:$0xff]
        %v319 = vld [vmem:[%s264 + $0x138] sm:$0xff]
        %v320 = vld [vmem:[%s264 + $0x140] sm:$0xff]
        %v321 = vld [vmem:[%s264 + $0x148] sm:$0xff]
        %v322 = vld [vmem:[%s264 + $0x150] sm:$0xff]
        %v323 = vld [vmem:[%s264 + $0x158] sm:$0xff]
        %v324 = vld [vmem:[%s264 + $0x160] sm:$0xff]
        %v325 = vld [vmem:[%s264 + $0x168] sm:$0xff]
        %v326 = vld [vmem:[%s264 + $0x170] sm:$0xff]
        %v327 = vld [vmem:[%s264 + $0x178] sm:$0xff]
        %v328 = vld [vmem:[%s264 + $0x180] sm:$0xff]
        %v329 = vld [vmem:[%s264 + $0x188] sm:$0xff]
        %v330 = vld [vmem:[%s264 + $0x190] sm:$0xff]
        %v331 = vld [vmem:[%s264 + $0x198] sm:$0xff]
        %v332 = vld [vmem:[%s264 + $0x1a0] sm:$0xff]
        %v333 = vld [vmem:[%s264 + $0x1a8] sm:$0xff]
        %v334 = vld [vmem:[%s264 + $0x1b0] sm:$0xff]
        %v335 = vld [vmem:[%s264 + $0x1b8] sm:$0xff]
        %v336 = vld [vmem:[%s264 + $0x1c0] sm:$0xff]
        %v337 = vld [vmem:[%s264 + $0x1c8] sm:$0xff]
        %v338 = vld [vmem:[%s264 + $0x1d0] sm:$0xff]
        %v339 = vld [vmem:[%s264 + $0x1d8] sm:$0xff]
        %v340 = vld [vmem:[%s264 + $0x1e0] sm:$0xff]
        %v341 = vld [vmem:[%s264 + $0x1e8] sm:$0xff]
        %v342 = vld [vmem:[%s264 + $0x1f0] sm:$0xff]
        %v343 = vld [vmem:[%s264 + $0x1f8] sm:$0xff]
        %v344 = vld [vmem:[%s264 + $0x200] sm:$0xff]
        %v345 = vld [vmem:[%s264 + $0x208] sm:$0xff]
        %v346 = vld [vmem:[%s264 + $0x210] sm:$0xff]
        %v347 = vld [vmem:[%s264 + $0x218] sm:$0xff]
        %v348 = vld [vmem:[%s264 + $0x220] sm:$0xff]
        %v349 = vld [vmem:[%s264 + $0x228] sm:$0xff]
        %v350 = vld [vmem:[%s264 + $0x230] sm:$0xff]
        %v351 = vld [vmem:[%s264 + $0x238] sm:$0xff]
        %v352 = vld [vmem:[%s264 + $0x240] sm:$0xff]
        %v353 = vld [vmem:[%s264 + $0x248] sm:$0xff]
        %v354 = vld [vmem:[%s264 + $0x250] sm:$0xff]
        %v355 = vld [vmem:[%s264 + $0x258] sm:$0xff]
        %v356 = vld [vmem:[%s264 + $0x260] sm:$0xff]
        %v357 = vld [vmem:[%s264 + $0x268] sm:$0xff]
        %v358 = vld [vmem:[%s264 + $0x270] sm:$0xff]
        %v359 = vld [vmem:[%s264 + $0x278] sm:$0xff]
        %v360 = vld [vmem:[%s264 + $0x280] sm:$0xff]
        %v361 = vld [vmem:[%s264 + $0x288] sm:$0xff]
        %v362 = vld [vmem:[%s264 + $0x290] sm:$0xff]
        %v363 = vld [vmem:[%s264 + $0x298] sm:$0xff]
        %v364 = vld [vmem:[%s264 + $0x2a0] sm:$0xff]
        %v365 = vld [vmem:[%s264 + $0x2a8] sm:$0xff]
        %v366 = vld [vmem:[%s264 + $0x2b0] sm:$0xff]
        %v367 = vld [vmem:[%s264 + $0x2b8] sm:$0xff]
        %v368 = vld [vmem:[%s264 + $0x2c0] sm:$0xff]
        %v369 = vld [vmem:[%s264 + $0x2c8] sm:$0xff]
        %v370 = vld [vmem:[%s264 + $0x2d0] sm:$0xff]
        %v371 = vld [vmem:[%s264 + $0x2d8] sm:$0xff]
        %v372 = vld [vmem:[%s264 + $0x2e0] sm:$0xff]
        %v373 = vld [vmem:[%s264 + $0x2e8] sm:$0xff]
        %v374 = vld [vmem:[%s264 + $0x2f0] sm:$0xff]
        %v375 = vld [vmem:[%s264 + $0x2f8] sm:$0xff]
        %v376 = vld [vmem:[%s264 + $0x300] sm:$0xff]
        %v377 = vld [vmem:[%s264 + $0x308] sm:$0xff]
        %v378 = vld [vmem:[%s264 + $0x310] sm:$0xff]
        %v379 = vld [vmem:[%s264 + $0x318] sm:$0xff]
        %v380 = vld [vmem:[%s264 + $0x320] sm:$0xff]
        %v381 = vld [vmem:[%s264 + $0x328] sm:$0xff]
        %v382 = vld [vmem:[%s264 + $0x330] sm:$0xff]
        %v383 = vld [vmem:[%s264 + $0x338] sm:$0xff]
        %v384 = vld [vmem:[%s264 + $0x340] sm:$0xff]
        %v385 = vld [vmem:[%s264 + $0x348] sm:$0xff]
        %v386 = vld [vmem:[%s264 + $0x350] sm:$0xff]
        %v387 = vld [vmem:[%s264 + $0x358] sm:$0xff]
        %v388 = vld [vmem:[%s264 + $0x360] sm:$0xff]
        %v389 = vld [vmem:[%s264 + $0x368] sm:$0xff]
        %v390 = vld [vmem:[%s264 + $0x370] sm:$0xff]
        %v391 = vld [vmem:[%s264 + $0x378] sm:$0xff]
        %v392 = vld [vmem:[%s264 + $0x380] sm:$0xff]
        %v393 = vld [vmem:[%s264 + $0x388] sm:$0xff]
        %v394 = vld [vmem:[%s264 + $0x390] sm:$0xff]
        %v395 = vld [vmem:[%s264 + $0x398] sm:$0xff]
        %v396 = vld [vmem:[%s264 + $0x3a0] sm:$0xff]
        %v397 = vld [vmem:[%s264 + $0x3a8] sm:$0xff]
        %v398 = vld [vmem:[%s264 + $0x3b0] sm:$0xff]
        %v399 = vld [vmem:[%s264 + $0x3b8] sm:$0xff]
        %v400 = vld [vmem:[%s264 + $0x3c0] sm:$0xff]
        %v401 = vld [vmem:[%s264 + $0x3c8] sm:$0xff]
        %v402 = vld [vmem:[%s264 + $0x3d0] sm:$0xff]
        %v403 = vld [vmem:[%s264 + $0x3d8] sm:$0xff]
        %v404 = vld [vmem:[%s264 + $0x3e0] sm:$0xff]
        %v405 = vld [vmem:[%s264 + $0x3e8] sm:$0xff]
        %v406 = vld [vmem:[%s264 + $0x3f0] sm:$0xff]
        %v407 = vld [vmem:[%s264 + $0x3f8] sm:$0xff]
        %v408 = vld [vmem:[%s264 + $0x400] sm:$0xff]
        %v409 = vld [vmem:[%s264 + $0x408] sm:$0xff]
        %v410 = vld [vmem:[%s264 + $0x410] sm:$0xff]
        %v411 = vld [vmem:[%s264 + $0x418] sm:$0xff]
        %v412 = vld [vmem:[%s264 + $0x420] sm:$0xff]
        %v413 = vld [vmem:[%s264 + $0x428] sm:$0xff]
        %v414 = vld [vmem:[%s264 + $0x430] sm:$0xff]
        %v415 = vld [vmem:[%s264 + $0x438] sm:$0xff]
        %v416 = vld [vmem:[%s264 + $0x440] sm:$0xff]
        %v417 = vld [vmem:[%s264 + $0x448] sm:$0xff]
        %v418 = vld [vmem:[%s264 + $0x450] sm:$0xff]
        %v419 = vld [vmem:[%s264 + $0x458] sm:$0xff]
        %v420 = vld [vmem:[%s264 + $0x460] sm:$0xff]
        %v421 = vld [vmem:[%s264 + $0x468] sm:$0xff]
        %v422 = vld [vmem:[%s264 + $0x470] sm:$0xff]
        %v423 = vld [vmem:[%s264 + $0x478] sm:$0xff]
        %v424 = vld [vmem:[%s264 + $0x480] sm:$0xff]
        %v425 = vld [vmem:[%s264 + $0x488] sm:$0xff]
        %v426 = vld [vmem:[%s264 + $0x490] sm:$0xff]
        %v427 = vld [vmem:[%s264 + $0x498] sm:$0xff]
        %v428 = vld [vmem:[%s264 + $0x4a0] sm:$0xff]
        %v429 = vld [vmem:[%s264 + $0x4a8] sm:$0xff]
        %v430 = vld [vmem:[%s264 + $0x4b0] sm:$0xff]
        %v431 = vld [vmem:[%s264 + $0x4b8] sm:$0xff]
        %v432 = vld [vmem:[%s264 + $0x4c0] sm:$0xff]
        %v433 = vld [vmem:[%s264 + $0x4c8] sm:$0xff]
        %v434 = vld [vmem:[%s264 + $0x4d0] sm:$0xff]
        %v435 = vld [vmem:[%s264 + $0x4d8] sm:$0xff]
        %v436 = vld [vmem:[%s264 + $0x4e0] sm:$0xff]
        %v437 = vld [vmem:[%s264 + $0x4e8] sm:$0xff]
        %v438 = vld [vmem:[%s264 + $0x4f0] sm:$0xff]
        %v439 = vld [vmem:[%s264 + $0x4f8] sm:$0xff]
        %v440 = vld [vmem:[%s264 + $0x500] sm:$0xff]
        %v441 = vld [vmem:[%s264 + $0x508] sm:$0xff]
        %v442 = vld [vmem:[%s264 + $0x510] sm:$0xff]
        %v443 = vld [vmem:[%s264 + $0x518] sm:$0xff]
        %v444 = vld [vmem:[%s264 + $0x520] sm:$0xff]
        %v445 = vld [vmem:[%s264 + $0x528] sm:$0xff]
        %v446 = vld [vmem:[%s264 + $0x530] sm:$0xff]
        %v447 = vld [vmem:[%s264 + $0x538] sm:$0xff]
        %v448 = vld [vmem:[%s264 + $0x540] sm:$0xff]
        %v449 = vld [vmem:[%s264 + $0x548] sm:$0xff]
        %v450 = vld [vmem:[%s264 + $0x550] sm:$0xff]
        %v451 = vld [vmem:[%s264 + $0x558] sm:$0xff]
        %v452 = vld [vmem:[%s264 + $0x560] sm:$0xff]
        %v453 = vld [vmem:[%s264 + $0x568] sm:$0xff]
        %v454 = vld [vmem:[%s264 + $0x570] sm:$0xff]
        %v455 = vld [vmem:[%s264 + $0x578] sm:$0xff]
        %v456 = vld [vmem:[%s264 + $0x580] sm:$0xff]
        %v457 = vld [vmem:[%s264 + $0x588] sm:$0xff]
        %v458 = vld [vmem:[%s264 + $0x590] sm:$0xff]
        %v459 = vld [vmem:[%s264 + $0x598] sm:$0xff]
        %v460 = vld [vmem:[%s264 + $0x5a0] sm:$0xff]
        %v461 = vld [vmem:[%s264 + $0x5a8] sm:$0xff]
        %v462 = vld [vmem:[%s264 + $0x5b0] sm:$0xff]
        %v463 = vld [vmem:[%s264 + $0x5b8] sm:$0xff]
        %v464 = vld [vmem:[%s264 + $0x5c0] sm:$0xff]
        %v465 = vld [vmem:[%s264 + $0x5c8] sm:$0xff]
        %v466 = vld [vmem:[%s264 + $0x5d0] sm:$0xff]
        %v467 = vld [vmem:[%s264 + $0x5d8] sm:$0xff]
        %v468 = vld [vmem:[%s264 + $0x5e0] sm:$0xff]
        %v469 = vld [vmem:[%s264 + $0x5e8] sm:$0xff]
        %v470 = vld [vmem:[%s264 + $0x5f0] sm:$0xff]
        %v471 = vld [vmem:[%s264 + $0x5f8] sm:$0xff]
        %v472 = vld [vmem:[%s264 + $0x600] sm:$0xff]
        %v473 = vld [vmem:[%s264 + $0x608] sm:$0xff]
        %v474 = vld [vmem:[%s264 + $0x610] sm:$0xff]
        %v475 = vld [vmem:[%s264 + $0x618] sm:$0xff]
        %v476 = vld [vmem:[%s264 + $0x620] sm:$0xff]
        %v477 = vld [vmem:[%s264 + $0x628] sm:$0xff]
        %v478 = vld [vmem:[%s264 + $0x630] sm:$0xff]
        %v479 = vld [vmem:[%s264 + $0x638] sm:$0xff]
        %v480 = vld [vmem:[%s264 + $0x640] sm:$0xff]
        %v481 = vld [vmem:[%s264 + $0x648] sm:$0xff]
        %v482 = vld [vmem:[%s264 + $0x650] sm:$0xff]
        %v483 = vld [vmem:[%s264 + $0x658] sm:$0xff]
        %v484 = vld [vmem:[%s264 + $0x660] sm:$0xff]
        %v485 = vld [vmem:[%s264 + $0x668] sm:$0xff]
        %v486 = vld [vmem:[%s264 + $0x670] sm:$0xff]
        %v487 = vld [vmem:[%s264 + $0x678] sm:$0xff]
        %v488 = vld [vmem:[%s264 + $0x680] sm:$0xff]
        %v489 = vld [vmem:[%s264 + $0x688] sm:$0xff]
        %v490 = vld [vmem:[%s264 + $0x690] sm:$0xff]
        %v491 = vld [vmem:[%s264 + $0x698] sm:$0xff]
        %v492 = vld [vmem:[%s264 + $0x6a0] sm:$0xff]
        %v493 = vld [vmem:[%s264 + $0x6a8] sm:$0xff]
        %v494 = vld [vmem:[%s264 + $0x6b0] sm:$0xff]
        %v495 = vld [vmem:[%s264 + $0x6b8] sm:$0xff]
        %v496 = vld [vmem:[%s264 + $0x6c0] sm:$0xff]
        %v497 = vld [vmem:[%s264 + $0x6c8] sm:$0xff]
        %v498 = vld [vmem:[%s264 + $0x6d0] sm:$0xff]
        %v499 = vld [vmem:[%s264 + $0x6d8] sm:$0xff]
        %v500 = vld [vmem:[%s264 + $0x6e0] sm:$0xff]
        %v501 = vld [vmem:[%s264 + $0x6e8] sm:$0xff]
        %v502 = vld [vmem:[%s264 + $0x6f0] sm:$0xff]
        %v503 = vld [vmem:[%s264 + $0x6f8] sm:$0xff]
        %v504 = vld [vmem:[%s264 + $0x700] sm:$0xff]
        %v505 = vld [vmem:[%s264 + $0x708] sm:$0xff]
        %v506 = vld [vmem:[%s264 + $0x710] sm:$0xff]
        %v507 = vld [vmem:[%s264 + $0x718] sm:$0xff]
        %v508 = vld [vmem:[%s264 + $0x720] sm:$0xff]
        %v509 = vld [vmem:[%s264 + $0x728] sm:$0xff]
        %v510 = vld [vmem:[%s264 + $0x730] sm:$0xff]
        %v511 = vld [vmem:[%s264 + $0x738] sm:$0xff]
        %v512 = vld [vmem:[%s264 + $0x740] sm:$0xff]
        %v513 = vld [vmem:[%s264 + $0x748] sm:$0xff]
        %v514 = vld [vmem:[%s264 + $0x750] sm:$0xff]
        %v515 = vld [vmem:[%s264 + $0x758] sm:$0xff]
        %v516 = vld [vmem:[%s264 + $0x760] sm:$0xff]
        %v517 = vld [vmem:[%s264 + $0x768] sm:$0xff]
        %v518 = vld [vmem:[%s264 + $0x770] sm:$0xff]
        %v519 = vld [vmem:[%s264 + $0x778] sm:$0xff]
        %v520 = vld [vmem:[%s264 + $0x780] sm:$0xff]
        %v521 = vld [vmem:[%s264 + $0x788] sm:$0xff]
        %v522 = vld [vmem:[%s264 + $0x790] sm:$0xff]
        %v523 = vld [vmem:[%s264 + $0x798] sm:$0xff]
        %v524 = vld [vmem:[%s264 + $0x7a0] sm:$0xff]
        %v525 = vld [vmem:[%s264 + $0x7a8] sm:$0xff]
        %v526 = vld [vmem:[%s264 + $0x7b0] sm:$0xff]
        %v527 = vld [vmem:[%s264 + $0x7b8] sm:$0xff]
        %v528 = vld [vmem:[%s264 + $0x7c0] sm:$0xff]
        %v529 = vld [vmem:[%s264 + $0x7c8] sm:$0xff]
        %v530 = vld [vmem:[%s264 + $0x7d0] sm:$0xff]
        %v531 = vld [vmem:[%s264 + $0x7d8] sm:$0xff]
        %v532 = vld [vmem:[%s264 + $0x7e0] sm:$0xff]
        %v533 = vld [vmem:[%s264 + $0x7e8] sm:$0xff]
        %v534 = vld [vmem:[%s264 + $0x7f0] sm:$0xff]
        %v535 = vld [vmem:[%s264 + $0x7f8] sm:$0xff]
        %v536 = vld [vmem:[%s264 + $0x800] sm:$0xff]
        %v537 = vld [vmem:[%s264 + $0x808] sm:$0xff]
        %v538 = vld [vmem:[%s264 + $0x810] sm:$0xff]
        %v539 = vld [vmem:[%s264 + $0x818] sm:$0xff]
        %v540 = vld [vmem:[%s264 + $0x820] sm:$0xff]
        %v541 = vld [vmem:[%s264 + $0x828] sm:$0xff]
        %v542 = vld [vmem:[%s264 + $0x830] sm:$0xff]
        %v543 = vld [vmem:[%s264 + $0x838] sm:$0xff]
        %v544 = vld [vmem:[%s264 + $0x840] sm:$0xff]
        %v545 = vld [vmem:[%s264 + $0x848] sm:$0xff]
        %v546 = vld [vmem:[%s264 + $0x850] sm:$0xff]
        %v547 = vld [vmem:[%s264 + $0x858] sm:$0xff]
        %v548 = vld [vmem:[%s264 + $0x860] sm:$0xff]
        %v549 = vld [vmem:[%s264 + $0x868] sm:$0xff]
        %v550 = vld [vmem:[%s264 + $0x870] sm:$0xff]
        %v551 = vld [vmem:[%s264 + $0x878] sm:$0xff]
        %v552 = vld [vmem:[%s264 + $0x880] sm:$0xff]
        %v553 = vld [vmem:[%s264 + $0x888] sm:$0xff]
        %v554 = vld [vmem:[%s264 + $0x890] sm:$0xff]
        %v555 = vld [vmem:[%s264 + $0x898] sm:$0xff]
        %v556 = vld [vmem:[%s264 + $0x8a0] sm:$0xff]
        %v557 = vld [vmem:[%s264 + $0x8a8] sm:$0xff]
        %v558 = vld [vmem:[%s264 + $0x8b0] sm:$0xff]
        %v559 = vld [vmem:[%s264 + $0x8b8] sm:$0xff]
        %v560 = vld [vmem:[%s264 + $0x8c0] sm:$0xff]
        %v561 = vld [vmem:[%s264 + $0x8c8] sm:$0xff]
        %v562 = vld [vmem:[%s264 + $0x8d0] sm:$0xff]
        %v563 = vld [vmem:[%s264 + $0x8d8] sm:$0xff]
        %v564 = vld [vmem:[%s264 + $0x8e0] sm:$0xff]
        %v565 = vld [vmem:[%s264 + $0x8e8] sm:$0xff]
        %v566 = vld [vmem:[%s264 + $0x8f0] sm:$0xff]
        %v567 = vld [vmem:[%s264 + $0x8f8] sm:$0xff]
        %v568 = vld [vmem:[%s264 + $0x900] sm:$0xff]
        %v569 = vld [vmem:[%s264 + $0x908] sm:$0xff]
        %v570 = vld [vmem:[%s264 + $0x910] sm:$0xff]
        %v571 = vld [vmem:[%s264 + $0x918] sm:$0xff]
        %v572 = vld [vmem:[%s264 + $0x920] sm:$0xff]
        %v573 = vld [vmem:[%s264 + $0x928] sm:$0xff]
        %v574 = vld [vmem:[%s264 + $0x930] sm:$0xff]
        %v575 = vld [vmem:[%s264 + $0x938] sm:$0xff]
        %v576 = vld [vmem:[%s264 + $0x940] sm:$0xff]
        %v577 = vld [vmem:[%s264 + $0x948] sm:$0xff]
        %v578 = vld [vmem:[%s264 + $0x950] sm:$0xff]
        %v579 = vld [vmem:[%s264 + $0x958] sm:$0xff]
        %v580 = vld [vmem:[%s264 + $0x960] sm:$0xff]
        %v581 = vld [vmem:[%s264 + $0x968] sm:$0xff]
        %v582 = vld [vmem:[%s264 + $0x970] sm:$0xff]
        %v583 = vld [vmem:[%s264 + $0x978] sm:$0xff]
        %v584 = vld [vmem:[%s264 + $0x980] sm:$0xff]
        %v585 = vld [vmem:[%s264 + $0x988] sm:$0xff]
        %v586 = vld [vmem:[%s264 + $0x990] sm:$0xff]
        %v587 = vld [vmem:[%s264 + $0x998] sm:$0xff]
        %v588 = vld [vmem:[%s264 + $0x9a0] sm:$0xff]
        %v589 = vld [vmem:[%s264 + $0x9a8] sm:$0xff]
        %v590 = vld [vmem:[%s264 + $0x9b0] sm:$0xff]
        %v591 = vld [vmem:[%s264 + $0x9b8] sm:$0xff]
        %v592 = vld [vmem:[%s264 + $0x9c0] sm:$0xff]
        %v593 = vld [vmem:[%s264 + $0x9c8] sm:$0xff]
        %v594 = vld [vmem:[%s264 + $0x9d0] sm:$0xff]
        %v595 = vld [vmem:[%s264 + $0x9d8] sm:$0xff]
        %v596 = vld [vmem:[%s264 + $0x9e0] sm:$0xff]
        %v597 = vld [vmem:[%s264 + $0x9e8] sm:$0xff]
        %v598 = vld [vmem:[%s264 + $0x9f0] sm:$0xff]
        %v599 = vld [vmem:[%s264 + $0x9f8] sm:$0xff]
        %v600 = vld [vmem:[%s264 + $0xa00] sm:$0xff]
        %v601 = vld [vmem:[%s264 + $0xa08] sm:$0xff]
        %v602 = vld [vmem:[%s264 + $0xa10] sm:$0xff]
        %v603 = vld [vmem:[%s264 + $0xa18] sm:$0xff]
        %v604 = vld [vmem:[%s264 + $0xa20] sm:$0xff]
        %v605 = vld [vmem:[%s264 + $0xa28] sm:$0xff]
        %v606 = vld [vmem:[%s264 + $0xa30] sm:$0xff]
        %v607 = vld [vmem:[%s264 + $0xa38] sm:$0xff]
        %v608 = vld [vmem:[%s264 + $0xa40] sm:$0xff]
        %v609 = vld [vmem:[%s264 + $0xa48] sm:$0xff]
        %v610 = vld [vmem:[%s264 + $0xa50] sm:$0xff]
        %v611 = vld [vmem:[%s264 + $0xa58] sm:$0xff]
        %v612 = vld [vmem:[%s264 + $0xa60] sm:$0xff]
        %v613 = vld [vmem:[%s264 + $0xa68] sm:$0xff]
        %v614 = vld [vmem:[%s264 + $0xa70] sm:$0xff]
        %v615 = vld [vmem:[%s264 + $0xa78] sm:$0xff]
        %v616 = vld [vmem:[%s264 + $0xa80] sm:$0xff]
        %v617 = vld [vmem:[%s264 + $0xa88] sm:$0xff]
        %v618 = vld [vmem:[%s264 + $0xa90] sm:$0xff]
        %v619 = vld [vmem:[%s264 + $0xa98] sm:$0xff]
        %v620 = vld [vmem:[%s264 + $0xaa0] sm:$0xff]
        %v621 = vld [vmem:[%s264 + $0xaa8] sm:$0xff]
        %v622 = vld [vmem:[%s264 + $0xab0] sm:$0xff]
        %v623 = vld [vmem:[%s264 + $0xab8] sm:$0xff]
        %v624 = vld [vmem:[%s264 + $0xac0] sm:$0xff]
        %v625 = vld [vmem:[%s264 + $0xac8] sm:$0xff]
        %v626 = vld [vmem:[%s264 + $0xad0] sm:$0xff]
        %v627 = vld [vmem:[%s264 + $0xad8] sm:$0xff]
        %v628 = vld [vmem:[%s264 + $0xae0] sm:$0xff]
        %v629 = vld [vmem:[%s264 + $0xae8] sm:$0xff]
        %v630 = vld [vmem:[%s264 + $0xaf0] sm:$0xff]
        %v631 = vld [vmem:[%s264 + $0xaf8] sm:$0xff]
        %v632 = vld [vmem:[%s264 + $0xb00] sm:$0xff]
        %v633 = vld [vmem:[%s264 + $0xb08] sm:$0xff]
        %v634 = vld [vmem:[%s264 + $0xb10] sm:$0xff]
        %v635 = vld [vmem:[%s264 + $0xb18] sm:$0xff]
        %v636 = vld [vmem:[%s264 + $0xb20] sm:$0xff]
        %v637 = vld [vmem:[%s264 + $0xb28] sm:$0xff]
        %v638 = vld [vmem:[%s264 + $0xb30] sm:$0xff]
        %v639 = vld [vmem:[%s264 + $0xb38] sm:$0xff]
        %v640 = vld [vmem:[%s264 + $0xb40] sm:$0xff]
        %v641 = vld [vmem:[%s264 + $0xb48] sm:$0xff]
        %v642 = vld [vmem:[%s264 + $0xb50] sm:$0xff]
        %v643 = vld [vmem:[%s264 + $0xb58] sm:$0xff]
        %v644 = vld [vmem:[%s264 + $0xb60] sm:$0xff]
        %v645 = vld [vmem:[%s264 + $0xb68] sm:$0xff]
        %v646 = vld [vmem:[%s264 + $0xb70] sm:$0xff]
        %v647 = vld [vmem:[%s264 + $0xb78] sm:$0xff]
        %v648 = vld [vmem:[%s264 + $0xb80] sm:$0xff]
        %v649 = vld [vmem:[%s264 + $0xb88] sm:$0xff]
        %v650 = vld [vmem:[%s264 + $0xb90] sm:$0xff]
        %v651 = vld [vmem:[%s264 + $0xb98] sm:$0xff]
        %v652 = vld [vmem:[%s264 + $0xba0] sm:$0xff]
        %v653 = vld [vmem:[%s264 + $0xba8] sm:$0xff]
        %v654 = vld [vmem:[%s264 + $0xbb0] sm:$0xff]
        %v655 = vld [vmem:[%s264 + $0xbb8] sm:$0xff]
        %v656 = vld [vmem:[%s264 + $0xbc0] sm:$0xff]
        %v657 = vld [vmem:[%s264 + $0xbc8] sm:$0xff]
        %v658 = vld [vmem:[%s264 + $0xbd0] sm:$0xff]
        %v659 = vld [vmem:[%s264 + $0xbd8] sm:$0xff]
        %v660 = vld [vmem:[%s264 + $0xbe0] sm:$0xff]
        %v661 = vld [vmem:[%s264 + $0xbe8] sm:$0xff]
        %v662 = vld [vmem:[%s264 + $0xbf0] sm:$0xff]
        %v663 = vld [vmem:[%s264 + $0xbf8] sm:$0xff]
        %v664 = vld [vmem:[%s264 + $0xc00] sm:$0xff]
        %v665 = vld [vmem:[%s264 + $0xc08] sm:$0xff]
        %v666 = vld [vmem:[%s264 + $0xc10] sm:$0xff]
        %v667 = vld [vmem:[%s264 + $0xc18] sm:$0xff]
        %v668 = vld [vmem:[%s264 + $0xc20] sm:$0xff]
        %v669 = vld [vmem:[%s264 + $0xc28] sm:$0xff]
        %v670 = vld [vmem:[%s264 + $0xc30] sm:$0xff]
        %v671 = vld [vmem:[%s264 + $0xc38] sm:$0xff]
        %v672 = vld [vmem:[%s264 + $0xc40] sm:$0xff]
        %v673 = vld [vmem:[%s264 + $0xc48] sm:$0xff]
        %v674 = vld [vmem:[%s264 + $0xc50] sm:$0xff]
        %v675 = vld [vmem:[%s264 + $0xc58] sm:$0xff]
        %v676 = vld [vmem:[%s264 + $0xc60] sm:$0xff]
        %v677 = vld [vmem:[%s264 + $0xc68] sm:$0xff]
        %v678 = vld [vmem:[%s264 + $0xc70] sm:$0xff]
        %v679 = vld [vmem:[%s264 + $0xc78] sm:$0xff]
        %v680 = vld [vmem:[%s264 + $0xc80] sm:$0xff]
        %v681 = vld [vmem:[%s264 + $0xc88] sm:$0xff]
        %v682 = vld [vmem:[%s264 + $0xc90] sm:$0xff]
        %v683 = vld [vmem:[%s264 + $0xc98] sm:$0xff]
        %v684 = vld [vmem:[%s264 + $0xca0] sm:$0xff]
        %v685 = vld [vmem:[%s264 + $0xca8] sm:$0xff]
        %v686 = vld [vmem:[%s264 + $0xcb0] sm:$0xff]
        %v687 = vld [vmem:[%s264 + $0xcb8] sm:$0xff]
        %v688 = vld [vmem:[%s264 + $0xcc0] sm:$0xff]
        %v689 = vld [vmem:[%s264 + $0xcc8] sm:$0xff]
        %v690 = vld [vmem:[%s264 + $0xcd0] sm:$0xff]
        %v691 = vld [vmem:[%s264 + $0xcd8] sm:$0xff]
        %v692 = vld [vmem:[%s264 + $0xce0] sm:$0xff]
        %v693 = vld [vmem:[%s264 + $0xce8] sm:$0xff]
        %v694 = vld [vmem:[%s264 + $0xcf0] sm:$0xff]
        %v695 = vld [vmem:[%s264 + $0xcf8] sm:$0xff]
        %v696 = vld [vmem:[%s264 + $0xd00] sm:$0xff]
        %v697 = vld [vmem:[%s264 + $0xd08] sm:$0xff]
        %v698 = vld [vmem:[%s264 + $0xd10] sm:$0xff]
        %v699 = vld [vmem:[%s264 + $0xd18] sm:$0xff]
        %v700 = vld [vmem:[%s264 + $0xd20] sm:$0xff]
        %v701 = vld [vmem:[%s264 + $0xd28] sm:$0xff]
        %v702 = vld [vmem:[%s264 + $0xd30] sm:$0xff]
        %v703 = vld [vmem:[%s264 + $0xd38] sm:$0xff]
        %v704 = vld [vmem:[%s264 + $0xd40] sm:$0xff]
        %v705 = vld [vmem:[%s264 + $0xd48] sm:$0xff]
        %v706 = vld [vmem:[%s264 + $0xd50] sm:$0xff]
        %v707 = vld [vmem:[%s264 + $0xd58] sm:$0xff]
        %v708 = vld [vmem:[%s264 + $0xd60] sm:$0xff]
        %v709 = vld [vmem:[%s264 + $0xd68] sm:$0xff]
        %v710 = vld [vmem:[%s264 + $0xd70] sm:$0xff]
        %v711 = vld [vmem:[%s264 + $0xd78] sm:$0xff]
        %v712 = vld [vmem:[%s264 + $0xd80] sm:$0xff]
        %v713 = vld [vmem:[%s264 + $0xd88] sm:$0xff]
        %v714 = vld [vmem:[%s264 + $0xd90] sm:$0xff]
        %v715 = vld [vmem:[%s264 + $0xd98] sm:$0xff]
        %v716 = vld [vmem:[%s264 + $0xda0] sm:$0xff]
        %v717 = vld [vmem:[%s264 + $0xda8] sm:$0xff]
        %v718 = vld [vmem:[%s264 + $0xdb0] sm:$0xff]
        %v719 = vld [vmem:[%s264 + $0xdb8] sm:$0xff]
        %v720 = vld [vmem:[%s264 + $0xdc0] sm:$0xff]
        %v721 = vld [vmem:[%s264 + $0xdc8] sm:$0xff]
        %v722 = vld [vmem:[%s264 + $0xdd0] sm:$0xff]
        %v723 = vld [vmem:[%s264 + $0xdd8] sm:$0xff]
        %v724 = vld [vmem:[%s264 + $0xde0] sm:$0xff]
        %v725 = vld [vmem:[%s264 + $0xde8] sm:$0xff]
        %v726 = vld [vmem:[%s264 + $0xdf0] sm:$0xff]
        %v727 = vld [vmem:[%s264 + $0xdf8] sm:$0xff]
        %v728 = vld [vmem:[%s264 + $0xe00] sm:$0xff]
        %v729 = vld [vmem:[%s264 + $0xe08] sm:$0xff]
        %v730 = vld [vmem:[%s264 + $0xe10] sm:$0xff]
        %v731 = vld [vmem:[%s264 + $0xe18] sm:$0xff]
        %v732 = vld [vmem:[%s264 + $0xe20] sm:$0xff]
        %v733 = vld [vmem:[%s264 + $0xe28] sm:$0xff]
        %v734 = vld [vmem:[%s264 + $0xe30] sm:$0xff]
        %v735 = vld [vmem:[%s264 + $0xe38] sm:$0xff]
        %v736 = vld [vmem:[%s264 + $0xe40] sm:$0xff]
        %v737 = vld [vmem:[%s264 + $0xe48] sm:$0xff]
        %v738 = vld [vmem:[%s264 + $0xe50] sm:$0xff]
        %v739 = vld [vmem:[%s264 + $0xe58] sm:$0xff]
        %v740 = vld [vmem:[%s264 + $0xe60] sm:$0xff]
        %v741 = vld [vmem:[%s264 + $0xe68] sm:$0xff]
        %v742 = vld [vmem:[%s264 + $0xe70] sm:$0xff]
        %v743 = vld [vmem:[%s264 + $0xe78] sm:$0xff]
        %v744 = vld [vmem:[%s264 + $0xe80] sm:$0xff]
        %v745 = vld [vmem:[%s264 + $0xe88] sm:$0xff]
        %v746 = vld [vmem:[%s264 + $0xe90] sm:$0xff]
        %v747 = vld [vmem:[%s264 + $0xe98] sm:$0xff]
        %v748 = vld [vmem:[%s264 + $0xea0] sm:$0xff]
        %v749 = vld [vmem:[%s264 + $0xea8] sm:$0xff]
        %v750 = vld [vmem:[%s264 + $0xeb0] sm:$0xff]
        %v751 = vld [vmem:[%s264 + $0xeb8] sm:$0xff]
        %v752 = vld [vmem:[%s264 + $0xec0] sm:$0xff]
        %v753 = vld [vmem:[%s264 + $0xec8] sm:$0xff]
        %v754 = vld [vmem:[%s264 + $0xed0] sm:$0xff]
        %v755 = vld [vmem:[%s264 + $0xed8] sm:$0xff]
        %v756 = vld [vmem:[%s264 + $0xee0] sm:$0xff]
        %v757 = vld [vmem:[%s264 + $0xee8] sm:$0xff]
        %v758 = vld [vmem:[%s264 + $0xef0] sm:$0xff]
        %v759 = vld [vmem:[%s264 + $0xef8] sm:$0xff]
        %v760 = vld [vmem:[%s264 + $0xf00] sm:$0xff]
        %v761 = vld [vmem:[%s264 + $0xf08] sm:$0xff]
        %v762 = vld [vmem:[%s264 + $0xf10] sm:$0xff]
        %v763 = vld [vmem:[%s264 + $0xf18] sm:$0xff]
        %v764 = vld [vmem:[%s264 + $0xf20] sm:$0xff]
        %v765 = vld [vmem:[%s264 + $0xf28] sm:$0xff]
        %v766 = vld [vmem:[%s264 + $0xf30] sm:$0xff]
        %v767 = vld [vmem:[%s264 + $0xf38] sm:$0xff]
        %v768 = vld [vmem:[%s264 + $0xf40] sm:$0xff]
        %v769 = vld [vmem:[%s264 + $0xf48] sm:$0xff]
        %v770 = vld [vmem:[%s264 + $0xf50] sm:$0xff]
        %v771 = vld [vmem:[%s264 + $0xf58] sm:$0xff]
        %v772 = vld [vmem:[%s264 + $0xf60] sm:$0xff]
        %v773 = vld [vmem:[%s264 + $0xf68] sm:$0xff]
        %v774 = vld [vmem:[%s264 + $0xf70] sm:$0xff]
        %v775 = vld [vmem:[%s264 + $0xf78] sm:$0xff]
        %v776 = vld [vmem:[%s264 + $0xf80] sm:$0xff]
        %v777 = vld [vmem:[%s264 + $0xf88] sm:$0xff]
        %v778 = vld [vmem:[%s264 + $0xf90] sm:$0xff]
        %v779 = vld [vmem:[%s264 + $0xf98] sm:$0xff]
        %v780 = vld [vmem:[%s264 + $0xfa0] sm:$0xff]
        %v781 = vld [vmem:[%s264 + $0xfa8] sm:$0xff]
        %v782 = vld [vmem:[%s264 + $0xfb0] sm:$0xff]
        %v783 = vld [vmem:[%s264 + $0xfb8] sm:$0xff]
        %v784 = vld [vmem:[%s264 + $0xfc0] sm:$0xff]
        %v785 = vld [vmem:[%s264 + $0xfc8] sm:$0xff]
        %v786 = vld [vmem:[%s264 + $0xfd0] sm:$0xff]
        %v787 = vld [vmem:[%s264 + $0xfd8] sm:$0xff]
        %v788 = vld [vmem:[%s264 + $0xfe0] sm:$0xff]
        %v789 = vld [vmem:[%s264 + $0xfe8] sm:$0xff]
        %v790 = vld [vmem:[%s264 + $0xff0] sm:$0xff]
        %v791 = vld [vmem:[%s264 + $0xff8] sm:$0xff]
        %v792 = vld [vmem:[%s264 + $0x1000] sm:$0xff]
        %v793 = vld [vmem:[%s264 + $0x1008] sm:$0xff]
        %v794 = vld [vmem:[%s264 + $0x1010] sm:$0xff]
        %v795 = vld [vmem:[%s264 + $0x1018] sm:$0xff]
        %v796 = vld [vmem:[%s264 + $0x1020] sm:$0xff]
        %v797 = vld [vmem:[%s264 + $0x1028] sm:$0xff]
        %v798 = vld [vmem:[%s264 + $0x1030] sm:$0xff]
        %v799 = vld [vmem:[%s264 + $0x1038] sm:$0xff]
        %v800 = vld [vmem:[%s264 + $0x1040] sm:$0xff]
        %v801 = vld [vmem:[%s264 + $0x1048] sm:$0xff]
        %v802 = vld [vmem:[%s264 + $0x1050] sm:$0xff]
        %v803 = vld [vmem:[%s264 + $0x1058] sm:$0xff]
        %v804 = vld [vmem:[%s264 + $0x1060] sm:$0xff]
        %v805 = vld [vmem:[%s264 + $0x1068] sm:$0xff]
        %v806 = vld [vmem:[%s264 + $0x1070] sm:$0xff]
        %v807 = vld [vmem:[%s264 + $0x1078] sm:$0xff]
        %v808 = vld [vmem:[%s264 + $0x1080] sm:$0xff]
        %v809 = vld [vmem:[%s264 + $0x1088] sm:$0xff]
        %v810 = vld [vmem:[%s264 + $0x1090] sm:$0xff]
        %v811 = vld [vmem:[%s264 + $0x1098] sm:$0xff]
        %v812 = vld [vmem:[%s264 + $0x10a0] sm:$0xff]
        %v813 = vld [vmem:[%s264 + $0x10a8] sm:$0xff]
        %v814 = vld [vmem:[%s264 + $0x10b0] sm:$0xff]
        %v815 = vld [vmem:[%s264 + $0x10b8] sm:$0xff]
        %v816 = vld [vmem:[%s264 + $0x10c0] sm:$0xff]
        %v817 = vld [vmem:[%s264 + $0x10c8] sm:$0xff]
        %v818 = vld [vmem:[%s264 + $0x10d0] sm:$0xff]
        %v819 = vld [vmem:[%s264 + $0x10d8] sm:$0xff]
        %v820 = vld [vmem:[%s264 + $0x10e0] sm:$0xff]
        %v821 = vld [vmem:[%s264 + $0x10e8] sm:$0xff]
        %v822 = vld [vmem:[%s264 + $0x10f0] sm:$0xff]
        %v823 = vld [vmem:[%s264 + $0x10f8] sm:$0xff]
        %v824 = vld [vmem:[%s264 + $0x1100] sm:$0xff]
        %v825 = vld [vmem:[%s264 + $0x1108] sm:$0xff]
        %v826 = vld [vmem:[%s264 + $0x1110] sm:$0xff]
        %v827 = vld [vmem:[%s264 + $0x1118] sm:$0xff]
        %v828 = vld [vmem:[%s264 + $0x1120] sm:$0xff]
        %v829 = vld [vmem:[%s264 + $0x1128] sm:$0xff]
        %v830 = vld [vmem:[%s264 + $0x1130] sm:$0xff]
        %v831 = vld [vmem:[%s264 + $0x1138] sm:$0xff]
        %v832 = vld [vmem:[%s264 + $0x1140] sm:$0xff]
        %v833 = vld [vmem:[%s264 + $0x1148] sm:$0xff]
        %v834 = vld [vmem:[%s264 + $0x1150] sm:$0xff]
        %v835 = vld [vmem:[%s264 + $0x1158] sm:$0xff]
        %v836 = vld [vmem:[%s264 + $0x1160] sm:$0xff]
        %v837 = vld [vmem:[%s264 + $0x1168] sm:$0xff]
        %v838 = vld [vmem:[%s264 + $0x1170] sm:$0xff]
        %v839 = vld [vmem:[%s264 + $0x1178] sm:$0xff]
        %v840 = vld [vmem:[%s264 + $0x1180] sm:$0xff]
        %v841 = vld [vmem:[%s264 + $0x1188] sm:$0xff]
        %v842 = vld [vmem:[%s264 + $0x1190] sm:$0xff]
        %v843 = vld [vmem:[%s264 + $0x1198] sm:$0xff]
        %v844 = vld [vmem:[%s264 + $0x11a0] sm:$0xff]
        %v845 = vld [vmem:[%s264 + $0x11a8] sm:$0xff]
        %v846 = vld [vmem:[%s264 + $0x11b0] sm:$0xff]
        %v847 = vld [vmem:[%s264 + $0x11b8] sm:$0xff]
        %v848 = vld [vmem:[%s264 + $0x11c0] sm:$0xff]
        %v849 = vld [vmem:[%s264 + $0x11c8] sm:$0xff]
        %v850 = vld [vmem:[%s264 + $0x11d0] sm:$0xff]
        %v851 = vld [vmem:[%s264 + $0x11d8] sm:$0xff]
        %v852 = vld [vmem:[%s264 + $0x11e0] sm:$0xff]
        %v853 = vld [vmem:[%s264 + $0x11e8] sm:$0xff]
        %v854 = vld [vmem:[%s264 + $0x11f0] sm:$0xff]
        %v855 = vld [vmem:[%s264 + $0x11f8] sm:$0xff]
        %v856 = vld [vmem:[%s264 + $0x1200] sm:$0xff]
        %v857 = vld [vmem:[%s264 + $0x1208] sm:$0xff]
        %v858 = vld [vmem:[%s264 + $0x1210] sm:$0xff]
        %v859 = vld [vmem:[%s264 + $0x1218] sm:$0xff]
        %v860 = vld [vmem:[%s264 + $0x1220] sm:$0xff]
        %v861 = vld [vmem:[%s264 + $0x1228] sm:$0xff]
        %v862 = vld [vmem:[%s264 + $0x1230] sm:$0xff]
        %v863 = vld [vmem:[%s264 + $0x1238] sm:$0xff]
        %v864 = vld [vmem:[%s264 + $0x1240] sm:$0xff]
        %v865 = vld [vmem:[%s264 + $0x1248] sm:$0xff]
        %v866 = vld [vmem:[%s264 + $0x1250] sm:$0xff]
        %v867 = vld [vmem:[%s264 + $0x1258] sm:$0xff]
        %v868 = vld [vmem:[%s264 + $0x1260] sm:$0xff]
        %v869 = vld [vmem:[%s264 + $0x1268] sm:$0xff]
        %v870 = vld [vmem:[%s264 + $0x1270] sm:$0xff]
        %v871 = vld [vmem:[%s264 + $0x1278] sm:$0xff]
        %v872 = vld [vmem:[%s264 + $0x1280] sm:$0xff]
        %v873 = vld [vmem:[%s264 + $0x1288] sm:$0xff]
        %v874 = vld [vmem:[%s264 + $0x1290] sm:$0xff]
        %v875 = vld [vmem:[%s264 + $0x1298] sm:$0xff]
        %v876 = vld [vmem:[%s264 + $0x12a0] sm:$0xff]
        %v877 = vld [vmem:[%s264 + $0x12a8] sm:$0xff]
        %v878 = vld [vmem:[%s264 + $0x12b0] sm:$0xff]
        %v879 = vld [vmem:[%s264 + $0x12b8] sm:$0xff]
        %v880 = vld [vmem:[%s264 + $0x12c0] sm:$0xff]
        %v881 = vld [vmem:[%s264 + $0x12c8] sm:$0xff]
        %v882 = vld [vmem:[%s264 + $0x12d0] sm:$0xff]
        %v883 = vld [vmem:[%s264 + $0x12d8] sm:$0xff]
        %v884 = vld [vmem:[%s264 + $0x12e0] sm:$0xff]
        %v885 = vld [vmem:[%s264 + $0x12e8] sm:$0xff]
        %v886 = vld [vmem:[%s264 + $0x12f0] sm:$0xff]
        %v887 = vld [vmem:[%s264 + $0x12f8] sm:$0xff]
        %v888 = vld [vmem:[%s264 + $0x1300] sm:$0xff]
        %v889 = vld [vmem:[%s264 + $0x1308] sm:$0xff]
        %v890 = vld [vmem:[%s264 + $0x1310] sm:$0xff]
        %v891 = vld [vmem:[%s264 + $0x1318] sm:$0xff]
        %v892 = vld [vmem:[%s264 + $0x1320] sm:$0xff]
        %v893 = vld [vmem:[%s264 + $0x1328] sm:$0xff]
        %v894 = vld [vmem:[%s264 + $0x1330] sm:$0xff]
        %v895 = vld [vmem:[%s264 + $0x1338] sm:$0xff]
        %v896 = vld [vmem:[%s264 + $0x1340] sm:$0xff]
        %v897 = vld [vmem:[%s264 + $0x1348] sm:$0xff]
        %v898 = vld [vmem:[%s264 + $0x1350] sm:$0xff]
        %v899 = vld [vmem:[%s264 + $0x1358] sm:$0xff]
        %v900 = vld [vmem:[%s264 + $0x1360] sm:$0xff]
        %v901 = vld [vmem:[%s264 + $0x1368] sm:$0xff]
        %v902 = vld [vmem:[%s264 + $0x1370] sm:$0xff]
        %v903 = vld [vmem:[%s264 + $0x1378] sm:$0xff]
        %v904 = vld [vmem:[%s264 + $0x1380] sm:$0xff]
        %v905 = vld [vmem:[%s264 + $0x1388] sm:$0xff]
        %v906 = vld [vmem:[%s264 + $0x1390] sm:$0xff]
        %v907 = vld [vmem:[%s264 + $0x1398] sm:$0xff]
        %v908 = vld [vmem:[%s264 + $0x13a0] sm:$0xff]
        %v909 = vld [vmem:[%s264 + $0x13a8] sm:$0xff]
        %v910 = vld [vmem:[%s264 + $0x13b0] sm:$0xff]
        %v911 = vld [vmem:[%s264 + $0x13b8] sm:$0xff]
        %v912 = vld [vmem:[%s264 + $0x13c0] sm:$0xff]
        %v913 = vld [vmem:[%s264 + $0x13c8] sm:$0xff]
        %v914 = vld [vmem:[%s264 + $0x13d0] sm:$0xff]
        %v915 = vld [vmem:[%s264 + $0x13d8] sm:$0xff]
        %v916 = vld [vmem:[%s264 + $0x13e0] sm:$0xff]
        %v917 = vld [vmem:[%s264 + $0x13e8] sm:$0xff]
        %v918 = vld [vmem:[%s264 + $0x13f0] sm:$0xff]
        %v919 = vld [vmem:[%s264 + $0x13f8] sm:$0xff]
        %v921 = vcombine.high %v279, %v279
        %v923 = vunpack.c.l.s4 1966171168
        %v924 = vunpack.c.0.s8 %v923
        %v925 = vlaneseq
        %v926 = vshrl.u32 %v925, 7
        %v927 = vsub.s32 %v924, %v926
        %v928 = vrot.slane %v279, %v927
        %v930 = vunpack.c.l.s4 1966171168
        %v931 = vunpack.c.0.s8 %v930
        %v932 = vlaneseq
        %v933 = vshrl.u32 %v932, 7
        %v934 = vsub.s32 %v931, %v933
        %v935 = vrot.slane %v921, %v934
        %v936 = vcombine.high %v928, %v928
        %v938 = vunpack.c.l.s4 1966171168
        %v939 = vunpack.c.0.s8 %v938
        %v940 = vlaneseq
        %v941 = vshrl.u32 %v940, 7
        %v942 = vsub.s32 %v939, %v941
        %v943 = vrot.slane %v928, %v942
        %v945 = vunpack.c.l.s4 1966171168
        %v946 = vunpack.c.0.s8 %v945
        %v947 = vlaneseq
        %v948 = vshrl.u32 %v947, 7
        %v949 = vsub.s32 %v946, %v948
        %v950 = vrot.slane %v935, %v949
        %v952 = vunpack.c.l.s4 1966171168
        %v953 = vunpack.c.0.s8 %v952
        %v954 = vlaneseq
        %v955 = vshrl.u32 %v954, 7
        %v956 = vsub.s32 %v953, %v955
        %v957 = vrot.slane %v936, %v956
        %v958 = vcombine.high %v943, %v943
        %v959 = vcombine.high %v957, %v957
        %v1605 = vunpack.c.l.b16 %v280
        %v1606 = vunpack.c.h.b16 %v280
        %v1607 = vunpack.c.l.b16 %v281
        %v1608 = vunpack.c.h.b16 %v281
        %v1609 = vunpack.c.l.b16 %v282
        %v1610 = vunpack.c.h.b16 %v282
        %v1611 = vunpack.c.l.b16 %v283
        %v1612 = vunpack.c.h.b16 %v283
        %v1613 = vunpack.c.l.b16 %v284
        %v1614 = vunpack.c.h.b16 %v284
        %v1615 = vunpack.c.l.b16 %v285
        %v1616 = vunpack.c.h.b16 %v285
        %v1617 = vunpack.c.l.b16 %v286
        %v1618 = vunpack.c.h.b16 %v286
        %v1619 = vunpack.c.l.b16 %v287
        %v1620 = vunpack.c.h.b16 %v287
        %v1621 = vunpack.c.l.b16 %v288
        %v1622 = vunpack.c.h.b16 %v288
        %v1623 = vunpack.c.l.b16 %v289
        %v1624 = vunpack.c.h.b16 %v289
        %v1625 = vunpack.c.l.b16 %v290
        %v1626 = vunpack.c.h.b16 %v290
        %v1627 = vunpack.c.l.b16 %v291
        %v1628 = vunpack.c.h.b16 %v291
        %v1629 = vunpack.c.l.b16 %v292
        %v1630 = vunpack.c.h.b16 %v292
        %v1631 = vunpack.c.l.b16 %v293
        %v1632 = vunpack.c.h.b16 %v293
        %v1633 = vunpack.c.l.b16 %v294
        %v1634 = vunpack.c.h.b16 %v294
        %v1635 = vunpack.c.l.b16 %v295
        %v1636 = vunpack.c.h.b16 %v295
        %v1637 = vunpack.c.l.b16 %v296
        %v1638 = vunpack.c.h.b16 %v296
        %v1639 = vunpack.c.l.b16 %v297
        %v1640 = vunpack.c.h.b16 %v297
        %v1641 = vunpack.c.l.b16 %v298
        %v1642 = vunpack.c.h.b16 %v298
        %v1643 = vunpack.c.l.b16 %v299
        %v1644 = vunpack.c.h.b16 %v299
        %v1645 = vunpack.c.l.b16 %v300
        %v1646 = vunpack.c.h.b16 %v300
        %v1647 = vunpack.c.l.b16 %v301
        %v1648 = vunpack.c.h.b16 %v301
        %v1649 = vunpack.c.l.b16 %v302
        %v1650 = vunpack.c.h.b16 %v302
        %v1651 = vunpack.c.l.b16 %v303
        %v1652 = vunpack.c.h.b16 %v303
        %v1653 = vunpack.c.l.b16 %v304
        %v1654 = vunpack.c.h.b16 %v304
        %v1655 = vunpack.c.l.b16 %v305
        %v1656 = vunpack.c.h.b16 %v305
        %v1657 = vunpack.c.l.b16 %v306
        %v1658 = vunpack.c.h.b16 %v306
        %v1659 = vunpack.c.l.b16 %v307
        %v1660 = vunpack.c.h.b16 %v307
        %v1661 = vunpack.c.l.b16 %v308
        %v1662 = vunpack.c.h.b16 %v308
        %v1663 = vunpack.c.l.b16 %v309
        %v1664 = vunpack.c.h.b16 %v309
        %v1665 = vunpack.c.l.b16 %v310
        %v1666 = vunpack.c.h.b16 %v310
        %v1667 = vunpack.c.l.b16 %v311
        %v1668 = vunpack.c.h.b16 %v311
        %v1669 = vunpack.c.l.b16 %v312
        %v1670 = vunpack.c.h.b16 %v312
        %v1671 = vunpack.c.l.b16 %v313
        %v1672 = vunpack.c.h.b16 %v313
        %v1673 = vunpack.c.l.b16 %v314
        %v1674 = vunpack.c.h.b16 %v314
        %v1675 = vunpack.c.l.b16 %v315
        %v1676 = vunpack.c.h.b16 %v315
        %v1677 = vunpack.c.l.b16 %v316
        %v1678 = vunpack.c.h.b16 %v316
        %v1679 = vunpack.c.l.b16 %v317
        %v1680 = vunpack.c.h.b16 %v317
        %v1681 = vunpack.c.l.b16 %v318
        %v1682 = vunpack.c.h.b16 %v318
        %v1683 = vunpack.c.l.b16 %v319
        %v1684 = vunpack.c.h.b16 %v319
        %v1685 = vunpack.c.l.b16 %v320
        %v1686 = vunpack.c.h.b16 %v320
        %v1687 = vunpack.c.l.b16 %v321
        %v1688 = vunpack.c.h.b16 %v321
        %v1689 = vunpack.c.l.b16 %v322
        %v1690 = vunpack.c.h.b16 %v322
        %v1691 = vunpack.c.l.b16 %v323
        %v1692 = vunpack.c.h.b16 %v323
        %v1693 = vunpack.c.l.b16 %v324
        %v1694 = vunpack.c.h.b16 %v324
        %v1695 = vunpack.c.l.b16 %v325
        %v1696 = vunpack.c.h.b16 %v325
        %v1697 = vunpack.c.l.b16 %v326
        %v1698 = vunpack.c.h.b16 %v326
        %v1699 = vunpack.c.l.b16 %v327
        %v1700 = vunpack.c.h.b16 %v327
        %v1701 = vunpack.c.l.b16 %v328
        %v1702 = vunpack.c.h.b16 %v328
        %v1703 = vunpack.c.l.b16 %v329
        %v1704 = vunpack.c.h.b16 %v329
        %v1705 = vunpack.c.l.b16 %v330
        %v1706 = vunpack.c.h.b16 %v330
        %v1707 = vunpack.c.l.b16 %v331
        %v1708 = vunpack.c.h.b16 %v331
        %v1709 = vunpack.c.l.b16 %v332
        %v1710 = vunpack.c.h.b16 %v332
        %v1711 = vunpack.c.l.b16 %v333
        %v1712 = vunpack.c.h.b16 %v333
        %v1713 = vunpack.c.l.b16 %v334
        %v1714 = vunpack.c.h.b16 %v334
        %v1715 = vunpack.c.l.b16 %v335
        %v1716 = vunpack.c.h.b16 %v335
        %v1717 = vunpack.c.l.b16 %v336
        %v1718 = vunpack.c.h.b16 %v336
        %v1719 = vunpack.c.l.b16 %v337
        %v1720 = vunpack.c.h.b16 %v337
        %v1721 = vunpack.c.l.b16 %v338
        %v1722 = vunpack.c.h.b16 %v338
        %v1723 = vunpack.c.l.b16 %v339
        %v1724 = vunpack.c.h.b16 %v339
        %v1725 = vunpack.c.l.b16 %v340
        %v1726 = vunpack.c.h.b16 %v340
        %v1727 = vunpack.c.l.b16 %v341
        %v1728 = vunpack.c.h.b16 %v341
        %v1729 = vunpack.c.l.b16 %v342
        %v1730 = vunpack.c.h.b16 %v342
        %v1731 = vunpack.c.l.b16 %v343
        %v1732 = vunpack.c.h.b16 %v343
        %v1733 = vunpack.c.l.b16 %v344
        %v1734 = vunpack.c.h.b16 %v344
        %v1735 = vunpack.c.l.b16 %v345
        %v1736 = vunpack.c.h.b16 %v345
        %v1737 = vunpack.c.l.b16 %v346
        %v1738 = vunpack.c.h.b16 %v346
        %v1739 = vunpack.c.l.b16 %v347
        %v1740 = vunpack.c.h.b16 %v347
        %v1741 = vunpack.c.l.b16 %v348
        %v1742 = vunpack.c.h.b16 %v348
        %v1743 = vunpack.c.l.b16 %v349
        %v1744 = vunpack.c.h.b16 %v349
        %v1745 = vunpack.c.l.b16 %v350
        %v1746 = vunpack.c.h.b16 %v350
        %v1747 = vunpack.c.l.b16 %v351
        %v1748 = vunpack.c.h.b16 %v351
        %v1749 = vunpack.c.l.b16 %v352
        %v1750 = vunpack.c.h.b16 %v352
        %v1751 = vunpack.c.l.b16 %v353
        %v1752 = vunpack.c.h.b16 %v353
        %v1753 = vunpack.c.l.b16 %v354
        %v1754 = vunpack.c.h.b16 %v354
        %v1755 = vunpack.c.l.b16 %v355
        %v1756 = vunpack.c.h.b16 %v355
        %v1757 = vunpack.c.l.b16 %v356
        %v1758 = vunpack.c.h.b16 %v356
        %v1759 = vunpack.c.l.b16 %v357
        %v1760 = vunpack.c.h.b16 %v357
        %v1761 = vunpack.c.l.b16 %v358
        %v1762 = vunpack.c.h.b16 %v358
        %v1763 = vunpack.c.l.b16 %v359
        %v1764 = vunpack.c.h.b16 %v359
        %v1765 = vunpack.c.l.b16 %v360
        %v1766 = vunpack.c.h.b16 %v360
        %v1767 = vunpack.c.l.b16 %v361
        %v1768 = vunpack.c.h.b16 %v361
        %v1769 = vunpack.c.l.b16 %v362
        %v1770 = vunpack.c.h.b16 %v362
        %v1771 = vunpack.c.l.b16 %v363
        %v1772 = vunpack.c.h.b16 %v363
        %v1773 = vunpack.c.l.b16 %v364
        %v1774 = vunpack.c.h.b16 %v364
        %v1775 = vunpack.c.l.b16 %v365
        %v1776 = vunpack.c.h.b16 %v365
        %v1777 = vunpack.c.l.b16 %v366
        %v1778 = vunpack.c.h.b16 %v366
        %v1779 = vunpack.c.l.b16 %v367
        %v1780 = vunpack.c.h.b16 %v367
        %v1781 = vunpack.c.l.b16 %v368
        %v1782 = vunpack.c.h.b16 %v368
        %v1783 = vunpack.c.l.b16 %v369
        %v1784 = vunpack.c.h.b16 %v369
        %v1785 = vunpack.c.l.b16 %v370
        %v1786 = vunpack.c.h.b16 %v370
        %v1787 = vunpack.c.l.b16 %v371
        %v1788 = vunpack.c.h.b16 %v371
        %v1789 = vunpack.c.l.b16 %v372
        %v1790 = vunpack.c.h.b16 %v372
        %v1791 = vunpack.c.l.b16 %v373
        %v1792 = vunpack.c.h.b16 %v373
        %v1793 = vunpack.c.l.b16 %v374
        %v1794 = vunpack.c.h.b16 %v374
        %v1795 = vunpack.c.l.b16 %v375
        %v1796 = vunpack.c.h.b16 %v375
        %v1797 = vunpack.c.l.b16 %v376
        %v1798 = vunpack.c.h.b16 %v376
        %v1799 = vunpack.c.l.b16 %v377
        %v1800 = vunpack.c.h.b16 %v377
        %v1801 = vunpack.c.l.b16 %v378
        %v1802 = vunpack.c.h.b16 %v378
        %v1803 = vunpack.c.l.b16 %v379
        %v1804 = vunpack.c.h.b16 %v379
        %v1805 = vunpack.c.l.b16 %v380
        %v1806 = vunpack.c.h.b16 %v380
        %v1807 = vunpack.c.l.b16 %v381
        %v1808 = vunpack.c.h.b16 %v381
        %v1809 = vunpack.c.l.b16 %v382
        %v1810 = vunpack.c.h.b16 %v382
        %v1811 = vunpack.c.l.b16 %v383
        %v1812 = vunpack.c.h.b16 %v383
        %v1813 = vunpack.c.l.b16 %v384
        %v1814 = vunpack.c.h.b16 %v384
        %v1815 = vunpack.c.l.b16 %v385
        %v1816 = vunpack.c.h.b16 %v385
        %v1817 = vunpack.c.l.b16 %v386
        %v1818 = vunpack.c.h.b16 %v386
        %v1819 = vunpack.c.l.b16 %v387
        %v1820 = vunpack.c.h.b16 %v387
        %v1821 = vunpack.c.l.b16 %v388
        %v1822 = vunpack.c.h.b16 %v388
        %v1823 = vunpack.c.l.b16 %v389
        %v1824 = vunpack.c.h.b16 %v389
        %v1825 = vunpack.c.l.b16 %v390
        %v1826 = vunpack.c.h.b16 %v390
        %v1827 = vunpack.c.l.b16 %v391
        %v1828 = vunpack.c.h.b16 %v391
        %v1829 = vunpack.c.l.b16 %v392
        %v1830 = vunpack.c.h.b16 %v392
        %v1831 = vunpack.c.l.b16 %v393
        %v1832 = vunpack.c.h.b16 %v393
        %v1833 = vunpack.c.l.b16 %v394
        %v1834 = vunpack.c.h.b16 %v394
        %v1835 = vunpack.c.l.b16 %v395
        %v1836 = vunpack.c.h.b16 %v395
        %v1837 = vunpack.c.l.b16 %v396
        %v1838 = vunpack.c.h.b16 %v396
        %v1839 = vunpack.c.l.b16 %v397
        %v1840 = vunpack.c.h.b16 %v397
        %v1841 = vunpack.c.l.b16 %v398
        %v1842 = vunpack.c.h.b16 %v398
        %v1843 = vunpack.c.l.b16 %v399
        %v1844 = vunpack.c.h.b16 %v399
        %v1845 = vunpack.c.l.b16 %v400
        %v1846 = vunpack.c.h.b16 %v400
        %v1847 = vunpack.c.l.b16 %v401
        %v1848 = vunpack.c.h.b16 %v401
        %v1849 = vunpack.c.l.b16 %v402
        %v1850 = vunpack.c.h.b16 %v402
        %v1851 = vunpack.c.l.b16 %v403
        %v1852 = vunpack.c.h.b16 %v403
        %v1853 = vunpack.c.l.b16 %v404
        %v1854 = vunpack.c.h.b16 %v404
        %v1855 = vunpack.c.l.b16 %v405
        %v1856 = vunpack.c.h.b16 %v405
        %v1857 = vunpack.c.l.b16 %v406
        %v1858 = vunpack.c.h.b16 %v406
        %v1859 = vunpack.c.l.b16 %v407
        %v1860 = vunpack.c.h.b16 %v407
        %v1861 = vunpack.c.l.b16 %v408
        %v1862 = vunpack.c.h.b16 %v408
        %v1863 = vunpack.c.l.b16 %v409
        %v1864 = vunpack.c.h.b16 %v409
        %v1865 = vunpack.c.l.b16 %v410
        %v1866 = vunpack.c.h.b16 %v410
        %v1867 = vunpack.c.l.b16 %v411
        %v1868 = vunpack.c.h.b16 %v411
        %v1869 = vunpack.c.l.b16 %v412
        %v1870 = vunpack.c.h.b16 %v412
        %v1871 = vunpack.c.l.b16 %v413
        %v1872 = vunpack.c.h.b16 %v413
        %v1873 = vunpack.c.l.b16 %v414
        %v1874 = vunpack.c.h.b16 %v414
        %v1875 = vunpack.c.l.b16 %v415
        %v1876 = vunpack.c.h.b16 %v415
        %v1877 = vunpack.c.l.b16 %v416
        %v1878 = vunpack.c.h.b16 %v416
        %v1879 = vunpack.c.l.b16 %v417
        %v1880 = vunpack.c.h.b16 %v417
        %v1881 = vunpack.c.l.b16 %v418
        %v1882 = vunpack.c.h.b16 %v418
        %v1883 = vunpack.c.l.b16 %v419
        %v1884 = vunpack.c.h.b16 %v419
        %v1885 = vunpack.c.l.b16 %v420
        %v1886 = vunpack.c.h.b16 %v420
        %v1887 = vunpack.c.l.b16 %v421
        %v1888 = vunpack.c.h.b16 %v421
        %v1889 = vunpack.c.l.b16 %v422
        %v1890 = vunpack.c.h.b16 %v422
        %v1891 = vunpack.c.l.b16 %v423
        %v1892 = vunpack.c.h.b16 %v423
        %v1893 = vunpack.c.l.b16 %v424
        %v1894 = vunpack.c.h.b16 %v424
        %v1895 = vunpack.c.l.b16 %v425
        %v1896 = vunpack.c.h.b16 %v425
        %v1897 = vunpack.c.l.b16 %v426
        %v1898 = vunpack.c.h.b16 %v426
        %v1899 = vunpack.c.l.b16 %v427
        %v1900 = vunpack.c.h.b16 %v427
        %v1901 = vunpack.c.l.b16 %v428
        %v1902 = vunpack.c.h.b16 %v428
        %v1903 = vunpack.c.l.b16 %v429
        %v1904 = vunpack.c.h.b16 %v429
        %v1905 = vunpack.c.l.b16 %v430
        %v1906 = vunpack.c.h.b16 %v430
        %v1907 = vunpack.c.l.b16 %v431
        %v1908 = vunpack.c.h.b16 %v431
        %v1909 = vunpack.c.l.b16 %v432
        %v1910 = vunpack.c.h.b16 %v432
        %v1911 = vunpack.c.l.b16 %v433
        %v1912 = vunpack.c.h.b16 %v433
        %v1913 = vunpack.c.l.b16 %v434
        %v1914 = vunpack.c.h.b16 %v434
        %v1915 = vunpack.c.l.b16 %v435
        %v1916 = vunpack.c.h.b16 %v435
        %v1917 = vunpack.c.l.b16 %v436
        %v1918 = vunpack.c.h.b16 %v436
        %v1919 = vunpack.c.l.b16 %v437
        %v1920 = vunpack.c.h.b16 %v437
        %v1921 = vunpack.c.l.b16 %v438
        %v1922 = vunpack.c.h.b16 %v438
        %v1923 = vunpack.c.l.b16 %v439
        %v1924 = vunpack.c.h.b16 %v439
        %v1925 = vunpack.c.l.b16 %v440
        %v1926 = vunpack.c.h.b16 %v440
        %v1927 = vunpack.c.l.b16 %v441
        %v1928 = vunpack.c.h.b16 %v441
        %v1929 = vunpack.c.l.b16 %v442
        %v1930 = vunpack.c.h.b16 %v442
        %v1931 = vunpack.c.l.b16 %v443
        %v1932 = vunpack.c.h.b16 %v443
        %v1933 = vunpack.c.l.b16 %v444
        %v1934 = vunpack.c.h.b16 %v444
        %v1935 = vunpack.c.l.b16 %v445
        %v1936 = vunpack.c.h.b16 %v445
        %v1937 = vunpack.c.l.b16 %v446
        %v1938 = vunpack.c.h.b16 %v446
        %v1939 = vunpack.c.l.b16 %v447
        %v1940 = vunpack.c.h.b16 %v447
        %v1941 = vunpack.c.l.b16 %v448
        %v1942 = vunpack.c.h.b16 %v448
        %v1943 = vunpack.c.l.b16 %v449
        %v1944 = vunpack.c.h.b16 %v449
        %v1945 = vunpack.c.l.b16 %v450
        %v1946 = vunpack.c.h.b16 %v450
        %v1947 = vunpack.c.l.b16 %v451
        %v1948 = vunpack.c.h.b16 %v451
        %v1949 = vunpack.c.l.b16 %v452
        %v1950 = vunpack.c.h.b16 %v452
        %v1951 = vunpack.c.l.b16 %v453
        %v1952 = vunpack.c.h.b16 %v453
        %v1953 = vunpack.c.l.b16 %v454
        %v1954 = vunpack.c.h.b16 %v454
        %v1955 = vunpack.c.l.b16 %v455
        %v1956 = vunpack.c.h.b16 %v455
        %v1957 = vunpack.c.l.b16 %v456
        %v1958 = vunpack.c.h.b16 %v456
        %v1959 = vunpack.c.l.b16 %v457
        %v1960 = vunpack.c.h.b16 %v457
        %v1961 = vunpack.c.l.b16 %v458
        %v1962 = vunpack.c.h.b16 %v458
        %v1963 = vunpack.c.l.b16 %v459
        %v1964 = vunpack.c.h.b16 %v459
        %v1965 = vunpack.c.l.b16 %v460
        %v1966 = vunpack.c.h.b16 %v460
        %v1967 = vunpack.c.l.b16 %v461
        %v1968 = vunpack.c.h.b16 %v461
        %v1969 = vunpack.c.l.b16 %v462
        %v1970 = vunpack.c.h.b16 %v462
        %v1971 = vunpack.c.l.b16 %v463
        %v1972 = vunpack.c.h.b16 %v463
        %v1973 = vunpack.c.l.b16 %v464
        %v1974 = vunpack.c.h.b16 %v464
        %v1975 = vunpack.c.l.b16 %v465
        %v1976 = vunpack.c.h.b16 %v465
        %v1977 = vunpack.c.l.b16 %v466
        %v1978 = vunpack.c.h.b16 %v466
        %v1979 = vunpack.c.l.b16 %v467
        %v1980 = vunpack.c.h.b16 %v467
        %v1981 = vunpack.c.l.b16 %v468
        %v1982 = vunpack.c.h.b16 %v468
        %v1983 = vunpack.c.l.b16 %v469
        %v1984 = vunpack.c.h.b16 %v469
        %v1985 = vunpack.c.l.b16 %v470
        %v1986 = vunpack.c.h.b16 %v470
        %v1987 = vunpack.c.l.b16 %v471
        %v1988 = vunpack.c.h.b16 %v471
        %v1989 = vunpack.c.l.b16 %v472
        %v1990 = vunpack.c.h.b16 %v472
        %v1991 = vunpack.c.l.b16 %v473
        %v1992 = vunpack.c.h.b16 %v473
        %v1993 = vunpack.c.l.b16 %v474
        %v1994 = vunpack.c.h.b16 %v474
        %v1995 = vunpack.c.l.b16 %v475
        %v1996 = vunpack.c.h.b16 %v475
        %v1997 = vunpack.c.l.b16 %v476
        %v1998 = vunpack.c.h.b16 %v476
        %v1999 = vunpack.c.l.b16 %v477
        %v2000 = vunpack.c.h.b16 %v477
        %v2001 = vunpack.c.l.b16 %v478
        %v2002 = vunpack.c.h.b16 %v478
        %v2003 = vunpack.c.l.b16 %v479
        %v2004 = vunpack.c.h.b16 %v479
        %v2005 = vunpack.c.l.b16 %v480
        %v2006 = vunpack.c.h.b16 %v480
        %v2007 = vunpack.c.l.b16 %v481
        %v2008 = vunpack.c.h.b16 %v481
        %v2009 = vunpack.c.l.b16 %v482
        %v2010 = vunpack.c.h.b16 %v482
        %v2011 = vunpack.c.l.b16 %v483
        %v2012 = vunpack.c.h.b16 %v483
        %v2013 = vunpack.c.l.b16 %v484
        %v2014 = vunpack.c.h.b16 %v484
        %v2015 = vunpack.c.l.b16 %v485
        %v2016 = vunpack.c.h.b16 %v485
        %v2017 = vunpack.c.l.b16 %v486
        %v2018 = vunpack.c.h.b16 %v486
        %v2019 = vunpack.c.l.b16 %v487
        %v2020 = vunpack.c.h.b16 %v487
        %v2021 = vunpack.c.l.b16 %v488
        %v2022 = vunpack.c.h.b16 %v488
        %v2023 = vunpack.c.l.b16 %v489
        %v2024 = vunpack.c.h.b16 %v489
        %v2025 = vunpack.c.l.b16 %v490
        %v2026 = vunpack.c.h.b16 %v490
        %v2027 = vunpack.c.l.b16 %v491
        %v2028 = vunpack.c.h.b16 %v491
        %v2029 = vunpack.c.l.b16 %v492
        %v2030 = vunpack.c.h.b16 %v492
        %v2031 = vunpack.c.l.b16 %v493
        %v2032 = vunpack.c.h.b16 %v493
        %v2033 = vunpack.c.l.b16 %v494
        %v2034 = vunpack.c.h.b16 %v494
        %v2035 = vunpack.c.l.b16 %v495
        %v2036 = vunpack.c.h.b16 %v495
        %v2037 = vunpack.c.l.b16 %v496
        %v2038 = vunpack.c.h.b16 %v496
        %v2039 = vunpack.c.l.b16 %v497
        %v2040 = vunpack.c.h.b16 %v497
        %v2041 = vunpack.c.l.b16 %v498
        %v2042 = vunpack.c.h.b16 %v498
        %v2043 = vunpack.c.l.b16 %v499
        %v2044 = vunpack.c.h.b16 %v499
        %v2045 = vunpack.c.l.b16 %v500
        %v2046 = vunpack.c.h.b16 %v500
        %v2047 = vunpack.c.l.b16 %v501
        %v2048 = vunpack.c.h.b16 %v501
        %v2049 = vunpack.c.l.b16 %v502
        %v2050 = vunpack.c.h.b16 %v502
        %v2051 = vunpack.c.l.b16 %v503
        %v2052 = vunpack.c.h.b16 %v503
        %v2053 = vunpack.c.l.b16 %v504
        %v2054 = vunpack.c.h.b16 %v504
        %v2055 = vunpack.c.l.b16 %v505
        %v2056 = vunpack.c.h.b16 %v505
        %v2057 = vunpack.c.l.b16 %v506
        %v2058 = vunpack.c.h.b16 %v506
        %v2059 = vunpack.c.l.b16 %v507
        %v2060 = vunpack.c.h.b16 %v507
        %v2061 = vunpack.c.l.b16 %v508
        %v2062 = vunpack.c.h.b16 %v508
        %v2063 = vunpack.c.l.b16 %v509
        %v2064 = vunpack.c.h.b16 %v509
        %v2065 = vunpack.c.l.b16 %v510
        %v2066 = vunpack.c.h.b16 %v510
        %v2067 = vunpack.c.l.b16 %v511
        %v2068 = vunpack.c.h.b16 %v511
        %v2069 = vunpack.c.l.b16 %v512
        %v2070 = vunpack.c.h.b16 %v512
        %v2071 = vunpack.c.l.b16 %v513
        %v2072 = vunpack.c.h.b16 %v513
        %v2073 = vunpack.c.l.b16 %v514
        %v2074 = vunpack.c.h.b16 %v514
        %v2075 = vunpack.c.l.b16 %v515
        %v2076 = vunpack.c.h.b16 %v515
        %v2077 = vunpack.c.l.b16 %v516
        %v2078 = vunpack.c.h.b16 %v516
        %v2079 = vunpack.c.l.b16 %v517
        %v2080 = vunpack.c.h.b16 %v517
        %v2081 = vunpack.c.l.b16 %v518
        %v2082 = vunpack.c.h.b16 %v518
        %v2083 = vunpack.c.l.b16 %v519
        %v2084 = vunpack.c.h.b16 %v519
        %v2085 = vunpack.c.l.b16 %v520
        %v2086 = vunpack.c.h.b16 %v520
        %v2087 = vunpack.c.l.b16 %v521
        %v2088 = vunpack.c.h.b16 %v521
        %v2089 = vunpack.c.l.b16 %v522
        %v2090 = vunpack.c.h.b16 %v522
        %v2091 = vunpack.c.l.b16 %v523
        %v2092 = vunpack.c.h.b16 %v523
        %v2093 = vunpack.c.l.b16 %v524
        %v2094 = vunpack.c.h.b16 %v524
        %v2095 = vunpack.c.l.b16 %v525
        %v2096 = vunpack.c.h.b16 %v525
        %v2097 = vunpack.c.l.b16 %v526
        %v2098 = vunpack.c.h.b16 %v526
        %v2099 = vunpack.c.l.b16 %v527
        %v2100 = vunpack.c.h.b16 %v527
        %v2101 = vunpack.c.l.b16 %v528
        %v2102 = vunpack.c.h.b16 %v528
        %v2103 = vunpack.c.l.b16 %v529
        %v2104 = vunpack.c.h.b16 %v529
        %v2105 = vunpack.c.l.b16 %v530
        %v2106 = vunpack.c.h.b16 %v530
        %v2107 = vunpack.c.l.b16 %v531
        %v2108 = vunpack.c.h.b16 %v531
        %v2109 = vunpack.c.l.b16 %v532
        %v2110 = vunpack.c.h.b16 %v532
        %v2111 = vunpack.c.l.b16 %v533
        %v2112 = vunpack.c.h.b16 %v533
        %v2113 = vunpack.c.l.b16 %v534
        %v2114 = vunpack.c.h.b16 %v534
        %v2115 = vunpack.c.l.b16 %v535
        %v2116 = vunpack.c.h.b16 %v535
        %v2117 = vunpack.c.l.b16 %v536
        %v2118 = vunpack.c.h.b16 %v536
        %v2119 = vunpack.c.l.b16 %v537
        %v2120 = vunpack.c.h.b16 %v537
        %v2121 = vunpack.c.l.b16 %v538
        %v2122 = vunpack.c.h.b16 %v538
        %v2123 = vunpack.c.l.b16 %v539
        %v2124 = vunpack.c.h.b16 %v539
        %v2125 = vunpack.c.l.b16 %v540
        %v2126 = vunpack.c.h.b16 %v540
        %v2127 = vunpack.c.l.b16 %v541
        %v2128 = vunpack.c.h.b16 %v541
        %v2129 = vunpack.c.l.b16 %v542
        %v2130 = vunpack.c.h.b16 %v542
        %v2131 = vunpack.c.l.b16 %v543
        %v2132 = vunpack.c.h.b16 %v543
        %v2133 = vunpack.c.l.b16 %v544
        %v2134 = vunpack.c.h.b16 %v544
        %v2135 = vunpack.c.l.b16 %v545
        %v2136 = vunpack.c.h.b16 %v545
        %v2137 = vunpack.c.l.b16 %v546
        %v2138 = vunpack.c.h.b16 %v546
        %v2139 = vunpack.c.l.b16 %v547
        %v2140 = vunpack.c.h.b16 %v547
        %v2141 = vunpack.c.l.b16 %v548
        %v2142 = vunpack.c.h.b16 %v548
        %v2143 = vunpack.c.l.b16 %v549
        %v2144 = vunpack.c.h.b16 %v549
        %v2145 = vunpack.c.l.b16 %v550
        %v2146 = vunpack.c.h.b16 %v550
        %v2147 = vunpack.c.l.b16 %v551
        %v2148 = vunpack.c.h.b16 %v551
        %v2149 = vunpack.c.l.b16 %v552
        %v2150 = vunpack.c.h.b16 %v552
        %v2151 = vunpack.c.l.b16 %v553
        %v2152 = vunpack.c.h.b16 %v553
        %v2153 = vunpack.c.l.b16 %v554
        %v2154 = vunpack.c.h.b16 %v554
        %v2155 = vunpack.c.l.b16 %v555
        %v2156 = vunpack.c.h.b16 %v555
        %v2157 = vunpack.c.l.b16 %v556
        %v2158 = vunpack.c.h.b16 %v556
        %v2159 = vunpack.c.l.b16 %v557
        %v2160 = vunpack.c.h.b16 %v557
        %v2161 = vunpack.c.l.b16 %v558
        %v2162 = vunpack.c.h.b16 %v558
        %v2163 = vunpack.c.l.b16 %v559
        %v2164 = vunpack.c.h.b16 %v559
        %v2165 = vunpack.c.l.b16 %v560
        %v2166 = vunpack.c.h.b16 %v560
        %v2167 = vunpack.c.l.b16 %v561
        %v2168 = vunpack.c.h.b16 %v561
        %v2169 = vunpack.c.l.b16 %v562
        %v2170 = vunpack.c.h.b16 %v562
        %v2171 = vunpack.c.l.b16 %v563
        %v2172 = vunpack.c.h.b16 %v563
        %v2173 = vunpack.c.l.b16 %v564
        %v2174 = vunpack.c.h.b16 %v564
        %v2175 = vunpack.c.l.b16 %v565
        %v2176 = vunpack.c.h.b16 %v565
        %v2177 = vunpack.c.l.b16 %v566
        %v2178 = vunpack.c.h.b16 %v566
        %v2179 = vunpack.c.l.b16 %v567
        %v2180 = vunpack.c.h.b16 %v567
        %v2181 = vunpack.c.l.b16 %v568
        %v2182 = vunpack.c.h.b16 %v568
        %v2183 = vunpack.c.l.b16 %v569
        %v2184 = vunpack.c.h.b16 %v569
        %v2185 = vunpack.c.l.b16 %v570
        %v2186 = vunpack.c.h.b16 %v570
        %v2187 = vunpack.c.l.b16 %v571
        %v2188 = vunpack.c.h.b16 %v571
        %v2189 = vunpack.c.l.b16 %v572
        %v2190 = vunpack.c.h.b16 %v572
        %v2191 = vunpack.c.l.b16 %v573
        %v2192 = vunpack.c.h.b16 %v573
        %v2193 = vunpack.c.l.b16 %v574
        %v2194 = vunpack.c.h.b16 %v574
        %v2195 = vunpack.c.l.b16 %v575
        %v2196 = vunpack.c.h.b16 %v575
        %v2197 = vunpack.c.l.b16 %v576
        %v2198 = vunpack.c.h.b16 %v576
        %v2199 = vunpack.c.l.b16 %v577
        %v2200 = vunpack.c.h.b16 %v577
        %v2201 = vunpack.c.l.b16 %v578
        %v2202 = vunpack.c.h.b16 %v578
        %v2203 = vunpack.c.l.b16 %v579
        %v2204 = vunpack.c.h.b16 %v579
        %v2205 = vunpack.c.l.b16 %v580
        %v2206 = vunpack.c.h.b16 %v580
        %v2207 = vunpack.c.l.b16 %v581
        %v2208 = vunpack.c.h.b16 %v581
        %v2209 = vunpack.c.l.b16 %v582
        %v2210 = vunpack.c.h.b16 %v582
        %v2211 = vunpack.c.l.b16 %v583
        %v2212 = vunpack.c.h.b16 %v583
        %v2213 = vunpack.c.l.b16 %v584
        %v2214 = vunpack.c.h.b16 %v584
        %v2215 = vunpack.c.l.b16 %v585
        %v2216 = vunpack.c.h.b16 %v585
        %v2217 = vunpack.c.l.b16 %v586
        %v2218 = vunpack.c.h.b16 %v586
        %v2219 = vunpack.c.l.b16 %v587
        %v2220 = vunpack.c.h.b16 %v587
        %v2221 = vunpack.c.l.b16 %v588
        %v2222 = vunpack.c.h.b16 %v588
        %v2223 = vunpack.c.l.b16 %v589
        %v2224 = vunpack.c.h.b16 %v589
        %v2225 = vunpack.c.l.b16 %v590
        %v2226 = vunpack.c.h.b16 %v590
        %v2227 = vunpack.c.l.b16 %v591
        %v2228 = vunpack.c.h.b16 %v591
        %v2229 = vunpack.c.l.b16 %v592
        %v2230 = vunpack.c.h.b16 %v592
        %v2231 = vunpack.c.l.b16 %v593
        %v2232 = vunpack.c.h.b16 %v593
        %v2233 = vunpack.c.l.b16 %v594
        %v2234 = vunpack.c.h.b16 %v594
        %v2235 = vunpack.c.l.b16 %v595
        %v2236 = vunpack.c.h.b16 %v595
        %v2237 = vunpack.c.l.b16 %v596
        %v2238 = vunpack.c.h.b16 %v596
        %v2239 = vunpack.c.l.b16 %v597
        %v2240 = vunpack.c.h.b16 %v597
        %v2241 = vunpack.c.l.b16 %v598
        %v2242 = vunpack.c.h.b16 %v598
        %v2243 = vunpack.c.l.b16 %v599
        %v2244 = vunpack.c.h.b16 %v599
        %v2245 = vunpack.c.l.b16 %v600
        %v2246 = vunpack.c.h.b16 %v600
        %v2247 = vunpack.c.l.b16 %v601
        %v2248 = vunpack.c.h.b16 %v601
        %v2249 = vunpack.c.l.b16 %v602
        %v2250 = vunpack.c.h.b16 %v602
        %v2251 = vunpack.c.l.b16 %v603
        %v2252 = vunpack.c.h.b16 %v603
        %v2253 = vunpack.c.l.b16 %v604
        %v2254 = vunpack.c.h.b16 %v604
        %v2255 = vunpack.c.l.b16 %v605
        %v2256 = vunpack.c.h.b16 %v605
        %v2257 = vunpack.c.l.b16 %v606
        %v2258 = vunpack.c.h.b16 %v606
        %v2259 = vunpack.c.l.b16 %v607
        %v2260 = vunpack.c.h.b16 %v607
        %v2261 = vunpack.c.l.b16 %v608
        %v2262 = vunpack.c.h.b16 %v608
        %v2263 = vunpack.c.l.b16 %v609
        %v2264 = vunpack.c.h.b16 %v609
        %v2265 = vunpack.c.l.b16 %v610
        %v2266 = vunpack.c.h.b16 %v610
        %v2267 = vunpack.c.l.b16 %v611
        %v2268 = vunpack.c.h.b16 %v611
        %v2269 = vunpack.c.l.b16 %v612
        %v2270 = vunpack.c.h.b16 %v612
        %v2271 = vunpack.c.l.b16 %v613
        %v2272 = vunpack.c.h.b16 %v613
        %v2273 = vunpack.c.l.b16 %v614
        %v2274 = vunpack.c.h.b16 %v614
        %v2275 = vunpack.c.l.b16 %v615
        %v2276 = vunpack.c.h.b16 %v615
        %v2277 = vunpack.c.l.b16 %v616
        %v2278 = vunpack.c.h.b16 %v616
        %v2279 = vunpack.c.l.b16 %v617
        %v2280 = vunpack.c.h.b16 %v617
        %v2281 = vunpack.c.l.b16 %v618
        %v2282 = vunpack.c.h.b16 %v618
        %v2283 = vunpack.c.l.b16 %v619
        %v2284 = vunpack.c.h.b16 %v619
        %v2285 = vunpack.c.l.b16 %v620
        %v2286 = vunpack.c.h.b16 %v620
        %v2287 = vunpack.c.l.b16 %v621
        %v2288 = vunpack.c.h.b16 %v621
        %v2289 = vunpack.c.l.b16 %v622
        %v2290 = vunpack.c.h.b16 %v622
        %v2291 = vunpack.c.l.b16 %v623
        %v2292 = vunpack.c.h.b16 %v623
        %v2293 = vunpack.c.l.b16 %v624
        %v2294 = vunpack.c.h.b16 %v624
        %v2295 = vunpack.c.l.b16 %v625
        %v2296 = vunpack.c.h.b16 %v625
        %v2297 = vunpack.c.l.b16 %v626
        %v2298 = vunpack.c.h.b16 %v626
        %v2299 = vunpack.c.l.b16 %v627
        %v2300 = vunpack.c.h.b16 %v627
        %v2301 = vunpack.c.l.b16 %v628
        %v2302 = vunpack.c.h.b16 %v628
        %v2303 = vunpack.c.l.b16 %v629
        %v2304 = vunpack.c.h.b16 %v629
        %v2305 = vunpack.c.l.b16 %v630
        %v2306 = vunpack.c.h.b16 %v630
        %v2307 = vunpack.c.l.b16 %v631
        %v2308 = vunpack.c.h.b16 %v631
        %v2309 = vunpack.c.l.b16 %v632
        %v2310 = vunpack.c.h.b16 %v632
        %v2311 = vunpack.c.l.b16 %v633
        %v2312 = vunpack.c.h.b16 %v633
        %v2313 = vunpack.c.l.b16 %v634
        %v2314 = vunpack.c.h.b16 %v634
        %v2315 = vunpack.c.l.b16 %v635
        %v2316 = vunpack.c.h.b16 %v635
        %v2317 = vunpack.c.l.b16 %v636
        %v2318 = vunpack.c.h.b16 %v636
        %v2319 = vunpack.c.l.b16 %v637
        %v2320 = vunpack.c.h.b16 %v637
        %v2321 = vunpack.c.l.b16 %v638
        %v2322 = vunpack.c.h.b16 %v638
        %v2323 = vunpack.c.l.b16 %v639
        %v2324 = vunpack.c.h.b16 %v639
        %v2325 = vunpack.c.l.b16 %v640
        %v2326 = vunpack.c.h.b16 %v640
        %v2327 = vunpack.c.l.b16 %v641
        %v2328 = vunpack.c.h.b16 %v641
        %v2329 = vunpack.c.l.b16 %v642
        %v2330 = vunpack.c.h.b16 %v642
        %v2331 = vunpack.c.l.b16 %v643
        %v2332 = vunpack.c.h.b16 %v643
        %v2333 = vunpack.c.l.b16 %v644
        %v2334 = vunpack.c.h.b16 %v644
        %v2335 = vunpack.c.l.b16 %v645
        %v2336 = vunpack.c.h.b16 %v645
        %v2337 = vunpack.c.l.b16 %v646
        %v2338 = vunpack.c.h.b16 %v646
        %v2339 = vunpack.c.l.b16 %v647
        %v2340 = vunpack.c.h.b16 %v647
        %v2341 = vunpack.c.l.b16 %v648
        %v2342 = vunpack.c.h.b16 %v648
        %v2343 = vunpack.c.l.b16 %v649
        %v2344 = vunpack.c.h.b16 %v649
        %v2345 = vunpack.c.l.b16 %v650
        %v2346 = vunpack.c.h.b16 %v650
        %v2347 = vunpack.c.l.b16 %v651
        %v2348 = vunpack.c.h.b16 %v651
        %v2349 = vunpack.c.l.b16 %v652
        %v2350 = vunpack.c.h.b16 %v652
        %v2351 = vunpack.c.l.b16 %v653
        %v2352 = vunpack.c.h.b16 %v653
        %v2353 = vunpack.c.l.b16 %v654
        %v2354 = vunpack.c.h.b16 %v654
        %v2355 = vunpack.c.l.b16 %v655
        %v2356 = vunpack.c.h.b16 %v655
        %v2357 = vunpack.c.l.b16 %v656
        %v2358 = vunpack.c.h.b16 %v656
        %v2359 = vunpack.c.l.b16 %v657
        %v2360 = vunpack.c.h.b16 %v657
        %v2361 = vunpack.c.l.b16 %v658
        %v2362 = vunpack.c.h.b16 %v658
        %v2363 = vunpack.c.l.b16 %v659
        %v2364 = vunpack.c.h.b16 %v659
        %v2365 = vunpack.c.l.b16 %v660
        %v2366 = vunpack.c.h.b16 %v660
        %v2367 = vunpack.c.l.b16 %v661
        %v2368 = vunpack.c.h.b16 %v661
        %v2369 = vunpack.c.l.b16 %v662
        %v2370 = vunpack.c.h.b16 %v662
        %v2371 = vunpack.c.l.b16 %v663
        %v2372 = vunpack.c.h.b16 %v663
        %v2373 = vunpack.c.l.b16 %v664
        %v2374 = vunpack.c.h.b16 %v664
        %v2375 = vunpack.c.l.b16 %v665
        %v2376 = vunpack.c.h.b16 %v665
        %v2377 = vunpack.c.l.b16 %v666
        %v2378 = vunpack.c.h.b16 %v666
        %v2379 = vunpack.c.l.b16 %v667
        %v2380 = vunpack.c.h.b16 %v667
        %v2381 = vunpack.c.l.b16 %v668
        %v2382 = vunpack.c.h.b16 %v668
        %v2383 = vunpack.c.l.b16 %v669
        %v2384 = vunpack.c.h.b16 %v669
        %v2385 = vunpack.c.l.b16 %v670
        %v2386 = vunpack.c.h.b16 %v670
        %v2387 = vunpack.c.l.b16 %v671
        %v2388 = vunpack.c.h.b16 %v671
        %v2389 = vunpack.c.l.b16 %v672
        %v2390 = vunpack.c.h.b16 %v672
        %v2391 = vunpack.c.l.b16 %v673
        %v2392 = vunpack.c.h.b16 %v673
        %v2393 = vunpack.c.l.b16 %v674
        %v2394 = vunpack.c.h.b16 %v674
        %v2395 = vunpack.c.l.b16 %v675
        %v2396 = vunpack.c.h.b16 %v675
        %v2397 = vunpack.c.l.b16 %v676
        %v2398 = vunpack.c.h.b16 %v676
        %v2399 = vunpack.c.l.b16 %v677
        %v2400 = vunpack.c.h.b16 %v677
        %v2401 = vunpack.c.l.b16 %v678
        %v2402 = vunpack.c.h.b16 %v678
        %v2403 = vunpack.c.l.b16 %v679
        %v2404 = vunpack.c.h.b16 %v679
        %v2405 = vunpack.c.l.b16 %v680
        %v2406 = vunpack.c.h.b16 %v680
        %v2407 = vunpack.c.l.b16 %v681
        %v2408 = vunpack.c.h.b16 %v681
        %v2409 = vunpack.c.l.b16 %v682
        %v2410 = vunpack.c.h.b16 %v682
        %v2411 = vunpack.c.l.b16 %v683
        %v2412 = vunpack.c.h.b16 %v683
        %v2413 = vunpack.c.l.b16 %v684
        %v2414 = vunpack.c.h.b16 %v684
        %v2415 = vunpack.c.l.b16 %v685
        %v2416 = vunpack.c.h.b16 %v685
        %v2417 = vunpack.c.l.b16 %v686
        %v2418 = vunpack.c.h.b16 %v686
        %v2419 = vunpack.c.l.b16 %v687
        %v2420 = vunpack.c.h.b16 %v687
        %v2421 = vunpack.c.l.b16 %v688
        %v2422 = vunpack.c.h.b16 %v688
        %v2423 = vunpack.c.l.b16 %v689
        %v2424 = vunpack.c.h.b16 %v689
        %v2425 = vunpack.c.l.b16 %v690
        %v2426 = vunpack.c.h.b16 %v690
        %v2427 = vunpack.c.l.b16 %v691
        %v2428 = vunpack.c.h.b16 %v691
        %v2429 = vunpack.c.l.b16 %v692
        %v2430 = vunpack.c.h.b16 %v692
        %v2431 = vunpack.c.l.b16 %v693
        %v2432 = vunpack.c.h.b16 %v693
        %v2433 = vunpack.c.l.b16 %v694
        %v2434 = vunpack.c.h.b16 %v694
        %v2435 = vunpack.c.l.b16 %v695
        %v2436 = vunpack.c.h.b16 %v695
        %v2437 = vunpack.c.l.b16 %v696
        %v2438 = vunpack.c.h.b16 %v696
        %v2439 = vunpack.c.l.b16 %v697
        %v2440 = vunpack.c.h.b16 %v697
        %v2441 = vunpack.c.l.b16 %v698
        %v2442 = vunpack.c.h.b16 %v698
        %v2443 = vunpack.c.l.b16 %v699
        %v2444 = vunpack.c.h.b16 %v699
        %v2445 = vunpack.c.l.b16 %v700
        %v2446 = vunpack.c.h.b16 %v700
        %v2447 = vunpack.c.l.b16 %v701
        %v2448 = vunpack.c.h.b16 %v701
        %v2449 = vunpack.c.l.b16 %v702
        %v2450 = vunpack.c.h.b16 %v702
        %v2451 = vunpack.c.l.b16 %v703
        %v2452 = vunpack.c.h.b16 %v703
        %v2453 = vunpack.c.l.b16 %v704
        %v2454 = vunpack.c.h.b16 %v704
        %v2455 = vunpack.c.l.b16 %v705
        %v2456 = vunpack.c.h.b16 %v705
        %v2457 = vunpack.c.l.b16 %v706
        %v2458 = vunpack.c.h.b16 %v706
        %v2459 = vunpack.c.l.b16 %v707
        %v2460 = vunpack.c.h.b16 %v707
        %v2461 = vunpack.c.l.b16 %v708
        %v2462 = vunpack.c.h.b16 %v708
        %v2463 = vunpack.c.l.b16 %v709
        %v2464 = vunpack.c.h.b16 %v709
        %v2465 = vunpack.c.l.b16 %v710
        %v2466 = vunpack.c.h.b16 %v710
        %v2467 = vunpack.c.l.b16 %v711
        %v2468 = vunpack.c.h.b16 %v711
        %v2469 = vunpack.c.l.b16 %v712
        %v2470 = vunpack.c.h.b16 %v712
        %v2471 = vunpack.c.l.b16 %v713
        %v2472 = vunpack.c.h.b16 %v713
        %v2473 = vunpack.c.l.b16 %v714
        %v2474 = vunpack.c.h.b16 %v714
        %v2475 = vunpack.c.l.b16 %v715
        %v2476 = vunpack.c.h.b16 %v715
        %v2477 = vunpack.c.l.b16 %v716
        %v2478 = vunpack.c.h.b16 %v716
        %v2479 = vunpack.c.l.b16 %v717
        %v2480 = vunpack.c.h.b16 %v717
        %v2481 = vunpack.c.l.b16 %v718
        %v2482 = vunpack.c.h.b16 %v718
        %v2483 = vunpack.c.l.b16 %v719
        %v2484 = vunpack.c.h.b16 %v719
        %v2485 = vunpack.c.l.b16 %v720
        %v2486 = vunpack.c.h.b16 %v720
        %v2487 = vunpack.c.l.b16 %v721
        %v2488 = vunpack.c.h.b16 %v721
        %v2489 = vunpack.c.l.b16 %v722
        %v2490 = vunpack.c.h.b16 %v722
        %v2491 = vunpack.c.l.b16 %v723
        %v2492 = vunpack.c.h.b16 %v723
        %v2493 = vunpack.c.l.b16 %v724
        %v2494 = vunpack.c.h.b16 %v724
        %v2495 = vunpack.c.l.b16 %v725
        %v2496 = vunpack.c.h.b16 %v725
        %v2497 = vunpack.c.l.b16 %v726
        %v2498 = vunpack.c.h.b16 %v726
        %v2499 = vunpack.c.l.b16 %v727
        %v2500 = vunpack.c.h.b16 %v727
        %v2501 = vunpack.c.l.b16 %v728
        %v2502 = vunpack.c.h.b16 %v728
        %v2503 = vunpack.c.l.b16 %v729
        %v2504 = vunpack.c.h.b16 %v729
        %v2505 = vunpack.c.l.b16 %v730
        %v2506 = vunpack.c.h.b16 %v730
        %v2507 = vunpack.c.l.b16 %v731
        %v2508 = vunpack.c.h.b16 %v731
        %v2509 = vunpack.c.l.b16 %v732
        %v2510 = vunpack.c.h.b16 %v732
        %v2511 = vunpack.c.l.b16 %v733
        %v2512 = vunpack.c.h.b16 %v733
        %v2513 = vunpack.c.l.b16 %v734
        %v2514 = vunpack.c.h.b16 %v734
        %v2515 = vunpack.c.l.b16 %v735
        %v2516 = vunpack.c.h.b16 %v735
        %v2517 = vunpack.c.l.b16 %v736
        %v2518 = vunpack.c.h.b16 %v736
        %v2519 = vunpack.c.l.b16 %v737
        %v2520 = vunpack.c.h.b16 %v737
        %v2521 = vunpack.c.l.b16 %v738
        %v2522 = vunpack.c.h.b16 %v738
        %v2523 = vunpack.c.l.b16 %v739
        %v2524 = vunpack.c.h.b16 %v739
        %v2525 = vunpack.c.l.b16 %v740
        %v2526 = vunpack.c.h.b16 %v740
        %v2527 = vunpack.c.l.b16 %v741
        %v2528 = vunpack.c.h.b16 %v741
        %v2529 = vunpack.c.l.b16 %v742
        %v2530 = vunpack.c.h.b16 %v742
        %v2531 = vunpack.c.l.b16 %v743
        %v2532 = vunpack.c.h.b16 %v743
        %v2533 = vunpack.c.l.b16 %v744
        %v2534 = vunpack.c.h.b16 %v744
        %v2535 = vunpack.c.l.b16 %v745
        %v2536 = vunpack.c.h.b16 %v745
        %v2537 = vunpack.c.l.b16 %v746
        %v2538 = vunpack.c.h.b16 %v746
        %v2539 = vunpack.c.l.b16 %v747
        %v2540 = vunpack.c.h.b16 %v747
        %v2541 = vunpack.c.l.b16 %v748
        %v2542 = vunpack.c.h.b16 %v748
        %v2543 = vunpack.c.l.b16 %v749
        %v2544 = vunpack.c.h.b16 %v749
        %v2545 = vunpack.c.l.b16 %v750
        %v2546 = vunpack.c.h.b16 %v750
        %v2547 = vunpack.c.l.b16 %v751
        %v2548 = vunpack.c.h.b16 %v751
        %v2549 = vunpack.c.l.b16 %v752
        %v2550 = vunpack.c.h.b16 %v752
        %v2551 = vunpack.c.l.b16 %v753
        %v2552 = vunpack.c.h.b16 %v753
        %v2553 = vunpack.c.l.b16 %v754
        %v2554 = vunpack.c.h.b16 %v754
        %v2555 = vunpack.c.l.b16 %v755
        %v2556 = vunpack.c.h.b16 %v755
        %v2557 = vunpack.c.l.b16 %v756
        %v2558 = vunpack.c.h.b16 %v756
        %v2559 = vunpack.c.l.b16 %v757
        %v2560 = vunpack.c.h.b16 %v757
        %v2561 = vunpack.c.l.b16 %v758
        %v2562 = vunpack.c.h.b16 %v758
        %v2563 = vunpack.c.l.b16 %v759
        %v2564 = vunpack.c.h.b16 %v759
        %v2565 = vunpack.c.l.b16 %v760
        %v2566 = vunpack.c.h.b16 %v760
        %v2567 = vunpack.c.l.b16 %v761
        %v2568 = vunpack.c.h.b16 %v761
        %v2569 = vunpack.c.l.b16 %v762
        %v2570 = vunpack.c.h.b16 %v762
        %v2571 = vunpack.c.l.b16 %v763
        %v2572 = vunpack.c.h.b16 %v763
        %v2573 = vunpack.c.l.b16 %v764
        %v2574 = vunpack.c.h.b16 %v764
        %v2575 = vunpack.c.l.b16 %v765
        %v2576 = vunpack.c.h.b16 %v765
        %v2577 = vunpack.c.l.b16 %v766
        %v2578 = vunpack.c.h.b16 %v766
        %v2579 = vunpack.c.l.b16 %v767
        %v2580 = vunpack.c.h.b16 %v767
        %v2581 = vunpack.c.l.b16 %v768
        %v2582 = vunpack.c.h.b16 %v768
        %v2583 = vunpack.c.l.b16 %v769
        %v2584 = vunpack.c.h.b16 %v769
        %v2585 = vunpack.c.l.b16 %v770
        %v2586 = vunpack.c.h.b16 %v770
        %v2587 = vunpack.c.l.b16 %v771
        %v2588 = vunpack.c.h.b16 %v771
        %v2589 = vunpack.c.l.b16 %v772
        %v2590 = vunpack.c.h.b16 %v772
        %v2591 = vunpack.c.l.b16 %v773
        %v2592 = vunpack.c.h.b16 %v773
        %v2593 = vunpack.c.l.b16 %v774
        %v2594 = vunpack.c.h.b16 %v774
        %v2595 = vunpack.c.l.b16 %v775
        %v2596 = vunpack.c.h.b16 %v775
        %v2597 = vunpack.c.l.b16 %v776
        %v2598 = vunpack.c.h.b16 %v776
        %v2599 = vunpack.c.l.b16 %v777
        %v2600 = vunpack.c.h.b16 %v777
        %v2601 = vunpack.c.l.b16 %v778
        %v2602 = vunpack.c.h.b16 %v778
        %v2603 = vunpack.c.l.b16 %v779
        %v2604 = vunpack.c.h.b16 %v779
        %v2605 = vunpack.c.l.b16 %v780
        %v2606 = vunpack.c.h.b16 %v780
        %v2607 = vunpack.c.l.b16 %v781
        %v2608 = vunpack.c.h.b16 %v781
        %v2609 = vunpack.c.l.b16 %v782
        %v2610 = vunpack.c.h.b16 %v782
        %v2611 = vunpack.c.l.b16 %v783
        %v2612 = vunpack.c.h.b16 %v783
        %v2613 = vunpack.c.l.b16 %v784
        %v2614 = vunpack.c.h.b16 %v784
        %v2615 = vunpack.c.l.b16 %v785
        %v2616 = vunpack.c.h.b16 %v785
        %v2617 = vunpack.c.l.b16 %v786
        %v2618 = vunpack.c.h.b16 %v786
        %v2619 = vunpack.c.l.b16 %v787
        %v2620 = vunpack.c.h.b16 %v787
        %v2621 = vunpack.c.l.b16 %v788
        %v2622 = vunpack.c.h.b16 %v788
        %v2623 = vunpack.c.l.b16 %v789
        %v2624 = vunpack.c.h.b16 %v789
        %v2625 = vunpack.c.l.b16 %v790
        %v2626 = vunpack.c.h.b16 %v790
        %v2627 = vunpack.c.l.b16 %v791
        %v2628 = vunpack.c.h.b16 %v791
        %v2629 = vunpack.c.l.b16 %v792
        %v2630 = vunpack.c.h.b16 %v792
        %v2631 = vunpack.c.l.b16 %v793
        %v2632 = vunpack.c.h.b16 %v793
        %v2633 = vunpack.c.l.b16 %v794
        %v2634 = vunpack.c.h.b16 %v794
        %v2635 = vunpack.c.l.b16 %v795
        %v2636 = vunpack.c.h.b16 %v795
        %v2637 = vunpack.c.l.b16 %v796
        %v2638 = vunpack.c.h.b16 %v796
        %v2639 = vunpack.c.l.b16 %v797
        %v2640 = vunpack.c.h.b16 %v797
        %v2641 = vunpack.c.l.b16 %v798
        %v2642 = vunpack.c.h.b16 %v798
        %v2643 = vunpack.c.l.b16 %v799
        %v2644 = vunpack.c.h.b16 %v799
        %v2645 = vunpack.c.l.b16 %v800
        %v2646 = vunpack.c.h.b16 %v800
        %v2647 = vunpack.c.l.b16 %v801
        %v2648 = vunpack.c.h.b16 %v801
        %v2649 = vunpack.c.l.b16 %v802
        %v2650 = vunpack.c.h.b16 %v802
        %v2651 = vunpack.c.l.b16 %v803
        %v2652 = vunpack.c.h.b16 %v803
        %v2653 = vunpack.c.l.b16 %v804
        %v2654 = vunpack.c.h.b16 %v804
        %v2655 = vunpack.c.l.b16 %v805
        %v2656 = vunpack.c.h.b16 %v805
        %v2657 = vunpack.c.l.b16 %v806
        %v2658 = vunpack.c.h.b16 %v806
        %v2659 = vunpack.c.l.b16 %v807
        %v2660 = vunpack.c.h.b16 %v807
        %v2661 = vunpack.c.l.b16 %v808
        %v2662 = vunpack.c.h.b16 %v808
        %v2663 = vunpack.c.l.b16 %v809
        %v2664 = vunpack.c.h.b16 %v809
        %v2665 = vunpack.c.l.b16 %v810
        %v2666 = vunpack.c.h.b16 %v810
        %v2667 = vunpack.c.l.b16 %v811
        %v2668 = vunpack.c.h.b16 %v811
        %v2669 = vunpack.c.l.b16 %v812
        %v2670 = vunpack.c.h.b16 %v812
        %v2671 = vunpack.c.l.b16 %v813
        %v2672 = vunpack.c.h.b16 %v813
        %v2673 = vunpack.c.l.b16 %v814
        %v2674 = vunpack.c.h.b16 %v814
        %v2675 = vunpack.c.l.b16 %v815
        %v2676 = vunpack.c.h.b16 %v815
        %v2677 = vunpack.c.l.b16 %v816
        %v2678 = vunpack.c.h.b16 %v816
        %v2679 = vunpack.c.l.b16 %v817
        %v2680 = vunpack.c.h.b16 %v817
        %v2681 = vunpack.c.l.b16 %v818
        %v2682 = vunpack.c.h.b16 %v818
        %v2683 = vunpack.c.l.b16 %v819
        %v2684 = vunpack.c.h.b16 %v819
        %v2685 = vunpack.c.l.b16 %v820
        %v2686 = vunpack.c.h.b16 %v820
        %v2687 = vunpack.c.l.b16 %v821
        %v2688 = vunpack.c.h.b16 %v821
        %v2689 = vunpack.c.l.b16 %v822
        %v2690 = vunpack.c.h.b16 %v822
        %v2691 = vunpack.c.l.b16 %v823
        %v2692 = vunpack.c.h.b16 %v823
        %v2693 = vunpack.c.l.b16 %v824
        %v2694 = vunpack.c.h.b16 %v824
        %v2695 = vunpack.c.l.b16 %v825
        %v2696 = vunpack.c.h.b16 %v825
        %v2697 = vunpack.c.l.b16 %v826
        %v2698 = vunpack.c.h.b16 %v826
        %v2699 = vunpack.c.l.b16 %v827
        %v2700 = vunpack.c.h.b16 %v827
        %v2701 = vunpack.c.l.b16 %v828
        %v2702 = vunpack.c.h.b16 %v828
        %v2703 = vunpack.c.l.b16 %v829
        %v2704 = vunpack.c.h.b16 %v829
        %v2705 = vunpack.c.l.b16 %v830
        %v2706 = vunpack.c.h.b16 %v830
        %v2707 = vunpack.c.l.b16 %v831
        %v2708 = vunpack.c.h.b16 %v831
        %v2709 = vunpack.c.l.b16 %v832
        %v2710 = vunpack.c.h.b16 %v832
        %v2711 = vunpack.c.l.b16 %v833
        %v2712 = vunpack.c.h.b16 %v833
        %v2713 = vunpack.c.l.b16 %v834
        %v2714 = vunpack.c.h.b16 %v834
        %v2715 = vunpack.c.l.b16 %v835
        %v2716 = vunpack.c.h.b16 %v835
        %v2717 = vunpack.c.l.b16 %v836
        %v2718 = vunpack.c.h.b16 %v836
        %v2719 = vunpack.c.l.b16 %v837
        %v2720 = vunpack.c.h.b16 %v837
        %v2721 = vunpack.c.l.b16 %v838
        %v2722 = vunpack.c.h.b16 %v838
        %v2723 = vunpack.c.l.b16 %v839
        %v2724 = vunpack.c.h.b16 %v839
        %v2725 = vunpack.c.l.b16 %v840
        %v2726 = vunpack.c.h.b16 %v840
        %v2727 = vunpack.c.l.b16 %v841
        %v2728 = vunpack.c.h.b16 %v841
        %v2729 = vunpack.c.l.b16 %v842
        %v2730 = vunpack.c.h.b16 %v842
        %v2731 = vunpack.c.l.b16 %v843
        %v2732 = vunpack.c.h.b16 %v843
        %v2733 = vunpack.c.l.b16 %v844
        %v2734 = vunpack.c.h.b16 %v844
        %v2735 = vunpack.c.l.b16 %v845
        %v2736 = vunpack.c.h.b16 %v845
        %v2737 = vunpack.c.l.b16 %v846
        %v2738 = vunpack.c.h.b16 %v846
        %v2739 = vunpack.c.l.b16 %v847
        %v2740 = vunpack.c.h.b16 %v847
        %v2741 = vunpack.c.l.b16 %v848
        %v2742 = vunpack.c.h.b16 %v848
        %v2743 = vunpack.c.l.b16 %v849
        %v2744 = vunpack.c.h.b16 %v849
        %v2745 = vunpack.c.l.b16 %v850
        %v2746 = vunpack.c.h.b16 %v850
        %v2747 = vunpack.c.l.b16 %v851
        %v2748 = vunpack.c.h.b16 %v851
        %v2749 = vunpack.c.l.b16 %v852
        %v2750 = vunpack.c.h.b16 %v852
        %v2751 = vunpack.c.l.b16 %v853
        %v2752 = vunpack.c.h.b16 %v853
        %v2753 = vunpack.c.l.b16 %v854
        %v2754 = vunpack.c.h.b16 %v854
        %v2755 = vunpack.c.l.b16 %v855
        %v2756 = vunpack.c.h.b16 %v855
        %v2757 = vunpack.c.l.b16 %v856
        %v2758 = vunpack.c.h.b16 %v856
        %v2759 = vunpack.c.l.b16 %v857
        %v2760 = vunpack.c.h.b16 %v857
        %v2761 = vunpack.c.l.b16 %v858
        %v2762 = vunpack.c.h.b16 %v858
        %v2763 = vunpack.c.l.b16 %v859
        %v2764 = vunpack.c.h.b16 %v859
        %v2765 = vunpack.c.l.b16 %v860
        %v2766 = vunpack.c.h.b16 %v860
        %v2767 = vunpack.c.l.b16 %v861
        %v2768 = vunpack.c.h.b16 %v861
        %v2769 = vunpack.c.l.b16 %v862
        %v2770 = vunpack.c.h.b16 %v862
        %v2771 = vunpack.c.l.b16 %v863
        %v2772 = vunpack.c.h.b16 %v863
        %v2773 = vunpack.c.l.b16 %v864
        %v2774 = vunpack.c.h.b16 %v864
        %v2775 = vunpack.c.l.b16 %v865
        %v2776 = vunpack.c.h.b16 %v865
        %v2777 = vunpack.c.l.b16 %v866
        %v2778 = vunpack.c.h.b16 %v866
        %v2779 = vunpack.c.l.b16 %v867
        %v2780 = vunpack.c.h.b16 %v867
        %v2781 = vunpack.c.l.b16 %v868
        %v2782 = vunpack.c.h.b16 %v868
        %v2783 = vunpack.c.l.b16 %v869
        %v2784 = vunpack.c.h.b16 %v869
        %v2785 = vunpack.c.l.b16 %v870
        %v2786 = vunpack.c.h.b16 %v870
        %v2787 = vunpack.c.l.b16 %v871
        %v2788 = vunpack.c.h.b16 %v871
        %v2789 = vunpack.c.l.b16 %v872
        %v2790 = vunpack.c.h.b16 %v872
        %v2791 = vunpack.c.l.b16 %v873
        %v2792 = vunpack.c.h.b16 %v873
        %v2793 = vunpack.c.l.b16 %v874
        %v2794 = vunpack.c.h.b16 %v874
        %v2795 = vunpack.c.l.b16 %v875
        %v2796 = vunpack.c.h.b16 %v875
        %v2797 = vunpack.c.l.b16 %v876
        %v2798 = vunpack.c.h.b16 %v876
        %v2799 = vunpack.c.l.b16 %v877
        %v2800 = vunpack.c.h.b16 %v877
        %v2801 = vunpack.c.l.b16 %v878
        %v2802 = vunpack.c.h.b16 %v878
        %v2803 = vunpack.c.l.b16 %v879
        %v2804 = vunpack.c.h.b16 %v879
        %v2805 = vunpack.c.l.b16 %v880
        %v2806 = vunpack.c.h.b16 %v880
        %v2807 = vunpack.c.l.b16 %v881
        %v2808 = vunpack.c.h.b16 %v881
        %v2809 = vunpack.c.l.b16 %v882
        %v2810 = vunpack.c.h.b16 %v882
        %v2811 = vunpack.c.l.b16 %v883
        %v2812 = vunpack.c.h.b16 %v883
        %v2813 = vunpack.c.l.b16 %v884
        %v2814 = vunpack.c.h.b16 %v884
        %v2815 = vunpack.c.l.b16 %v885
        %v2816 = vunpack.c.h.b16 %v885
        %v2817 = vunpack.c.l.b16 %v886
        %v2818 = vunpack.c.h.b16 %v886
        %v2819 = vunpack.c.l.b16 %v887
        %v2820 = vunpack.c.h.b16 %v887
        %v2821 = vunpack.c.l.b16 %v888
        %v2822 = vunpack.c.h.b16 %v888
        %v2823 = vunpack.c.l.b16 %v889
        %v2824 = vunpack.c.h.b16 %v889
        %v2825 = vunpack.c.l.b16 %v890
        %v2826 = vunpack.c.h.b16 %v890
        %v2827 = vunpack.c.l.b16 %v891
        %v2828 = vunpack.c.h.b16 %v891
        %v2829 = vunpack.c.l.b16 %v892
        %v2830 = vunpack.c.h.b16 %v892
        %v2831 = vunpack.c.l.b16 %v893
        %v2832 = vunpack.c.h.b16 %v893
        %v2833 = vunpack.c.l.b16 %v894
        %v2834 = vunpack.c.h.b16 %v894
        %v2835 = vunpack.c.l.b16 %v895
        %v2836 = vunpack.c.h.b16 %v895
        %v2837 = vunpack.c.l.b16 %v896
        %v2838 = vunpack.c.h.b16 %v896
        %v2839 = vunpack.c.l.b16 %v897
        %v2840 = vunpack.c.h.b16 %v897
        %v2841 = vunpack.c.l.b16 %v898
        %v2842 = vunpack.c.h.b16 %v898
        %v2843 = vunpack.c.l.b16 %v899
        %v2844 = vunpack.c.h.b16 %v899
        %v2845 = vunpack.c.l.b16 %v900
        %v2846 = vunpack.c.h.b16 %v900
        %v2847 = vunpack.c.l.b16 %v901
        %v2848 = vunpack.c.h.b16 %v901
        %v2849 = vunpack.c.l.b16 %v902
        %v2850 = vunpack.c.h.b16 %v902
        %v2851 = vunpack.c.l.b16 %v903
        %v2852 = vunpack.c.h.b16 %v903
        %v2853 = vunpack.c.l.b16 %v904
        %v2854 = vunpack.c.h.b16 %v904
        %v2855 = vunpack.c.l.b16 %v905
        %v2856 = vunpack.c.h.b16 %v905
        %v2857 = vunpack.c.l.b16 %v906
        %v2858 = vunpack.c.h.b16 %v906
        %v2859 = vunpack.c.l.b16 %v907
        %v2860 = vunpack.c.h.b16 %v907
        %v2861 = vunpack.c.l.b16 %v908
        %v2862 = vunpack.c.h.b16 %v908
        %v2863 = vunpack.c.l.b16 %v909
        %v2864 = vunpack.c.h.b16 %v909
        %v2865 = vunpack.c.l.b16 %v910
        %v2866 = vunpack.c.h.b16 %v910
        %v2867 = vunpack.c.l.b16 %v911
        %v2868 = vunpack.c.h.b16 %v911
        %v2869 = vunpack.c.l.b16 %v912
        %v2870 = vunpack.c.h.b16 %v912
        %v2871 = vunpack.c.l.b16 %v913
        %v2872 = vunpack.c.h.b16 %v913
        %v2873 = vunpack.c.l.b16 %v914
        %v2874 = vunpack.c.h.b16 %v914
        %v2875 = vunpack.c.l.b16 %v915
        %v2876 = vunpack.c.h.b16 %v915
        %v2877 = vunpack.c.l.b16 %v916
        %v2878 = vunpack.c.h.b16 %v916
        %v2879 = vunpack.c.l.b16 %v917
        %v2880 = vunpack.c.h.b16 %v917
        %v2881 = vunpack.c.l.b16 %v918
        %v2882 = vunpack.c.h.b16 %v918
        %v2883 = vunpack.c.l.b16 %v919
        %v2884 = vunpack.c.h.b16 %v919
        %v2885 = vpack.c.b16 %v1621, %v1605
        %v2886 = vpack.c.b16 %v1622, %v1606
        %v2887 = vpack.c.b16 %v1623, %v1607
        %v2888 = vpack.c.b16 %v1624, %v1608
        %v2889 = vpack.c.b16 %v1625, %v1609
        %v2890 = vpack.c.b16 %v1626, %v1610
        %v2891 = vpack.c.b16 %v1627, %v1611
        %v2892 = vpack.c.b16 %v1628, %v1612
        %v2893 = vpack.c.b16 %v1629, %v1613
        %v2894 = vpack.c.b16 %v1630, %v1614
        %v2895 = vpack.c.b16 %v1631, %v1615
        %v2896 = vpack.c.b16 %v1632, %v1616
        %v2897 = vpack.c.b16 %v1633, %v1617
        %v2898 = vpack.c.b16 %v1634, %v1618
        %v2899 = vpack.c.b16 %v1635, %v1619
        %v2900 = vpack.c.b16 %v1636, %v1620
        %v2901 = vpack.c.b16 %v1653, %v1637
        %v2902 = vpack.c.b16 %v1654, %v1638
        %v2903 = vpack.c.b16 %v1655, %v1639
        %v2904 = vpack.c.b16 %v1656, %v1640
        %v2905 = vpack.c.b16 %v1657, %v1641
        %v2906 = vpack.c.b16 %v1658, %v1642
        %v2907 = vpack.c.b16 %v1659, %v1643
        %v2908 = vpack.c.b16 %v1660, %v1644
        %v2909 = vpack.c.b16 %v1661, %v1645
        %v2910 = vpack.c.b16 %v1662, %v1646
        %v2911 = vpack.c.b16 %v1663, %v1647
        %v2912 = vpack.c.b16 %v1664, %v1648
        %v2913 = vpack.c.b16 %v1665, %v1649
        %v2914 = vpack.c.b16 %v1666, %v1650
        %v2915 = vpack.c.b16 %v1667, %v1651
        %v2916 = vpack.c.b16 %v1668, %v1652
        %v2917 = vpack.c.b16 %v1685, %v1669
        %v2918 = vpack.c.b16 %v1686, %v1670
        %v2919 = vpack.c.b16 %v1687, %v1671
        %v2920 = vpack.c.b16 %v1688, %v1672
        %v2921 = vpack.c.b16 %v1689, %v1673
        %v2922 = vpack.c.b16 %v1690, %v1674
        %v2923 = vpack.c.b16 %v1691, %v1675
        %v2924 = vpack.c.b16 %v1692, %v1676
        %v2925 = vpack.c.b16 %v1693, %v1677
        %v2926 = vpack.c.b16 %v1694, %v1678
        %v2927 = vpack.c.b16 %v1695, %v1679
        %v2928 = vpack.c.b16 %v1696, %v1680
        %v2929 = vpack.c.b16 %v1697, %v1681
        %v2930 = vpack.c.b16 %v1698, %v1682
        %v2931 = vpack.c.b16 %v1699, %v1683
        %v2932 = vpack.c.b16 %v1700, %v1684
        %v2933 = vpack.c.b16 %v1717, %v1701
        %v2934 = vpack.c.b16 %v1718, %v1702
        %v2935 = vpack.c.b16 %v1719, %v1703
        %v2936 = vpack.c.b16 %v1720, %v1704
        %v2937 = vpack.c.b16 %v1721, %v1705
        %v2938 = vpack.c.b16 %v1722, %v1706
        %v2939 = vpack.c.b16 %v1723, %v1707
        %v2940 = vpack.c.b16 %v1724, %v1708
        %v2941 = vpack.c.b16 %v1725, %v1709
        %v2942 = vpack.c.b16 %v1726, %v1710
        %v2943 = vpack.c.b16 %v1727, %v1711
        %v2944 = vpack.c.b16 %v1728, %v1712
        %v2945 = vpack.c.b16 %v1729, %v1713
        %v2946 = vpack.c.b16 %v1730, %v1714
        %v2947 = vpack.c.b16 %v1731, %v1715
        %v2948 = vpack.c.b16 %v1732, %v1716
        %v2949 = vpack.c.b16 %v1749, %v1733
        %v2950 = vpack.c.b16 %v1750, %v1734
        %v2951 = vpack.c.b16 %v1751, %v1735
        %v2952 = vpack.c.b16 %v1752, %v1736
        %v2953 = vpack.c.b16 %v1753, %v1737
        %v2954 = vpack.c.b16 %v1754, %v1738
        %v2955 = vpack.c.b16 %v1755, %v1739
        %v2956 = vpack.c.b16 %v1756, %v1740
        %v2957 = vpack.c.b16 %v1757, %v1741
        %v2958 = vpack.c.b16 %v1758, %v1742
        %v2959 = vpack.c.b16 %v1759, %v1743
        %v2960 = vpack.c.b16 %v1760, %v1744
        %v2961 = vpack.c.b16 %v1761, %v1745
        %v2962 = vpack.c.b16 %v1762, %v1746
        %v2963 = vpack.c.b16 %v1763, %v1747
        %v2964 = vpack.c.b16 %v1764, %v1748
        %v2965 = vpack.c.b16 %v1781, %v1765
        %v2966 = vpack.c.b16 %v1782, %v1766
        %v2967 = vpack.c.b16 %v1783, %v1767
        %v2968 = vpack.c.b16 %v1784, %v1768
        %v2969 = vpack.c.b16 %v1785, %v1769
        %v2970 = vpack.c.b16 %v1786, %v1770
        %v2971 = vpack.c.b16 %v1787, %v1771
        %v2972 = vpack.c.b16 %v1788, %v1772
        %v2973 = vpack.c.b16 %v1789, %v1773
        %v2974 = vpack.c.b16 %v1790, %v1774
        %v2975 = vpack.c.b16 %v1791, %v1775
        %v2976 = vpack.c.b16 %v1792, %v1776
        %v2977 = vpack.c.b16 %v1793, %v1777
        %v2978 = vpack.c.b16 %v1794, %v1778
        %v2979 = vpack.c.b16 %v1795, %v1779
        %v2980 = vpack.c.b16 %v1796, %v1780
        %v2981 = vpack.c.b16 %v1813, %v1797
        %v2982 = vpack.c.b16 %v1814, %v1798
        %v2983 = vpack.c.b16 %v1815, %v1799
        %v2984 = vpack.c.b16 %v1816, %v1800
        %v2985 = vpack.c.b16 %v1817, %v1801
        %v2986 = vpack.c.b16 %v1818, %v1802
        %v2987 = vpack.c.b16 %v1819, %v1803
        %v2988 = vpack.c.b16 %v1820, %v1804
        %v2989 = vpack.c.b16 %v1821, %v1805
        %v2990 = vpack.c.b16 %v1822, %v1806
        %v2991 = vpack.c.b16 %v1823, %v1807
        %v2992 = vpack.c.b16 %v1824, %v1808
        %v2993 = vpack.c.b16 %v1825, %v1809
        %v2994 = vpack.c.b16 %v1826, %v1810
        %v2995 = vpack.c.b16 %v1827, %v1811
        %v2996 = vpack.c.b16 %v1828, %v1812
        %v2997 = vpack.c.b16 %v1845, %v1829
        %v2998 = vpack.c.b16 %v1846, %v1830
        %v2999 = vpack.c.b16 %v1847, %v1831
        %v3000 = vpack.c.b16 %v1848, %v1832
        %v3001 = vpack.c.b16 %v1849, %v1833
        %v3002 = vpack.c.b16 %v1850, %v1834
        %v3003 = vpack.c.b16 %v1851, %v1835
        %v3004 = vpack.c.b16 %v1852, %v1836
        %v3005 = vpack.c.b16 %v1853, %v1837
        %v3006 = vpack.c.b16 %v1854, %v1838
        %v3007 = vpack.c.b16 %v1855, %v1839
        %v3008 = vpack.c.b16 %v1856, %v1840
        %v3009 = vpack.c.b16 %v1857, %v1841
        %v3010 = vpack.c.b16 %v1858, %v1842
        %v3011 = vpack.c.b16 %v1859, %v1843
        %v3012 = vpack.c.b16 %v1860, %v1844
        %v3013 = vpack.c.b16 %v1877, %v1861
        %v3014 = vpack.c.b16 %v1878, %v1862
        %v3015 = vpack.c.b16 %v1879, %v1863
        %v3016 = vpack.c.b16 %v1880, %v1864
        %v3017 = vpack.c.b16 %v1881, %v1865
        %v3018 = vpack.c.b16 %v1882, %v1866
        %v3019 = vpack.c.b16 %v1883, %v1867
        %v3020 = vpack.c.b16 %v1884, %v1868
        %v3021 = vpack.c.b16 %v1885, %v1869
        %v3022 = vpack.c.b16 %v1886, %v1870
        %v3023 = vpack.c.b16 %v1887, %v1871
        %v3024 = vpack.c.b16 %v1888, %v1872
        %v3025 = vpack.c.b16 %v1889, %v1873
        %v3026 = vpack.c.b16 %v1890, %v1874
        %v3027 = vpack.c.b16 %v1891, %v1875
        %v3028 = vpack.c.b16 %v1892, %v1876
        %v3029 = vpack.c.b16 %v1909, %v1893
        %v3030 = vpack.c.b16 %v1910, %v1894
        %v3031 = vpack.c.b16 %v1911, %v1895
        %v3032 = vpack.c.b16 %v1912, %v1896
        %v3033 = vpack.c.b16 %v1913, %v1897
        %v3034 = vpack.c.b16 %v1914, %v1898
        %v3035 = vpack.c.b16 %v1915, %v1899
        %v3036 = vpack.c.b16 %v1916, %v1900
        %v3037 = vpack.c.b16 %v1917, %v1901
        %v3038 = vpack.c.b16 %v1918, %v1902
        %v3039 = vpack.c.b16 %v1919, %v1903
        %v3040 = vpack.c.b16 %v1920, %v1904
        %v3041 = vpack.c.b16 %v1921, %v1905
        %v3042 = vpack.c.b16 %v1922, %v1906
        %v3043 = vpack.c.b16 %v1923, %v1907
        %v3044 = vpack.c.b16 %v1924, %v1908
        %v3045 = vpack.c.b16 %v1941, %v1925
        %v3046 = vpack.c.b16 %v1942, %v1926
        %v3047 = vpack.c.b16 %v1943, %v1927
        %v3048 = vpack.c.b16 %v1944, %v1928
        %v3049 = vpack.c.b16 %v1945, %v1929
        %v3050 = vpack.c.b16 %v1946, %v1930
        %v3051 = vpack.c.b16 %v1947, %v1931
        %v3052 = vpack.c.b16 %v1948, %v1932
        %v3053 = vpack.c.b16 %v1949, %v1933
        %v3054 = vpack.c.b16 %v1950, %v1934
        %v3055 = vpack.c.b16 %v1951, %v1935
        %v3056 = vpack.c.b16 %v1952, %v1936
        %v3057 = vpack.c.b16 %v1953, %v1937
        %v3058 = vpack.c.b16 %v1954, %v1938
        %v3059 = vpack.c.b16 %v1955, %v1939
        %v3060 = vpack.c.b16 %v1956, %v1940
        %v3061 = vpack.c.b16 %v1973, %v1957
        %v3062 = vpack.c.b16 %v1974, %v1958
        %v3063 = vpack.c.b16 %v1975, %v1959
        %v3064 = vpack.c.b16 %v1976, %v1960
        %v3065 = vpack.c.b16 %v1977, %v1961
        %v3066 = vpack.c.b16 %v1978, %v1962
        %v3067 = vpack.c.b16 %v1979, %v1963
        %v3068 = vpack.c.b16 %v1980, %v1964
        %v3069 = vpack.c.b16 %v1981, %v1965
        %v3070 = vpack.c.b16 %v1982, %v1966
        %v3071 = vpack.c.b16 %v1983, %v1967
        %v3072 = vpack.c.b16 %v1984, %v1968
        %v3073 = vpack.c.b16 %v1985, %v1969
        %v3074 = vpack.c.b16 %v1986, %v1970
        %v3075 = vpack.c.b16 %v1987, %v1971
        %v3076 = vpack.c.b16 %v1988, %v1972
        %v3077 = vpack.c.b16 %v2005, %v1989
        %v3078 = vpack.c.b16 %v2006, %v1990
        %v3079 = vpack.c.b16 %v2007, %v1991
        %v3080 = vpack.c.b16 %v2008, %v1992
        %v3081 = vpack.c.b16 %v2009, %v1993
        %v3082 = vpack.c.b16 %v2010, %v1994
        %v3083 = vpack.c.b16 %v2011, %v1995
        %v3084 = vpack.c.b16 %v2012, %v1996
        %v3085 = vpack.c.b16 %v2013, %v1997
        %v3086 = vpack.c.b16 %v2014, %v1998
        %v3087 = vpack.c.b16 %v2015, %v1999
        %v3088 = vpack.c.b16 %v2016, %v2000
        %v3089 = vpack.c.b16 %v2017, %v2001
        %v3090 = vpack.c.b16 %v2018, %v2002
        %v3091 = vpack.c.b16 %v2019, %v2003
        %v3092 = vpack.c.b16 %v2020, %v2004
        %v3093 = vpack.c.b16 %v2037, %v2021
        %v3094 = vpack.c.b16 %v2038, %v2022
        %v3095 = vpack.c.b16 %v2039, %v2023
        %v3096 = vpack.c.b16 %v2040, %v2024
        %v3097 = vpack.c.b16 %v2041, %v2025
        %v3098 = vpack.c.b16 %v2042, %v2026
        %v3099 = vpack.c.b16 %v2043, %v2027
        %v3100 = vpack.c.b16 %v2044, %v2028
        %v3101 = vpack.c.b16 %v2045, %v2029
        %v3102 = vpack.c.b16 %v2046, %v2030
        %v3103 = vpack.c.b16 %v2047, %v2031
        %v3104 = vpack.c.b16 %v2048, %v2032
        %v3105 = vpack.c.b16 %v2049, %v2033
        %v3106 = vpack.c.b16 %v2050, %v2034
        %v3107 = vpack.c.b16 %v2051, %v2035
        %v3108 = vpack.c.b16 %v2052, %v2036
        %v3109 = vpack.c.b16 %v2069, %v2053
        %v3110 = vpack.c.b16 %v2070, %v2054
        %v3111 = vpack.c.b16 %v2071, %v2055
        %v3112 = vpack.c.b16 %v2072, %v2056
        %v3113 = vpack.c.b16 %v2073, %v2057
        %v3114 = vpack.c.b16 %v2074, %v2058
        %v3115 = vpack.c.b16 %v2075, %v2059
        %v3116 = vpack.c.b16 %v2076, %v2060
        %v3117 = vpack.c.b16 %v2077, %v2061
        %v3118 = vpack.c.b16 %v2078, %v2062
        %v3119 = vpack.c.b16 %v2079, %v2063
        %v3120 = vpack.c.b16 %v2080, %v2064
        %v3121 = vpack.c.b16 %v2081, %v2065
        %v3122 = vpack.c.b16 %v2082, %v2066
        %v3123 = vpack.c.b16 %v2083, %v2067
        %v3124 = vpack.c.b16 %v2084, %v2068
        %v3125 = vpack.c.b16 %v2101, %v2085
        %v3126 = vpack.c.b16 %v2102, %v2086
        %v3127 = vpack.c.b16 %v2103, %v2087
        %v3128 = vpack.c.b16 %v2104, %v2088
        %v3129 = vpack.c.b16 %v2105, %v2089
        %v3130 = vpack.c.b16 %v2106, %v2090
        %v3131 = vpack.c.b16 %v2107, %v2091
        %v3132 = vpack.c.b16 %v2108, %v2092
        %v3133 = vpack.c.b16 %v2109, %v2093
        %v3134 = vpack.c.b16 %v2110, %v2094
        %v3135 = vpack.c.b16 %v2111, %v2095
        %v3136 = vpack.c.b16 %v2112, %v2096
        %v3137 = vpack.c.b16 %v2113, %v2097
        %v3138 = vpack.c.b16 %v2114, %v2098
        %v3139 = vpack.c.b16 %v2115, %v2099
        %v3140 = vpack.c.b16 %v2116, %v2100
        %v3141 = vpack.c.b16 %v2133, %v2117
        %v3142 = vpack.c.b16 %v2134, %v2118
        %v3143 = vpack.c.b16 %v2135, %v2119
        %v3144 = vpack.c.b16 %v2136, %v2120
        %v3145 = vpack.c.b16 %v2137, %v2121
        %v3146 = vpack.c.b16 %v2138, %v2122
        %v3147 = vpack.c.b16 %v2139, %v2123
        %v3148 = vpack.c.b16 %v2140, %v2124
        %v3149 = vpack.c.b16 %v2141, %v2125
        %v3150 = vpack.c.b16 %v2142, %v2126
        %v3151 = vpack.c.b16 %v2143, %v2127
        %v3152 = vpack.c.b16 %v2144, %v2128
        %v3153 = vpack.c.b16 %v2145, %v2129
        %v3154 = vpack.c.b16 %v2146, %v2130
        %v3155 = vpack.c.b16 %v2147, %v2131
        %v3156 = vpack.c.b16 %v2148, %v2132
        %v3157 = vpack.c.b16 %v2165, %v2149
        %v3158 = vpack.c.b16 %v2166, %v2150
        %v3159 = vpack.c.b16 %v2167, %v2151
        %v3160 = vpack.c.b16 %v2168, %v2152
        %v3161 = vpack.c.b16 %v2169, %v2153
        %v3162 = vpack.c.b16 %v2170, %v2154
        %v3163 = vpack.c.b16 %v2171, %v2155
        %v3164 = vpack.c.b16 %v2172, %v2156
        %v3165 = vpack.c.b16 %v2173, %v2157
        %v3166 = vpack.c.b16 %v2174, %v2158
        %v3167 = vpack.c.b16 %v2175, %v2159
        %v3168 = vpack.c.b16 %v2176, %v2160
        %v3169 = vpack.c.b16 %v2177, %v2161
        %v3170 = vpack.c.b16 %v2178, %v2162
        %v3171 = vpack.c.b16 %v2179, %v2163
        %v3172 = vpack.c.b16 %v2180, %v2164
        %v3173 = vpack.c.b16 %v2197, %v2181
        %v3174 = vpack.c.b16 %v2198, %v2182
        %v3175 = vpack.c.b16 %v2199, %v2183
        %v3176 = vpack.c.b16 %v2200, %v2184
        %v3177 = vpack.c.b16 %v2201, %v2185
        %v3178 = vpack.c.b16 %v2202, %v2186
        %v3179 = vpack.c.b16 %v2203, %v2187
        %v3180 = vpack.c.b16 %v2204, %v2188
        %v3181 = vpack.c.b16 %v2205, %v2189
        %v3182 = vpack.c.b16 %v2206, %v2190
        %v3183 = vpack.c.b16 %v2207, %v2191
        %v3184 = vpack.c.b16 %v2208, %v2192
        %v3185 = vpack.c.b16 %v2209, %v2193
        %v3186 = vpack.c.b16 %v2210, %v2194
        %v3187 = vpack.c.b16 %v2211, %v2195
        %v3188 = vpack.c.b16 %v2212, %v2196
        %v3189 = vpack.c.b16 %v2229, %v2213
        %v3190 = vpack.c.b16 %v2230, %v2214
        %v3191 = vpack.c.b16 %v2231, %v2215
        %v3192 = vpack.c.b16 %v2232, %v2216
        %v3193 = vpack.c.b16 %v2233, %v2217
        %v3194 = vpack.c.b16 %v2234, %v2218
        %v3195 = vpack.c.b16 %v2235, %v2219
        %v3196 = vpack.c.b16 %v2236, %v2220
        %v3197 = vpack.c.b16 %v2237, %v2221
        %v3198 = vpack.c.b16 %v2238, %v2222
        %v3199 = vpack.c.b16 %v2239, %v2223
        %v3200 = vpack.c.b16 %v2240, %v2224
        %v3201 = vpack.c.b16 %v2241, %v2225
        %v3202 = vpack.c.b16 %v2242, %v2226
        %v3203 = vpack.c.b16 %v2243, %v2227
        %v3204 = vpack.c.b16 %v2244, %v2228
        %v3205 = vpack.c.b16 %v2261, %v2245
        %v3206 = vpack.c.b16 %v2262, %v2246
        %v3207 = vpack.c.b16 %v2263, %v2247
        %v3208 = vpack.c.b16 %v2264, %v2248
        %v3209 = vpack.c.b16 %v2265, %v2249
        %v3210 = vpack.c.b16 %v2266, %v2250
        %v3211 = vpack.c.b16 %v2267, %v2251
        %v3212 = vpack.c.b16 %v2268, %v2252
        %v3213 = vpack.c.b16 %v2269, %v2253
        %v3214 = vpack.c.b16 %v2270, %v2254
        %v3215 = vpack.c.b16 %v2271, %v2255
        %v3216 = vpack.c.b16 %v2272, %v2256
        %v3217 = vpack.c.b16 %v2273, %v2257
        %v3218 = vpack.c.b16 %v2274, %v2258
        %v3219 = vpack.c.b16 %v2275, %v2259
        %v3220 = vpack.c.b16 %v2276, %v2260
        %v3221 = vpack.c.b16 %v2293, %v2277
        %v3222 = vpack.c.b16 %v2294, %v2278
        %v3223 = vpack.c.b16 %v2295, %v2279
        %v3224 = vpack.c.b16 %v2296, %v2280
        %v3225 = vpack.c.b16 %v2297, %v2281
        %v3226 = vpack.c.b16 %v2298, %v2282
        %v3227 = vpack.c.b16 %v2299, %v2283
        %v3228 = vpack.c.b16 %v2300, %v2284
        %v3229 = vpack.c.b16 %v2301, %v2285
        %v3230 = vpack.c.b16 %v2302, %v2286
        %v3231 = vpack.c.b16 %v2303, %v2287
        %v3232 = vpack.c.b16 %v2304, %v2288
        %v3233 = vpack.c.b16 %v2305, %v2289
        %v3234 = vpack.c.b16 %v2306, %v2290
        %v3235 = vpack.c.b16 %v2307, %v2291
        %v3236 = vpack.c.b16 %v2308, %v2292
        %v3237 = vpack.c.b16 %v2325, %v2309
        %v3238 = vpack.c.b16 %v2326, %v2310
        %v3239 = vpack.c.b16 %v2327, %v2311
        %v3240 = vpack.c.b16 %v2328, %v2312
        %v3241 = vpack.c.b16 %v2329, %v2313
        %v3242 = vpack.c.b16 %v2330, %v2314
        %v3243 = vpack.c.b16 %v2331, %v2315
        %v3244 = vpack.c.b16 %v2332, %v2316
        %v3245 = vpack.c.b16 %v2333, %v2317
        %v3246 = vpack.c.b16 %v2334, %v2318
        %v3247 = vpack.c.b16 %v2335, %v2319
        %v3248 = vpack.c.b16 %v2336, %v2320
        %v3249 = vpack.c.b16 %v2337, %v2321
        %v3250 = vpack.c.b16 %v2338, %v2322
        %v3251 = vpack.c.b16 %v2339, %v2323
        %v3252 = vpack.c.b16 %v2340, %v2324
        %v3253 = vpack.c.b16 %v2357, %v2341
        %v3254 = vpack.c.b16 %v2358, %v2342
        %v3255 = vpack.c.b16 %v2359, %v2343
        %v3256 = vpack.c.b16 %v2360, %v2344
        %v3257 = vpack.c.b16 %v2361, %v2345
        %v3258 = vpack.c.b16 %v2362, %v2346
        %v3259 = vpack.c.b16 %v2363, %v2347
        %v3260 = vpack.c.b16 %v2364, %v2348
        %v3261 = vpack.c.b16 %v2365, %v2349
        %v3262 = vpack.c.b16 %v2366, %v2350
        %v3263 = vpack.c.b16 %v2367, %v2351
        %v3264 = vpack.c.b16 %v2368, %v2352
        %v3265 = vpack.c.b16 %v2369, %v2353
        %v3266 = vpack.c.b16 %v2370, %v2354
        %v3267 = vpack.c.b16 %v2371, %v2355
        %v3268 = vpack.c.b16 %v2372, %v2356
        %v3269 = vpack.c.b16 %v2389, %v2373
        %v3270 = vpack.c.b16 %v2390, %v2374
        %v3271 = vpack.c.b16 %v2391, %v2375
        %v3272 = vpack.c.b16 %v2392, %v2376
        %v3273 = vpack.c.b16 %v2393, %v2377
        %v3274 = vpack.c.b16 %v2394, %v2378
        %v3275 = vpack.c.b16 %v2395, %v2379
        %v3276 = vpack.c.b16 %v2396, %v2380
        %v3277 = vpack.c.b16 %v2397, %v2381
        %v3278 = vpack.c.b16 %v2398, %v2382
        %v3279 = vpack.c.b16 %v2399, %v2383
        %v3280 = vpack.c.b16 %v2400, %v2384
        %v3281 = vpack.c.b16 %v2401, %v2385
        %v3282 = vpack.c.b16 %v2402, %v2386
        %v3283 = vpack.c.b16 %v2403, %v2387
        %v3284 = vpack.c.b16 %v2404, %v2388
        %v3285 = vpack.c.b16 %v2421, %v2405
        %v3286 = vpack.c.b16 %v2422, %v2406
        %v3287 = vpack.c.b16 %v2423, %v2407
        %v3288 = vpack.c.b16 %v2424, %v2408
        %v3289 = vpack.c.b16 %v2425, %v2409
        %v3290 = vpack.c.b16 %v2426, %v2410
        %v3291 = vpack.c.b16 %v2427, %v2411
        %v3292 = vpack.c.b16 %v2428, %v2412
        %v3293 = vpack.c.b16 %v2429, %v2413
        %v3294 = vpack.c.b16 %v2430, %v2414
        %v3295 = vpack.c.b16 %v2431, %v2415
        %v3296 = vpack.c.b16 %v2432, %v2416
        %v3297 = vpack.c.b16 %v2433, %v2417
        %v3298 = vpack.c.b16 %v2434, %v2418
        %v3299 = vpack.c.b16 %v2435, %v2419
        %v3300 = vpack.c.b16 %v2436, %v2420
        %v3301 = vpack.c.b16 %v2453, %v2437
        %v3302 = vpack.c.b16 %v2454, %v2438
        %v3303 = vpack.c.b16 %v2455, %v2439
        %v3304 = vpack.c.b16 %v2456, %v2440
        %v3305 = vpack.c.b16 %v2457, %v2441
        %v3306 = vpack.c.b16 %v2458, %v2442
        %v3307 = vpack.c.b16 %v2459, %v2443
        %v3308 = vpack.c.b16 %v2460, %v2444
        %v3309 = vpack.c.b16 %v2461, %v2445
        %v3310 = vpack.c.b16 %v2462, %v2446
        %v3311 = vpack.c.b16 %v2463, %v2447
        %v3312 = vpack.c.b16 %v2464, %v2448
        %v3313 = vpack.c.b16 %v2465, %v2449
        %v3314 = vpack.c.b16 %v2466, %v2450
        %v3315 = vpack.c.b16 %v2467, %v2451
        %v3316 = vpack.c.b16 %v2468, %v2452
        %v3317 = vpack.c.b16 %v2485, %v2469
        %v3318 = vpack.c.b16 %v2486, %v2470
        %v3319 = vpack.c.b16 %v2487, %v2471
        %v3320 = vpack.c.b16 %v2488, %v2472
        %v3321 = vpack.c.b16 %v2489, %v2473
        %v3322 = vpack.c.b16 %v2490, %v2474
        %v3323 = vpack.c.b16 %v2491, %v2475
        %v3324 = vpack.c.b16 %v2492, %v2476
        %v3325 = vpack.c.b16 %v2493, %v2477
        %v3326 = vpack.c.b16 %v2494, %v2478
        %v3327 = vpack.c.b16 %v2495, %v2479
        %v3328 = vpack.c.b16 %v2496, %v2480
        %v3329 = vpack.c.b16 %v2497, %v2481
        %v3330 = vpack.c.b16 %v2498, %v2482
        %v3331 = vpack.c.b16 %v2499, %v2483
        %v3332 = vpack.c.b16 %v2500, %v2484
        %v3333 = vpack.c.b16 %v2517, %v2501
        %v3334 = vpack.c.b16 %v2518, %v2502
        %v3335 = vpack.c.b16 %v2519, %v2503
        %v3336 = vpack.c.b16 %v2520, %v2504
        %v3337 = vpack.c.b16 %v2521, %v2505
        %v3338 = vpack.c.b16 %v2522, %v2506
        %v3339 = vpack.c.b16 %v2523, %v2507
        %v3340 = vpack.c.b16 %v2524, %v2508
        %v3341 = vpack.c.b16 %v2525, %v2509
        %v3342 = vpack.c.b16 %v2526, %v2510
        %v3343 = vpack.c.b16 %v2527, %v2511
        %v3344 = vpack.c.b16 %v2528, %v2512
        %v3345 = vpack.c.b16 %v2529, %v2513
        %v3346 = vpack.c.b16 %v2530, %v2514
        %v3347 = vpack.c.b16 %v2531, %v2515
        %v3348 = vpack.c.b16 %v2532, %v2516
        %v3349 = vpack.c.b16 %v2549, %v2533
        %v3350 = vpack.c.b16 %v2550, %v2534
        %v3351 = vpack.c.b16 %v2551, %v2535
        %v3352 = vpack.c.b16 %v2552, %v2536
        %v3353 = vpack.c.b16 %v2553, %v2537
        %v3354 = vpack.c.b16 %v2554, %v2538
        %v3355 = vpack.c.b16 %v2555, %v2539
        %v3356 = vpack.c.b16 %v2556, %v2540
        %v3357 = vpack.c.b16 %v2557, %v2541
        %v3358 = vpack.c.b16 %v2558, %v2542
        %v3359 = vpack.c.b16 %v2559, %v2543
        %v3360 = vpack.c.b16 %v2560, %v2544
        %v3361 = vpack.c.b16 %v2561, %v2545
        %v3362 = vpack.c.b16 %v2562, %v2546
        %v3363 = vpack.c.b16 %v2563, %v2547
        %v3364 = vpack.c.b16 %v2564, %v2548
        %v3365 = vpack.c.b16 %v2581, %v2565
        %v3366 = vpack.c.b16 %v2582, %v2566
        %v3367 = vpack.c.b16 %v2583, %v2567
        %v3368 = vpack.c.b16 %v2584, %v2568
        %v3369 = vpack.c.b16 %v2585, %v2569
        %v3370 = vpack.c.b16 %v2586, %v2570
        %v3371 = vpack.c.b16 %v2587, %v2571
        %v3372 = vpack.c.b16 %v2588, %v2572
        %v3373 = vpack.c.b16 %v2589, %v2573
        %v3374 = vpack.c.b16 %v2590, %v2574
        %v3375 = vpack.c.b16 %v2591, %v2575
        %v3376 = vpack.c.b16 %v2592, %v2576
        %v3377 = vpack.c.b16 %v2593, %v2577
        %v3378 = vpack.c.b16 %v2594, %v2578
        %v3379 = vpack.c.b16 %v2595, %v2579
        %v3380 = vpack.c.b16 %v2596, %v2580
        %v3381 = vpack.c.b16 %v2613, %v2597
        %v3382 = vpack.c.b16 %v2614, %v2598
        %v3383 = vpack.c.b16 %v2615, %v2599
        %v3384 = vpack.c.b16 %v2616, %v2600
        %v3385 = vpack.c.b16 %v2617, %v2601
        %v3386 = vpack.c.b16 %v2618, %v2602
        %v3387 = vpack.c.b16 %v2619, %v2603
        %v3388 = vpack.c.b16 %v2620, %v2604
        %v3389 = vpack.c.b16 %v2621, %v2605
        %v3390 = vpack.c.b16 %v2622, %v2606
        %v3391 = vpack.c.b16 %v2623, %v2607
        %v3392 = vpack.c.b16 %v2624, %v2608
        %v3393 = vpack.c.b16 %v2625, %v2609
        %v3394 = vpack.c.b16 %v2626, %v2610
        %v3395 = vpack.c.b16 %v2627, %v2611
        %v3396 = vpack.c.b16 %v2628, %v2612
        %v3397 = vpack.c.b16 %v2645, %v2629
        %v3398 = vpack.c.b16 %v2646, %v2630
        %v3399 = vpack.c.b16 %v2647, %v2631
        %v3400 = vpack.c.b16 %v2648, %v2632
        %v3401 = vpack.c.b16 %v2649, %v2633
        %v3402 = vpack.c.b16 %v2650, %v2634
        %v3403 = vpack.c.b16 %v2651, %v2635
        %v3404 = vpack.c.b16 %v2652, %v2636
        %v3405 = vpack.c.b16 %v2653, %v2637
        %v3406 = vpack.c.b16 %v2654, %v2638
        %v3407 = vpack.c.b16 %v2655, %v2639
        %v3408 = vpack.c.b16 %v2656, %v2640
        %v3409 = vpack.c.b16 %v2657, %v2641
        %v3410 = vpack.c.b16 %v2658, %v2642
        %v3411 = vpack.c.b16 %v2659, %v2643
        %v3412 = vpack.c.b16 %v2660, %v2644
        %v3413 = vpack.c.b16 %v2677, %v2661
        %v3414 = vpack.c.b16 %v2678, %v2662
        %v3415 = vpack.c.b16 %v2679, %v2663
        %v3416 = vpack.c.b16 %v2680, %v2664
        %v3417 = vpack.c.b16 %v2681, %v2665
        %v3418 = vpack.c.b16 %v2682, %v2666
        %v3419 = vpack.c.b16 %v2683, %v2667
        %v3420 = vpack.c.b16 %v2684, %v2668
        %v3421 = vpack.c.b16 %v2685, %v2669
        %v3422 = vpack.c.b16 %v2686, %v2670
        %v3423 = vpack.c.b16 %v2687, %v2671
        %v3424 = vpack.c.b16 %v2688, %v2672
        %v3425 = vpack.c.b16 %v2689, %v2673
        %v3426 = vpack.c.b16 %v2690, %v2674
        %v3427 = vpack.c.b16 %v2691, %v2675
        %v3428 = vpack.c.b16 %v2692, %v2676
        %v3429 = vpack.c.b16 %v2709, %v2693
        %v3430 = vpack.c.b16 %v2710, %v2694
        %v3431 = vpack.c.b16 %v2711, %v2695
        %v3432 = vpack.c.b16 %v2712, %v2696
        %v3433 = vpack.c.b16 %v2713, %v2697
        %v3434 = vpack.c.b16 %v2714, %v2698
        %v3435 = vpack.c.b16 %v2715, %v2699
        %v3436 = vpack.c.b16 %v2716, %v2700
        %v3437 = vpack.c.b16 %v2717, %v2701
        %v3438 = vpack.c.b16 %v2718, %v2702
        %v3439 = vpack.c.b16 %v2719, %v2703
        %v3440 = vpack.c.b16 %v2720, %v2704
        %v3441 = vpack.c.b16 %v2721, %v2705
        %v3442 = vpack.c.b16 %v2722, %v2706
        %v3443 = vpack.c.b16 %v2723, %v2707
        %v3444 = vpack.c.b16 %v2724, %v2708
        %v3445 = vpack.c.b16 %v2741, %v2725
        %v3446 = vpack.c.b16 %v2742, %v2726
        %v3447 = vpack.c.b16 %v2743, %v2727
        %v3448 = vpack.c.b16 %v2744, %v2728
        %v3449 = vpack.c.b16 %v2745, %v2729
        %v3450 = vpack.c.b16 %v2746, %v2730
        %v3451 = vpack.c.b16 %v2747, %v2731
        %v3452 = vpack.c.b16 %v2748, %v2732
        %v3453 = vpack.c.b16 %v2749, %v2733
        %v3454 = vpack.c.b16 %v2750, %v2734
        %v3455 = vpack.c.b16 %v2751, %v2735
        %v3456 = vpack.c.b16 %v2752, %v2736
        %v3457 = vpack.c.b16 %v2753, %v2737
        %v3458 = vpack.c.b16 %v2754, %v2738
        %v3459 = vpack.c.b16 %v2755, %v2739
        %v3460 = vpack.c.b16 %v2756, %v2740
        %v3461 = vpack.c.b16 %v2773, %v2757
        %v3462 = vpack.c.b16 %v2774, %v2758
        %v3463 = vpack.c.b16 %v2775, %v2759
        %v3464 = vpack.c.b16 %v2776, %v2760
        %v3465 = vpack.c.b16 %v2777, %v2761
        %v3466 = vpack.c.b16 %v2778, %v2762
        %v3467 = vpack.c.b16 %v2779, %v2763
        %v3468 = vpack.c.b16 %v2780, %v2764
        %v3469 = vpack.c.b16 %v2781, %v2765
        %v3470 = vpack.c.b16 %v2782, %v2766
        %v3471 = vpack.c.b16 %v2783, %v2767
        %v3472 = vpack.c.b16 %v2784, %v2768
        %v3473 = vpack.c.b16 %v2785, %v2769
        %v3474 = vpack.c.b16 %v2786, %v2770
        %v3475 = vpack.c.b16 %v2787, %v2771
        %v3476 = vpack.c.b16 %v2788, %v2772
        %v3477 = vpack.c.b16 %v2805, %v2789
        %v3478 = vpack.c.b16 %v2806, %v2790
        %v3479 = vpack.c.b16 %v2807, %v2791
        %v3480 = vpack.c.b16 %v2808, %v2792
        %v3481 = vpack.c.b16 %v2809, %v2793
        %v3482 = vpack.c.b16 %v2810, %v2794
        %v3483 = vpack.c.b16 %v2811, %v2795
        %v3484 = vpack.c.b16 %v2812, %v2796
        %v3485 = vpack.c.b16 %v2813, %v2797
        %v3486 = vpack.c.b16 %v2814, %v2798
        %v3487 = vpack.c.b16 %v2815, %v2799
        %v3488 = vpack.c.b16 %v2816, %v2800
        %v3489 = vpack.c.b16 %v2817, %v2801
        %v3490 = vpack.c.b16 %v2818, %v2802
        %v3491 = vpack.c.b16 %v2819, %v2803
        %v3492 = vpack.c.b16 %v2820, %v2804
        %v3493 = vpack.c.b16 %v2837, %v2821
        %v3494 = vpack.c.b16 %v2838, %v2822
        %v3495 = vpack.c.b16 %v2839, %v2823
        %v3496 = vpack.c.b16 %v2840, %v2824
        %v3497 = vpack.c.b16 %v2841, %v2825
        %v3498 = vpack.c.b16 %v2842, %v2826
        %v3499 = vpack.c.b16 %v2843, %v2827
        %v3500 = vpack.c.b16 %v2844, %v2828
        %v3501 = vpack.c.b16 %v2845, %v2829
        %v3502 = vpack.c.b16 %v2846, %v2830
        %v3503 = vpack.c.b16 %v2847, %v2831
        %v3504 = vpack.c.b16 %v2848, %v2832
        %v3505 = vpack.c.b16 %v2849, %v2833
        %v3506 = vpack.c.b16 %v2850, %v2834
        %v3507 = vpack.c.b16 %v2851, %v2835
        %v3508 = vpack.c.b16 %v2852, %v2836
        %v3509 = vpack.c.b16 %v2869, %v2853
        %v3510 = vpack.c.b16 %v2870, %v2854
        %v3511 = vpack.c.b16 %v2871, %v2855
        %v3512 = vpack.c.b16 %v2872, %v2856
        %v3513 = vpack.c.b16 %v2873, %v2857
        %v3514 = vpack.c.b16 %v2874, %v2858
        %v3515 = vpack.c.b16 %v2875, %v2859
        %v3516 = vpack.c.b16 %v2876, %v2860
        %v3517 = vpack.c.b16 %v2877, %v2861
        %v3518 = vpack.c.b16 %v2878, %v2862
        %v3519 = vpack.c.b16 %v2879, %v2863
        %v3520 = vpack.c.b16 %v2880, %v2864
        %v3521 = vpack.c.b16 %v2881, %v2865
        %v3522 = vpack.c.b16 %v2882, %v2866
        %v3523 = vpack.c.b16 %v2883, %v2867
        %v3524 = vpack.c.b16 %v2884, %v2868
        %4165 = vmatprep.subr.bf16.mxu0 %v2998
        %4166 = vmatpush1.bf16.msra.mxu0 %v2997
        %4167 = vmatprep.subr.bf16.mxu0 %v2982
        %4168 = vmatpush1.bf16.msra.mxu0 %v2981
        %4169 = vmatprep.subr.bf16.mxu0 %v2966
        %4170 = vmatpush1.bf16.msra.mxu0 %v2965
        %4171 = vmatprep.subr.bf16.mxu0 %v2950
        %4172 = vmatpush1.bf16.msra.mxu0 %v2949
        %4173 = vmatprep.subr.bf16.mxu0 %v2934
        %4174 = vmatpush1.bf16.msra.mxu0 %v2933
        %4175 = vmatprep.subr.bf16.mxu0 %v2918
        %4176 = vmatpush1.bf16.msra.mxu0 %v2917
        %4177 = vmatprep.subr.bf16.mxu0 %v2902
        %4178 = vmatpush1.bf16.msra.mxu0 %v2901
        %4179 = vmatprep.subr.bf16.mxu0 %v2886
        %4180 = vmatpush1.bf16.msra.mxu0 %v2885
        %4181 = vmatprep.subr.bf16.mxu0 %v3126
        %4182 = vmatpush2.bf16.msra.mxu0 %v3125
        %4183 = vmatprep.subr.bf16.mxu0 %v3110
        %4184 = vmatpush2.bf16.msra.mxu0 %v3109
        %4185 = vmatprep.subr.bf16.mxu0 %v3094
        %4186 = vmatpush2.bf16.msra.mxu0 %v3093
        %4187 = vmatprep.subr.bf16.mxu0 %v3078
        %4188 = vmatpush2.bf16.msra.mxu0 %v3077
        %4189 = vmatprep.subr.bf16.mxu0 %v3062
        %4190 = vmatpush2.bf16.msra.mxu0 %v3061
        %4191 = vmatprep.subr.bf16.mxu0 %v3046
        %4192 = vmatpush2.bf16.msra.mxu0 %v3045
        %4193 = vmatprep.subr.bf16.mxu0 %v3030
        %4194 = vmatpush2.bf16.msra.mxu0 %v3029
        %4195 = vmatprep.subr.bf16.mxu0 %v3014
        %4196 = vmatpush2.bf16.msra.mxu0 %v3013
        %4197 = vmatprep.mubr.bf16.mxu0 %v957
        %4198 = vmatmul.mubr.bf16.gmra.mxu0 %v943
        %v4199 = vpop.f32.mrf.mxu0
        %v4200 = vadd.f32 0.0, %v4199
        %v4201 = vpop.f32.mrf.mxu0
        %v4202 = vadd.f32 0.0, %v4201
        %v4203 = vpop.f32.mrf.mxu0
        %v4204 = vpop.f32.mrf.mxu0
        %4205 = vdwg.mxu0
        %4206 = vmatprep.subr.bf16.mxu0 %v3254
        %4207 = vmatpush1.bf16.msra.mxu0 %v3253
        %4208 = vmatprep.subr.bf16.mxu0 %v3238
        %4209 = vmatpush1.bf16.msra.mxu0 %v3237
        %4210 = vmatprep.subr.bf16.mxu0 %v3222
        %4211 = vmatpush1.bf16.msra.mxu0 %v3221
        %4212 = vmatprep.subr.bf16.mxu0 %v3206
        %4213 = vmatpush1.bf16.msra.mxu0 %v3205
        %4214 = vmatprep.subr.bf16.mxu0 %v3190
        %4215 = vmatpush1.bf16.msra.mxu0 %v3189
        %4216 = vmatprep.subr.bf16.mxu0 %v3174
        %4217 = vmatpush1.bf16.msra.mxu0 %v3173
        %4218 = vmatprep.subr.bf16.mxu0 %v3158
        %4219 = vmatpush1.bf16.msra.mxu0 %v3157
        %4220 = vmatprep.subr.bf16.mxu0 %v3142
        %4221 = vmatpush1.bf16.msra.mxu0 %v3141
        %4222 = vmatprep.subr.bf16.mxu0 %v3382
        %4223 = vmatpush2.bf16.msra.mxu0 %v3381
        %4224 = vmatprep.subr.bf16.mxu0 %v3366
        %4225 = vmatpush2.bf16.msra.mxu0 %v3365
        %4226 = vmatprep.subr.bf16.mxu0 %v3350
        %4227 = vmatpush2.bf16.msra.mxu0 %v3349
        %4228 = vmatprep.subr.bf16.mxu0 %v3334
        %4229 = vmatpush2.bf16.msra.mxu0 %v3333
        %4230 = vmatprep.subr.bf16.mxu0 %v3318
        %4231 = vmatpush2.bf16.msra.mxu0 %v3317
        %4232 = vmatprep.subr.bf16.mxu0 %v3302
        %4233 = vmatpush2.bf16.msra.mxu0 %v3301
        %4234 = vmatprep.subr.bf16.mxu0 %v3286
        %4235 = vmatpush2.bf16.msra.mxu0 %v3285
        %4236 = vmatprep.subr.bf16.mxu0 %v3270
        %4237 = vmatpush2.bf16.msra.mxu0 %v3269
        %4238 = vmatprep.mubr.bf16.mxu0 %v959
        %4239 = vmatmul.mubr.bf16.gmra.mxu0 %v958
        %v4240 = vpop.f32.mrf.mxu0
        %v4241 = vadd.f32 %v4200, %v4240
        %v4242 = vpop.f32.mrf.mxu0
        %v4243 = vadd.f32 %v4202, %v4242
        %v4244 = vpop.f32.mrf.mxu0
        %v4245 = vpop.f32.mrf.mxu0
        %4246 = vdwg.mxu0
        %4247 = vmatprep.subr.bf16.mxu0 %v3510
        %4248 = vmatpush1.bf16.msra.mxu0 %v3509
        %4249 = vmatprep.subr.bf16.mxu0 %v3494
        %4250 = vmatpush1.bf16.msra.mxu0 %v3493
        %4251 = vmatprep.subr.bf16.mxu0 %v3478
        %4252 = vmatpush1.bf16.msra.mxu0 %v3477
        %4253 = vmatprep.subr.bf16.mxu0 %v3462
        %4254 = vmatpush1.bf16.msra.mxu0 %v3461
        %4255 = vmatprep.subr.bf16.mxu0 %v3446
        %4256 = vmatpush1.bf16.msra.mxu0 %v3445
        %4257 = vmatprep.subr.bf16.mxu0 %v3430
        %4258 = vmatpush1.bf16.msra.mxu0 %v3429
        %4259 = vmatprep.subr.bf16.mxu0 %v3414
        %4260 = vmatpush1.bf16.msra.mxu0 %v3413
        %4261 = vmatprep.subr.bf16.mxu0 %v3398
        %4262 = vmatpush1.bf16.msra.mxu0 %v3397
        %4263 = vmatprep.subr.bf16.mxu0 0
        %4264 = vmatpush2.bf16.msra.mxu0 0
        %4265 = vmatprep.subr.bf16.mxu0 0
        %4266 = vmatpush2.bf16.msra.mxu0 0
        %4267 = vmatprep.subr.bf16.mxu0 0
        %4268 = vmatpush2.bf16.msra.mxu0 0
        %4269 = vmatprep.subr.bf16.mxu0 0
        %4270 = vmatpush2.bf16.msra.mxu0 0
        %4271 = vmatprep.subr.bf16.mxu0 0
        %4272 = vmatpush2.bf16.msra.mxu0 0
        %4273 = vmatprep.subr.bf16.mxu0 0
        %4274 = vmatpush2.bf16.msra.mxu0 0
        %4275 = vmatprep.subr.bf16.mxu0 0
        %4276 = vmatpush2.bf16.msra.mxu0 0
        %4277 = vmatprep.subr.bf16.mxu0 0
        %4278 = vmatpush2.bf16.msra.mxu0 0
        %4279 = vmatprep.mubr.bf16.mxu0 0
        %4280 = vmatmul.mubr.bf16.gmra.mxu0 %v950
        %v4281 = vpop.f32.mrf.mxu0
        %v4282 = vadd.f32 %v4241, %v4281
        %v4283 = vpop.f32.mrf.mxu0
        %v4284 = vadd.f32 %v4243, %v4283
        %v4285 = vpop.f32.mrf.mxu0
        %v4286 = vpop.f32.mrf.mxu0
        %4287 = vdwg.mxu0
        %4288 = vmatprep.subr.bf16.mxu0 %v3000
        %4289 = vmatpush1.bf16.msra.mxu0 %v2999
        %4290 = vmatprep.subr.bf16.mxu0 %v2984
        %4291 = vmatpush1.bf16.msra.mxu0 %v2983
        %4292 = vmatprep.subr.bf16.mxu0 %v2968
        %4293 = vmatpush1.bf16.msra.mxu0 %v2967
        %4294 = vmatprep.subr.bf16.mxu0 %v2952
        %4295 = vmatpush1.bf16.msra.mxu0 %v2951
        %4296 = vmatprep.subr.bf16.mxu0 %v2936
        %4297 = vmatpush1.bf16.msra.mxu0 %v2935
        %4298 = vmatprep.subr.bf16.mxu0 %v2920
        %4299 = vmatpush1.bf16.msra.mxu0 %v2919
        %4300 = vmatprep.subr.bf16.mxu0 %v2904
        %4301 = vmatpush1.bf16.msra.mxu0 %v2903
        %4302 = vmatprep.subr.bf16.mxu0 %v2888
        %4303 = vmatpush1.bf16.msra.mxu0 %v2887
        %4304 = vmatprep.subr.bf16.mxu0 %v3128
        %4305 = vmatpush2.bf16.msra.mxu0 %v3127
        %4306 = vmatprep.subr.bf16.mxu0 %v3112
        %4307 = vmatpush2.bf16.msra.mxu0 %v3111
        %4308 = vmatprep.subr.bf16.mxu0 %v3096
        %4309 = vmatpush2.bf16.msra.mxu0 %v3095
        %4310 = vmatprep.subr.bf16.mxu0 %v3080
        %4311 = vmatpush2.bf16.msra.mxu0 %v3079
        %4312 = vmatprep.subr.bf16.mxu0 %v3064
        %4313 = vmatpush2.bf16.msra.mxu0 %v3063
        %4314 = vmatprep.subr.bf16.mxu0 %v3048
        %4315 = vmatpush2.bf16.msra.mxu0 %v3047
        %4316 = vmatprep.subr.bf16.mxu0 %v3032
        %4317 = vmatpush2.bf16.msra.mxu0 %v3031
        %4318 = vmatprep.subr.bf16.mxu0 %v3016
        %4319 = vmatpush2.bf16.msra.mxu0 %v3015
        %4320 = vmatprep.mubr.bf16.mxu0 %v957
        %4321 = vmatmul.mubr.bf16.gmra.mxu0 %v943
        %v4322 = vpop.f32.mrf.mxu0
        %v4323 = vadd.f32 0.0, %v4322
        %v4324 = vpop.f32.mrf.mxu0
        %v4325 = vadd.f32 0.0, %v4324
        %v4326 = vpop.f32.mrf.mxu0
        %v4327 = vpop.f32.mrf.mxu0
        %4328 = vdwg.mxu0
        %4329 = vmatprep.subr.bf16.mxu0 %v3256
        %4330 = vmatpush1.bf16.msra.mxu0 %v3255
        %4331 = vmatprep.subr.bf16.mxu0 %v3240
        %4332 = vmatpush1.bf16.msra.mxu0 %v3239
        %4333 = vmatprep.subr.bf16.mxu0 %v3224
        %4334 = vmatpush1.bf16.msra.mxu0 %v3223
        %4335 = vmatprep.subr.bf16.mxu0 %v3208
        %4336 = vmatpush1.bf16.msra.mxu0 %v3207
        %4337 = vmatprep.subr.bf16.mxu0 %v3192
        %4338 = vmatpush1.bf16.msra.mxu0 %v3191
        %4339 = vmatprep.subr.bf16.mxu0 %v3176
        %4340 = vmatpush1.bf16.msra.mxu0 %v3175
        %4341 = vmatprep.subr.bf16.mxu0 %v3160
        %4342 = vmatpush1.bf16.msra.mxu0 %v3159
        %4343 = vmatprep.subr.bf16.mxu0 %v3144
        %4344 = vmatpush1.bf16.msra.mxu0 %v3143
        %4345 = vmatprep.subr.bf16.mxu0 %v3384
        %4346 = vmatpush2.bf16.msra.mxu0 %v3383
        %4347 = vmatprep.subr.bf16.mxu0 %v3368
        %4348 = vmatpush2.bf16.msra.mxu0 %v3367
        %4349 = vmatprep.subr.bf16.mxu0 %v3352
        %4350 = vmatpush2.bf16.msra.mxu0 %v3351
        %4351 = vmatprep.subr.bf16.mxu0 %v3336
        %4352 = vmatpush2.bf16.msra.mxu0 %v3335
        %4353 = vmatprep.subr.bf16.mxu0 %v3320
        %4354 = vmatpush2.bf16.msra.mxu0 %v3319
        %4355 = vmatprep.subr.bf16.mxu0 %v3304
        %4356 = vmatpush2.bf16.msra.mxu0 %v3303
        %4357 = vmatprep.subr.bf16.mxu0 %v3288
        %4358 = vmatpush2.bf16.msra.mxu0 %v3287
        %4359 = vmatprep.subr.bf16.mxu0 %v3272
        %4360 = vmatpush2.bf16.msra.mxu0 %v3271
        %4361 = vmatprep.mubr.bf16.mxu0 %v959
        %4362 = vmatmul.mubr.bf16.gmra.mxu0 %v958
        %v4363 = vpop.f32.mrf.mxu0
        %v4364 = vadd.f32 %v4323, %v4363
        %v4365 = vpop.f32.mrf.mxu0
        %v4366 = vadd.f32 %v4325, %v4365
        %v4367 = vpop.f32.mrf.mxu0
        %v4368 = vpop.f32.mrf.mxu0
        %4369 = vdwg.mxu0
        %4370 = vmatprep.subr.bf16.mxu0 %v3512
        %4371 = vmatpush1.bf16.msra.mxu0 %v3511
        %4372 = vmatprep.subr.bf16.mxu0 %v3496
        %4373 = vmatpush1.bf16.msra.mxu0 %v3495
        %4374 = vmatprep.subr.bf16.mxu0 %v3480
        %4375 = vmatpush1.bf16.msra.mxu0 %v3479
        %4376 = vmatprep.subr.bf16.mxu0 %v3464
        %4377 = vmatpush1.bf16.msra.mxu0 %v3463
        %4378 = vmatprep.subr.bf16.mxu0 %v3448
        %4379 = vmatpush1.bf16.msra.mxu0 %v3447
        %4380 = vmatprep.subr.bf16.mxu0 %v3432
        %4381 = vmatpush1.bf16.msra.mxu0 %v3431
        %4382 = vmatprep.subr.bf16.mxu0 %v3416
        %4383 = vmatpush1.bf16.msra.mxu0 %v3415
        %4384 = vmatprep.subr.bf16.mxu0 %v3400
        %4385 = vmatpush1.bf16.msra.mxu0 %v3399
        %4386 = vmatprep.subr.bf16.mxu0 0
        %4387 = vmatpush2.bf16.msra.mxu0 0
        %4388 = vmatprep.subr.bf16.mxu0 0
        %4389 = vmatpush2.bf16.msra.mxu0 0
        %4390 = vmatprep.subr.bf16.mxu0 0
        %4391 = vmatpush2.bf16.msra.mxu0 0
        %4392 = vmatprep.subr.bf16.mxu0 0
        %4393 = vmatpush2.bf16.msra.mxu0 0
        %4394 = vmatprep.subr.bf16.mxu0 0
        %4395 = vmatpush2.bf16.msra.mxu0 0
        %4396 = vmatprep.subr.bf16.mxu0 0
        %4397 = vmatpush2.bf16.msra.mxu0 0
        %4398 = vmatprep.subr.bf16.mxu0 0
        %4399 = vmatpush2.bf16.msra.mxu0 0
        %4400 = vmatprep.subr.bf16.mxu0 0
        %4401 = vmatpush2.bf16.msra.mxu0 0
        %4402 = vmatprep.mubr.bf16.mxu0 0
        %4403 = vmatmul.mubr.bf16.gmra.mxu0 %v950
        %v4404 = vpop.f32.mrf.mxu0
        %v4405 = vadd.f32 %v4364, %v4404
        %v4406 = vpop.f32.mrf.mxu0
        %v4407 = vadd.f32 %v4366, %v4406
        %v4408 = vpop.f32.mrf.mxu0
        %v4409 = vpop.f32.mrf.mxu0
        %4410 = vdwg.mxu0
        %4411 = vmatprep.subr.bf16.mxu0 %v3002
        %4412 = vmatpush1.bf16.msra.mxu0 %v3001
        %4413 = vmatprep.subr.bf16.mxu0 %v2986
        %4414 = vmatpush1.bf16.msra.mxu0 %v2985
        %4415 = vmatprep.subr.bf16.mxu0 %v2970
        %4416 = vmatpush1.bf16.msra.mxu0 %v2969
        %4417 = vmatprep.subr.bf16.mxu0 %v2954
        %4418 = vmatpush1.bf16.msra.mxu0 %v2953
        %4419 = vmatprep.subr.bf16.mxu0 %v2938
        %4420 = vmatpush1.bf16.msra.mxu0 %v2937
        %4421 = vmatprep.subr.bf16.mxu0 %v2922
        %4422 = vmatpush1.bf16.msra.mxu0 %v2921
        %4423 = vmatprep.subr.bf16.mxu0 %v2906
        %4424 = vmatpush1.bf16.msra.mxu0 %v2905
        %4425 = vmatprep.subr.bf16.mxu0 %v2890
        %4426 = vmatpush1.bf16.msra.mxu0 %v2889
        %4427 = vmatprep.subr.bf16.mxu0 %v3130
        %4428 = vmatpush2.bf16.msra.mxu0 %v3129
        %4429 = vmatprep.subr.bf16.mxu0 %v3114
        %4430 = vmatpush2.bf16.msra.mxu0 %v3113
        %4431 = vmatprep.subr.bf16.mxu0 %v3098
        %4432 = vmatpush2.bf16.msra.mxu0 %v3097
        %4433 = vmatprep.subr.bf16.mxu0 %v3082
        %4434 = vmatpush2.bf16.msra.mxu0 %v3081
        %4435 = vmatprep.subr.bf16.mxu0 %v3066
        %4436 = vmatpush2.bf16.msra.mxu0 %v3065
        %4437 = vmatprep.subr.bf16.mxu0 %v3050
        %4438 = vmatpush2.bf16.msra.mxu0 %v3049
        %4439 = vmatprep.subr.bf16.mxu0 %v3034
        %4440 = vmatpush2.bf16.msra.mxu0 %v3033
        %4441 = vmatprep.subr.bf16.mxu0 %v3018
        %4442 = vmatpush2.bf16.msra.mxu0 %v3017
        %4443 = vmatprep.mubr.bf16.mxu0 %v957
        %4444 = vmatmul.mubr.bf16.gmra.mxu0 %v943
        %v4445 = vpop.f32.mrf.mxu0
        %v4446 = vadd.f32 0.0, %v4445
        %v4447 = vpop.f32.mrf.mxu0
        %v4448 = vadd.f32 0.0, %v4447
        %v4449 = vpop.f32.mrf.mxu0
        %v4450 = vpop.f32.mrf.mxu0
        %4451 = vdwg.mxu0
        %4452 = vmatprep.subr.bf16.mxu0 %v3258
        %4453 = vmatpush1.bf16.msra.mxu0 %v3257
        %4454 = vmatprep.subr.bf16.mxu0 %v3242
        %4455 = vmatpush1.bf16.msra.mxu0 %v3241
        %4456 = vmatprep.subr.bf16.mxu0 %v3226
        %4457 = vmatpush1.bf16.msra.mxu0 %v3225
        %4458 = vmatprep.subr.bf16.mxu0 %v3210
        %4459 = vmatpush1.bf16.msra.mxu0 %v3209
        %4460 = vmatprep.subr.bf16.mxu0 %v3194
        %4461 = vmatpush1.bf16.msra.mxu0 %v3193
        %4462 = vmatprep.subr.bf16.mxu0 %v3178
        %4463 = vmatpush1.bf16.msra.mxu0 %v3177
        %4464 = vmatprep.subr.bf16.mxu0 %v3162
        %4465 = vmatpush1.bf16.msra.mxu0 %v3161
        %4466 = vmatprep.subr.bf16.mxu0 %v3146
        %4467 = vmatpush1.bf16.msra.mxu0 %v3145
        %4468 = vmatprep.subr.bf16.mxu0 %v3386
        %4469 = vmatpush2.bf16.msra.mxu0 %v3385
        %4470 = vmatprep.subr.bf16.mxu0 %v3370
        %4471 = vmatpush2.bf16.msra.mxu0 %v3369
        %4472 = vmatprep.subr.bf16.mxu0 %v3354
        %4473 = vmatpush2.bf16.msra.mxu0 %v3353
        %4474 = vmatprep.subr.bf16.mxu0 %v3338
        %4475 = vmatpush2.bf16.msra.mxu0 %v3337
        %4476 = vmatprep.subr.bf16.mxu0 %v3322
        %4477 = vmatpush2.bf16.msra.mxu0 %v3321
        %4478 = vmatprep.subr.bf16.mxu0 %v3306
        %4479 = vmatpush2.bf16.msra.mxu0 %v3305
        %4480 = vmatprep.subr.bf16.mxu0 %v3290
        %4481 = vmatpush2.bf16.msra.mxu0 %v3289
        %4482 = vmatprep.subr.bf16.mxu0 %v3274
        %4483 = vmatpush2.bf16.msra.mxu0 %v3273
        %4484 = vmatprep.mubr.bf16.mxu0 %v959
        %4485 = vmatmul.mubr.bf16.gmra.mxu0 %v958
        %v4486 = vpop.f32.mrf.mxu0
        %v4487 = vadd.f32 %v4446, %v4486
        %v4488 = vpop.f32.mrf.mxu0
        %v4489 = vadd.f32 %v4448, %v4488
        %v4490 = vpop.f32.mrf.mxu0
        %v4491 = vpop.f32.mrf.mxu0
        %4492 = vdwg.mxu0
        %4493 = vmatprep.subr.bf16.mxu0 %v3514
        %4494 = vmatpush1.bf16.msra.mxu0 %v3513
        %4495 = vmatprep.subr.bf16.mxu0 %v3498
        %4496 = vmatpush1.bf16.msra.mxu0 %v3497
        %4497 = vmatprep.subr.bf16.mxu0 %v3482
        %4498 = vmatpush1.bf16.msra.mxu0 %v3481
        %4499 = vmatprep.subr.bf16.mxu0 %v3466
        %4500 = vmatpush1.bf16.msra.mxu0 %v3465
        %4501 = vmatprep.subr.bf16.mxu0 %v3450
        %4502 = vmatpush1.bf16.msra.mxu0 %v3449
        %4503 = vmatprep.subr.bf16.mxu0 %v3434
        %4504 = vmatpush1.bf16.msra.mxu0 %v3433
        %4505 = vmatprep.subr.bf16.mxu0 %v3418
        %4506 = vmatpush1.bf16.msra.mxu0 %v3417
        %4507 = vmatprep.subr.bf16.mxu0 %v3402
        %4508 = vmatpush1.bf16.msra.mxu0 %v3401
        %4509 = vmatprep.subr.bf16.mxu0 0
        %4510 = vmatpush2.bf16.msra.mxu0 0
        %4511 = vmatprep.subr.bf16.mxu0 0
        %4512 = vmatpush2.bf16.msra.mxu0 0
        %4513 = vmatprep.subr.bf16.mxu0 0
        %4514 = vmatpush2.bf16.msra.mxu0 0
        %4515 = vmatprep.subr.bf16.mxu0 0
        %4516 = vmatpush2.bf16.msra.mxu0 0
        %4517 = vmatprep.subr.bf16.mxu0 0
        %4518 = vmatpush2.bf16.msra.mxu0 0
        %4519 = vmatprep.subr.bf16.mxu0 0
        %4520 = vmatpush2.bf16.msra.mxu0 0
        %4521 = vmatprep.subr.bf16.mxu0 0
        %4522 = vmatpush2.bf16.msra.mxu0 0
        %4523 = vmatprep.subr.bf16.mxu0 0
        %4524 = vmatpush2.bf16.msra.mxu0 0
        %4525 = vmatprep.mubr.bf16.mxu0 0
        %4526 = vmatmul.mubr.bf16.gmra.mxu0 %v950
        %v4527 = vpop.f32.mrf.mxu0
        %v4528 = vadd.f32 %v4487, %v4527
        %v4529 = vpop.f32.mrf.mxu0
        %v4530 = vadd.f32 %v4489, %v4529
        %v4531 = vpop.f32.mrf.mxu0
        %v4532 = vpop.f32.mrf.mxu0
        %4533 = vdwg.mxu0
        %4534 = vmatprep.subr.bf16.mxu0 %v3004
        %4535 = vmatpush1.bf16.msra.mxu0 %v3003
        %4536 = vmatprep.subr.bf16.mxu0 %v2988
        %4537 = vmatpush1.bf16.msra.mxu0 %v2987
        %4538 = vmatprep.subr.bf16.mxu0 %v2972
        %4539 = vmatpush1.bf16.msra.mxu0 %v2971
        %4540 = vmatprep.subr.bf16.mxu0 %v2956
        %4541 = vmatpush1.bf16.msra.mxu0 %v2955
        %4542 = vmatprep.subr.bf16.mxu0 %v2940
        %4543 = vmatpush1.bf16.msra.mxu0 %v2939
        %4544 = vmatprep.subr.bf16.mxu0 %v2924
        %4545 = vmatpush1.bf16.msra.mxu0 %v2923
        %4546 = vmatprep.subr.bf16.mxu0 %v2908
        %4547 = vmatpush1.bf16.msra.mxu0 %v2907
        %4548 = vmatprep.subr.bf16.mxu0 %v2892
        %4549 = vmatpush1.bf16.msra.mxu0 %v2891
        %4550 = vmatprep.subr.bf16.mxu0 %v3132
        %4551 = vmatpush2.bf16.msra.mxu0 %v3131
        %4552 = vmatprep.subr.bf16.mxu0 %v3116
        %4553 = vmatpush2.bf16.msra.mxu0 %v3115
        %4554 = vmatprep.subr.bf16.mxu0 %v3100
        %4555 = vmatpush2.bf16.msra.mxu0 %v3099
        %4556 = vmatprep.subr.bf16.mxu0 %v3084
        %4557 = vmatpush2.bf16.msra.mxu0 %v3083
        %4558 = vmatprep.subr.bf16.mxu0 %v3068
        %4559 = vmatpush2.bf16.msra.mxu0 %v3067
        %4560 = vmatprep.subr.bf16.mxu0 %v3052
        %4561 = vmatpush2.bf16.msra.mxu0 %v3051
        %4562 = vmatprep.subr.bf16.mxu0 %v3036
        %4563 = vmatpush2.bf16.msra.mxu0 %v3035
        %4564 = vmatprep.subr.bf16.mxu0 %v3020
        %4565 = vmatpush2.bf16.msra.mxu0 %v3019
        %4566 = vmatprep.mubr.bf16.mxu0 %v957
        %4567 = vmatmul.mubr.bf16.gmra.mxu0 %v943
        %v4568 = vpop.f32.mrf.mxu0
        %v4569 = vadd.f32 0.0, %v4568
        %v4570 = vpop.f32.mrf.mxu0
        %v4571 = vadd.f32 0.0, %v4570
        %v4572 = vpop.f32.mrf.mxu0
        %v4573 = vpop.f32.mrf.mxu0
        %4574 = vdwg.mxu0
        %4575 = vmatprep.subr.bf16.mxu0 %v3260
        %4576 = vmatpush1.bf16.msra.mxu0 %v3259
        %4577 = vmatprep.subr.bf16.mxu0 %v3244
        %4578 = vmatpush1.bf16.msra.mxu0 %v3243
        %4579 = vmatprep.subr.bf16.mxu0 %v3228
        %4580 = vmatpush1.bf16.msra.mxu0 %v3227
        %4581 = vmatprep.subr.bf16.mxu0 %v3212
        %4582 = vmatpush1.bf16.msra.mxu0 %v3211
        %4583 = vmatprep.subr.bf16.mxu0 %v3196
        %4584 = vmatpush1.bf16.msra.mxu0 %v3195
        %4585 = vmatprep.subr.bf16.mxu0 %v3180
        %4586 = vmatpush1.bf16.msra.mxu0 %v3179
        %4587 = vmatprep.subr.bf16.mxu0 %v3164
        %4588 = vmatpush1.bf16.msra.mxu0 %v3163
        %4589 = vmatprep.subr.bf16.mxu0 %v3148
        %4590 = vmatpush1.bf16.msra.mxu0 %v3147
        %4591 = vmatprep.subr.bf16.mxu0 %v3388
        %4592 = vmatpush2.bf16.msra.mxu0 %v3387
        %4593 = vmatprep.subr.bf16.mxu0 %v3372
        %4594 = vmatpush2.bf16.msra.mxu0 %v3371
        %4595 = vmatprep.subr.bf16.mxu0 %v3356
        %4596 = vmatpush2.bf16.msra.mxu0 %v3355
        %4597 = vmatprep.subr.bf16.mxu0 %v3340
        %4598 = vmatpush2.bf16.msra.mxu0 %v3339
        %4599 = vmatprep.subr.bf16.mxu0 %v3324
        %4600 = vmatpush2.bf16.msra.mxu0 %v3323
        %4601 = vmatprep.subr.bf16.mxu0 %v3308
        %4602 = vmatpush2.bf16.msra.mxu0 %v3307
        %4603 = vmatprep.subr.bf16.mxu0 %v3292
        %4604 = vmatpush2.bf16.msra.mxu0 %v3291
        %4605 = vmatprep.subr.bf16.mxu0 %v3276
        %4606 = vmatpush2.bf16.msra.mxu0 %v3275
        %4607 = vmatprep.mubr.bf16.mxu0 %v959
        %4608 = vmatmul.mubr.bf16.gmra.mxu0 %v958
        %v4609 = vpop.f32.mrf.mxu0
        %v4610 = vadd.f32 %v4569, %v4609
        %v4611 = vpop.f32.mrf.mxu0
        %v4612 = vadd.f32 %v4571, %v4611
        %v4613 = vpop.f32.mrf.mxu0
        %v4614 = vpop.f32.mrf.mxu0
        %4615 = vdwg.mxu0
        %4616 = vmatprep.subr.bf16.mxu0 %v3516
        %4617 = vmatpush1.bf16.msra.mxu0 %v3515
        %4618 = vmatprep.subr.bf16.mxu0 %v3500
        %4619 = vmatpush1.bf16.msra.mxu0 %v3499
        %4620 = vmatprep.subr.bf16.mxu0 %v3484
        %4621 = vmatpush1.bf16.msra.mxu0 %v3483
        %4622 = vmatprep.subr.bf16.mxu0 %v3468
        %4623 = vmatpush1.bf16.msra.mxu0 %v3467
        %4624 = vmatprep.subr.bf16.mxu0 %v3452
        %4625 = vmatpush1.bf16.msra.mxu0 %v3451
        %4626 = vmatprep.subr.bf16.mxu0 %v3436
        %4627 = vmatpush1.bf16.msra.mxu0 %v3435
        %4628 = vmatprep.subr.bf16.mxu0 %v3420
        %4629 = vmatpush1.bf16.msra.mxu0 %v3419
        %4630 = vmatprep.subr.bf16.mxu0 %v3404
        %4631 = vmatpush1.bf16.msra.mxu0 %v3403
        %4632 = vmatprep.subr.bf16.mxu0 0
        %4633 = vmatpush2.bf16.msra.mxu0 0
        %4634 = vmatprep.subr.bf16.mxu0 0
        %4635 = vmatpush2.bf16.msra.mxu0 0
        %4636 = vmatprep.subr.bf16.mxu0 0
        %4637 = vmatpush2.bf16.msra.mxu0 0
        %4638 = vmatprep.subr.bf16.mxu0 0
        %4639 = vmatpush2.bf16.msra.mxu0 0
        %4640 = vmatprep.subr.bf16.mxu0 0
        %4641 = vmatpush2.bf16.msra.mxu0 0
        %4642 = vmatprep.subr.bf16.mxu0 0
        %4643 = vmatpush2.bf16.msra.mxu0 0
        %4644 = vmatprep.subr.bf16.mxu0 0
        %4645 = vmatpush2.bf16.msra.mxu0 0
        %4646 = vmatprep.subr.bf16.mxu0 0
        %4647 = vmatpush2.bf16.msra.mxu0 0
        %4648 = vmatprep.mubr.bf16.mxu0 0
        %4649 = vmatmul.mubr.bf16.gmra.mxu0 %v950
        %v4650 = vpop.f32.mrf.mxu0
        %v4651 = vadd.f32 %v4610, %v4650
        %v4652 = vpop.f32.mrf.mxu0
        %v4653 = vadd.f32 %v4612, %v4652
        %v4654 = vpop.f32.mrf.mxu0
        %v4655 = vpop.f32.mrf.mxu0
        %4656 = vdwg.mxu0
        %4657 = vmatprep.subr.bf16.mxu0 %v3006
        %4658 = vmatpush1.bf16.msra.mxu0 %v3005
        %4659 = vmatprep.subr.bf16.mxu0 %v2990
        %4660 = vmatpush1.bf16.msra.mxu0 %v2989
        %4661 = vmatprep.subr.bf16.mxu0 %v2974
        %4662 = vmatpush1.bf16.msra.mxu0 %v2973
        %4663 = vmatprep.subr.bf16.mxu0 %v2958
        %4664 = vmatpush1.bf16.msra.mxu0 %v2957
        %4665 = vmatprep.subr.bf16.mxu0 %v2942
        %4666 = vmatpush1.bf16.msra.mxu0 %v2941
        %4667 = vmatprep.subr.bf16.mxu0 %v2926
        %4668 = vmatpush1.bf16.msra.mxu0 %v2925
        %4669 = vmatprep.subr.bf16.mxu0 %v2910
        %4670 = vmatpush1.bf16.msra.mxu0 %v2909
        %4671 = vmatprep.subr.bf16.mxu0 %v2894
        %4672 = vmatpush1.bf16.msra.mxu0 %v2893
        %4673 = vmatprep.subr.bf16.mxu0 %v3134
        %4674 = vmatpush2.bf16.msra.mxu0 %v3133
        %4675 = vmatprep.subr.bf16.mxu0 %v3118
        %4676 = vmatpush2.bf16.msra.mxu0 %v3117
        %4677 = vmatprep.subr.bf16.mxu0 %v3102
        %4678 = vmatpush2.bf16.msra.mxu0 %v3101
        %4679 = vmatprep.subr.bf16.mxu0 %v3086
        %4680 = vmatpush2.bf16.msra.mxu0 %v3085
        %4681 = vmatprep.subr.bf16.mxu0 %v3070
        %4682 = vmatpush2.bf16.msra.mxu0 %v3069
        %4683 = vmatprep.subr.bf16.mxu0 %v3054
        %4684 = vmatpush2.bf16.msra.mxu0 %v3053
        %4685 = vmatprep.subr.bf16.mxu0 %v3038
        %4686 = vmatpush2.bf16.msra.mxu0 %v3037
        %4687 = vmatprep.subr.bf16.mxu0 %v3022
        %4688 = vmatpush2.bf16.msra.mxu0 %v3021
        %4689 = vmatprep.mubr.bf16.mxu0 %v957
        %4690 = vmatmul.mubr.bf16.gmra.mxu0 %v943
        %v4691 = vpop.f32.mrf.mxu0
        %v4692 = vadd.f32 0.0, %v4691
        %v4693 = vpop.f32.mrf.mxu0
        %v4694 = vadd.f32 0.0, %v4693
        %v4695 = vpop.f32.mrf.mxu0
        %v4696 = vpop.f32.mrf.mxu0
        %4697 = vdwg.mxu0
        %4698 = vmatprep.subr.bf16.mxu0 %v3262
        %4699 = vmatpush1.bf16.msra.mxu0 %v3261
        %4700 = vmatprep.subr.bf16.mxu0 %v3246
        %4701 = vmatpush1.bf16.msra.mxu0 %v3245
        %4702 = vmatprep.subr.bf16.mxu0 %v3230
        %4703 = vmatpush1.bf16.msra.mxu0 %v3229
        %4704 = vmatprep.subr.bf16.mxu0 %v3214
        %4705 = vmatpush1.bf16.msra.mxu0 %v3213
        %4706 = vmatprep.subr.bf16.mxu0 %v3198
        %4707 = vmatpush1.bf16.msra.mxu0 %v3197
        %4708 = vmatprep.subr.bf16.mxu0 %v3182
        %4709 = vmatpush1.bf16.msra.mxu0 %v3181
        %4710 = vmatprep.subr.bf16.mxu0 %v3166
        %4711 = vmatpush1.bf16.msra.mxu0 %v3165
        %4712 = vmatprep.subr.bf16.mxu0 %v3150
        %4713 = vmatpush1.bf16.msra.mxu0 %v3149
        %4714 = vmatprep.subr.bf16.mxu0 %v3390
        %4715 = vmatpush2.bf16.msra.mxu0 %v3389
        %4716 = vmatprep.subr.bf16.mxu0 %v3374
        %4717 = vmatpush2.bf16.msra.mxu0 %v3373
        %4718 = vmatprep.subr.bf16.mxu0 %v3358
        %4719 = vmatpush2.bf16.msra.mxu0 %v3357
        %4720 = vmatprep.subr.bf16.mxu0 %v3342
        %4721 = vmatpush2.bf16.msra.mxu0 %v3341
        %4722 = vmatprep.subr.bf16.mxu0 %v3326
        %4723 = vmatpush2.bf16.msra.mxu0 %v3325
        %4724 = vmatprep.subr.bf16.mxu0 %v3310
        %4725 = vmatpush2.bf16.msra.mxu0 %v3309
        %4726 = vmatprep.subr.bf16.mxu0 %v3294
        %4727 = vmatpush2.bf16.msra.mxu0 %v3293
        %4728 = vmatprep.subr.bf16.mxu0 %v3278
        %4729 = vmatpush2.bf16.msra.mxu0 %v3277
        %4730 = vmatprep.mubr.bf16.mxu0 %v959
        %4731 = vmatmul.mubr.bf16.gmra.mxu0 %v958
        %v4732 = vpop.f32.mrf.mxu0
        %v4733 = vadd.f32 %v4692, %v4732
        %v4734 = vpop.f32.mrf.mxu0
        %v4735 = vadd.f32 %v4694, %v4734
        %v4736 = vpop.f32.mrf.mxu0
        %v4737 = vpop.f32.mrf.mxu0
        %4738 = vdwg.mxu0
        %4739 = vmatprep.subr.bf16.mxu0 %v3518
        %4740 = vmatpush1.bf16.msra.mxu0 %v3517
        %4741 = vmatprep.subr.bf16.mxu0 %v3502
        %4742 = vmatpush1.bf16.msra.mxu0 %v3501
        %4743 = vmatprep.subr.bf16.mxu0 %v3486
        %4744 = vmatpush1.bf16.msra.mxu0 %v3485
        %4745 = vmatprep.subr.bf16.mxu0 %v3470
        %4746 = vmatpush1.bf16.msra.mxu0 %v3469
        %4747 = vmatprep.subr.bf16.mxu0 %v3454
        %4748 = vmatpush1.bf16.msra.mxu0 %v3453
        %4749 = vmatprep.subr.bf16.mxu0 %v3438
        %4750 = vmatpush1.bf16.msra.mxu0 %v3437
        %4751 = vmatprep.subr.bf16.mxu0 %v3422
        %4752 = vmatpush1.bf16.msra.mxu0 %v3421
        %4753 = vmatprep.subr.bf16.mxu0 %v3406
        %4754 = vmatpush1.bf16.msra.mxu0 %v3405
        %4755 = vmatprep.subr.bf16.mxu0 0
        %4756 = vmatpush2.bf16.msra.mxu0 0
        %4757 = vmatprep.subr.bf16.mxu0 0
        %4758 = vmatpush2.bf16.msra.mxu0 0
        %4759 = vmatprep.subr.bf16.mxu0 0
        %4760 = vmatpush2.bf16.msra.mxu0 0
        %4761 = vmatprep.subr.bf16.mxu0 0
        %4762 = vmatpush2.bf16.msra.mxu0 0
        %4763 = vmatprep.subr.bf16.mxu0 0
        %4764 = vmatpush2.bf16.msra.mxu0 0
        %4765 = vmatprep.subr.bf16.mxu0 0
        %4766 = vmatpush2.bf16.msra.mxu0 0
        %4767 = vmatprep.subr.bf16.mxu0 0
        %4768 = vmatpush2.bf16.msra.mxu0 0
        %4769 = vmatprep.subr.bf16.mxu0 0
        %4770 = vmatpush2.bf16.msra.mxu0 0
        %4771 = vmatprep.mubr.bf16.mxu0 0
        %4772 = vmatmul.mubr.bf16.gmra.mxu0 %v950
        %v4773 = vpop.f32.mrf.mxu0
        %v4774 = vadd.f32 %v4733, %v4773
        %v4775 = vpop.f32.mrf.mxu0
        %v4776 = vadd.f32 %v4735, %v4775
        %v4777 = vpop.f32.mrf.mxu0
        %v4778 = vpop.f32.mrf.mxu0
        %4779 = vdwg.mxu0
        %4780 = vmatprep.subr.bf16.mxu0 %v3008
        %4781 = vmatpush1.bf16.msra.mxu0 %v3007
        %4782 = vmatprep.subr.bf16.mxu0 %v2992
        %4783 = vmatpush1.bf16.msra.mxu0 %v2991
        %4784 = vmatprep.subr.bf16.mxu0 %v2976
        %4785 = vmatpush1.bf16.msra.mxu0 %v2975
        %4786 = vmatprep.subr.bf16.mxu0 %v2960
        %4787 = vmatpush1.bf16.msra.mxu0 %v2959
        %4788 = vmatprep.subr.bf16.mxu0 %v2944
        %4789 = vmatpush1.bf16.msra.mxu0 %v2943
        %4790 = vmatprep.subr.bf16.mxu0 %v2928
        %4791 = vmatpush1.bf16.msra.mxu0 %v2927
        %4792 = vmatprep.subr.bf16.mxu0 %v2912
        %4793 = vmatpush1.bf16.msra.mxu0 %v2911
        %4794 = vmatprep.subr.bf16.mxu0 %v2896
        %4795 = vmatpush1.bf16.msra.mxu0 %v2895
        %4796 = vmatprep.subr.bf16.mxu0 %v3136
        %4797 = vmatpush2.bf16.msra.mxu0 %v3135
        %4798 = vmatprep.subr.bf16.mxu0 %v3120
        %4799 = vmatpush2.bf16.msra.mxu0 %v3119
        %4800 = vmatprep.subr.bf16.mxu0 %v3104
        %4801 = vmatpush2.bf16.msra.mxu0 %v3103
        %4802 = vmatprep.subr.bf16.mxu0 %v3088
        %4803 = vmatpush2.bf16.msra.mxu0 %v3087
        %4804 = vmatprep.subr.bf16.mxu0 %v3072
        %4805 = vmatpush2.bf16.msra.mxu0 %v3071
        %4806 = vmatprep.subr.bf16.mxu0 %v3056
        %4807 = vmatpush2.bf16.msra.mxu0 %v3055
        %4808 = vmatprep.subr.bf16.mxu0 %v3040
        %4809 = vmatpush2.bf16.msra.mxu0 %v3039
        %4810 = vmatprep.subr.bf16.mxu0 %v3024
        %4811 = vmatpush2.bf16.msra.mxu0 %v3023
        %4812 = vmatprep.mubr.bf16.mxu0 %v957
        %4813 = vmatmul.mubr.bf16.gmra.mxu0 %v943
        %v4814 = vpop.f32.mrf.mxu0
        %v4815 = vadd.f32 0.0, %v4814
        %v4816 = vpop.f32.mrf.mxu0
        %v4817 = vadd.f32 0.0, %v4816
        %v4818 = vpop.f32.mrf.mxu0
        %v4819 = vpop.f32.mrf.mxu0
        %4820 = vdwg.mxu0
        %4821 = vmatprep.subr.bf16.mxu0 %v3264
        %4822 = vmatpush1.bf16.msra.mxu0 %v3263
        %4823 = vmatprep.subr.bf16.mxu0 %v3248
        %4824 = vmatpush1.bf16.msra.mxu0 %v3247
        %4825 = vmatprep.subr.bf16.mxu0 %v3232
        %4826 = vmatpush1.bf16.msra.mxu0 %v3231
        %4827 = vmatprep.subr.bf16.mxu0 %v3216
        %4828 = vmatpush1.bf16.msra.mxu0 %v3215
        %4829 = vmatprep.subr.bf16.mxu0 %v3200
        %4830 = vmatpush1.bf16.msra.mxu0 %v3199
        %4831 = vmatprep.subr.bf16.mxu0 %v3184
        %4832 = vmatpush1.bf16.msra.mxu0 %v3183
        %4833 = vmatprep.subr.bf16.mxu0 %v3168
        %4834 = vmatpush1.bf16.msra.mxu0 %v3167
        %4835 = vmatprep.subr.bf16.mxu0 %v3152
        %4836 = vmatpush1.bf16.msra.mxu0 %v3151
        %4837 = vmatprep.subr.bf16.mxu0 %v3392
        %4838 = vmatpush2.bf16.msra.mxu0 %v3391
        %4839 = vmatprep.subr.bf16.mxu0 %v3376
        %4840 = vmatpush2.bf16.msra.mxu0 %v3375
        %4841 = vmatprep.subr.bf16.mxu0 %v3360
        %4842 = vmatpush2.bf16.msra.mxu0 %v3359
        %4843 = vmatprep.subr.bf16.mxu0 %v3344
        %4844 = vmatpush2.bf16.msra.mxu0 %v3343
        %4845 = vmatprep.subr.bf16.mxu0 %v3328
        %4846 = vmatpush2.bf16.msra.mxu0 %v3327
        %4847 = vmatprep.subr.bf16.mxu0 %v3312
        %4848 = vmatpush2.bf16.msra.mxu0 %v3311
        %4849 = vmatprep.subr.bf16.mxu0 %v3296
        %4850 = vmatpush2.bf16.msra.mxu0 %v3295
        %4851 = vmatprep.subr.bf16.mxu0 %v3280
        %4852 = vmatpush2.bf16.msra.mxu0 %v3279
        %4853 = vmatprep.mubr.bf16.mxu0 %v959
        %4854 = vmatmul.mubr.bf16.gmra.mxu0 %v958
        %v4855 = vpop.f32.mrf.mxu0
        %v4856 = vadd.f32 %v4815, %v4855
        %v4857 = vpop.f32.mrf.mxu0
        %v4858 = vadd.f32 %v4817, %v4857
        %v4859 = vpop.f32.mrf.mxu0
        %v4860 = vpop.f32.mrf.mxu0
        %4861 = vdwg.mxu0
        %4862 = vmatprep.subr.bf16.mxu0 %v3520
        %4863 = vmatpush1.bf16.msra.mxu0 %v3519
        %4864 = vmatprep.subr.bf16.mxu0 %v3504
        %4865 = vmatpush1.bf16.msra.mxu0 %v3503
        %4866 = vmatprep.subr.bf16.mxu0 %v3488
        %4867 = vmatpush1.bf16.msra.mxu0 %v3487
        %4868 = vmatprep.subr.bf16.mxu0 %v3472
        %4869 = vmatpush1.bf16.msra.mxu0 %v3471
        %4870 = vmatprep.subr.bf16.mxu0 %v3456
        %4871 = vmatpush1.bf16.msra.mxu0 %v3455
        %4872 = vmatprep.subr.bf16.mxu0 %v3440
        %4873 = vmatpush1.bf16.msra.mxu0 %v3439
        %4874 = vmatprep.subr.bf16.mxu0 %v3424
        %4875 = vmatpush1.bf16.msra.mxu0 %v3423
        %4876 = vmatprep.subr.bf16.mxu0 %v3408
        %4877 = vmatpush1.bf16.msra.mxu0 %v3407
        %4878 = vmatprep.subr.bf16.mxu0 0
        %4879 = vmatpush2.bf16.msra.mxu0 0
        %4880 = vmatprep.subr.bf16.mxu0 0
        %4881 = vmatpush2.bf16.msra.mxu0 0
        %4882 = vmatprep.subr.bf16.mxu0 0
        %4883 = vmatpush2.bf16.msra.mxu0 0
        %4884 = vmatprep.subr.bf16.mxu0 0
        %4885 = vmatpush2.bf16.msra.mxu0 0
        %4886 = vmatprep.subr.bf16.mxu0 0
        %4887 = vmatpush2.bf16.msra.mxu0 0
        %4888 = vmatprep.subr.bf16.mxu0 0
        %4889 = vmatpush2.bf16.msra.mxu0 0
        %4890 = vmatprep.subr.bf16.mxu0 0
        %4891 = vmatpush2.bf16.msra.mxu0 0
        %4892 = vmatprep.subr.bf16.mxu0 0
        %4893 = vmatpush2.bf16.msra.mxu0 0
        %4894 = vmatprep.mubr.bf16.mxu0 0
        %4895 = vmatmul.mubr.bf16.gmra.mxu0 %v950
        %v4896 = vpop.f32.mrf.mxu0
        %v4897 = vadd.f32 %v4856, %v4896
        %v4898 = vpop.f32.mrf.mxu0
        %v4899 = vadd.f32 %v4858, %v4898
        %v4900 = vpop.f32.mrf.mxu0
        %v4901 = vpop.f32.mrf.mxu0
        %4902 = vdwg.mxu0
        %4903 = vmatprep.subr.bf16.mxu0 %v3010
        %4904 = vmatpush1.bf16.msra.mxu0 %v3009
        %4905 = vmatprep.subr.bf16.mxu0 %v2994
        %4906 = vmatpush1.bf16.msra.mxu0 %v2993
        %4907 = vmatprep.subr.bf16.mxu0 %v2978
        %4908 = vmatpush1.bf16.msra.mxu0 %v2977
        %4909 = vmatprep.subr.bf16.mxu0 %v2962
        %4910 = vmatpush1.bf16.msra.mxu0 %v2961
        %4911 = vmatprep.subr.bf16.mxu0 %v2946
        %4912 = vmatpush1.bf16.msra.mxu0 %v2945
        %4913 = vmatprep.subr.bf16.mxu0 %v2930
        %4914 = vmatpush1.bf16.msra.mxu0 %v2929
        %4915 = vmatprep.subr.bf16.mxu0 %v2914
        %4916 = vmatpush1.bf16.msra.mxu0 %v2913
        %4917 = vmatprep.subr.bf16.mxu0 %v2898
        %4918 = vmatpush1.bf16.msra.mxu0 %v2897
        %4919 = vmatprep.subr.bf16.mxu0 %v3138
        %4920 = vmatpush2.bf16.msra.mxu0 %v3137
        %4921 = vmatprep.subr.bf16.mxu0 %v3122
        %4922 = vmatpush2.bf16.msra.mxu0 %v3121
        %4923 = vmatprep.subr.bf16.mxu0 %v3106
        %4924 = vmatpush2.bf16.msra.mxu0 %v3105
        %4925 = vmatprep.subr.bf16.mxu0 %v3090
        %4926 = vmatpush2.bf16.msra.mxu0 %v3089
        %4927 = vmatprep.subr.bf16.mxu0 %v3074
        %4928 = vmatpush2.bf16.msra.mxu0 %v3073
        %4929 = vmatprep.subr.bf16.mxu0 %v3058
        %4930 = vmatpush2.bf16.msra.mxu0 %v3057
        %4931 = vmatprep.subr.bf16.mxu0 %v3042
        %4932 = vmatpush2.bf16.msra.mxu0 %v3041
        %4933 = vmatprep.subr.bf16.mxu0 %v3026
        %4934 = vmatpush2.bf16.msra.mxu0 %v3025
        %4935 = vmatprep.mubr.bf16.mxu0 %v957
        %4936 = vmatmul.mubr.bf16.gmra.mxu0 %v943
        %v4937 = vpop.f32.mrf.mxu0
        %v4938 = vadd.f32 0.0, %v4937
        %v4939 = vpop.f32.mrf.mxu0
        %v4940 = vadd.f32 0.0, %v4939
        %v4941 = vpop.f32.mrf.mxu0
        %v4942 = vpop.f32.mrf.mxu0
        %4943 = vdwg.mxu0
        %4944 = vmatprep.subr.bf16.mxu0 %v3266
        %4945 = vmatpush1.bf16.msra.mxu0 %v3265
        %4946 = vmatprep.subr.bf16.mxu0 %v3250
        %4947 = vmatpush1.bf16.msra.mxu0 %v3249
        %4948 = vmatprep.subr.bf16.mxu0 %v3234
        %4949 = vmatpush1.bf16.msra.mxu0 %v3233
        %4950 = vmatprep.subr.bf16.mxu0 %v3218
        %4951 = vmatpush1.bf16.msra.mxu0 %v3217
        %4952 = vmatprep.subr.bf16.mxu0 %v3202
        %4953 = vmatpush1.bf16.msra.mxu0 %v3201
        %4954 = vmatprep.subr.bf16.mxu0 %v3186
        %4955 = vmatpush1.bf16.msra.mxu0 %v3185
        %4956 = vmatprep.subr.bf16.mxu0 %v3170
        %4957 = vmatpush1.bf16.msra.mxu0 %v3169
        %4958 = vmatprep.subr.bf16.mxu0 %v3154
        %4959 = vmatpush1.bf16.msra.mxu0 %v3153
        %4960 = vmatprep.subr.bf16.mxu0 %v3394
        %4961 = vmatpush2.bf16.msra.mxu0 %v3393
        %4962 = vmatprep.subr.bf16.mxu0 %v3378
        %4963 = vmatpush2.bf16.msra.mxu0 %v3377
        %4964 = vmatprep.subr.bf16.mxu0 %v3362
        %4965 = vmatpush2.bf16.msra.mxu0 %v3361
        %4966 = vmatprep.subr.bf16.mxu0 %v3346
        %4967 = vmatpush2.bf16.msra.mxu0 %v3345
        %4968 = vmatprep.subr.bf16.mxu0 %v3330
        %4969 = vmatpush2.bf16.msra.mxu0 %v3329
        %4970 = vmatprep.subr.bf16.mxu0 %v3314
        %4971 = vmatpush2.bf16.msra.mxu0 %v3313
        %4972 = vmatprep.subr.bf16.mxu0 %v3298
        %4973 = vmatpush2.bf16.msra.mxu0 %v3297
        %4974 = vmatprep.subr.bf16.mxu0 %v3282
        %4975 = vmatpush2.bf16.msra.mxu0 %v3281
        %4976 = vmatprep.mubr.bf16.mxu0 %v959
        %4977 = vmatmul.mubr.bf16.gmra.mxu0 %v958
        %v4978 = vpop.f32.mrf.mxu0
        %v4979 = vadd.f32 %v4938, %v4978
        %v4980 = vpop.f32.mrf.mxu0
        %v4981 = vadd.f32 %v4940, %v4980
        %v4982 = vpop.f32.mrf.mxu0
        %v4983 = vpop.f32.mrf.mxu0
        %4984 = vdwg.mxu0
        %4985 = vmatprep.subr.bf16.mxu0 %v3522
        %4986 = vmatpush1.bf16.msra.mxu0 %v3521
        %4987 = vmatprep.subr.bf16.mxu0 %v3506
        %4988 = vmatpush1.bf16.msra.mxu0 %v3505
        %4989 = vmatprep.subr.bf16.mxu0 %v3490
        %4990 = vmatpush1.bf16.msra.mxu0 %v3489
        %4991 = vmatprep.subr.bf16.mxu0 %v3474
        %4992 = vmatpush1.bf16.msra.mxu0 %v3473
        %4993 = vmatprep.subr.bf16.mxu0 %v3458
        %4994 = vmatpush1.bf16.msra.mxu0 %v3457
        %4995 = vmatprep.subr.bf16.mxu0 %v3442
        %4996 = vmatpush1.bf16.msra.mxu0 %v3441
        %4997 = vmatprep.subr.bf16.mxu0 %v3426
        %4998 = vmatpush1.bf16.msra.mxu0 %v3425
        %4999 = vmatprep.subr.bf16.mxu0 %v3410
        %5000 = vmatpush1.bf16.msra.mxu0 %v3409
        %5001 = vmatprep.subr.bf16.mxu0 0
        %5002 = vmatpush2.bf16.msra.mxu0 0
        %5003 = vmatprep.subr.bf16.mxu0 0
        %5004 = vmatpush2.bf16.msra.mxu0 0
        %5005 = vmatprep.subr.bf16.mxu0 0
        %5006 = vmatpush2.bf16.msra.mxu0 0
        %5007 = vmatprep.subr.bf16.mxu0 0
        %5008 = vmatpush2.bf16.msra.mxu0 0
        %5009 = vmatprep.subr.bf16.mxu0 0
        %5010 = vmatpush2.bf16.msra.mxu0 0
        %5011 = vmatprep.subr.bf16.mxu0 0
        %5012 = vmatpush2.bf16.msra.mxu0 0
        %5013 = vmatprep.subr.bf16.mxu0 0
        %5014 = vmatpush2.bf16.msra.mxu0 0
        %5015 = vmatprep.subr.bf16.mxu0 0
        %5016 = vmatpush2.bf16.msra.mxu0 0
        %5017 = vmatprep.mubr.bf16.mxu0 0
        %5018 = vmatmul.mubr.bf16.gmra.mxu0 %v950
        %v5019 = vpop.f32.mrf.mxu0
        %v5020 = vadd.f32 %v4979, %v5019
        %v5021 = vpop.f32.mrf.mxu0
        %v5022 = vadd.f32 %v4981, %v5021
        %v5023 = vpop.f32.mrf.mxu0
        %v5024 = vpop.f32.mrf.mxu0
        %5025 = vdwg.mxu0
        %5026 = vmatprep.subr.bf16.mxu0 %v3012
        %5027 = vmatpush1.bf16.msra.mxu0 %v3011
        %5028 = vmatprep.subr.bf16.mxu0 %v2996
        %5029 = vmatpush1.bf16.msra.mxu0 %v2995
        %5030 = vmatprep.subr.bf16.mxu0 %v2980
        %5031 = vmatpush1.bf16.msra.mxu0 %v2979
        %5032 = vmatprep.subr.bf16.mxu0 %v2964
        %5033 = vmatpush1.bf16.msra.mxu0 %v2963
        %5034 = vmatprep.subr.bf16.mxu0 %v2948
        %5035 = vmatpush1.bf16.msra.mxu0 %v2947
        %5036 = vmatprep.subr.bf16.mxu0 %v2932
        %5037 = vmatpush1.bf16.msra.mxu0 %v2931
        %5038 = vmatprep.subr.bf16.mxu0 %v2916
        %5039 = vmatpush1.bf16.msra.mxu0 %v2915
        %5040 = vmatprep.subr.bf16.mxu0 %v2900
        %5041 = vmatpush1.bf16.msra.mxu0 %v2899
        %5042 = vmatprep.subr.bf16.mxu0 %v3140
        %5043 = vmatpush2.bf16.msra.mxu0 %v3139
        %5044 = vmatprep.subr.bf16.mxu0 %v3124
        %5045 = vmatpush2.bf16.msra.mxu0 %v3123
        %5046 = vmatprep.subr.bf16.mxu0 %v3108
        %5047 = vmatpush2.bf16.msra.mxu0 %v3107
        %5048 = vmatprep.subr.bf16.mxu0 %v3092
        %5049 = vmatpush2.bf16.msra.mxu0 %v3091
        %5050 = vmatprep.subr.bf16.mxu0 %v3076
        %5051 = vmatpush2.bf16.msra.mxu0 %v3075
        %5052 = vmatprep.subr.bf16.mxu0 %v3060
        %5053 = vmatpush2.bf16.msra.mxu0 %v3059
        %5054 = vmatprep.subr.bf16.mxu0 %v3044
        %5055 = vmatpush2.bf16.msra.mxu0 %v3043
        %5056 = vmatprep.subr.bf16.mxu0 %v3028
        %5057 = vmatpush2.bf16.msra.mxu0 %v3027
        %5058 = vmatprep.mubr.bf16.mxu0 %v957
        %5059 = vmatmul.mubr.bf16.gmra.mxu0 %v943
        %v5060 = vpop.f32.mrf.mxu0
        %v5061 = vadd.f32 0.0, %v5060
        %v5062 = vpop.f32.mrf.mxu0
        %v5063 = vadd.f32 0.0, %v5062
        %v5064 = vpop.f32.mrf.mxu0
        %v5065 = vpop.f32.mrf.mxu0
        %5066 = vdwg.mxu0
        %5067 = vmatprep.subr.bf16.mxu0 %v3268
        %5068 = vmatpush1.bf16.msra.mxu0 %v3267
        %5069 = vmatprep.subr.bf16.mxu0 %v3252
        %5070 = vmatpush1.bf16.msra.mxu0 %v3251
        %5071 = vmatprep.subr.bf16.mxu0 %v3236
        %5072 = vmatpush1.bf16.msra.mxu0 %v3235
        %5073 = vmatprep.subr.bf16.mxu0 %v3220
        %5074 = vmatpush1.bf16.msra.mxu0 %v3219
        %5075 = vmatprep.subr.bf16.mxu0 %v3204
        %5076 = vmatpush1.bf16.msra.mxu0 %v3203
        %5077 = vmatprep.subr.bf16.mxu0 %v3188
        %5078 = vmatpush1.bf16.msra.mxu0 %v3187
        %5079 = vmatprep.subr.bf16.mxu0 %v3172
        %5080 = vmatpush1.bf16.msra.mxu0 %v3171
        %5081 = vmatprep.subr.bf16.mxu0 %v3156
        %5082 = vmatpush1.bf16.msra.mxu0 %v3155
        %5083 = vmatprep.subr.bf16.mxu0 %v3396
        %5084 = vmatpush2.bf16.msra.mxu0 %v3395
        %5085 = vmatprep.subr.bf16.mxu0 %v3380
        %5086 = vmatpush2.bf16.msra.mxu0 %v3379
        %5087 = vmatprep.subr.bf16.mxu0 %v3364
        %5088 = vmatpush2.bf16.msra.mxu0 %v3363
        %5089 = vmatprep.subr.bf16.mxu0 %v3348
        %5090 = vmatpush2.bf16.msra.mxu0 %v3347
        %5091 = vmatprep.subr.bf16.mxu0 %v3332
        %5092 = vmatpush2.bf16.msra.mxu0 %v3331
        %5093 = vmatprep.subr.bf16.mxu0 %v3316
        %5094 = vmatpush2.bf16.msra.mxu0 %v3315
        %5095 = vmatprep.subr.bf16.mxu0 %v3300
        %5096 = vmatpush2.bf16.msra.mxu0 %v3299
        %5097 = vmatprep.subr.bf16.mxu0 %v3284
        %5098 = vmatpush2.bf16.msra.mxu0 %v3283
        %5099 = vmatprep.mubr.bf16.mxu0 %v959
        %5100 = vmatmul.mubr.bf16.gmra.mxu0 %v958
        %v5101 = vpop.f32.mrf.mxu0
        %v5102 = vadd.f32 %v5061, %v5101
        %v5103 = vpop.f32.mrf.mxu0
        %v5104 = vadd.f32 %v5063, %v5103
        %v5105 = vpop.f32.mrf.mxu0
        %v5106 = vpop.f32.mrf.mxu0
        %5107 = vdwg.mxu0
        %5108 = vmatprep.subr.bf16.mxu0 %v3524
        %5109 = vmatpush1.bf16.msra.mxu0 %v3523
        %5110 = vmatprep.subr.bf16.mxu0 %v3508
        %5111 = vmatpush1.bf16.msra.mxu0 %v3507
        %5112 = vmatprep.subr.bf16.mxu0 %v3492
        %5113 = vmatpush1.bf16.msra.mxu0 %v3491
        %5114 = vmatprep.subr.bf16.mxu0 %v3476
        %5115 = vmatpush1.bf16.msra.mxu0 %v3475
        %5116 = vmatprep.subr.bf16.mxu0 %v3460
        %5117 = vmatpush1.bf16.msra.mxu0 %v3459
        %5118 = vmatprep.subr.bf16.mxu0 %v3444
        %5119 = vmatpush1.bf16.msra.mxu0 %v3443
        %5120 = vmatprep.subr.bf16.mxu0 %v3428
        %5121 = vmatpush1.bf16.msra.mxu0 %v3427
        %5122 = vmatprep.subr.bf16.mxu0 %v3412
        %5123 = vmatpush1.bf16.msra.mxu0 %v3411
        %5124 = vmatprep.subr.bf16.mxu0 0
        %5125 = vmatpush2.bf16.msra.mxu0 0
        %5126 = vmatprep.subr.bf16.mxu0 0
        %5127 = vmatpush2.bf16.msra.mxu0 0
        %5128 = vmatprep.subr.bf16.mxu0 0
        %5129 = vmatpush2.bf16.msra.mxu0 0
        %5130 = vmatprep.subr.bf16.mxu0 0
        %5131 = vmatpush2.bf16.msra.mxu0 0
        %5132 = vmatprep.subr.bf16.mxu0 0
        %5133 = vmatpush2.bf16.msra.mxu0 0
        %5134 = vmatprep.subr.bf16.mxu0 0
        %5135 = vmatpush2.bf16.msra.mxu0 0
        %5136 = vmatprep.subr.bf16.mxu0 0
        %5137 = vmatpush2.bf16.msra.mxu0 0
        %5138 = vmatprep.subr.bf16.mxu0 0
        %5139 = vmatpush2.bf16.msra.mxu0 0
        %5140 = vmatprep.mubr.bf16.mxu0 0
        %5141 = vmatmul.mubr.bf16.gmra.mxu0 %v950
        %v5142 = vpop.f32.mrf.mxu0
        %v5143 = vadd.f32 %v5102, %v5142
        %v5144 = vpop.f32.mrf.mxu0
        %v5145 = vadd.f32 %v5104, %v5144
        %v5146 = vpop.f32.mrf.mxu0
        %v5147 = vpop.f32.mrf.mxu0
        %5148 = vdwg.mxu0
        %v5165 = vcombine.low %v4282, %v4284
        %v5166 = vcombine.low %v4405, %v4407
        %v5168 = vunpack.c.l.s4 1983009808
        %v5169 = vunpack.c.0.s8 %v5168
        %v5170 = vlaneseq
        %v5171 = vshrl.u32 %v5170, 7
        %v5172 = vsub.s32 %v5169, %v5171
        %v5173 = vrot.slane %v5165, %v5172
        %v5175 = vunpack.c.l.s4 1983009808
        %v5176 = vunpack.c.0.s8 %v5175
        %v5177 = vlaneseq
        %v5178 = vshrl.u32 %v5177, 7
        %v5179 = vsub.s32 %v5176, %v5178
        %v5180 = vrot.slane %v5166, %v5179
        %v5181 = vcombine.low %v5173, %v5180
        %v5182 = vcombine.low %v4528, %v4530
        %v5183 = vcombine.low %v4651, %v4653
        %v5185 = vunpack.c.l.s4 1983009808
        %v5186 = vunpack.c.0.s8 %v5185
        %v5187 = vlaneseq
        %v5188 = vshrl.u32 %v5187, 7
        %v5189 = vsub.s32 %v5186, %v5188
        %v5190 = vrot.slane %v5182, %v5189
        %v5192 = vunpack.c.l.s4 1983009808
        %v5193 = vunpack.c.0.s8 %v5192
        %v5194 = vlaneseq
        %v5195 = vshrl.u32 %v5194, 7
        %v5196 = vsub.s32 %v5193, %v5195
        %v5197 = vrot.slane %v5183, %v5196
        %v5198 = vcombine.low %v5190, %v5197
        %v5199 = vcombine.low %v4774, %v4776
        %v5200 = vcombine.low %v4897, %v4899
        %v5202 = vunpack.c.l.s4 1983009808
        %v5203 = vunpack.c.0.s8 %v5202
        %v5204 = vlaneseq
        %v5205 = vshrl.u32 %v5204, 7
        %v5206 = vsub.s32 %v5203, %v5205
        %v5207 = vrot.slane %v5199, %v5206
        %v5209 = vunpack.c.l.s4 1983009808
        %v5210 = vunpack.c.0.s8 %v5209
        %v5211 = vlaneseq
        %v5212 = vshrl.u32 %v5211, 7
        %v5213 = vsub.s32 %v5210, %v5212
        %v5214 = vrot.slane %v5200, %v5213
        %v5215 = vcombine.low %v5207, %v5214
        %v5216 = vcombine.low %v5020, %v5022
        %v5217 = vcombine.low %v5143, %v5145
        %v5219 = vunpack.c.l.s4 1983009808
        %v5220 = vunpack.c.0.s8 %v5219
        %v5221 = vlaneseq
        %v5222 = vshrl.u32 %v5221, 7
        %v5223 = vsub.s32 %v5220, %v5222
        %v5224 = vrot.slane %v5216, %v5223
        %v5226 = vunpack.c.l.s4 1983009808
        %v5227 = vunpack.c.0.s8 %v5226
        %v5228 = vlaneseq
        %v5229 = vshrl.u32 %v5228, 7
        %v5230 = vsub.s32 %v5227, %v5229
        %v5231 = vrot.slane %v5217, %v5230
        %v5232 = vcombine.low %v5224, %v5231
        %v5237 = vadd.f32 %v275, %v5181
        %v5238 = vadd.f32 %v276, %v5198
        %v5239 = vadd.f32 %v277, %v5215
        %v5240 = vadd.f32 %v278, %v5232
        %5241 = vst [vmem:[#allocation2] sm:$0xff] %v5237
        %5242 = vst [vmem:[#allocation2 + $0x8] sm:$0xff] %v5238
        %5243 = vst [vmem:[#allocation2 + $0x10] sm:$0xff] %v5239
        %5244 = vst [vmem:[#allocation2 + $0x18] sm:$0xff] %v5240
        %p5245 = scmp.eq.s32.totalorder %s22, 4
        // Predicated region
        $region45: #{net_forward.5} parent=39 // pred_check
          %p5246 = pneg %p5245
        $region46: #{net_forward.5} parent=39 // pred_check_branch
          %5248 = sbr.rel (%p5246) target = $region48
        $region47: #{net_forward.5} parent=39 // pred_region
          %v5249 = vld [vmem:[#allocation2] sm:$0xff]
          %v5250 = vld [vmem:[#allocation2 + $0x8] sm:$0xff]
          %v5251 = vld [vmem:[#allocation2 + $0x10] sm:$0xff]
          %v5252 = vld [vmem:[#allocation2 + $0x18] sm:$0xff]
          %v5253 = vld [vmem:[%s2] sm:$0xff]
          %v5254 = vld [vmem:[%s2 + $0x8] sm:$0xff]
          %v5257 = vlaneseq
          %v5258 = vshrl.u32 %v5257, 7
          %v5259 = vsub.s32 0, %v5258
          %v5260 = vrot.slane %v5253, %v5259
          %v5261 = vlaneseq
          %v5262 = vshrl.u32 %v5261, 7
          %v5263 = vsub.s32 1, %v5262
          %v5264 = vrot.slane %v5253, %v5263
          %v5265 = vlaneseq
          %v5266 = vshrl.u32 %v5265, 7
          %v5267 = vsub.s32 2, %v5266
          %v5268 = vrot.slane %v5253, %v5267
          %v5269 = vlaneseq
          %v5270 = vshrl.u32 %v5269, 7
          %v5271 = vsub.s32 3, %v5270
          %v5272 = vrot.slane %v5253, %v5271
          %v5273 = vlaneseq
          %v5274 = vshrl.u32 %v5273, 7
          %v5275 = vsub.s32 4, %v5274
          %v5276 = vrot.slane %v5253, %v5275
          %v5277 = vlaneseq
          %v5278 = vshrl.u32 %v5277, 7
          %v5279 = vsub.s32 5, %v5278
          %v5280 = vrot.slane %v5253, %v5279
          %v5281 = vlaneseq
          %v5282 = vshrl.u32 %v5281, 7
          %v5283 = vsub.s32 6, %v5282
          %v5284 = vrot.slane %v5253, %v5283
          %v5285 = vlaneseq
          %v5286 = vshrl.u32 %v5285, 7
          %v5287 = vsub.s32 7, %v5286
          %v5288 = vrot.slane %v5253, %v5287
          %v5289 = vlaneseq
          %v5290 = vshrl.u32 %v5289, 7
          %v5291 = vsub.s32 0, %v5290
          %v5292 = vrot.slane %v5254, %v5291
          %v5293 = vlaneseq
          %v5294 = vshrl.u32 %v5293, 7
          %v5295 = vsub.s32 1, %v5294
          %v5296 = vrot.slane %v5254, %v5295
          %v5297 = vlaneseq
          %v5298 = vshrl.u32 %v5297, 7
          %v5299 = vsub.s32 2, %v5298
          %v5300 = vrot.slane %v5254, %v5299
          %v5301 = vlaneseq
          %v5302 = vshrl.u32 %v5301, 7
          %v5303 = vsub.s32 3, %v5302
          %v5304 = vrot.slane %v5254, %v5303
          %v5305 = vlaneseq
          %v5306 = vshrl.u32 %v5305, 7
          %v5307 = vsub.s32 4, %v5306
          %v5308 = vrot.slane %v5254, %v5307
          %v5309 = vlaneseq
          %v5310 = vshrl.u32 %v5309, 7
          %v5311 = vsub.s32 5, %v5310
          %v5312 = vrot.slane %v5254, %v5311
          %v5313 = vlaneseq
          %v5314 = vshrl.u32 %v5313, 7
          %v5315 = vsub.s32 6, %v5314
          %v5316 = vrot.slane %v5254, %v5315
          %v5317 = vlaneseq
          %v5318 = vshrl.u32 %v5317, 7
          %v5319 = vsub.s32 7, %v5318
          %v5320 = vrot.slane %v5254, %v5319
          %v5321 = vcombine.low %v5260, %v5264
          %v5322 = vcombine.low %v5268, %v5272
          %v5324 = vunpack.c.l.s4 1983009808
          %v5325 = vunpack.c.0.s8 %v5324
          %v5326 = vlaneseq
          %v5327 = vshrl.u32 %v5326, 7
          %v5328 = vsub.s32 %v5325, %v5327
          %v5329 = vrot.slane %v5321, %v5328
          %v5331 = vunpack.c.l.s4 1983009808
          %v5332 = vunpack.c.0.s8 %v5331
          %v5333 = vlaneseq
          %v5334 = vshrl.u32 %v5333, 7
          %v5335 = vsub.s32 %v5332, %v5334
          %v5336 = vrot.slane %v5322, %v5335
          %v5337 = vcombine.low %v5329, %v5336
          %v5338 = vcombine.low %v5276, %v5280
          %v5339 = vcombine.low %v5284, %v5288
          %v5341 = vunpack.c.l.s4 1983009808
          %v5342 = vunpack.c.0.s8 %v5341
          %v5343 = vlaneseq
          %v5344 = vshrl.u32 %v5343, 7
          %v5345 = vsub.s32 %v5342, %v5344
          %v5346 = vrot.slane %v5338, %v5345
          %v5348 = vunpack.c.l.s4 1983009808
          %v5349 = vunpack.c.0.s8 %v5348
          %v5350 = vlaneseq
          %v5351 = vshrl.u32 %v5350, 7
          %v5352 = vsub.s32 %v5349, %v5351
          %v5353 = vrot.slane %v5339, %v5352
          %v5354 = vcombine.low %v5346, %v5353
          %v5355 = vcombine.low %v5292, %v5296
          %v5356 = vcombine.low %v5300, %v5304
          %v5358 = vunpack.c.l.s4 1983009808
          %v5359 = vunpack.c.0.s8 %v5358
          %v5360 = vlaneseq
          %v5361 = vshrl.u32 %v5360, 7
          %v5362 = vsub.s32 %v5359, %v5361
          %v5363 = vrot.slane %v5355, %v5362
          %v5365 = vunpack.c.l.s4 1983009808
          %v5366 = vunpack.c.0.s8 %v5365
          %v5367 = vlaneseq
          %v5368 = vshrl.u32 %v5367, 7
          %v5369 = vsub.s32 %v5366, %v5368
          %v5370 = vrot.slane %v5356, %v5369
          %v5371 = vcombine.low %v5363, %v5370
          %v5372 = vcombine.low %v5308, %v5312
          %v5373 = vcombine.low %v5316, %v5320
          %v5375 = vunpack.c.l.s4 1983009808
          %v5376 = vunpack.c.0.s8 %v5375
          %v5377 = vlaneseq
          %v5378 = vshrl.u32 %v5377, 7
          %v5379 = vsub.s32 %v5376, %v5378
          %v5380 = vrot.slane %v5372, %v5379
          %v5382 = vunpack.c.l.s4 1983009808
          %v5383 = vunpack.c.0.s8 %v5382
          %v5384 = vlaneseq
          %v5385 = vshrl.u32 %v5384, 7
          %v5386 = vsub.s32 %v5383, %v5385
          %v5387 = vrot.slane %v5373, %v5386
          %v5388 = vcombine.low %v5380, %v5387
          %v5393 = vadd.f32 %v5249, %v5337
          %v5394 = vadd.f32 %v5250, %v5354
          %v5395 = vadd.f32 %v5251, %v5371
          %v5396 = vadd.f32 %v5252, %v5388
          %v5397 = vmax.f32 %v5393, 0.0
          %v5398 = vmax.f32 %v5394, 0.0
          %v5399 = vmax.f32 %v5395, 0.0
          %v5400 = vmax.f32 %v5396, 0.0
          %v5405 = vcombine.high %v5397, %v5397
          %v5407 = vunpack.c.l.s4 1983009808
          %v5408 = vunpack.c.0.s8 %v5407
          %v5409 = vlaneseq
          %v5410 = vshrl.u32 %v5409, 7
          %v5411 = vsub.s32 %v5408, %v5410
          %v5412 = vrot.slane %v5397, %v5411
          %v5414 = vunpack.c.l.s4 1983009808
          %v5415 = vunpack.c.0.s8 %v5414
          %v5416 = vlaneseq
          %v5417 = vshrl.u32 %v5416, 7
          %v5418 = vsub.s32 %v5415, %v5417
          %v5419 = vrot.slane %v5405, %v5418
          %v5420 = vcombine.high %v5412, %v5412
          %v5421 = vcombine.high %v5419, %v5419
          %v5422 = vcombine.high %v5398, %v5398
          %v5424 = vunpack.c.l.s4 1983009808
          %v5425 = vunpack.c.0.s8 %v5424
          %v5426 = vlaneseq
          %v5427 = vshrl.u32 %v5426, 7
          %v5428 = vsub.s32 %v5425, %v5427
          %v5429 = vrot.slane %v5398, %v5428
          %v5431 = vunpack.c.l.s4 1983009808
          %v5432 = vunpack.c.0.s8 %v5431
          %v5433 = vlaneseq
          %v5434 = vshrl.u32 %v5433, 7
          %v5435 = vsub.s32 %v5432, %v5434
          %v5436 = vrot.slane %v5422, %v5435
          %v5437 = vcombine.high %v5429, %v5429
          %v5438 = vcombine.high %v5436, %v5436
          %v5439 = vcombine.high %v5399, %v5399
          %v5441 = vunpack.c.l.s4 1983009808
          %v5442 = vunpack.c.0.s8 %v5441
          %v5443 = vlaneseq
          %v5444 = vshrl.u32 %v5443, 7
          %v5445 = vsub.s32 %v5442, %v5444
          %v5446 = vrot.slane %v5399, %v5445
          %v5448 = vunpack.c.l.s4 1983009808
          %v5449 = vunpack.c.0.s8 %v5448
          %v5450 = vlaneseq
          %v5451 = vshrl.u32 %v5450, 7
          %v5452 = vsub.s32 %v5449, %v5451
          %v5453 = vrot.slane %v5439, %v5452
          %v5454 = vcombine.high %v5446, %v5446
          %v5455 = vcombine.high %v5453, %v5453
          %v5456 = vcombine.high %v5400, %v5400
          %v5458 = vunpack.c.l.s4 1983009808
          %v5459 = vunpack.c.0.s8 %v5458
          %v5460 = vlaneseq
          %v5461 = vshrl.u32 %v5460, 7
          %v5462 = vsub.s32 %v5459, %v5461
          %v5463 = vrot.slane %v5400, %v5462
          %v5465 = vunpack.c.l.s4 1983009808
          %v5466 = vunpack.c.0.s8 %v5465
          %v5467 = vlaneseq
          %v5468 = vshrl.u32 %v5467, 7
          %v5469 = vsub.s32 %v5466, %v5468
          %v5470 = vrot.slane %v5456, %v5469
          %v5471 = vcombine.high %v5463, %v5463
          %v5472 = vcombine.high %v5470, %v5470
          %v5489 = vpack.c.bf16 %v5412, %v5412
          %v5490 = vpack.c.bf16 %v5420, %v5420
          %v5491 = vpack.c.bf16 %v5419, %v5419
          %v5492 = vpack.c.bf16 %v5421, %v5421
          %v5493 = vpack.c.bf16 %v5429, %v5429
          %v5494 = vpack.c.bf16 %v5437, %v5437
          %v5495 = vpack.c.bf16 %v5436, %v5436
          %v5496 = vpack.c.bf16 %v5438, %v5438
          %v5497 = vpack.c.bf16 %v5446, %v5446
          %v5498 = vpack.c.bf16 %v5454, %v5454
          %v5499 = vpack.c.bf16 %v5453, %v5453
          %v5500 = vpack.c.bf16 %v5455, %v5455
          %v5501 = vpack.c.bf16 %v5463, %v5463
          %v5502 = vpack.c.bf16 %v5471, %v5471
          %v5503 = vpack.c.bf16 %v5470, %v5470
          %v5504 = vpack.c.bf16 %v5472, %v5472
          %v5505 = vld [vmem:[%s3] sm:$0xf]
          %v5506 = vld [vmem:[%s3 + $0x4] sm:$0xf]
          %v5507 = vld [vmem:[%s3 + $0x8] sm:$0xf]
          %v5508 = vld [vmem:[%s3 + $0xc] sm:$0xf]
          %v5509 = vld [vmem:[%s3 + $0x10] sm:$0xf]
          %v5510 = vld [vmem:[%s3 + $0x14] sm:$0xf]
          %v5511 = vld [vmem:[%s3 + $0x18] sm:$0xf]
          %v5512 = vld [vmem:[%s3 + $0x1c] sm:$0xf]
          %v5513 = vld [vmem:[%s3 + $0x20] sm:$0xf]
          %v5514 = vld [vmem:[%s3 + $0x24] sm:$0xf]
          %v5515 = vld [vmem:[%s3 + $0x28] sm:$0xf]
          %v5516 = vld [vmem:[%s3 + $0x2c] sm:$0xf]
          %v5517 = vld [vmem:[%s3 + $0x30] sm:$0xf]
          %v5518 = vld [vmem:[%s3 + $0x34] sm:$0xf]
          %v5519 = vld [vmem:[%s3 + $0x38] sm:$0xf]
          %v5520 = vld [vmem:[%s3 + $0x3c] sm:$0xf]
          %v5521 = vld [vmem:[%s3 + $0x40] sm:$0xf]
          %v5522 = vld [vmem:[%s3 + $0x44] sm:$0xf]
          %v5523 = vld [vmem:[%s3 + $0x48] sm:$0xf]
          %v5524 = vld [vmem:[%s3 + $0x4c] sm:$0xf]
          %v5525 = vld [vmem:[%s3 + $0x50] sm:$0xf]
          %v5526 = vld [vmem:[%s3 + $0x54] sm:$0xf]
          %v5527 = vld [vmem:[%s3 + $0x58] sm:$0xf]
          %v5528 = vld [vmem:[%s3 + $0x5c] sm:$0xf]
          %v5529 = vld [vmem:[%s3 + $0x60] sm:$0xf]
          %v5530 = vld [vmem:[%s3 + $0x64] sm:$0xf]
          %v5531 = vld [vmem:[%s3 + $0x68] sm:$0xf]
          %v5532 = vld [vmem:[%s3 + $0x6c] sm:$0xf]
          %v5533 = vld [vmem:[%s3 + $0x70] sm:$0xf]
          %v5534 = vld [vmem:[%s3 + $0x74] sm:$0xf]
          %v5535 = vld [vmem:[%s3 + $0x78] sm:$0xf]
          %v5536 = vld [vmem:[%s3 + $0x7c] sm:$0xf]
          %v5537 = vld [vmem:[%s3 + $0x80] sm:$0xf]
          %v5538 = vld [vmem:[%s3 + $0x84] sm:$0xf]
          %v5539 = vld [vmem:[%s3 + $0x88] sm:$0xf]
          %v5540 = vld [vmem:[%s3 + $0x8c] sm:$0xf]
          %v5541 = vld [vmem:[%s3 + $0x90] sm:$0xf]
          %v5542 = vld [vmem:[%s3 + $0x94] sm:$0xf]
          %v5543 = vld [vmem:[%s3 + $0x98] sm:$0xf]
          %v5544 = vld [vmem:[%s3 + $0x9c] sm:$0xf]
          %v5545 = vld [vmem:[%s3 + $0xa0] sm:$0xf]
          %v5546 = vld [vmem:[%s3 + $0xa4] sm:$0xf]
          %v5547 = vld [vmem:[%s3 + $0xa8] sm:$0xf]
          %v5548 = vld [vmem:[%s3 + $0xac] sm:$0xf]
          %v5549 = vld [vmem:[%s3 + $0xb0] sm:$0xf]
          %v5550 = vld [vmem:[%s3 + $0xb4] sm:$0xf]
          %v5551 = vld [vmem:[%s3 + $0xb8] sm:$0xf]
          %v5552 = vld [vmem:[%s3 + $0xbc] sm:$0xf]
          %v5553 = vld [vmem:[%s3 + $0xc0] sm:$0xf]
          %v5554 = vld [vmem:[%s3 + $0xc4] sm:$0xf]
          %v5555 = vld [vmem:[%s3 + $0xc8] sm:$0xf]
          %v5556 = vld [vmem:[%s3 + $0xcc] sm:$0xf]
          %v5557 = vld [vmem:[%s3 + $0xd0] sm:$0xf]
          %v5558 = vld [vmem:[%s3 + $0xd4] sm:$0xf]
          %v5559 = vld [vmem:[%s3 + $0xd8] sm:$0xf]
          %v5560 = vld [vmem:[%s3 + $0xdc] sm:$0xf]
          %v5561 = vld [vmem:[%s3 + $0xe0] sm:$0xf]
          %v5562 = vld [vmem:[%s3 + $0xe4] sm:$0xf]
          %v5563 = vld [vmem:[%s3 + $0xe8] sm:$0xf]
          %v5564 = vld [vmem:[%s3 + $0xec] sm:$0xf]
          %v5565 = vld [vmem:[%s3 + $0xf0] sm:$0xf]
          %v5566 = vld [vmem:[%s3 + $0xf4] sm:$0xf]
          %v5567 = vld [vmem:[%s3 + $0xf8] sm:$0xf]
          %v5568 = vld [vmem:[%s3 + $0xfc] sm:$0xf]
          %v5569 = vld [vmem:[%s3 + $0x100] sm:$0xf]
          %v5570 = vld [vmem:[%s3 + $0x104] sm:$0xf]
          %v5571 = vld [vmem:[%s3 + $0x108] sm:$0xf]
          %v5572 = vld [vmem:[%s3 + $0x10c] sm:$0xf]
          %v5573 = vld [vmem:[%s3 + $0x110] sm:$0xf]
          %v5574 = vld [vmem:[%s3 + $0x114] sm:$0xf]
          %v5575 = vld [vmem:[%s3 + $0x118] sm:$0xf]
          %v5576 = vld [vmem:[%s3 + $0x11c] sm:$0xf]
          %v5577 = vld [vmem:[%s3 + $0x120] sm:$0xf]
          %v5578 = vld [vmem:[%s3 + $0x124] sm:$0xf]
          %v5579 = vld [vmem:[%s3 + $0x128] sm:$0xf]
          %v5580 = vld [vmem:[%s3 + $0x12c] sm:$0xf]
          %v5581 = vld [vmem:[%s3 + $0x130] sm:$0xf]
          %v5582 = vld [vmem:[%s3 + $0x134] sm:$0xf]
          %v5583 = vld [vmem:[%s3 + $0x138] sm:$0xf]
          %v5584 = vld [vmem:[%s3 + $0x13c] sm:$0xf]
          %v5585 = vld [vmem:[%s3 + $0x140] sm:$0xf]
          %v5586 = vld [vmem:[%s3 + $0x144] sm:$0xf]
          %v5587 = vld [vmem:[%s3 + $0x148] sm:$0xf]
          %v5588 = vld [vmem:[%s3 + $0x14c] sm:$0xf]
          %v5589 = vld [vmem:[%s3 + $0x150] sm:$0xf]
          %v5590 = vld [vmem:[%s3 + $0x154] sm:$0xf]
          %v5591 = vld [vmem:[%s3 + $0x158] sm:$0xf]
          %v5592 = vld [vmem:[%s3 + $0x15c] sm:$0xf]
          %v5593 = vld [vmem:[%s3 + $0x160] sm:$0xf]
          %v5594 = vld [vmem:[%s3 + $0x164] sm:$0xf]
          %v5595 = vld [vmem:[%s3 + $0x168] sm:$0xf]
          %v5596 = vld [vmem:[%s3 + $0x16c] sm:$0xf]
          %v5597 = vld [vmem:[%s3 + $0x170] sm:$0xf]
          %v5598 = vld [vmem:[%s3 + $0x174] sm:$0xf]
          %v5599 = vld [vmem:[%s3 + $0x178] sm:$0xf]
          %v5600 = vld [vmem:[%s3 + $0x17c] sm:$0xf]
          %v5601 = vld [vmem:[%s3 + $0x180] sm:$0xf]
          %v5602 = vld [vmem:[%s3 + $0x184] sm:$0xf]
          %v5603 = vld [vmem:[%s3 + $0x188] sm:$0xf]
          %v5604 = vld [vmem:[%s3 + $0x18c] sm:$0xf]
          %v5605 = vld [vmem:[%s3 + $0x190] sm:$0xf]
          %v5606 = vld [vmem:[%s3 + $0x194] sm:$0xf]
          %v5607 = vld [vmem:[%s3 + $0x198] sm:$0xf]
          %v5608 = vld [vmem:[%s3 + $0x19c] sm:$0xf]
          %v5609 = vld [vmem:[%s3 + $0x1a0] sm:$0xf]
          %v5610 = vld [vmem:[%s3 + $0x1a4] sm:$0xf]
          %v5611 = vld [vmem:[%s3 + $0x1a8] sm:$0xf]
          %v5612 = vld [vmem:[%s3 + $0x1ac] sm:$0xf]
          %v5613 = vld [vmem:[%s3 + $0x1b0] sm:$0xf]
          %v5614 = vld [vmem:[%s3 + $0x1b4] sm:$0xf]
          %v5615 = vld [vmem:[%s3 + $0x1b8] sm:$0xf]
          %v5616 = vld [vmem:[%s3 + $0x1bc] sm:$0xf]
          %v5617 = vld [vmem:[%s3 + $0x1c0] sm:$0xf]
          %v5618 = vld [vmem:[%s3 + $0x1c4] sm:$0xf]
          %v5619 = vld [vmem:[%s3 + $0x1c8] sm:$0xf]
          %v5620 = vld [vmem:[%s3 + $0x1cc] sm:$0xf]
          %v5621 = vld [vmem:[%s3 + $0x1d0] sm:$0xf]
          %v5622 = vld [vmem:[%s3 + $0x1d4] sm:$0xf]
          %v5623 = vld [vmem:[%s3 + $0x1d8] sm:$0xf]
          %v5624 = vld [vmem:[%s3 + $0x1dc] sm:$0xf]
          %v5625 = vld [vmem:[%s3 + $0x1e0] sm:$0xf]
          %v5626 = vld [vmem:[%s3 + $0x1e4] sm:$0xf]
          %v5627 = vld [vmem:[%s3 + $0x1e8] sm:$0xf]
          %v5628 = vld [vmem:[%s3 + $0x1ec] sm:$0xf]
          %v5629 = vld [vmem:[%s3 + $0x1f0] sm:$0xf]
          %v5630 = vld [vmem:[%s3 + $0x1f4] sm:$0xf]
          %v5631 = vld [vmem:[%s3 + $0x1f8] sm:$0xf]
          %v5632 = vld [vmem:[%s3 + $0x1fc] sm:$0xf]
          %v5633 = vld [vmem:[%s3 + $0x200] sm:$0xf]
          %v5634 = vld [vmem:[%s3 + $0x204] sm:$0xf]
          %v5635 = vld [vmem:[%s3 + $0x208] sm:$0xf]
          %v5636 = vld [vmem:[%s3 + $0x20c] sm:$0xf]
          %v5637 = vld [vmem:[%s3 + $0x210] sm:$0xf]
          %v5638 = vld [vmem:[%s3 + $0x214] sm:$0xf]
          %v5639 = vld [vmem:[%s3 + $0x218] sm:$0xf]
          %v5640 = vld [vmem:[%s3 + $0x21c] sm:$0xf]
          %v5641 = vld [vmem:[%s3 + $0x220] sm:$0xf]
          %v5642 = vld [vmem:[%s3 + $0x224] sm:$0xf]
          %v5643 = vld [vmem:[%s3 + $0x228] sm:$0xf]
          %v5644 = vld [vmem:[%s3 + $0x22c] sm:$0xf]
          %v5645 = vld [vmem:[%s3 + $0x230] sm:$0xf]
          %v5646 = vld [vmem:[%s3 + $0x234] sm:$0xf]
          %v5647 = vld [vmem:[%s3 + $0x238] sm:$0xf]
          %v5648 = vld [vmem:[%s3 + $0x23c] sm:$0xf]
          %v5649 = vld [vmem:[%s3 + $0x240] sm:$0xf]
          %v5650 = vld [vmem:[%s3 + $0x244] sm:$0xf]
          %v5651 = vld [vmem:[%s3 + $0x248] sm:$0xf]
          %v5652 = vld [vmem:[%s3 + $0x24c] sm:$0xf]
          %v5653 = vld [vmem:[%s3 + $0x250] sm:$0xf]
          %v5654 = vld [vmem:[%s3 + $0x254] sm:$0xf]
          %v5655 = vld [vmem:[%s3 + $0x258] sm:$0xf]
          %v5656 = vld [vmem:[%s3 + $0x25c] sm:$0xf]
          %v5657 = vld [vmem:[%s3 + $0x260] sm:$0xf]
          %v5658 = vld [vmem:[%s3 + $0x264] sm:$0xf]
          %v5659 = vld [vmem:[%s3 + $0x268] sm:$0xf]
          %v5660 = vld [vmem:[%s3 + $0x26c] sm:$0xf]
          %v5661 = vld [vmem:[%s3 + $0x270] sm:$0xf]
          %v5662 = vld [vmem:[%s3 + $0x274] sm:$0xf]
          %v5663 = vld [vmem:[%s3 + $0x278] sm:$0xf]
          %v5664 = vld [vmem:[%s3 + $0x27c] sm:$0xf]
          %v5665 = vld [vmem:[%s3 + $0x280] sm:$0xf]
          %v5666 = vld [vmem:[%s3 + $0x284] sm:$0xf]
          %v5667 = vld [vmem:[%s3 + $0x288] sm:$0xf]
          %v5668 = vld [vmem:[%s3 + $0x28c] sm:$0xf]
          %v5669 = vld [vmem:[%s3 + $0x290] sm:$0xf]
          %v5670 = vld [vmem:[%s3 + $0x294] sm:$0xf]
          %v5671 = vld [vmem:[%s3 + $0x298] sm:$0xf]
          %v5672 = vld [vmem:[%s3 + $0x29c] sm:$0xf]
          %v5673 = vld [vmem:[%s3 + $0x2a0] sm:$0xf]
          %v5674 = vld [vmem:[%s3 + $0x2a4] sm:$0xf]
          %v5675 = vld [vmem:[%s3 + $0x2a8] sm:$0xf]
          %v5676 = vld [vmem:[%s3 + $0x2ac] sm:$0xf]
          %v5677 = vld [vmem:[%s3 + $0x2b0] sm:$0xf]
          %v5678 = vld [vmem:[%s3 + $0x2b4] sm:$0xf]
          %v5679 = vld [vmem:[%s3 + $0x2b8] sm:$0xf]
          %v5680 = vld [vmem:[%s3 + $0x2bc] sm:$0xf]
          %v5681 = vld [vmem:[%s3 + $0x2c0] sm:$0xf]
          %v5682 = vld [vmem:[%s3 + $0x2c4] sm:$0xf]
          %v5683 = vld [vmem:[%s3 + $0x2c8] sm:$0xf]
          %v5684 = vld [vmem:[%s3 + $0x2cc] sm:$0xf]
          %v5685 = vld [vmem:[%s3 + $0x2d0] sm:$0xf]
          %v5686 = vld [vmem:[%s3 + $0x2d4] sm:$0xf]
          %v5687 = vld [vmem:[%s3 + $0x2d8] sm:$0xf]
          %v5688 = vld [vmem:[%s3 + $0x2dc] sm:$0xf]
          %v5689 = vld [vmem:[%s3 + $0x2e0] sm:$0xf]
          %v5690 = vld [vmem:[%s3 + $0x2e4] sm:$0xf]
          %v5691 = vld [vmem:[%s3 + $0x2e8] sm:$0xf]
          %v5692 = vld [vmem:[%s3 + $0x2ec] sm:$0xf]
          %v5693 = vld [vmem:[%s3 + $0x2f0] sm:$0xf]
          %v5694 = vld [vmem:[%s3 + $0x2f4] sm:$0xf]
          %v5695 = vld [vmem:[%s3 + $0x2f8] sm:$0xf]
          %v5696 = vld [vmem:[%s3 + $0x2fc] sm:$0xf]
          %v5697 = vld [vmem:[%s3 + $0x300] sm:$0xf]
          %v5698 = vld [vmem:[%s3 + $0x304] sm:$0xf]
          %v5699 = vld [vmem:[%s3 + $0x308] sm:$0xf]
          %v5700 = vld [vmem:[%s3 + $0x30c] sm:$0xf]
          %v5701 = vld [vmem:[%s3 + $0x310] sm:$0xf]
          %v5702 = vld [vmem:[%s3 + $0x314] sm:$0xf]
          %v5703 = vld [vmem:[%s3 + $0x318] sm:$0xf]
          %v5704 = vld [vmem:[%s3 + $0x31c] sm:$0xf]
          %v5705 = vld [vmem:[%s3 + $0x320] sm:$0xf]
          %v5706 = vld [vmem:[%s3 + $0x324] sm:$0xf]
          %v5707 = vld [vmem:[%s3 + $0x328] sm:$0xf]
          %v5708 = vld [vmem:[%s3 + $0x32c] sm:$0xf]
          %v5709 = vld [vmem:[%s3 + $0x330] sm:$0xf]
          %v5710 = vld [vmem:[%s3 + $0x334] sm:$0xf]
          %v5711 = vld [vmem:[%s3 + $0x338] sm:$0xf]
          %v5712 = vld [vmem:[%s3 + $0x33c] sm:$0xf]
          %v5713 = vld [vmem:[%s3 + $0x340] sm:$0xf]
          %v5714 = vld [vmem:[%s3 + $0x344] sm:$0xf]
          %v5715 = vld [vmem:[%s3 + $0x348] sm:$0xf]
          %v5716 = vld [vmem:[%s3 + $0x34c] sm:$0xf]
          %v5717 = vld [vmem:[%s3 + $0x350] sm:$0xf]
          %v5718 = vld [vmem:[%s3 + $0x354] sm:$0xf]
          %v5719 = vld [vmem:[%s3 + $0x358] sm:$0xf]
          %v5720 = vld [vmem:[%s3 + $0x35c] sm:$0xf]
          %v5721 = vld [vmem:[%s3 + $0x360] sm:$0xf]
          %v5722 = vld [vmem:[%s3 + $0x364] sm:$0xf]
          %v5723 = vld [vmem:[%s3 + $0x368] sm:$0xf]
          %v5724 = vld [vmem:[%s3 + $0x36c] sm:$0xf]
          %v5725 = vld [vmem:[%s3 + $0x370] sm:$0xf]
          %v5726 = vld [vmem:[%s3 + $0x374] sm:$0xf]
          %v5727 = vld [vmem:[%s3 + $0x378] sm:$0xf]
          %v5728 = vld [vmem:[%s3 + $0x37c] sm:$0xf]
          %v5729 = vld [vmem:[%s3 + $0x380] sm:$0xf]
          %v5730 = vld [vmem:[%s3 + $0x384] sm:$0xf]
          %v5731 = vld [vmem:[%s3 + $0x388] sm:$0xf]
          %v5732 = vld [vmem:[%s3 + $0x38c] sm:$0xf]
          %v5733 = vld [vmem:[%s3 + $0x390] sm:$0xf]
          %v5734 = vld [vmem:[%s3 + $0x394] sm:$0xf]
          %v5735 = vld [vmem:[%s3 + $0x398] sm:$0xf]
          %v5736 = vld [vmem:[%s3 + $0x39c] sm:$0xf]
          %v5737 = vld [vmem:[%s3 + $0x3a0] sm:$0xf]
          %v5738 = vld [vmem:[%s3 + $0x3a4] sm:$0xf]
          %v5739 = vld [vmem:[%s3 + $0x3a8] sm:$0xf]
          %v5740 = vld [vmem:[%s3 + $0x3ac] sm:$0xf]
          %v5741 = vld [vmem:[%s3 + $0x3b0] sm:$0xf]
          %v5742 = vld [vmem:[%s3 + $0x3b4] sm:$0xf]
          %v5743 = vld [vmem:[%s3 + $0x3b8] sm:$0xf]
          %v5744 = vld [vmem:[%s3 + $0x3bc] sm:$0xf]
          %v5745 = vld [vmem:[%s3 + $0x3c0] sm:$0xf]
          %v5746 = vld [vmem:[%s3 + $0x3c4] sm:$0xf]
          %v5747 = vld [vmem:[%s3 + $0x3c8] sm:$0xf]
          %v5748 = vld [vmem:[%s3 + $0x3cc] sm:$0xf]
          %v5749 = vld [vmem:[%s3 + $0x3d0] sm:$0xf]
          %v5750 = vld [vmem:[%s3 + $0x3d4] sm:$0xf]
          %v5751 = vld [vmem:[%s3 + $0x3d8] sm:$0xf]
          %v5752 = vld [vmem:[%s3 + $0x3dc] sm:$0xf]
          %v5753 = vld [vmem:[%s3 + $0x3e0] sm:$0xf]
          %v5754 = vld [vmem:[%s3 + $0x3e4] sm:$0xf]
          %v5755 = vld [vmem:[%s3 + $0x3e8] sm:$0xf]
          %v5756 = vld [vmem:[%s3 + $0x3ec] sm:$0xf]
          %v5757 = vld [vmem:[%s3 + $0x3f0] sm:$0xf]
          %v5758 = vld [vmem:[%s3 + $0x3f4] sm:$0xf]
          %v5759 = vld [vmem:[%s3 + $0x3f8] sm:$0xf]
          %v5760 = vld [vmem:[%s3 + $0x3fc] sm:$0xf]
          %v5761 = vld [vmem:[%s4] sm:$0x1]
          %v5763 = vlaneseq
          %v5764 = vshrl.u32 %v5763, 7
          %v5765 = vsub.s32 0, %v5764
          %v5766 = vrot.slane %v5761, %v5765
          %v6024 = vunpack.c.l.b16 %v5505
          %v6025 = vunpack.c.l.b16 %v5506
          %v6026 = vunpack.c.l.b16 %v5507
          %v6027 = vunpack.c.l.b16 %v5508
          %v6028 = vunpack.c.l.b16 %v5509
          %v6029 = vunpack.c.l.b16 %v5510
          %v6030 = vunpack.c.l.b16 %v5511
          %v6031 = vunpack.c.l.b16 %v5512
          %v6032 = vunpack.c.l.b16 %v5513
          %v6033 = vunpack.c.l.b16 %v5514
          %v6034 = vunpack.c.l.b16 %v5515
          %v6035 = vunpack.c.l.b16 %v5516
          %v6036 = vunpack.c.l.b16 %v5517
          %v6037 = vunpack.c.l.b16 %v5518
          %v6038 = vunpack.c.l.b16 %v5519
          %v6039 = vunpack.c.l.b16 %v5520
          %v6040 = vunpack.c.l.b16 %v5521
          %v6041 = vunpack.c.l.b16 %v5522
          %v6042 = vunpack.c.l.b16 %v5523
          %v6043 = vunpack.c.l.b16 %v5524
          %v6044 = vunpack.c.l.b16 %v5525
          %v6045 = vunpack.c.l.b16 %v5526
          %v6046 = vunpack.c.l.b16 %v5527
          %v6047 = vunpack.c.l.b16 %v5528
          %v6048 = vunpack.c.l.b16 %v5529
          %v6049 = vunpack.c.l.b16 %v5530
          %v6050 = vunpack.c.l.b16 %v5531
          %v6051 = vunpack.c.l.b16 %v5532
          %v6052 = vunpack.c.l.b16 %v5533
          %v6053 = vunpack.c.l.b16 %v5534
          %v6054 = vunpack.c.l.b16 %v5535
          %v6055 = vunpack.c.l.b16 %v5536
          %v6056 = vunpack.c.l.b16 %v5537
          %v6057 = vunpack.c.l.b16 %v5538
          %v6058 = vunpack.c.l.b16 %v5539
          %v6059 = vunpack.c.l.b16 %v5540
          %v6060 = vunpack.c.l.b16 %v5541
          %v6061 = vunpack.c.l.b16 %v5542
          %v6062 = vunpack.c.l.b16 %v5543
          %v6063 = vunpack.c.l.b16 %v5544
          %v6064 = vunpack.c.l.b16 %v5545
          %v6065 = vunpack.c.l.b16 %v5546
          %v6066 = vunpack.c.l.b16 %v5547
          %v6067 = vunpack.c.l.b16 %v5548
          %v6068 = vunpack.c.l.b16 %v5549
          %v6069 = vunpack.c.l.b16 %v5550
          %v6070 = vunpack.c.l.b16 %v5551
          %v6071 = vunpack.c.l.b16 %v5552
          %v6072 = vunpack.c.l.b16 %v5553
          %v6073 = vunpack.c.l.b16 %v5554
          %v6074 = vunpack.c.l.b16 %v5555
          %v6075 = vunpack.c.l.b16 %v5556
          %v6076 = vunpack.c.l.b16 %v5557
          %v6077 = vunpack.c.l.b16 %v5558
          %v6078 = vunpack.c.l.b16 %v5559
          %v6079 = vunpack.c.l.b16 %v5560
          %v6080 = vunpack.c.l.b16 %v5561
          %v6081 = vunpack.c.l.b16 %v5562
          %v6082 = vunpack.c.l.b16 %v5563
          %v6083 = vunpack.c.l.b16 %v5564
          %v6084 = vunpack.c.l.b16 %v5565
          %v6085 = vunpack.c.l.b16 %v5566
          %v6086 = vunpack.c.l.b16 %v5567
          %v6087 = vunpack.c.l.b16 %v5568
          %v6088 = vunpack.c.l.b16 %v5569
          %v6089 = vunpack.c.l.b16 %v5570
          %v6090 = vunpack.c.l.b16 %v5571
          %v6091 = vunpack.c.l.b16 %v5572
          %v6092 = vunpack.c.l.b16 %v5573
          %v6093 = vunpack.c.l.b16 %v5574
          %v6094 = vunpack.c.l.b16 %v5575
          %v6095 = vunpack.c.l.b16 %v5576
          %v6096 = vunpack.c.l.b16 %v5577
          %v6097 = vunpack.c.l.b16 %v5578
          %v6098 = vunpack.c.l.b16 %v5579
          %v6099 = vunpack.c.l.b16 %v5580
          %v6100 = vunpack.c.l.b16 %v5581
          %v6101 = vunpack.c.l.b16 %v5582
          %v6102 = vunpack.c.l.b16 %v5583
          %v6103 = vunpack.c.l.b16 %v5584
          %v6104 = vunpack.c.l.b16 %v5585
          %v6105 = vunpack.c.l.b16 %v5586
          %v6106 = vunpack.c.l.b16 %v5587
          %v6107 = vunpack.c.l.b16 %v5588
          %v6108 = vunpack.c.l.b16 %v5589
          %v6109 = vunpack.c.l.b16 %v5590
          %v6110 = vunpack.c.l.b16 %v5591
          %v6111 = vunpack.c.l.b16 %v5592
          %v6112 = vunpack.c.l.b16 %v5593
          %v6113 = vunpack.c.l.b16 %v5594
          %v6114 = vunpack.c.l.b16 %v5595
          %v6115 = vunpack.c.l.b16 %v5596
          %v6116 = vunpack.c.l.b16 %v5597
          %v6117 = vunpack.c.l.b16 %v5598
          %v6118 = vunpack.c.l.b16 %v5599
          %v6119 = vunpack.c.l.b16 %v5600
          %v6120 = vunpack.c.l.b16 %v5601
          %v6121 = vunpack.c.l.b16 %v5602
          %v6122 = vunpack.c.l.b16 %v5603
          %v6123 = vunpack.c.l.b16 %v5604
          %v6124 = vunpack.c.l.b16 %v5605
          %v6125 = vunpack.c.l.b16 %v5606
          %v6126 = vunpack.c.l.b16 %v5607
          %v6127 = vunpack.c.l.b16 %v5608
          %v6128 = vunpack.c.l.b16 %v5609
          %v6129 = vunpack.c.l.b16 %v5610
          %v6130 = vunpack.c.l.b16 %v5611
          %v6131 = vunpack.c.l.b16 %v5612
          %v6132 = vunpack.c.l.b16 %v5613
          %v6133 = vunpack.c.l.b16 %v5614
          %v6134 = vunpack.c.l.b16 %v5615
          %v6135 = vunpack.c.l.b16 %v5616
          %v6136 = vunpack.c.l.b16 %v5617
          %v6137 = vunpack.c.l.b16 %v5618
          %v6138 = vunpack.c.l.b16 %v5619
          %v6139 = vunpack.c.l.b16 %v5620
          %v6140 = vunpack.c.l.b16 %v5621
          %v6141 = vunpack.c.l.b16 %v5622
          %v6142 = vunpack.c.l.b16 %v5623
          %v6143 = vunpack.c.l.b16 %v5624
          %v6144 = vunpack.c.l.b16 %v5625
          %v6145 = vunpack.c.l.b16 %v5626
          %v6146 = vunpack.c.l.b16 %v5627
          %v6147 = vunpack.c.l.b16 %v5628
          %v6148 = vunpack.c.l.b16 %v5629
          %v6149 = vunpack.c.l.b16 %v5630
          %v6150 = vunpack.c.l.b16 %v5631
          %v6151 = vunpack.c.l.b16 %v5632
          %v6152 = vunpack.c.l.b16 %v5633
          %v6153 = vunpack.c.l.b16 %v5634
          %v6154 = vunpack.c.l.b16 %v5635
          %v6155 = vunpack.c.l.b16 %v5636
          %v6156 = vunpack.c.l.b16 %v5637
          %v6157 = vunpack.c.l.b16 %v5638
          %v6158 = vunpack.c.l.b16 %v5639
          %v6159 = vunpack.c.l.b16 %v5640
          %v6160 = vunpack.c.l.b16 %v5641
          %v6161 = vunpack.c.l.b16 %v5642
          %v6162 = vunpack.c.l.b16 %v5643
          %v6163 = vunpack.c.l.b16 %v5644
          %v6164 = vunpack.c.l.b16 %v5645
          %v6165 = vunpack.c.l.b16 %v5646
          %v6166 = vunpack.c.l.b16 %v5647
          %v6167 = vunpack.c.l.b16 %v5648
          %v6168 = vunpack.c.l.b16 %v5649
          %v6169 = vunpack.c.l.b16 %v5650
          %v6170 = vunpack.c.l.b16 %v5651
          %v6171 = vunpack.c.l.b16 %v5652
          %v6172 = vunpack.c.l.b16 %v5653
          %v6173 = vunpack.c.l.b16 %v5654
          %v6174 = vunpack.c.l.b16 %v5655
          %v6175 = vunpack.c.l.b16 %v5656
          %v6176 = vunpack.c.l.b16 %v5657
          %v6177 = vunpack.c.l.b16 %v5658
          %v6178 = vunpack.c.l.b16 %v5659
          %v6179 = vunpack.c.l.b16 %v5660
          %v6180 = vunpack.c.l.b16 %v5661
          %v6181 = vunpack.c.l.b16 %v5662
          %v6182 = vunpack.c.l.b16 %v5663
          %v6183 = vunpack.c.l.b16 %v5664
          %v6184 = vunpack.c.l.b16 %v5665
          %v6185 = vunpack.c.l.b16 %v5666
          %v6186 = vunpack.c.l.b16 %v5667
          %v6187 = vunpack.c.l.b16 %v5668
          %v6188 = vunpack.c.l.b16 %v5669
          %v6189 = vunpack.c.l.b16 %v5670
          %v6190 = vunpack.c.l.b16 %v5671
          %v6191 = vunpack.c.l.b16 %v5672
          %v6192 = vunpack.c.l.b16 %v5673
          %v6193 = vunpack.c.l.b16 %v5674
          %v6194 = vunpack.c.l.b16 %v5675
          %v6195 = vunpack.c.l.b16 %v5676
          %v6196 = vunpack.c.l.b16 %v5677
          %v6197 = vunpack.c.l.b16 %v5678
          %v6198 = vunpack.c.l.b16 %v5679
          %v6199 = vunpack.c.l.b16 %v5680
          %v6200 = vunpack.c.l.b16 %v5681
          %v6201 = vunpack.c.l.b16 %v5682
          %v6202 = vunpack.c.l.b16 %v5683
          %v6203 = vunpack.c.l.b16 %v5684
          %v6204 = vunpack.c.l.b16 %v5685
          %v6205 = vunpack.c.l.b16 %v5686
          %v6206 = vunpack.c.l.b16 %v5687
          %v6207 = vunpack.c.l.b16 %v5688
          %v6208 = vunpack.c.l.b16 %v5689
          %v6209 = vunpack.c.l.b16 %v5690
          %v6210 = vunpack.c.l.b16 %v5691
          %v6211 = vunpack.c.l.b16 %v5692
          %v6212 = vunpack.c.l.b16 %v5693
          %v6213 = vunpack.c.l.b16 %v5694
          %v6214 = vunpack.c.l.b16 %v5695
          %v6215 = vunpack.c.l.b16 %v5696
          %v6216 = vunpack.c.l.b16 %v5697
          %v6217 = vunpack.c.l.b16 %v5698
          %v6218 = vunpack.c.l.b16 %v5699
          %v6219 = vunpack.c.l.b16 %v5700
          %v6220 = vunpack.c.l.b16 %v5701
          %v6221 = vunpack.c.l.b16 %v5702
          %v6222 = vunpack.c.l.b16 %v5703
          %v6223 = vunpack.c.l.b16 %v5704
          %v6224 = vunpack.c.l.b16 %v5705
          %v6225 = vunpack.c.l.b16 %v5706
          %v6226 = vunpack.c.l.b16 %v5707
          %v6227 = vunpack.c.l.b16 %v5708
          %v6228 = vunpack.c.l.b16 %v5709
          %v6229 = vunpack.c.l.b16 %v5710
          %v6230 = vunpack.c.l.b16 %v5711
          %v6231 = vunpack.c.l.b16 %v5712
          %v6232 = vunpack.c.l.b16 %v5713
          %v6233 = vunpack.c.l.b16 %v5714
          %v6234 = vunpack.c.l.b16 %v5715
          %v6235 = vunpack.c.l.b16 %v5716
          %v6236 = vunpack.c.l.b16 %v5717
          %v6237 = vunpack.c.l.b16 %v5718
          %v6238 = vunpack.c.l.b16 %v5719
          %v6239 = vunpack.c.l.b16 %v5720
          %v6240 = vunpack.c.l.b16 %v5721
          %v6241 = vunpack.c.l.b16 %v5722
          %v6242 = vunpack.c.l.b16 %v5723
          %v6243 = vunpack.c.l.b16 %v5724
          %v6244 = vunpack.c.l.b16 %v5725
          %v6245 = vunpack.c.l.b16 %v5726
          %v6246 = vunpack.c.l.b16 %v5727
          %v6247 = vunpack.c.l.b16 %v5728
          %v6248 = vunpack.c.l.b16 %v5729
          %v6249 = vunpack.c.l.b16 %v5730
          %v6250 = vunpack.c.l.b16 %v5731
          %v6251 = vunpack.c.l.b16 %v5732
          %v6252 = vunpack.c.l.b16 %v5733
          %v6253 = vunpack.c.l.b16 %v5734
          %v6254 = vunpack.c.l.b16 %v5735
          %v6255 = vunpack.c.l.b16 %v5736
          %v6256 = vunpack.c.l.b16 %v5737
          %v6257 = vunpack.c.l.b16 %v5738
          %v6258 = vunpack.c.l.b16 %v5739
          %v6259 = vunpack.c.l.b16 %v5740
          %v6260 = vunpack.c.l.b16 %v5741
          %v6261 = vunpack.c.l.b16 %v5742
          %v6262 = vunpack.c.l.b16 %v5743
          %v6263 = vunpack.c.l.b16 %v5744
          %v6264 = vunpack.c.l.b16 %v5745
          %v6265 = vunpack.c.l.b16 %v5746
          %v6266 = vunpack.c.l.b16 %v5747
          %v6267 = vunpack.c.l.b16 %v5748
          %v6268 = vunpack.c.l.b16 %v5749
          %v6269 = vunpack.c.l.b16 %v5750
          %v6270 = vunpack.c.l.b16 %v5751
          %v6271 = vunpack.c.l.b16 %v5752
          %v6272 = vunpack.c.l.b16 %v5753
          %v6273 = vunpack.c.l.b16 %v5754
          %v6274 = vunpack.c.l.b16 %v5755
          %v6275 = vunpack.c.l.b16 %v5756
          %v6276 = vunpack.c.l.b16 %v5757
          %v6277 = vunpack.c.l.b16 %v5758
          %v6278 = vunpack.c.l.b16 %v5759
          %v6279 = vunpack.c.l.b16 %v5760
          %v6280 = vpack.c.b16 %v6025, %v6024
          %v6281 = vpack.c.b16 %v6027, %v6026
          %v6282 = vpack.c.b16 %v6029, %v6028
          %v6283 = vpack.c.b16 %v6031, %v6030
          %v6284 = vpack.c.b16 %v6033, %v6032
          %v6285 = vpack.c.b16 %v6035, %v6034
          %v6286 = vpack.c.b16 %v6037, %v6036
          %v6287 = vpack.c.b16 %v6039, %v6038
          %v6288 = vpack.c.b16 %v6041, %v6040
          %v6289 = vpack.c.b16 %v6043, %v6042
          %v6290 = vpack.c.b16 %v6045, %v6044
          %v6291 = vpack.c.b16 %v6047, %v6046
          %v6292 = vpack.c.b16 %v6049, %v6048
          %v6293 = vpack.c.b16 %v6051, %v6050
          %v6294 = vpack.c.b16 %v6053, %v6052
          %v6295 = vpack.c.b16 %v6055, %v6054
          %v6296 = vpack.c.b16 %v6057, %v6056
          %v6297 = vpack.c.b16 %v6059, %v6058
          %v6298 = vpack.c.b16 %v6061, %v6060
          %v6299 = vpack.c.b16 %v6063, %v6062
          %v6300 = vpack.c.b16 %v6065, %v6064
          %v6301 = vpack.c.b16 %v6067, %v6066
          %v6302 = vpack.c.b16 %v6069, %v6068
          %v6303 = vpack.c.b16 %v6071, %v6070
          %v6304 = vpack.c.b16 %v6073, %v6072
          %v6305 = vpack.c.b16 %v6075, %v6074
          %v6306 = vpack.c.b16 %v6077, %v6076
          %v6307 = vpack.c.b16 %v6079, %v6078
          %v6308 = vpack.c.b16 %v6081, %v6080
          %v6309 = vpack.c.b16 %v6083, %v6082
          %v6310 = vpack.c.b16 %v6085, %v6084
          %v6311 = vpack.c.b16 %v6087, %v6086
          %v6312 = vpack.c.b16 %v6089, %v6088
          %v6313 = vpack.c.b16 %v6091, %v6090
          %v6314 = vpack.c.b16 %v6093, %v6092
          %v6315 = vpack.c.b16 %v6095, %v6094
          %v6316 = vpack.c.b16 %v6097, %v6096
          %v6317 = vpack.c.b16 %v6099, %v6098
          %v6318 = vpack.c.b16 %v6101, %v6100
          %v6319 = vpack.c.b16 %v6103, %v6102
          %v6320 = vpack.c.b16 %v6105, %v6104
          %v6321 = vpack.c.b16 %v6107, %v6106
          %v6322 = vpack.c.b16 %v6109, %v6108
          %v6323 = vpack.c.b16 %v6111, %v6110
          %v6324 = vpack.c.b16 %v6113, %v6112
          %v6325 = vpack.c.b16 %v6115, %v6114
          %v6326 = vpack.c.b16 %v6117, %v6116
          %v6327 = vpack.c.b16 %v6119, %v6118
          %v6328 = vpack.c.b16 %v6121, %v6120
          %v6329 = vpack.c.b16 %v6123, %v6122
          %v6330 = vpack.c.b16 %v6125, %v6124
          %v6331 = vpack.c.b16 %v6127, %v6126
          %v6332 = vpack.c.b16 %v6129, %v6128
          %v6333 = vpack.c.b16 %v6131, %v6130
          %v6334 = vpack.c.b16 %v6133, %v6132
          %v6335 = vpack.c.b16 %v6135, %v6134
          %v6336 = vpack.c.b16 %v6137, %v6136
          %v6337 = vpack.c.b16 %v6139, %v6138
          %v6338 = vpack.c.b16 %v6141, %v6140
          %v6339 = vpack.c.b16 %v6143, %v6142
          %v6340 = vpack.c.b16 %v6145, %v6144
          %v6341 = vpack.c.b16 %v6147, %v6146
          %v6342 = vpack.c.b16 %v6149, %v6148
          %v6343 = vpack.c.b16 %v6151, %v6150
          %v6344 = vpack.c.b16 %v6153, %v6152
          %v6345 = vpack.c.b16 %v6155, %v6154
          %v6346 = vpack.c.b16 %v6157, %v6156
          %v6347 = vpack.c.b16 %v6159, %v6158
          %v6348 = vpack.c.b16 %v6161, %v6160
          %v6349 = vpack.c.b16 %v6163, %v6162
          %v6350 = vpack.c.b16 %v6165, %v6164
          %v6351 = vpack.c.b16 %v6167, %v6166
          %v6352 = vpack.c.b16 %v6169, %v6168
          %v6353 = vpack.c.b16 %v6171, %v6170
          %v6354 = vpack.c.b16 %v6173, %v6172
          %v6355 = vpack.c.b16 %v6175, %v6174
          %v6356 = vpack.c.b16 %v6177, %v6176
          %v6357 = vpack.c.b16 %v6179, %v6178
          %v6358 = vpack.c.b16 %v6181, %v6180
          %v6359 = vpack.c.b16 %v6183, %v6182
          %v6360 = vpack.c.b16 %v6185, %v6184
          %v6361 = vpack.c.b16 %v6187, %v6186
          %v6362 = vpack.c.b16 %v6189, %v6188
          %v6363 = vpack.c.b16 %v6191, %v6190
          %v6364 = vpack.c.b16 %v6193, %v6192
          %v6365 = vpack.c.b16 %v6195, %v6194
          %v6366 = vpack.c.b16 %v6197, %v6196
          %v6367 = vpack.c.b16 %v6199, %v6198
          %v6368 = vpack.c.b16 %v6201, %v6200
          %v6369 = vpack.c.b16 %v6203, %v6202
          %v6370 = vpack.c.b16 %v6205, %v6204
          %v6371 = vpack.c.b16 %v6207, %v6206
          %v6372 = vpack.c.b16 %v6209, %v6208
          %v6373 = vpack.c.b16 %v6211, %v6210
          %v6374 = vpack.c.b16 %v6213, %v6212
          %v6375 = vpack.c.b16 %v6215, %v6214
          %v6376 = vpack.c.b16 %v6217, %v6216
          %v6377 = vpack.c.b16 %v6219, %v6218
          %v6378 = vpack.c.b16 %v6221, %v6220
          %v6379 = vpack.c.b16 %v6223, %v6222
          %v6380 = vpack.c.b16 %v6225, %v6224
          %v6381 = vpack.c.b16 %v6227, %v6226
          %v6382 = vpack.c.b16 %v6229, %v6228
          %v6383 = vpack.c.b16 %v6231, %v6230
          %v6384 = vpack.c.b16 %v6233, %v6232
          %v6385 = vpack.c.b16 %v6235, %v6234
          %v6386 = vpack.c.b16 %v6237, %v6236
          %v6387 = vpack.c.b16 %v6239, %v6238
          %v6388 = vpack.c.b16 %v6241, %v6240
          %v6389 = vpack.c.b16 %v6243, %v6242
          %v6390 = vpack.c.b16 %v6245, %v6244
          %v6391 = vpack.c.b16 %v6247, %v6246
          %v6392 = vpack.c.b16 %v6249, %v6248
          %v6393 = vpack.c.b16 %v6251, %v6250
          %v6394 = vpack.c.b16 %v6253, %v6252
          %v6395 = vpack.c.b16 %v6255, %v6254
          %v6396 = vpack.c.b16 %v6257, %v6256
          %v6397 = vpack.c.b16 %v6259, %v6258
          %v6398 = vpack.c.b16 %v6261, %v6260
          %v6399 = vpack.c.b16 %v6263, %v6262
          %v6400 = vpack.c.b16 %v6265, %v6264
          %v6401 = vpack.c.b16 %v6267, %v6266
          %v6402 = vpack.c.b16 %v6269, %v6268
          %v6403 = vpack.c.b16 %v6271, %v6270
          %v6404 = vpack.c.b16 %v6273, %v6272
          %v6405 = vpack.c.b16 %v6275, %v6274
          %v6406 = vpack.c.b16 %v6277, %v6276
          %v6407 = vpack.c.b16 %v6279, %v6278
          %6536 = vmatprep.subr.bf16.mxu0 0
          %6537 = vmatpush1.bf16.msra.mxu0 %v6287
          %6538 = vmatprep.subr.bf16.mxu0 0
          %6539 = vmatpush1.bf16.msra.mxu0 %v6286
          %6540 = vmatprep.subr.bf16.mxu0 0
          %6541 = vmatpush1.bf16.msra.mxu0 %v6285
          %6542 = vmatprep.subr.bf16.mxu0 0
          %6543 = vmatpush1.bf16.msra.mxu0 %v6284
          %6544 = vmatprep.subr.bf16.mxu0 0
          %6545 = vmatpush1.bf16.msra.mxu0 %v6283
          %6546 = vmatprep.subr.bf16.mxu0 0
          %6547 = vmatpush1.bf16.msra.mxu0 %v6282
          %6548 = vmatprep.subr.bf16.mxu0 0
          %6549 = vmatpush1.bf16.msra.mxu0 %v6281
          %6550 = vmatprep.subr.bf16.mxu0 0
          %6551 = vmatpush1.bf16.msra.mxu0 %v6280
          %6552 = vmatprep.subr.bf16.mxu0 0
          %6553 = vmatpush2.bf16.msra.mxu0 %v6295
          %6554 = vmatprep.subr.bf16.mxu0 0
          %6555 = vmatpush2.bf16.msra.mxu0 %v6294
          %6556 = vmatprep.subr.bf16.mxu0 0
          %6557 = vmatpush2.bf16.msra.mxu0 %v6293
          %6558 = vmatprep.subr.bf16.mxu0 0
          %6559 = vmatpush2.bf16.msra.mxu0 %v6292
          %6560 = vmatprep.subr.bf16.mxu0 0
          %6561 = vmatpush2.bf16.msra.mxu0 %v6291
          %6562 = vmatprep.subr.bf16.mxu0 0
          %6563 = vmatpush2.bf16.msra.mxu0 %v6290
          %6564 = vmatprep.subr.bf16.mxu0 0
          %6565 = vmatpush2.bf16.msra.mxu0 %v6289
          %6566 = vmatprep.subr.bf16.mxu0 0
          %6567 = vmatpush2.bf16.msra.mxu0 %v6288
          %6568 = vmatprep.mubr.bf16.mxu0 %v5490
          %6569 = vmatmul.mubr.bf16.gmra.mxu0 %v5489
          %v6570 = vpop.f32.mrf.mxu0
          %v6571 = vadd.f32 %v5766, %v6570
          %v6572 = vpop.f32.mrf.mxu0
          %v6573 = vpop.f32.mrf.mxu0
          %v6574 = vpop.f32.mrf.mxu0
          %6575 = vdwg.mxu0
          %6576 = vmatprep.subr.bf16.mxu0 0
          %6577 = vmatpush1.bf16.msra.mxu0 %v6303
          %6578 = vmatprep.subr.bf16.mxu0 0
          %6579 = vmatpush1.bf16.msra.mxu0 %v6302
          %6580 = vmatprep.subr.bf16.mxu0 0
          %6581 = vmatpush1.bf16.msra.mxu0 %v6301
          %6582 = vmatprep.subr.bf16.mxu0 0
          %6583 = vmatpush1.bf16.msra.mxu0 %v6300
          %6584 = vmatprep.subr.bf16.mxu0 0
          %6585 = vmatpush1.bf16.msra.mxu0 %v6299
          %6586 = vmatprep.subr.bf16.mxu0 0
          %6587 = vmatpush1.bf16.msra.mxu0 %v6298
          %6588 = vmatprep.subr.bf16.mxu0 0
          %6589 = vmatpush1.bf16.msra.mxu0 %v6297
          %6590 = vmatprep.subr.bf16.mxu0 0
          %6591 = vmatpush1.bf16.msra.mxu0 %v6296
          %6592 = vmatprep.subr.bf16.mxu0 0
          %6593 = vmatpush2.bf16.msra.mxu0 %v6311
          %6594 = vmatprep.subr.bf16.mxu0 0
          %6595 = vmatpush2.bf16.msra.mxu0 %v6310
          %6596 = vmatprep.subr.bf16.mxu0 0
          %6597 = vmatpush2.bf16.msra.mxu0 %v6309
          %6598 = vmatprep.subr.bf16.mxu0 0
          %6599 = vmatpush2.bf16.msra.mxu0 %v6308
          %6600 = vmatprep.subr.bf16.mxu0 0
          %6601 = vmatpush2.bf16.msra.mxu0 %v6307
          %6602 = vmatprep.subr.bf16.mxu0 0
          %6603 = vmatpush2.bf16.msra.mxu0 %v6306
          %6604 = vmatprep.subr.bf16.mxu0 0
          %6605 = vmatpush2.bf16.msra.mxu0 %v6305
          %6606 = vmatprep.subr.bf16.mxu0 0
          %6607 = vmatpush2.bf16.msra.mxu0 %v6304
          %6608 = vmatprep.mubr.bf16.mxu0 %v5492
          %6609 = vmatmul.mubr.bf16.gmra.mxu0 %v5491
          %v6610 = vpop.f32.mrf.mxu0
          %v6611 = vadd.f32 %v6571, %v6610
          %v6612 = vpop.f32.mrf.mxu0
          %v6613 = vpop.f32.mrf.mxu0
          %v6614 = vpop.f32.mrf.mxu0
          %6615 = vdwg.mxu0
          %6616 = vmatprep.subr.bf16.mxu0 0
          %6617 = vmatpush1.bf16.msra.mxu0 %v6319
          %6618 = vmatprep.subr.bf16.mxu0 0
          %6619 = vmatpush1.bf16.msra.mxu0 %v6318
          %6620 = vmatprep.subr.bf16.mxu0 0
          %6621 = vmatpush1.bf16.msra.mxu0 %v6317
          %6622 = vmatprep.subr.bf16.mxu0 0
          %6623 = vmatpush1.bf16.msra.mxu0 %v6316
          %6624 = vmatprep.subr.bf16.mxu0 0
          %6625 = vmatpush1.bf16.msra.mxu0 %v6315
          %6626 = vmatprep.subr.bf16.mxu0 0
          %6627 = vmatpush1.bf16.msra.mxu0 %v6314
          %6628 = vmatprep.subr.bf16.mxu0 0
          %6629 = vmatpush1.bf16.msra.mxu0 %v6313
          %6630 = vmatprep.subr.bf16.mxu0 0
          %6631 = vmatpush1.bf16.msra.mxu0 %v6312
          %6632 = vmatprep.subr.bf16.mxu0 0
          %6633 = vmatpush2.bf16.msra.mxu0 %v6327
          %6634 = vmatprep.subr.bf16.mxu0 0
          %6635 = vmatpush2.bf16.msra.mxu0 %v6326
          %6636 = vmatprep.subr.bf16.mxu0 0
          %6637 = vmatpush2.bf16.msra.mxu0 %v6325
          %6638 = vmatprep.subr.bf16.mxu0 0
          %6639 = vmatpush2.bf16.msra.mxu0 %v6324
          %6640 = vmatprep.subr.bf16.mxu0 0
          %6641 = vmatpush2.bf16.msra.mxu0 %v6323
          %6642 = vmatprep.subr.bf16.mxu0 0
          %6643 = vmatpush2.bf16.msra.mxu0 %v6322
          %6644 = vmatprep.subr.bf16.mxu0 0
          %6645 = vmatpush2.bf16.msra.mxu0 %v6321
          %6646 = vmatprep.subr.bf16.mxu0 0
          %6647 = vmatpush2.bf16.msra.mxu0 %v6320
          %6648 = vmatprep.mubr.bf16.mxu0 %v5494
          %6649 = vmatmul.mubr.bf16.gmra.mxu0 %v5493
          %v6650 = vpop.f32.mrf.mxu0
          %v6651 = vadd.f32 %v6611, %v6650
          %v6652 = vpop.f32.mrf.mxu0
          %v6653 = vpop.f32.mrf.mxu0
          %v6654 = vpop.f32.mrf.mxu0
          %6655 = vdwg.mxu0
          %6656 = vmatprep.subr.bf16.mxu0 0
          %6657 = vmatpush1.bf16.msra.mxu0 %v6335
          %6658 = vmatprep.subr.bf16.mxu0 0
          %6659 = vmatpush1.bf16.msra.mxu0 %v6334
          %6660 = vmatprep.subr.bf16.mxu0 0
          %6661 = vmatpush1.bf16.msra.mxu0 %v6333
          %6662 = vmatprep.subr.bf16.mxu0 0
          %6663 = vmatpush1.bf16.msra.mxu0 %v6332
          %6664 = vmatprep.subr.bf16.mxu0 0
          %6665 = vmatpush1.bf16.msra.mxu0 %v6331
          %6666 = vmatprep.subr.bf16.mxu0 0
          %6667 = vmatpush1.bf16.msra.mxu0 %v6330
          %6668 = vmatprep.subr.bf16.mxu0 0
          %6669 = vmatpush1.bf16.msra.mxu0 %v6329
          %6670 = vmatprep.subr.bf16.mxu0 0
          %6671 = vmatpush1.bf16.msra.mxu0 %v6328
          %6672 = vmatprep.subr.bf16.mxu0 0
          %6673 = vmatpush2.bf16.msra.mxu0 %v6343
          %6674 = vmatprep.subr.bf16.mxu0 0
          %6675 = vmatpush2.bf16.msra.mxu0 %v6342
          %6676 = vmatprep.subr.bf16.mxu0 0
          %6677 = vmatpush2.bf16.msra.mxu0 %v6341
          %6678 = vmatprep.subr.bf16.mxu0 0
          %6679 = vmatpush2.bf16.msra.mxu0 %v6340
          %6680 = vmatprep.subr.bf16.mxu0 0
          %6681 = vmatpush2.bf16.msra.mxu0 %v6339
          %6682 = vmatprep.subr.bf16.mxu0 0
          %6683 = vmatpush2.bf16.msra.mxu0 %v6338
          %6684 = vmatprep.subr.bf16.mxu0 0
          %6685 = vmatpush2.bf16.msra.mxu0 %v6337
          %6686 = vmatprep.subr.bf16.mxu0 0
          %6687 = vmatpush2.bf16.msra.mxu0 %v6336
          %6688 = vmatprep.mubr.bf16.mxu0 %v5496
          %6689 = vmatmul.mubr.bf16.gmra.mxu0 %v5495
          %v6690 = vpop.f32.mrf.mxu0
          %v6691 = vadd.f32 %v6651, %v6690
          %v6692 = vpop.f32.mrf.mxu0
          %v6693 = vpop.f32.mrf.mxu0
          %v6694 = vpop.f32.mrf.mxu0
          %6695 = vdwg.mxu0
          %6696 = vmatprep.subr.bf16.mxu0 0
          %6697 = vmatpush1.bf16.msra.mxu0 %v6351
          %6698 = vmatprep.subr.bf16.mxu0 0
          %6699 = vmatpush1.bf16.msra.mxu0 %v6350
          %6700 = vmatprep.subr.bf16.mxu0 0
          %6701 = vmatpush1.bf16.msra.mxu0 %v6349
          %6702 = vmatprep.subr.bf16.mxu0 0
          %6703 = vmatpush1.bf16.msra.mxu0 %v6348
          %6704 = vmatprep.subr.bf16.mxu0 0
          %6705 = vmatpush1.bf16.msra.mxu0 %v6347
          %6706 = vmatprep.subr.bf16.mxu0 0
          %6707 = vmatpush1.bf16.msra.mxu0 %v6346
          %6708 = vmatprep.subr.bf16.mxu0 0
          %6709 = vmatpush1.bf16.msra.mxu0 %v6345
          %6710 = vmatprep.subr.bf16.mxu0 0
          %6711 = vmatpush1.bf16.msra.mxu0 %v6344
          %6712 = vmatprep.subr.bf16.mxu0 0
          %6713 = vmatpush2.bf16.msra.mxu0 %v6359
          %6714 = vmatprep.subr.bf16.mxu0 0
          %6715 = vmatpush2.bf16.msra.mxu0 %v6358
          %6716 = vmatprep.subr.bf16.mxu0 0
          %6717 = vmatpush2.bf16.msra.mxu0 %v6357
          %6718 = vmatprep.subr.bf16.mxu0 0
          %6719 = vmatpush2.bf16.msra.mxu0 %v6356
          %6720 = vmatprep.subr.bf16.mxu0 0
          %6721 = vmatpush2.bf16.msra.mxu0 %v6355
          %6722 = vmatprep.subr.bf16.mxu0 0
          %6723 = vmatpush2.bf16.msra.mxu0 %v6354
          %6724 = vmatprep.subr.bf16.mxu0 0
          %6725 = vmatpush2.bf16.msra.mxu0 %v6353
          %6726 = vmatprep.subr.bf16.mxu0 0
          %6727 = vmatpush2.bf16.msra.mxu0 %v6352
          %6728 = vmatprep.mubr.bf16.mxu0 %v5498
          %6729 = vmatmul.mubr.bf16.gmra.mxu0 %v5497
          %v6730 = vpop.f32.mrf.mxu0
          %v6731 = vadd.f32 %v6691, %v6730
          %v6732 = vpop.f32.mrf.mxu0
          %v6733 = vpop.f32.mrf.mxu0
          %v6734 = vpop.f32.mrf.mxu0
          %6735 = vdwg.mxu0
          %6736 = vmatprep.subr.bf16.mxu0 0
          %6737 = vmatpush1.bf16.msra.mxu0 %v6367
          %6738 = vmatprep.subr.bf16.mxu0 0
          %6739 = vmatpush1.bf16.msra.mxu0 %v6366
          %6740 = vmatprep.subr.bf16.mxu0 0
          %6741 = vmatpush1.bf16.msra.mxu0 %v6365
          %6742 = vmatprep.subr.bf16.mxu0 0
          %6743 = vmatpush1.bf16.msra.mxu0 %v6364
          %6744 = vmatprep.subr.bf16.mxu0 0
          %6745 = vmatpush1.bf16.msra.mxu0 %v6363
          %6746 = vmatprep.subr.bf16.mxu0 0
          %6747 = vmatpush1.bf16.msra.mxu0 %v6362
          %6748 = vmatprep.subr.bf16.mxu0 0
          %6749 = vmatpush1.bf16.msra.mxu0 %v6361
          %6750 = vmatprep.subr.bf16.mxu0 0
          %6751 = vmatpush1.bf16.msra.mxu0 %v6360
          %6752 = vmatprep.subr.bf16.mxu0 0
          %6753 = vmatpush2.bf16.msra.mxu0 %v6375
          %6754 = vmatprep.subr.bf16.mxu0 0
          %6755 = vmatpush2.bf16.msra.mxu0 %v6374
          %6756 = vmatprep.subr.bf16.mxu0 0
          %6757 = vmatpush2.bf16.msra.mxu0 %v6373
          %6758 = vmatprep.subr.bf16.mxu0 0
          %6759 = vmatpush2.bf16.msra.mxu0 %v6372
          %6760 = vmatprep.subr.bf16.mxu0 0
          %6761 = vmatpush2.bf16.msra.mxu0 %v6371
          %6762 = vmatprep.subr.bf16.mxu0 0
          %6763 = vmatpush2.bf16.msra.mxu0 %v6370
          %6764 = vmatprep.subr.bf16.mxu0 0
          %6765 = vmatpush2.bf16.msra.mxu0 %v6369
          %6766 = vmatprep.subr.bf16.mxu0 0
          %6767 = vmatpush2.bf16.msra.mxu0 %v6368
          %6768 = vmatprep.mubr.bf16.mxu0 %v5500
          %6769 = vmatmul.mubr.bf16.gmra.mxu0 %v5499
          %v6770 = vpop.f32.mrf.mxu0
          %v6771 = vadd.f32 %v6731, %v6770
          %v6772 = vpop.f32.mrf.mxu0
          %v6773 = vpop.f32.mrf.mxu0
          %v6774 = vpop.f32.mrf.mxu0
          %6775 = vdwg.mxu0
          %6776 = vmatprep.subr.bf16.mxu0 0
          %6777 = vmatpush1.bf16.msra.mxu0 %v6383
          %6778 = vmatprep.subr.bf16.mxu0 0
          %6779 = vmatpush1.bf16.msra.mxu0 %v6382
          %6780 = vmatprep.subr.bf16.mxu0 0
          %6781 = vmatpush1.bf16.msra.mxu0 %v6381
          %6782 = vmatprep.subr.bf16.mxu0 0
          %6783 = vmatpush1.bf16.msra.mxu0 %v6380
          %6784 = vmatprep.subr.bf16.mxu0 0
          %6785 = vmatpush1.bf16.msra.mxu0 %v6379
          %6786 = vmatprep.subr.bf16.mxu0 0
          %6787 = vmatpush1.bf16.msra.mxu0 %v6378
          %6788 = vmatprep.subr.bf16.mxu0 0
          %6789 = vmatpush1.bf16.msra.mxu0 %v6377
          %6790 = vmatprep.subr.bf16.mxu0 0
          %6791 = vmatpush1.bf16.msra.mxu0 %v6376
          %6792 = vmatprep.subr.bf16.mxu0 0
          %6793 = vmatpush2.bf16.msra.mxu0 %v6391
          %6794 = vmatprep.subr.bf16.mxu0 0
          %6795 = vmatpush2.bf16.msra.mxu0 %v6390
          %6796 = vmatprep.subr.bf16.mxu0 0
          %6797 = vmatpush2.bf16.msra.mxu0 %v6389
          %6798 = vmatprep.subr.bf16.mxu0 0
          %6799 = vmatpush2.bf16.msra.mxu0 %v6388
          %6800 = vmatprep.subr.bf16.mxu0 0
          %6801 = vmatpush2.bf16.msra.mxu0 %v6387
          %6802 = vmatprep.subr.bf16.mxu0 0
          %6803 = vmatpush2.bf16.msra.mxu0 %v6386
          %6804 = vmatprep.subr.bf16.mxu0 0
          %6805 = vmatpush2.bf16.msra.mxu0 %v6385
          %6806 = vmatprep.subr.bf16.mxu0 0
          %6807 = vmatpush2.bf16.msra.mxu0 %v6384
          %6808 = vmatprep.mubr.bf16.mxu0 %v5502
          %6809 = vmatmul.mubr.bf16.gmra.mxu0 %v5501
          %v6810 = vpop.f32.mrf.mxu0
          %v6811 = vadd.f32 %v6771, %v6810
          %v6812 = vpop.f32.mrf.mxu0
          %v6813 = vpop.f32.mrf.mxu0
          %v6814 = vpop.f32.mrf.mxu0
          %6815 = vdwg.mxu0
          %6816 = vmatprep.subr.bf16.mxu0 0
          %6817 = vmatpush1.bf16.msra.mxu0 %v6399
          %6818 = vmatprep.subr.bf16.mxu0 0
          %6819 = vmatpush1.bf16.msra.mxu0 %v6398
          %6820 = vmatprep.subr.bf16.mxu0 0
          %6821 = vmatpush1.bf16.msra.mxu0 %v6397
          %6822 = vmatprep.subr.bf16.mxu0 0
          %6823 = vmatpush1.bf16.msra.mxu0 %v6396
          %6824 = vmatprep.subr.bf16.mxu0 0
          %6825 = vmatpush1.bf16.msra.mxu0 %v6395
          %6826 = vmatprep.subr.bf16.mxu0 0
          %6827 = vmatpush1.bf16.msra.mxu0 %v6394
          %6828 = vmatprep.subr.bf16.mxu0 0
          %6829 = vmatpush1.bf16.msra.mxu0 %v6393
          %6830 = vmatprep.subr.bf16.mxu0 0
          %6831 = vmatpush1.bf16.msra.mxu0 %v6392
          %6832 = vmatprep.subr.bf16.mxu0 0
          %6833 = vmatpush2.bf16.msra.mxu0 %v6407
          %6834 = vmatprep.subr.bf16.mxu0 0
          %6835 = vmatpush2.bf16.msra.mxu0 %v6406
          %6836 = vmatprep.subr.bf16.mxu0 0
          %6837 = vmatpush2.bf16.msra.mxu0 %v6405
          %6838 = vmatprep.subr.bf16.mxu0 0
          %6839 = vmatpush2.bf16.msra.mxu0 %v6404
          %6840 = vmatprep.subr.bf16.mxu0 0
          %6841 = vmatpush2.bf16.msra.mxu0 %v6403
          %6842 = vmatprep.subr.bf16.mxu0 0
          %6843 = vmatpush2.bf16.msra.mxu0 %v6402
          %6844 = vmatprep.subr.bf16.mxu0 0
          %6845 = vmatpush2.bf16.msra.mxu0 %v6401
          %6846 = vmatprep.subr.bf16.mxu0 0
          %6847 = vmatpush2.bf16.msra.mxu0 %v6400
          %6848 = vmatprep.mubr.bf16.mxu0 %v5504
          %6849 = vmatmul.mubr.bf16.gmra.mxu0 %v5503
          %v6850 = vpop.f32.mrf.mxu0
          %v6851 = vadd.f32 %v6811, %v6850
          %v6852 = vpop.f32.mrf.mxu0
          %v6853 = vpop.f32.mrf.mxu0
          %v6854 = vpop.f32.mrf.mxu0
          %6855 = vdwg.mxu0
          %6856 = vst [vmem:[#allocation3] sm:$0x3] %v6851
        $region48: #{net_forward.5} parent=39 // pred_fallthru
          _
        // Predicated region
        $region49: #{net_forward.5} parent=39 // pred_check
          %p6857 = pneg %p164
        $region50: #{net_forward.5} parent=39 // pred_check_branch
          %6859 = sbr.rel (%p6857) target = $region52
        $region51: #{net_forward.5} parent=39 // pred_region
          %s6861 = ssub.s32 32, 32
          %6862 = vsyncadd [#allocation4], %s6861
          %s6863 = smul.addr %s21, 32
          %s6864 = scalar_lea.hbm %s5, %s6863
          %s6866 = sshll.u32 [#allocation3], 4
          %s6867 = int_to_ptr.vmem [resolvable:$true] %s6866
          %6869 = dma.vmem_to_hbm [thread:$0]  %s6867, 32, %s6864, [#allocation4]
        $region52: #{net_forward.5} parent=39 // pred_fallthru
          _
        // Predicated region
        $region53: #{net_forward.5} parent=39 // pred_check
          %p6870 = pneg %p164
        $region54: #{net_forward.5} parent=39 // pred_check_branch
          %6872 = sbr.rel (%p6870) target = $region56
        $region55: #{net_forward.5} parent=39 // pred_region
          %6873 = dma.done [#allocation4], 32
        $region56: #{net_forward.5} parent=39 // pred_fallthru
          _
      $region40: #{net_forward.5} parent=5 // pred_fallthru
        _
      %p6874 = scmp.le.s32.totalorder 2, %s12
      // Predicated region
      $region57: #{net_forward.5} parent=5 // pred_check
        %p6875 = pneg %p6874
      $region58: #{net_forward.5} parent=5 // pred_check_branch
        %6877 = sbr.rel (%p6875) target = $region60
      $region59: #{net_forward.5} parent=5 // pred_region
        %s6878 = ssub.s32 %s12, 2
      $region60: #{net_forward.5} parent=5 // pred_fallthru
        _
    $region6: #{net_forward.5} parent=1 // loop_footer
      %s16 = sadd.s32 1, %s12
    $region7: #{net_forward.5} parent=1 // loop_footer_branch
      %11 = sbr.rel target = $region3
    $region8: #{net_forward.5} parent=1 // loop_exit
      _
    %6879 = vsyncpa [#allocation4], 1
    %s6880 = scalar_lea.sflag [#allocation4], 1
    %6881 = vsyncpa %s6880, 1

</llo_original>
